<compile_context>
chip_gen: v6e
topology: v6e:2x2x1
jax: 0.10.0
libtpu: 0.0.40
codegen_flags: <defaults>
</compile_context>

<pallas_src>
import functools

import jax
import jax.numpy as jnp
from jax.experimental import pallas as pl
from jax.experimental.pallas import tpu as pltpu


# ----------------------------------------------------------------------------
# Small ALBERT-style config (scaled down for a fast self-contained test;
# every lane dimension is a multiple of 128).
# ----------------------------------------------------------------------------
NUM_TAGS   = 20
TAG_PAD    = 128          # num_tags padded to a lane-dense 128
HIDDEN     = 256          # real ALBERT: 768
EMB        = 128          # ALBERT factorized embedding size
INTER      = 512          # FFN intermediate size
NUM_HEADS  = 4            # head_dim = 64
HEAD_DIM   = HIDDEN // NUM_HEADS
NUM_LAYERS = 2            # ALBERT shares one layer's params across depth
VOCAB      = 64
MAX_POS    = 64
LN_EPS     = 1e-12


def _ln(x, g, b, eps):
    """LayerNorm in f32.  x: (S, H), g/b: (1, H)."""
    mu = jnp.mean(x, axis=-1, keepdims=True)
    var = jnp.mean(jnp.square(x - mu), axis=-1, keepdims=True)
    return (x - mu) * jax.lax.rsqrt(var + eps) * g + b


# ----------------------------------------------------------------------------
# Kernel 1: embedding LayerNorm + factorized-embedding projection (EMB -> H).
# Grid over batch; output stored bf16.
# ----------------------------------------------------------------------------
def _embed_kernel(e_ref, g_ref, b_ref, w_ref, wb_ref, o_ref, *, eps):
    e = e_ref[0].astype(jnp.float32)                          # (S, EMB)
    h = _ln(e, g_ref[...], b_ref[...], eps)
    o = jnp.dot(h.astype(jnp.bfloat16), w_ref[...],
                preferred_element_type=jnp.float32) + wb_ref[...]
    o_ref[0] = o.astype(o_ref.dtype)


def embed_pallas(emb_sum, p):
    B, S, _ = emb_sum.shape
    return pl.pallas_call(
        functools.partial(_embed_kernel, eps=LN_EPS),
        out_shape=jax.ShapeDtypeStruct((B, S, HIDDEN), jnp.bfloat16),
        grid=(B,),
        in_specs=[
            pl.BlockSpec((1, S, EMB), lambda b: (b, 0, 0)),
            pl.BlockSpec((1, EMB), lambda b: (0, 0)),
            pl.BlockSpec((1, EMB), lambda b: (0, 0)),
            pl.BlockSpec((EMB, HIDDEN), lambda b: (0, 0)),
            pl.BlockSpec((1, HIDDEN), lambda b: (0, 0)),
        ],
        out_specs=pl.BlockSpec((1, S, HIDDEN), lambda b: (b, 0, 0)),
        compiler_params=pltpu.CompilerParams(dimension_semantics=("parallel",)),
    )(emb_sum, p["emb_ln_g"], p["emb_ln_b"], p["emb_map_w"], p["emb_map_b"])


# ----------------------------------------------------------------------------
# Kernel 2: one full ALBERT transformer layer, fused.
#   QKV -> per-head attention (heads sliced in VMEM) -> output projection ->
#   residual + LN -> FFN-up (gelu) -> FFN-down -> residual + LN.
# Grid over batch; input/output stored bf16, all math accumulated in f32.
# ----------------------------------------------------------------------------
def _albert_layer_kernel(x_ref, mbias_ref,
                         qkv_w_ref, qkv_b_ref,
                         ao_w_ref, ao_b_ref, aln_g_ref, aln_b_ref,
                         f1_w_ref, f1_b_ref, f2_w_ref, f2_b_ref,
                         fln_g_ref, fln_b_ref,
                         o_ref, *, num_heads, scale, eps):
    x_in = x_ref[0].astype(jnp.float32)                       # (S, H)
    x_bf = x_ref[0]                                           # already bf16
    H = x_in.shape[-1]
    dh = H // num_heads

    qkv = jnp.dot(x_bf, qkv_w_ref[...],
                  preferred_element_type=jnp.float32) + qkv_b_ref[...]  # (S, 3H)
    bias = mbias_ref[0]                                       # (1, S) additive mask

    ctx_heads = []
    for h in range(num_heads):                                # static unroll
        q = qkv[:, h * dh:(h + 1) * dh].astype(jnp.bfloat16)
        k = qkv[:, H + h * dh:H + (h + 1) * dh].astype(jnp.bfloat16)
        v = qkv[:, 2 * H + h * dh:2 * H + (h + 1) * dh].astype(jnp.bfloat16)
        s = jnp.dot(q, k.T, preferred_element_type=jnp.float32) * scale + bias
        s = s - jnp.max(s, axis=-1, keepdims=True)
        pr = jnp.exp(s)
        pr = pr * pl.reciprocal(jnp.sum(pr, axis=-1, keepdims=True), approx=True)
        ctx_heads.append(jnp.dot(pr.astype(jnp.bfloat16), v,
                                 preferred_element_type=jnp.float32))
    ctx = jnp.concatenate(ctx_heads, axis=-1)                 # (S, H)

    attn_out = jnp.dot(ctx.astype(jnp.bfloat16), ao_w_ref[...],
                       preferred_element_type=jnp.float32) + ao_b_ref[...]
    x1 = _ln(attn_out + x_in, aln_g_ref[...], aln_b_ref[...], eps)

    ffn = jnp.dot(x1.astype(jnp.bfloat16), f1_w_ref[...],
                  preferred_element_type=jnp.float32) + f1_b_ref[...]
    # ALBERT uses gelu_new == tanh-approximate GELU.
    ffn = jax.nn.gelu(ffn, approximate=True)
    ffn_out = jnp.dot(ffn.astype(jnp.bfloat16), f2_w_ref[...],
                      preferred_element_type=jnp.float32) + f2_b_ref[...]
    x2 = _ln(ffn_out + x1, fln_g_ref[...], fln_b_ref[...], eps)

    o_ref[0] = x2.astype(o_ref.dtype)


def albert_layer_pallas(x, mask_bias, p):
    B, S, H = x.shape
    row = pl.BlockSpec((1, S, H), lambda b: (b, 0, 0))
    const = lambda shape: pl.BlockSpec(shape, lambda b: (0, 0))
    return pl.pallas_call(
        functools.partial(_albert_layer_kernel, num_heads=NUM_HEADS,
                          scale=1.0 / (HEAD_DIM ** 0.5), eps=LN_EPS),
        out_shape=jax.ShapeDtypeStruct((B, S, H), jnp.bfloat16),
        grid=(B,),
        in_specs=[
            row,
            pl.BlockSpec((1, 1, S), lambda b: (b, 0, 0)),
            const((H, 3 * H)), const((1, 3 * H)),
            const((H, H)), const((1, H)), const((1, H)), const((1, H)),
            const((H, INTER)), const((1, INTER)),
            const((INTER, H)), const((1, H)), const((1, H)), const((1, H)),
        ],
        out_specs=row,
        compiler_params=pltpu.CompilerParams(dimension_semantics=("parallel",)),
    )(x, mask_bias,
      p["qkv_w"], p["qkv_b"],
      p["attn_o_w"], p["attn_o_b"], p["attn_ln_g"], p["attn_ln_b"],
      p["ffn_w"], p["ffn_b"], p["ffn_o_w"], p["ffn_o_b"],
      p["ffn_ln_g"], p["ffn_ln_b"])


# ----------------------------------------------------------------------------
# Kernel 3: all heads fused.
#   starts|ends linear (2 x 128 lanes), pooler (tanh linear on CLS) + tags
#   head (128 lanes), and get_emb() as a VPU masked mean over the sequence.
# Grid over batch.
# ----------------------------------------------------------------------------
def _heads_kernel(x_ref, fs_ref,
                  se_w_ref, se_b_ref,
                  pool_w_ref, pool_b_ref, tags_w_ref, tags_b_ref,
                  se_ref, tags_ref, emb_ref):
    x_bf = x_ref[0]                                           # (S, H) bf16
    x = x_bf.astype(jnp.float32)

    # starts | ends fused head (lane-dense 2*128 output)
    se = jnp.dot(x_bf, se_w_ref[...],
                 preferred_element_type=jnp.float32) + se_b_ref[...]
    se_ref[0] = se.astype(se_ref.dtype)

    # pooler (tanh linear on CLS token) -> tags head
    cls = x_bf[0:1, :]                                        # (1, H)
    pooled = jnp.tanh(jnp.dot(cls, pool_w_ref[...],
                              preferred_element_type=jnp.float32)
                      + pool_b_ref[...])
    tags = jnp.dot(pooled.astype(jnp.bfloat16), tags_w_ref[...],
                   preferred_element_type=jnp.float32) + tags_b_ref[...]
    tags_ref[0] = tags.astype(tags_ref.dtype)

    # get_emb: masked mean over first-sentence tokens (VPU mul + sublane reduce)
    m = fs_ref[0]                                             # (S, 1) f32 {0,1}
    num = jnp.sum(x * m, axis=0, keepdims=True)               # (1, H)
    den = jnp.sum(m, axis=0, keepdims=True)                   # (1, 1)
    emb_ref[0] = (num / den).astype(emb_ref.dtype)


def heads_pallas(seq_out, first_sentence, p):
    B, S, H = seq_out.shape
    const = lambda shape: pl.BlockSpec(shape, lambda b: (0, 0))
    se, tags, emb = pl.pallas_call(
        _heads_kernel,
        out_shape=(
            jax.ShapeDtypeStruct((B, S, 2 * TAG_PAD), jnp.float32),
            jax.ShapeDtypeStruct((B, 1, TAG_PAD), jnp.float32),
            jax.ShapeDtypeStruct((B, 1, H), jnp.float32),
        ),
        grid=(B,),
        in_specs=[
            pl.BlockSpec((1, S, H), lambda b: (b, 0, 0)),
            pl.BlockSpec((1, S, 1), lambda b: (b, 0, 0)),
            const((H, 2 * TAG_PAD)), const((1, 2 * TAG_PAD)),
            const((H, H)), const((1, H)),
            const((H, TAG_PAD)), const((1, TAG_PAD)),
        ],
        out_specs=(
            pl.BlockSpec((1, S, 2 * TAG_PAD), lambda b: (b, 0, 0)),
            pl.BlockSpec((1, 1, TAG_PAD), lambda b: (b, 0, 0)),
            pl.BlockSpec((1, 1, H), lambda b: (b, 0, 0)),
        ),
        compiler_params=pltpu.CompilerParams(dimension_semantics=("parallel",)),
    )(seq_out, first_sentence,
      p["se_w"], p["se_b"], p["pool_w"], p["pool_b"], p["tags_w"], p["tags_b"])
    return se, tags[:, 0, :], emb[:, 0, :]


# ----------------------------------------------------------------------------
# Deterministic parameter construction.
# Matmul weights are (in_features, out_features) and pre-cast to bf16;
# biases / LayerNorm params stay f32 and are stored as (1, N).
# ----------------------------------------------------------------------------
def init_params(key):
    def nrm(k, shape, dtype=jnp.bfloat16):
        return (0.02 * jax.random.normal(k, shape, jnp.float32)).astype(dtype)

    ks = iter(jax.random.split(key, 16))
    return {
        # embeddings (gather tables kept f32; gathers run in XLA)
        "word_emb": nrm(next(ks), (VOCAB, EMB), jnp.float32),
        "pos_emb":  nrm(next(ks), (MAX_POS, EMB), jnp.float32),
        "type_emb": nrm(next(ks), (2, EMB), jnp.float32),
        "emb_ln_g": jnp.ones((1, EMB), jnp.float32),
        "emb_ln_b": jnp.zeros((1, EMB), jnp.float32),
        "emb_map_w": nrm(next(ks), (EMB, HIDDEN)),
        "emb_map_b": jnp.zeros((1, HIDDEN), jnp.float32),
        # shared ALBERT transformer layer
        "qkv_w":    nrm(next(ks), (HIDDEN, 3 * HIDDEN)),      # fused Q|K|V
        "qkv_b":    jnp.zeros((1, 3 * HIDDEN), jnp.float32),
        "attn_o_w": nrm(next(ks), (HIDDEN, HIDDEN)),
        "attn_o_b": jnp.zeros((1, HIDDEN), jnp.float32),
        "attn_ln_g": jnp.ones((1, HIDDEN), jnp.float32),
        "attn_ln_b": jnp.zeros((1, HIDDEN), jnp.float32),
        "ffn_w":    nrm(next(ks), (HIDDEN, INTER)),
        "ffn_b":    jnp.zeros((1, INTER), jnp.float32),
        "ffn_o_w":  nrm(next(ks), (INTER, HIDDEN)),
        "ffn_o_b":  jnp.zeros((1, HIDDEN), jnp.float32),
        "ffn_ln_g": jnp.ones((1, HIDDEN), jnp.float32),
        "ffn_ln_b": jnp.zeros((1, HIDDEN), jnp.float32),
        # pooler (ALBERT: tanh(Linear(seq[:, 0])))
        "pool_w":   nrm(next(ks), (HIDDEN, HIDDEN)),
        "pool_b":   jnp.zeros((1, HIDDEN), jnp.float32),
        # heads: tags (padded to 128 lanes), fused starts|ends (2 x 128 lanes)
        "tags_w":   nrm(next(ks), (HIDDEN, TAG_PAD)),
        "tags_b":   jnp.zeros((1, TAG_PAD), jnp.float32),
        "se_w":     nrm(next(ks), (HIDDEN, 2 * TAG_PAD)),
        "se_b":     jnp.zeros((1, 2 * TAG_PAD), jnp.float32),
    }


# ----------------------------------------------------------------------------
# TagValueModel.forward
# ----------------------------------------------------------------------------
def tag_value_forward(params, ids, type_ids, att_ids, softmax_mask=None):
    B, S = ids.shape

    # Embedding lookups (gather) stay in XLA.
    # TODO(synk): embedding gather has no clean Pallas win at this size.
    emb_sum = (jnp.take(params["word_emb"], ids, axis=0)
               + params["pos_emb"][None, :S, :]
               + jnp.take(params["type_emb"], type_ids, axis=0))   # (B, S, EMB)

    x = embed_pallas(emb_sum, params)                              # (B, S, H) bf16

    mask_bias = ((1.0 - att_ids.astype(jnp.float32)) * -1e9).reshape(B, 1, S)
    for _ in range(NUM_LAYERS):          # ALBERT: same params every layer
        x = albert_layer_pallas(x, mask_bias, params)              # (B, S, H) bf16

    # nn.Dropout(0.1) -> identity in eval mode (deterministic forward).
    first_sentence = ((1 - type_ids) * att_ids).astype(jnp.float32)  # (B, S)
    se, tags_pad, emb = heads_pallas(x, first_sentence.reshape(B, S, 1), params)

    pred_tags = tags_pad[:, :NUM_TAGS]                               # (B, T)
    pred_starts = jnp.transpose(se[..., :NUM_TAGS], (0, 2, 1))       # (B, T, S)
    pred_ends = jnp.transpose(se[..., TAG_PAD:TAG_PAD + NUM_TAGS], (0, 2, 1))

    if softmax_mask is not None:  # mask.repeat(T,1,1).permute(1,0,2) == broadcast
        pred_starts = pred_starts + softmax_mask[:, None, :]
        pred_ends = pred_ends + softmax_mask[:, None, :]

    return pred_tags, pred_starts, pred_ends, emb


if __name__ == "__main__":
    B, S = 2, 16
    key = jax.random.PRNGKey(0)
    kp, kid = jax.random.split(key)

    params = init_params(kp)
    ids = jax.random.randint(kid, (B, S), 0, VOCAB, dtype=jnp.int32)
    type_ids = jnp.concatenate([jnp.zeros((B, S // 2), jnp.int32),
                                jnp.ones((B, S // 2), jnp.int32)], axis=1)
    att_ids = jnp.ones((B, S), jnp.int32)

    fwd = jax.jit(tag_value_forward)
    pred_tags, pred_starts, pred_ends, emb = jax.block_until_ready(
        fwd(params, ids, type_ids, att_ids))

    assert pred_tags.shape == (B, NUM_TAGS), pred_tags.shape
    assert pred_starts.shape == (B, NUM_TAGS, S), pred_starts.shape
    assert pred_ends.shape == (B, NUM_TAGS, S), pred_ends.shape
    assert emb.shape == (B, HIDDEN), emb.shape
    for t in (pred_tags, pred_starts, pred_ends, emb):
        assert bool(jnp.all(jnp.isfinite(t)))
    print("KERNEL_OK")
</pallas_src>

<mosaic_0001>
module attributes {stable_mosaic.version = 11 : i64} {
  func.func @_embed_kernel(%arg0: i32, %arg1: memref<1x16x128xf32, #tpu.memory_space<vmem>>, %arg2: memref<1x128xf32, #tpu.memory_space<vmem>>, %arg3: memref<1x128xf32, #tpu.memory_space<vmem>>, %arg4: memref<128x256xbf16, #tpu.memory_space<vmem>>, %arg5: memref<1x256xf32, #tpu.memory_space<vmem>>, %arg6: memref<1x16x256xbf16, #tpu.memory_space<vmem>>) attributes {dimension_semantics = [#tpu.dimension_semantics<parallel>], iteration_bounds = array<i64: 2>, scalar_prefetch = 0 : i64, scratch_operands = 0 : i64, tpu.core_type = #tpu.core_type<tc>, window_params = [{transform_indices = @transform_0, window_bounds = array<i64: 1, 16, 128>}, {pipeline_mode = #tpu.pipeline_mode<synchronous>, transform_indices = @transform_1, window_bounds = array<i64: 1, 128>}, {pipeline_mode = #tpu.pipeline_mode<synchronous>, transform_indices = @transform_2, window_bounds = array<i64: 1, 128>}, {pipeline_mode = #tpu.pipeline_mode<synchronous>, transform_indices = @transform_3, window_bounds = array<i64: 128, 256>}, {pipeline_mode = #tpu.pipeline_mode<synchronous>, transform_indices = @transform_4, window_bounds = array<i64: 1, 256>}, {transform_indices = @transform_5, window_bounds = array<i64: 1, 16, 256>}]} {
    %c0 = arith.constant 0 : index
    %c0_0 = arith.constant 0 : index
    %c0_1 = arith.constant 0 : index
    %0 = vector.load %arg1[%c0, %c0_0, %c0_1] : memref<1x16x128xf32, #tpu.memory_space<vmem>>, vector<1x16x128xf32>
    %1 = vector.shape_cast %0 : vector<1x16x128xf32> to vector<16x128xf32>
    %c0_2 = arith.constant 0 : index
    %c0_3 = arith.constant 0 : index
    %2 = vector.load %arg2[%c0_2, %c0_3] : memref<1x128xf32, #tpu.memory_space<vmem>>, vector<1x128xf32>
    %c0_4 = arith.constant 0 : index
    %c0_5 = arith.constant 0 : index
    %3 = vector.load %arg3[%c0_4, %c0_5] : memref<1x128xf32, #tpu.memory_space<vmem>>, vector<1x128xf32>
    %cst = arith.constant dense<0.000000e+00> : vector<16xf32>
    %4 = vector.multi_reduction <add>, %1, %cst [1] : vector<16x128xf32> to vector<16xf32>
    %5 = vector.shape_cast %4 : vector<16xf32> to vector<16x1xf32>
    %cst_6 = arith.constant 1.280000e+02 : f32
    %6 = vector.broadcast %cst_6 : f32 to vector<16x1xf32>
    %7 = arith.divf %5, %6 : vector<16x1xf32>
    %8 = vector.broadcast %7 : vector<16x1xf32> to vector<16x128xf32>
    %9 = arith.subf %1, %8 : vector<16x128xf32>
    %10 = arith.mulf %9, %9 : vector<16x128xf32>
    %cst_7 = arith.constant dense<0.000000e+00> : vector<16xf32>
    %11 = vector.multi_reduction <add>, %10, %cst_7 [1] : vector<16x128xf32> to vector<16xf32>
    %12 = vector.shape_cast %11 : vector<16xf32> to vector<16x1xf32>
    %cst_8 = arith.constant 1.280000e+02 : f32
    %13 = vector.broadcast %cst_8 : f32 to vector<16x1xf32>
    %14 = arith.divf %12, %13 : vector<16x1xf32>
    %15 = vector.broadcast %7 : vector<16x1xf32> to vector<16x128xf32>
    %16 = arith.subf %1, %15 : vector<16x128xf32>
    %cst_9 = arith.constant 9.99999996E-13 : f32
    %17 = vector.broadcast %cst_9 : f32 to vector<16x1xf32>
    %18 = arith.addf %14, %17 : vector<16x1xf32>
    %19 = math.rsqrt %18 : vector<16x1xf32>
    %20 = vector.broadcast %19 : vector<16x1xf32> to vector<16x128xf32>
    %21 = arith.mulf %16, %20 : vector<16x128xf32>
    %22 = vector.broadcast %2 : vector<1x128xf32> to vector<16x128xf32>
    %23 = arith.mulf %21, %22 : vector<16x128xf32>
    %24 = vector.broadcast %3 : vector<1x128xf32> to vector<16x128xf32>
    %25 = arith.addf %23, %24 : vector<16x128xf32>
    %26 = arith.truncf %25 : vector<16x128xf32> to vector<16x128xbf16>
    %c0_10 = arith.constant 0 : index
    %c0_11 = arith.constant 0 : index
    %27 = vector.load %arg4[%c0_10, %c0_11] : memref<128x256xbf16, #tpu.memory_space<vmem>>, vector<128x256xbf16>
    %cst_12 = arith.constant dense<0.000000e+00> : vector<16x256xf32>
    %28 = tpu.matmul %26, %27, %cst_12 {dimension_numbers = #tpu.dot_dimension_numbers<[1], [0], [0], [1], [0, 0, 1, 1], [], []>} : vector<16x128xbf16>, vector<128x256xbf16>, vector<16x256xf32> -> vector<16x256xf32>
    %c0_13 = arith.constant 0 : index
    %c0_14 = arith.constant 0 : index
    %29 = vector.load %arg5[%c0_13, %c0_14] : memref<1x256xf32, #tpu.memory_space<vmem>>, vector<1x256xf32>
    %30 = vector.broadcast %29 : vector<1x256xf32> to vector<16x256xf32>
    %31 = arith.addf %28, %30 : vector<16x256xf32>
    %32 = arith.truncf %31 : vector<16x256xf32> to vector<16x256xbf16>
    %c0_15 = arith.constant 0 : index
    %c0_16 = arith.constant 0 : index
    %c0_17 = arith.constant 0 : index
    %33 = vector.load %arg6[%c0_15, %c0_16, %c0_17] : memref<1x16x256xbf16, #tpu.memory_space<vmem>>, vector<1x16x256xbf16>
    %34 = vector.shape_cast %33 : vector<1x16x256xbf16> to vector<16x256xbf16>
    %35 = vector.shape_cast %32 : vector<16x256xbf16> to vector<1x16x256xbf16>
    tpu.vector_store %arg6[%c0_15, %c0_16, %c0_17], %35 {strides = array<i32>} : memref<1x16x256xbf16, #tpu.memory_space<vmem>>, vector<1x16x256xbf16>,
    return
  }
  func.func @transform_0(%arg0: i32) -> (i32, i32, i32) {
    %c0_i32 = arith.constant 0 : i32
    %c0_i32_0 = arith.constant 0 : i32
    %c0_i32_1 = arith.constant 0 : i32
    return %arg0, %c0_i32, %c0_i32_0 : i32, i32, i32
  }
  func.func @transform_1(%arg0: i32) -> (i32, i32) {
    %c0_i32 = arith.constant 0 : i32
    %c0_i32_0 = arith.constant 0 : i32
    %c0_i32_1 = arith.constant 0 : i32
    return %c0_i32, %c0_i32_0 : i32, i32
  }
  func.func @transform_2(%arg0: i32) -> (i32, i32) {
    %c0_i32 = arith.constant 0 : i32
    %c0_i32_0 = arith.constant 0 : i32
    %c0_i32_1 = arith.constant 0 : i32
    return %c0_i32, %c0_i32_0 : i32, i32
  }
  func.func @transform_3(%arg0: i32) -> (i32, i32) {
    %c0_i32 = arith.constant 0 : i32
    %c0_i32_0 = arith.constant 0 : i32
    %c0_i32_1 = arith.constant 0 : i32
    return %c0_i32, %c0_i32_0 : i32, i32
  }
  func.func @transform_4(%arg0: i32) -> (i32, i32) {
    %c0_i32 = arith.constant 0 : i32
    %c0_i32_0 = arith.constant 0 : i32
    %c0_i32_1 = arith.constant 0 : i32
    return %c0_i32, %c0_i32_0 : i32, i32
  }
  func.func @transform_5(%arg0: i32) -> (i32, i32, i32) {
    %c0_i32 = arith.constant 0 : i32
    %c0_i32_0 = arith.constant 0 : i32
    %c0_i32_1 = arith.constant 0 : i32
    return %arg0, %c0_i32, %c0_i32_0 : i32, i32, i32
  }
}

module attributes {stable_mosaic.version = 11 : i64} {
  func.func @_heads_kernel(%arg0: i32, %arg1: memref<1x16x256xbf16, #tpu.memory_space<vmem>>, %arg2: memref<1x16x1xf32, #tpu.memory_space<vmem>>, %arg3: memref<256x256xbf16, #tpu.memory_space<vmem>>, %arg4: memref<1x256xf32, #tpu.memory_space<vmem>>, %arg5: memref<256x256xbf16, #tpu.memory_space<vmem>>, %arg6: memref<1x256xf32, #tpu.memory_space<vmem>>, %arg7: memref<256x128xbf16, #tpu.memory_space<vmem>>, %arg8: memref<1x128xf32, #tpu.memory_space<vmem>>, %arg9: memref<1x16x256xf32, #tpu.memory_space<vmem>>, %arg10: memref<1x1x128xf32, #tpu.memory_space<vmem>>, %arg11: memref<1x1x256xf32, #tpu.memory_space<vmem>>) attributes {dimension_semantics = [#tpu.dimension_semantics<parallel>], iteration_bounds = array<i64: 2>, scalar_prefetch = 0 : i64, scratch_operands = 0 : i64, tpu.core_type = #tpu.core_type<tc>, window_params = [{transform_indices = @transform_0, window_bounds = array<i64: 1, 16, 256>}, {transform_indices = @transform_1, window_bounds = array<i64: 1, 16, 1>}, {pipeline_mode = #tpu.pipeline_mode<synchronous>, transform_indices = @transform_2, window_bounds = array<i64: 256, 256>}, {pipeline_mode = #tpu.pipeline_mode<synchronous>, transform_indices = @transform_3, window_bounds = array<i64: 1, 256>}, {pipeline_mode = #tpu.pipeline_mode<synchronous>, transform_indices = @transform_4, window_bounds = array<i64: 256, 256>}, {pipeline_mode = #tpu.pipeline_mode<synchronous>, transform_indices = @transform_5, window_bounds = array<i64: 1, 256>}, {pipeline_mode = #tpu.pipeline_mode<synchronous>, transform_indices = @transform_6, window_bounds = array<i64: 256, 128>}, {pipeline_mode = #tpu.pipeline_mode<synchronous>, transform_indices = @transform_7, window_bounds = array<i64: 1, 128>}, {transform_indices = @transform_8, window_bounds = array<i64: 1, 16, 256>}, {transform_indices = @transform_9, window_bounds = array<i64: 1, 1, 128>}, {transform_indices = @transform_10, window_bounds = array<i64: 1, 1, 256>}]} {
    %c0 = arith.constant 0 : index
    %c0_0 = arith.constant 0 : index
    %c0_1 = arith.constant 0 : index
    %0 = vector.load %arg1[%c0, %c0_0, %c0_1] : memref<1x16x256xbf16, #tpu.memory_space<vmem>>, vector<1x16x256xbf16>
    %1 = vector.shape_cast %0 : vector<1x16x256xbf16> to vector<16x256xbf16>
    %2 = arith.extf %1 : vector<16x256xbf16> to vector<16x256xf32>
    %c0_2 = arith.constant 0 : index
    %c0_3 = arith.constant 0 : index
    %3 = vector.load %arg3[%c0_2, %c0_3] : memref<256x256xbf16, #tpu.memory_space<vmem>>, vector<256x256xbf16>
    %cst = arith.constant dense<0.000000e+00> : vector<16x256xf32>
    %4 = tpu.matmul %1, %3, %cst {dimension_numbers = #tpu.dot_dimension_numbers<[1], [0], [0], [1], [0, 0, 1, 1], [], []>} : vector<16x256xbf16>, vector<256x256xbf16>, vector<16x256xf32> -> vector<16x256xf32>
    %c0_4 = arith.constant 0 : index
    %c0_5 = arith.constant 0 : index
    %5 = vector.load %arg4[%c0_4, %c0_5] : memref<1x256xf32, #tpu.memory_space<vmem>>, vector<1x256xf32>
    %6 = vector.broadcast %5 : vector<1x256xf32> to vector<16x256xf32>
    %7 = arith.addf %4, %6 : vector<16x256xf32>
    %c0_6 = arith.constant 0 : index
    %c0_7 = arith.constant 0 : index
    %c0_8 = arith.constant 0 : index
    %8 = vector.load %arg9[%c0_6, %c0_7, %c0_8] : memref<1x16x256xf32, #tpu.memory_space<vmem>>, vector<1x16x256xf32>
    %9 = vector.shape_cast %8 : vector<1x16x256xf32> to vector<16x256xf32>
    %10 = vector.shape_cast %7 : vector<16x256xf32> to vector<1x16x256xf32>
    tpu.vector_store %arg9[%c0_6, %c0_7, %c0_8], %10 {strides = array<i32>} : memref<1x16x256xf32, #tpu.memory_space<vmem>>, vector<1x16x256xf32>,
    %11 = vector.extract_strided_slice %1 {offsets = [0, 0], sizes = [1, 256], strides = [1, 1]} : vector<16x256xbf16> to vector<1x256xbf16>
    %c0_9 = arith.constant 0 : index
    %c0_10 = arith.constant 0 : index
    %12 = vector.load %arg5[%c0_9, %c0_10] : memref<256x256xbf16, #tpu.memory_space<vmem>>, vector<256x256xbf16>
    %cst_11 = arith.constant dense<0.000000e+00> : vector<1x256xf32>
    %13 = tpu.matmul %11, %12, %cst_11 {dimension_numbers = #tpu.dot_dimension_numbers<[1], [0], [0], [1], [0, 0, 1, 1], [], []>} : vector<1x256xbf16>, vector<256x256xbf16>, vector<1x256xf32> -> vector<1x256xf32>
    %c0_12 = arith.constant 0 : index
    %c0_13 = arith.constant 0 : index
    %14 = vector.load %arg6[%c0_12, %c0_13] : memref<1x256xf32, #tpu.memory_space<vmem>>, vector<1x256xf32>
    %15 = arith.addf %13, %14 : vector<1x256xf32>
    %16 = math.tanh %15 : vector<1x256xf32>
    %17 = arith.truncf %16 : vector<1x256xf32> to vector<1x256xbf16>
    %c0_14 = arith.constant 0 : index
    %c0_15 = arith.constant 0 : index
    %18 = vector.load %arg7[%c0_14, %c0_15] : memref<256x128xbf16, #tpu.memory_space<vmem>>, vector<256x128xbf16>
    %cst_16 = arith.constant dense<0.000000e+00> : vector<1x128xf32>
    %19 = tpu.matmul %17, %18, %cst_16 {dimension_numbers = #tpu.dot_dimension_numbers<[1], [0], [0], [1], [0, 0, 1, 1], [], []>} : vector<1x256xbf16>, vector<256x128xbf16>, vector<1x128xf32> -> vector<1x128xf32>
    %c0_17 = arith.constant 0 : index
    %c0_18 = arith.constant 0 : index
    %20 = vector.load %arg8[%c0_17, %c0_18] : memref<1x128xf32, #tpu.memory_space<vmem>>, vector<1x128xf32>
    %21 = arith.addf %19, %20 : vector<1x128xf32>
    %c0_19 = arith.constant 0 : index
    %c0_20 = arith.constant 0 : index
    %c0_21 = arith.constant 0 : index
    %22 = vector.load %arg10[%c0_19, %c0_20, %c0_21] : memref<1x1x128xf32, #tpu.memory_space<vmem>>, vector<1x1x128xf32>
    %23 = vector.shape_cast %22 : vector<1x1x128xf32> to vector<1x128xf32>
    %24 = vector.shape_cast %21 : vector<1x128xf32> to vector<1x1x128xf32>
    tpu.vector_store %arg10[%c0_19, %c0_20, %c0_21], %24 {strides = array<i32>} : memref<1x1x128xf32, #tpu.memory_space<vmem>>, vector<1x1x128xf32>,
    %c0_22 = arith.constant 0 : index
    %c0_23 = arith.constant 0 : index
    %c0_24 = arith.constant 0 : index
    %25 = vector.load %arg2[%c0_22, %c0_23, %c0_24] : memref<1x16x1xf32, #tpu.memory_space<vmem>>, vector<1x16x1xf32>
    %26 = vector.shape_cast %25 : vector<1x16x1xf32> to vector<16x1xf32>
    %27 = vector.broadcast %26 : vector<16x1xf32> to vector<16x256xf32>
    %28 = arith.mulf %2, %27 : vector<16x256xf32>
    %cst_25 = arith.constant dense<0.000000e+00> : vector<256xf32>
    %29 = vector.multi_reduction <add>, %28, %cst_25 [0] : vector<16x256xf32> to vector<256xf32>
    %30 = vector.shape_cast %29 : vector<256xf32> to vector<1x256xf32>
    %cst_26 = arith.constant dense<0.000000e+00> : vector<1xf32>
    %31 = vector.multi_reduction <add>, %26, %cst_26 [0] : vector<16x1xf32> to vector<1xf32>
    %32 = vector.shape_cast %31 : vector<1xf32> to vector<1x1xf32>
    %33 = vector.broadcast %32 : vector<1x1xf32> to vector<1x256xf32>
    %34 = arith.divf %30, %33 : vector<1x256xf32>
    %c0_27 = arith.constant 0 : index
    %c0_28 = arith.constant 0 : index
    %c0_29 = arith.constant 0 : index
    %35 = vector.load %arg11[%c0_27, %c0_28, %c0_29] : memref<1x1x256xf32, #tpu.memory_space<vmem>>, vector<1x1x256xf32>
    %36 = vector.shape_cast %35 : vector<1x1x256xf32> to vector<1x256xf32>
    %37 = vector.shape_cast %34 : vector<1x256xf32> to vector<1x1x256xf32>
    tpu.vector_store %arg11[%c0_27, %c0_28, %c0_29], %37 {strides = array<i32>} : memref<1x1x256xf32, #tpu.memory_space<vmem>>, vector<1x1x256xf32>,
    return
  }
  func.func @transform_0(%arg0: i32) -> (i32, i32, i32) {
    %c0_i32 = arith.constant 0 : i32
    %c0_i32_0 = arith.constant 0 : i32
    %c0_i32_1 = arith.constant 0 : i32
    return %arg0, %c0_i32, %c0_i32_0 : i32, i32, i32
  }
  func.func @transform_1(%arg0: i32) -> (i32, i32, i32) {
    %c0_i32 = arith.constant 0 : i32
    %c0_i32_0 = arith.constant 0 : i32
    %c0_i32_1 = arith.constant 0 : i32
    return %arg0, %c0_i32, %c0_i32_0 : i32, i32, i32
  }
  func.func @transform_2(%arg0: i32) -> (i32, i32) {
    %c0_i32 = arith.constant 0 : i32
    %c0_i32_0 = arith.constant 0 : i32
    %c0_i32_1 = arith.constant 0 : i32
    return %c0_i32, %c0_i32_0 : i32, i32
  }
  func.func @transform_3(%arg0: i32) -> (i32, i32) {
    %c0_i32 = arith.constant 0 : i32
    %c0_i32_0 = arith.constant 0 : i32
    %c0_i32_1 = arith.constant 0 : i32
    return %c0_i32, %c0_i32_0 : i32, i32
  }
  func.func @transform_4(%arg0: i32) -> (i32, i32) {
    %c0_i32 = arith.constant 0 : i32
    %c0_i32_0 = arith.constant 0 : i32
    %c0_i32_1 = arith.constant 0 : i32
    return %c0_i32, %c0_i32_0 : i32, i32
  }
  func.func @transform_5(%arg0: i32) -> (i32, i32) {
    %c0_i32 = arith.constant 0 : i32
    %c0_i32_0 = arith.constant 0 : i32
    %c0_i32_1 = arith.constant 0 : i32
    return %c0_i32, %c0_i32_0 : i32, i32
  }
  func.func @transform_6(%arg0: i32) -> (i32, i32) {
    %c0_i32 = arith.constant 0 : i32
    %c0_i32_0 = arith.constant 0 : i32
    %c0_i32_1 = arith.constant 0 : i32
    return %c0_i32, %c0_i32_0 : i32, i32
  }
  func.func @transform_7(%arg0: i32) -> (i32, i32) {
    %c0_i32 = arith.constant 0 : i32
    %c0_i32_0 = arith.constant 0 : i32
    %c0_i32_1 = arith.constant 0 : i32
    return %c0_i32, %c0_i32_0 : i32, i32
  }
  func.func @transform_8(%arg0: i32) -> (i32, i32, i32) {
    %c0_i32 = arith.constant 0 : i32
    %c0_i32_0 = arith.constant 0 : i32
    %c0_i32_1 = arith.constant 0 : i32
    return %arg0, %c0_i32, %c0_i32_0 : i32, i32, i32
  }
  func.func @transform_9(%arg0: i32) -> (i32, i32, i32) {
    %c0_i32 = arith.constant 0 : i32
    %c0_i32_0 = arith.constant 0 : i32
    %c0_i32_1 = arith.constant 0 : i32
    return %arg0, %c0_i32, %c0_i32_0 : i32, i32, i32
  }
  func.func @transform_10(%arg0: i32) -> (i32, i32, i32) {
    %c0_i32 = arith.constant 0 : i32
    %c0_i32_0 = arith.constant 0 : i32
    %c0_i32_1 = arith.constant 0 : i32
    return %arg0, %c0_i32, %c0_i32_0 : i32, i32, i32
  }
}

module attributes {stable_mosaic.version = 11 : i64} {
  func.func @_albert_layer_kernel(%arg0: i32, %arg1: memref<1x16x256xbf16, #tpu.memory_space<vmem>>, %arg2: memref<1x1x16xf32, #tpu.memory_space<vmem>>, %arg3: memref<256x768xbf16, #tpu.memory_space<vmem>>, %arg4: memref<1x768xf32, #tpu.memory_space<vmem>>, %arg5: memref<256x256xbf16, #tpu.memory_space<vmem>>, %arg6: memref<1x256xf32, #tpu.memory_space<vmem>>, %arg7: memref<1x256xf32, #tpu.memory_space<vmem>>, %arg8: memref<1x256xf32, #tpu.memory_space<vmem>>, %arg9: memref<256x512xbf16, #tpu.memory_space<vmem>>, %arg10: memref<1x512xf32, #tpu.memory_space<vmem>>, %arg11: memref<512x256xbf16, #tpu.memory_space<vmem>>, %arg12: memref<1x256xf32, #tpu.memory_space<vmem>>, %arg13: memref<1x256xf32, #tpu.memory_space<vmem>>, %arg14: memref<1x256xf32, #tpu.memory_space<vmem>>, %arg15: memref<1x16x256xbf16, #tpu.memory_space<vmem>>) attributes {dimension_semantics = [#tpu.dimension_semantics<parallel>], iteration_bounds = array<i64: 2>, scalar_prefetch = 0 : i64, scratch_operands = 0 : i64, tpu.core_type = #tpu.core_type<tc>, window_params = [{transform_indices = @transform_0, window_bounds = array<i64: 1, 16, 256>}, {transform_indices = @transform_1, window_bounds = array<i64: 1, 1, 16>}, {pipeline_mode = #tpu.pipeline_mode<synchronous>, transform_indices = @transform_2, window_bounds = array<i64: 256, 768>}, {pipeline_mode = #tpu.pipeline_mode<synchronous>, transform_indices = @transform_3, window_bounds = array<i64: 1, 768>}, {pipeline_mode = #tpu.pipeline_mode<synchronous>, transform_indices = @transform_4, window_bounds = array<i64: 256, 256>}, {pipeline_mode = #tpu.pipeline_mode<synchronous>, transform_indices = @transform_5, window_bounds = array<i64: 1, 256>}, {pipeline_mode = #tpu.pipeline_mode<synchronous>, transform_indices = @transform_6, window_bounds = array<i64: 1, 256>}, {pipeline_mode = #tpu.pipeline_mode<synchronous>, transform_indices = @transform_7, window_bounds = array<i64: 1, 256>}, {pipeline_mode = #tpu.pipeline_mode<synchronous>, transform_indices = @transform_8, window_bounds = array<i64: 256, 512>}, {pipeline_mode = #tpu.pipeline_mode<synchronous>, transform_indices = @transform_9, window_bounds = array<i64: 1, 512>}, {pipeline_mode = #tpu.pipeline_mode<synchronous>, transform_indices = @transform_10, window_bounds = array<i64: 512, 256>}, {pipeline_mode = #tpu.pipeline_mode<synchronous>, transform_indices = @transform_11, window_bounds = array<i64: 1, 256>}, {pipeline_mode = #tpu.pipeline_mode<synchronous>, transform_indices = @transform_12, window_bounds = array<i64: 1, 256>}, {pipeline_mode = #tpu.pipeline_mode<synchronous>, transform_indices = @transform_13, window_bounds = array<i64: 1, 256>}, {transform_indices = @transform_14, window_bounds = array<i64: 1, 16, 256>}]} {
    %c0 = arith.constant 0 : index
    %c0_0 = arith.constant 0 : index
    %c0_1 = arith.constant 0 : index
    %0 = vector.load %arg1[%c0, %c0_0, %c0_1] : memref<1x16x256xbf16, #tpu.memory_space<vmem>>, vector<1x16x256xbf16>
    %1 = vector.shape_cast %0 : vector<1x16x256xbf16> to vector<16x256xbf16>
    %2 = arith.extf %1 : vector<16x256xbf16> to vector<16x256xf32>
    %c0_2 = arith.constant 0 : index
    %c0_3 = arith.constant 0 : index
    %c0_4 = arith.constant 0 : index
    %3 = vector.load %arg1[%c0_2, %c0_3, %c0_4] : memref<1x16x256xbf16, #tpu.memory_space<vmem>>, vector<1x16x256xbf16>
    %4 = vector.shape_cast %3 : vector<1x16x256xbf16> to vector<16x256xbf16>
    %c0_5 = arith.constant 0 : index
    %c0_6 = arith.constant 0 : index
    %5 = vector.load %arg3[%c0_5, %c0_6] : memref<256x768xbf16, #tpu.memory_space<vmem>>, vector<256x768xbf16>
    %cst = arith.constant dense<0.000000e+00> : vector<16x768xf32>
    %6 = tpu.matmul %4, %5, %cst {dimension_numbers = #tpu.dot_dimension_numbers<[1], [0], [0], [1], [0, 0, 1, 1], [], []>} : vector<16x256xbf16>, vector<256x768xbf16>, vector<16x768xf32> -> vector<16x768xf32>
    %c0_7 = arith.constant 0 : index
    %c0_8 = arith.constant 0 : index
    %7 = vector.load %arg4[%c0_7, %c0_8] : memref<1x768xf32, #tpu.memory_space<vmem>>, vector<1x768xf32>
    %8 = vector.broadcast %7 : vector<1x768xf32> to vector<16x768xf32>
    %9 = arith.addf %6, %8 : vector<16x768xf32>
    %c0_9 = arith.constant 0 : index
    %c0_10 = arith.constant 0 : index
    %c0_11 = arith.constant 0 : index
    %10 = vector.load %arg2[%c0_9, %c0_10, %c0_11] : memref<1x1x16xf32, #tpu.memory_space<vmem>>, vector<1x1x16xf32>
    %11 = vector.shape_cast %10 : vector<1x1x16xf32> to vector<1x16xf32>
    %12 = vector.extract_strided_slice %9 {offsets = [0, 0], sizes = [16, 64], strides = [1, 1]} : vector<16x768xf32> to vector<16x64xf32>
    %13 = arith.truncf %12 : vector<16x64xf32> to vector<16x64xbf16>
    %14 = vector.extract_strided_slice %9 {offsets = [0, 256], sizes = [16, 64], strides = [1, 1]} : vector<16x768xf32> to vector<16x64xf32>
    %15 = arith.truncf %14 : vector<16x64xf32> to vector<16x64xbf16>
    %16 = vector.extract_strided_slice %9 {offsets = [0, 512], sizes = [16, 64], strides = [1, 1]} : vector<16x768xf32> to vector<16x64xf32>
    %17 = arith.truncf %16 : vector<16x64xf32> to vector<16x64xbf16>
    %18 = tpu.transpose %15, [1, 0] : vector<16x64xbf16> -> vector<64x16xbf16>
    %cst_12 = arith.constant dense<0.000000e+00> : vector<16x16xf32>
    %19 = tpu.matmul %13, %18, %cst_12 {dimension_numbers = #tpu.dot_dimension_numbers<[1], [0], [0], [1], [0, 0, 1, 1], [], []>} : vector<16x64xbf16>, vector<64x16xbf16>, vector<16x16xf32> -> vector<16x16xf32>
    %cst_13 = arith.constant 1.250000e-01 : f32
    %20 = vector.broadcast %cst_13 : f32 to vector<16x16xf32>
    %21 = arith.mulf %19, %20 : vector<16x16xf32>
    %22 = vector.broadcast %11 : vector<1x16xf32> to vector<16x16xf32>
    %23 = arith.addf %21, %22 : vector<16x16xf32>
    %cst_14 = arith.constant dense<0xFF800000> : vector<16xf32>
    %24 = vector.multi_reduction <maximumf>, %23, %cst_14 [1] : vector<16x16xf32> to vector<16xf32>
    %25 = vector.shape_cast %24 : vector<16xf32> to vector<16x1xf32>
    %26 = vector.broadcast %25 : vector<16x1xf32> to vector<16x16xf32>
    %27 = arith.subf %23, %26 : vector<16x16xf32>
    %28 = math.exp %27 : vector<16x16xf32>
    %cst_15 = arith.constant dense<0.000000e+00> : vector<16xf32>
    %29 = vector.multi_reduction <add>, %28, %cst_15 [1] : vector<16x16xf32> to vector<16xf32>
    %30 = vector.shape_cast %29 : vector<16xf32> to vector<16x1xf32>
    %31 = tpu.reciprocal %30 {approx = true} : vector<16x1xf32> -> vector<16x1xf32>
    %32 = vector.broadcast %31 : vector<16x1xf32> to vector<16x16xf32>
    %33 = arith.mulf %28, %32 : vector<16x16xf32>
    %34 = arith.truncf %33 : vector<16x16xf32> to vector<16x16xbf16>
    %cst_16 = arith.constant dense<0.000000e+00> : vector<16x64xf32>
    %35 = tpu.matmul %34, %17, %cst_16 {dimension_numbers = #tpu.dot_dimension_numbers<[1], [0], [0], [1], [0, 0, 1, 1], [], []>} : vector<16x16xbf16>, vector<16x64xbf16>, vector<16x64xf32> -> vector<16x64xf32>
    %36 = vector.extract_strided_slice %9 {offsets = [0, 64], sizes = [16, 64], strides = [1, 1]} : vector<16x768xf32> to vector<16x64xf32>
    %37 = arith.truncf %36 : vector<16x64xf32> to vector<16x64xbf16>
    %38 = vector.extract_strided_slice %9 {offsets = [0, 320], sizes = [16, 64], strides = [1, 1]} : vector<16x768xf32> to vector<16x64xf32>
    %39 = arith.truncf %38 : vector<16x64xf32> to vector<16x64xbf16>
    %40 = vector.extract_strided_slice %9 {offsets = [0, 576], sizes = [16, 64], strides = [1, 1]} : vector<16x768xf32> to vector<16x64xf32>
    %41 = arith.truncf %40 : vector<16x64xf32> to vector<16x64xbf16>
    %42 = tpu.transpose %39, [1, 0] : vector<16x64xbf16> -> vector<64x16xbf16>
    %cst_17 = arith.constant dense<0.000000e+00> : vector<16x16xf32>
    %43 = tpu.matmul %37, %42, %cst_17 {dimension_numbers = #tpu.dot_dimension_numbers<[1], [0], [0], [1], [0, 0, 1, 1], [], []>} : vector<16x64xbf16>, vector<64x16xbf16>, vector<16x16xf32> -> vector<16x16xf32>
    %cst_18 = arith.constant 1.250000e-01 : f32
    %44 = vector.broadcast %cst_18 : f32 to vector<16x16xf32>
    %45 = arith.mulf %43, %44 : vector<16x16xf32>
    %46 = vector.broadcast %11 : vector<1x16xf32> to vector<16x16xf32>
    %47 = arith.addf %45, %46 : vector<16x16xf32>
    %cst_19 = arith.constant dense<0xFF800000> : vector<16xf32>
    %48 = vector.multi_reduction <maximumf>, %47, %cst_19 [1] : vector<16x16xf32> to vector<16xf32>
    %49 = vector.shape_cast %48 : vector<16xf32> to vector<16x1xf32>
    %50 = vector.broadcast %49 : vector<16x1xf32> to vector<16x16xf32>
    %51 = arith.subf %47, %50 : vector<16x16xf32>
    %52 = math.exp %51 : vector<16x16xf32>
    %cst_20 = arith.constant dense<0.000000e+00> : vector<16xf32>
    %53 = vector.multi_reduction <add>, %52, %cst_20 [1] : vector<16x16xf32> to vector<16xf32>
    %54 = vector.shape_cast %53 : vector<16xf32> to vector<16x1xf32>
    %55 = tpu.reciprocal %54 {approx = true} : vector<16x1xf32> -> vector<16x1xf32>
    %56 = vector.broadcast %55 : vector<16x1xf32> to vector<16x16xf32>
    %57 = arith.mulf %52, %56 : vector<16x16xf32>
    %58 = arith.truncf %57 : vector<16x16xf32> to vector<16x16xbf16>
    %cst_21 = arith.constant dense<0.000000e+00> : vector<16x64xf32>
    %59 = tpu.matmul %58, %41, %cst_21 {dimension_numbers = #tpu.dot_dimension_numbers<[1], [0], [0], [1], [0, 0, 1, 1], [], []>} : vector<16x16xbf16>, vector<16x64xbf16>, vector<16x64xf32> -> vector<16x64xf32>
    %60 = vector.extract_strided_slice %9 {offsets = [0, 128], sizes = [16, 64], strides = [1, 1]} : vector<16x768xf32> to vector<16x64xf32>
    %61 = arith.truncf %60 : vector<16x64xf32> to vector<16x64xbf16>
    %62 = vector.extract_strided_slice %9 {offsets = [0, 384], sizes = [16, 64], strides = [1, 1]} : vector<16x768xf32> to vector<16x64xf32>
    %63 = arith.truncf %62 : vector<16x64xf32> to vector<16x64xbf16>
    %64 = vector.extract_strided_slice %9 {offsets = [0, 640], sizes = [16, 64], strides = [1, 1]} : vector<16x768xf32> to vector<16x64xf32>
    %65 = arith.truncf %64 : vector<16x64xf32> to vector<16x64xbf16>
    %66 = tpu.transpose %63, [1, 0] : vector<16x64xbf16> -> vector<64x16xbf16>
    %cst_22 = arith.constant dense<0.000000e+00> : vector<16x16xf32>
    %67 = tpu.matmul %61, %66, %cst_22 {dimension_numbers = #tpu.dot_dimension_numbers<[1], [0], [0], [1], [0, 0, 1, 1], [], []>} : vector<16x64xbf16>, vector<64x16xbf16>, vector<16x16xf32> -> vector<16x16xf32>
    %cst_23 = arith.constant 1.250000e-01 : f32
    %68 = vector.broadcast %cst_23 : f32 to vector<16x16xf32>
    %69 = arith.mulf %67, %68 : vector<16x16xf32>
    %70 = vector.broadcast %11 : vector<1x16xf32> to vector<16x16xf32>
    %71 = arith.addf %69, %70 : vector<16x16xf32>
    %cst_24 = arith.constant dense<0xFF800000> : vector<16xf32>
    %72 = vector.multi_reduction <maximumf>, %71, %cst_24 [1] : vector<16x16xf32> to vector<16xf32>
    %73 = vector.shape_cast %72 : vector<16xf32> to vector<16x1xf32>
    %74 = vector.broadcast %73 : vector<16x1xf32> to vector<16x16xf32>
    %75 = arith.subf %71, %74 : vector<16x16xf32>
    %76 = math.exp %75 : vector<16x16xf32>
    %cst_25 = arith.constant dense<0.000000e+00> : vector<16xf32>
    %77 = vector.multi_reduction <add>, %76, %cst_25 [1] : vector<16x16xf32> to vector<16xf32>
    %78 = vector.shape_cast %77 : vector<16xf32> to vector<16x1xf32>
    %79 = tpu.reciprocal %78 {approx = true} : vector<16x1xf32> -> vector<16x1xf32>
    %80 = vector.broadcast %79 : vector<16x1xf32> to vector<16x16xf32>
    %81 = arith.mulf %76, %80 : vector<16x16xf32>
    %82 = arith.truncf %81 : vector<16x16xf32> to vector<16x16xbf16>
    %cst_26 = arith.constant dense<0.000000e+00> : vector<16x64xf32>
    %83 = tpu.matmul %82, %65, %cst_26 {dimension_numbers = #tpu.dot_dimension_numbers<[1], [0], [0], [1], [0, 0, 1, 1], [], []>} : vector<16x16xbf16>, vector<16x64xbf16>, vector<16x64xf32> -> vector<16x64xf32>
    %84 = vector.extract_strided_slice %9 {offsets = [0, 192], sizes = [16, 64], strides = [1, 1]} : vector<16x768xf32> to vector<16x64xf32>
    %85 = arith.truncf %84 : vector<16x64xf32> to vector<16x64xbf16>
    %86 = vector.extract_strided_slice %9 {offsets = [0, 448], sizes = [16, 64], strides = [1, 1]} : vector<16x768xf32> to vector<16x64xf32>
    %87 = arith.truncf %86 : vector<16x64xf32> to vector<16x64xbf16>
    %88 = vector.extract_strided_slice %9 {offsets = [0, 704], sizes = [16, 64], strides = [1, 1]} : vector<16x768xf32> to vector<16x64xf32>
    %89 = arith.truncf %88 : vector<16x64xf32> to vector<16x64xbf16>
    %90 = tpu.transpose %87, [1, 0] : vector<16x64xbf16> -> vector<64x16xbf16>
    %cst_27 = arith.constant dense<0.000000e+00> : vector<16x16xf32>
    %91 = tpu.matmul %85, %90, %cst_27 {dimension_numbers = #tpu.dot_dimension_numbers<[1], [0], [0], [1], [0, 0, 1, 1], [], []>} : vector<16x64xbf16>, vector<64x16xbf16>, vector<16x16xf32> -> vector<16x16xf32>
    %cst_28 = arith.constant 1.250000e-01 : f32
    %92 = vector.broadcast %cst_28 : f32 to vector<16x16xf32>
    %93 = arith.mulf %91, %92 : vector<16x16xf32>
    %94 = vector.broadcast %11 : vector<1x16xf32> to vector<16x16xf32>
    %95 = arith.addf %93, %94 : vector<16x16xf32>
    %cst_29 = arith.constant dense<0xFF800000> : vector<16xf32>
    %96 = vector.multi_reduction <maximumf>, %95, %cst_29 [1] : vector<16x16xf32> to vector<16xf32>
    %97 = vector.shape_cast %96 : vector<16xf32> to vector<16x1xf32>
    %98 = vector.broadcast %97 : vector<16x1xf32> to vector<16x16xf32>
    %99 = arith.subf %95, %98 : vector<16x16xf32>
    %100 = math.exp %99 : vector<16x16xf32>
    %cst_30 = arith.constant dense<0.000000e+00> : vector<16xf32>
    %101 = vector.multi_reduction <add>, %100, %cst_30 [1] : vector<16x16xf32> to vector<16xf32>
    %102 = vector.shape_cast %101 : vector<16xf32> to vector<16x1xf32>
    %103 = tpu.reciprocal %102 {approx = true} : vector<16x1xf32> -> vector<16x1xf32>
    %104 = vector.broadcast %103 : vector<16x1xf32> to vector<16x16xf32>
    %105 = arith.mulf %100, %104 : vector<16x16xf32>
    %106 = arith.truncf %105 : vector<16x16xf32> to vector<16x16xbf16>
    %cst_31 = arith.constant dense<0.000000e+00> : vector<16x64xf32>
    %107 = tpu.matmul %106, %89, %cst_31 {dimension_numbers = #tpu.dot_dimension_numbers<[1], [0], [0], [1], [0, 0, 1, 1], [], []>} : vector<16x16xbf16>, vector<16x64xbf16>, vector<16x64xf32> -> vector<16x64xf32>
    %108 = tpu.concatenate %35, %59, %83, %107 in 1 : vector<16x64xf32>, vector<16x64xf32>, vector<16x64xf32>, vector<16x64xf32> -> vector<16x256xf32>
    %109 = arith.truncf %108 : vector<16x256xf32> to vector<16x256xbf16>
    %c0_32 = arith.constant 0 : index
    %c0_33 = arith.constant 0 : index
    %110 = vector.load %arg5[%c0_32, %c0_33] : memref<256x256xbf16, #tpu.memory_space<vmem>>, vector<256x256xbf16>
    %cst_34 = arith.constant dense<0.000000e+00> : vector<16x256xf32>
    %111 = tpu.matmul %109, %110, %cst_34 {dimension_numbers = #tpu.dot_dimension_numbers<[1], [0], [0], [1], [0, 0, 1, 1], [], []>} : vector<16x256xbf16>, vector<256x256xbf16>, vector<16x256xf32> -> vector<16x256xf32>
    %c0_35 = arith.constant 0 : index
    %c0_36 = arith.constant 0 : index
    %112 = vector.load %arg6[%c0_35, %c0_36] : memref<1x256xf32, #tpu.memory_space<vmem>>, vector<1x256xf32>
    %113 = vector.broadcast %112 : vector<1x256xf32> to vector<16x256xf32>
    %114 = arith.addf %111, %113 : vector<16x256xf32>
    %115 = arith.addf %114, %2 : vector<16x256xf32>
    %c0_37 = arith.constant 0 : index
    %c0_38 = arith.constant 0 : index
    %116 = vector.load %arg7[%c0_37, %c0_38] : memref<1x256xf32, #tpu.memory_space<vmem>>, vector<1x256xf32>
    %c0_39 = arith.constant 0 : index
    %c0_40 = arith.constant 0 : index
    %117 = vector.load %arg8[%c0_39, %c0_40] : memref<1x256xf32, #tpu.memory_space<vmem>>, vector<1x256xf32>
    %cst_41 = arith.constant dense<0.000000e+00> : vector<16xf32>
    %118 = vector.multi_reduction <add>, %115, %cst_41 [1] : vector<16x256xf32> to vector<16xf32>
    %119 = vector.shape_cast %118 : vector<16xf32> to vector<16x1xf32>
    %cst_42 = arith.constant 2.560000e+02 : f32
    %120 = vector.broadcast %cst_42 : f32 to vector<16x1xf32>
    %121 = arith.divf %119, %120 : vector<16x1xf32>
    %122 = vector.broadcast %121 : vector<16x1xf32> to vector<16x256xf32>
    %123 = arith.subf %115, %122 : vector<16x256xf32>
    %124 = arith.mulf %123, %123 : vector<16x256xf32>
    %cst_43 = arith.constant dense<0.000000e+00> : vector<16xf32>
    %125 = vector.multi_reduction <add>, %124, %cst_43 [1] : vector<16x256xf32> to vector<16xf32>
    %126 = vector.shape_cast %125 : vector<16xf32> to vector<16x1xf32>
    %cst_44 = arith.constant 2.560000e+02 : f32
    %127 = vector.broadcast %cst_44 : f32 to vector<16x1xf32>
    %128 = arith.divf %126, %127 : vector<16x1xf32>
    %129 = vector.broadcast %121 : vector<16x1xf32> to vector<16x256xf32>
    %130 = arith.subf %115, %129 : vector<16x256xf32>
    %cst_45 = arith.constant 9.99999996E-13 : f32
    %131 = vector.broadcast %cst_45 : f32 to vector<16x1xf32>
    %132 = arith.addf %128, %131 : vector<16x1xf32>
    %133 = math.rsqrt %132 : vector<16x1xf32>
    %134 = vector.broadcast %133 : vector<16x1xf32> to vector<16x256xf32>
    %135 = arith.mulf %130, %134 : vector<16x256xf32>
    %136 = vector.broadcast %116 : vector<1x256xf32> to vector<16x256xf32>
    %137 = arith.mulf %135, %136 : vector<16x256xf32>
    %138 = vector.broadcast %117 : vector<1x256xf32> to vector<16x256xf32>
    %139 = arith.addf %137, %138 : vector<16x256xf32>
    %140 = arith.truncf %139 : vector<16x256xf32> to vector<16x256xbf16>
    %c0_46 = arith.constant 0 : index
    %c0_47 = arith.constant 0 : index
    %141 = vector.load %arg9[%c0_46, %c0_47] : memref<256x512xbf16, #tpu.memory_space<vmem>>, vector<256x512xbf16>
    %cst_48 = arith.constant dense<0.000000e+00> : vector<16x512xf32>
    %142 = tpu.matmul %140, %141, %cst_48 {dimension_numbers = #tpu.dot_dimension_numbers<[1], [0], [0], [1], [0, 0, 1, 1], [], []>} : vector<16x256xbf16>, vector<256x512xbf16>, vector<16x512xf32> -> vector<16x512xf32>
    %c0_49 = arith.constant 0 : index
    %c0_50 = arith.constant 0 : index
    %143 = vector.load %arg10[%c0_49, %c0_50] : memref<1x512xf32, #tpu.memory_space<vmem>>, vector<1x512xf32>
    %144 = vector.broadcast %143 : vector<1x512xf32> to vector<16x512xf32>
    %145 = arith.addf %142, %144 : vector<16x512xf32>
    %146 = arith.mulf %145, %145 : vector<16x512xf32>
    %147 = arith.mulf %145, %146 : vector<16x512xf32>
    %cst_51 = arith.constant 4.471500e-02 : f32
    %148 = vector.broadcast %cst_51 : f32 to vector<16x512xf32>
    %149 = arith.mulf %148, %147 : vector<16x512xf32>
    %150 = arith.addf %145, %149 : vector<16x512xf32>
    %cst_52 = arith.constant 0.797884583 : f32
    %151 = vector.broadcast %cst_52 : f32 to vector<16x512xf32>
    %152 = arith.mulf %151, %150 : vector<16x512xf32>
    %153 = math.tanh %152 : vector<16x512xf32>
    %cst_53 = arith.constant 1.000000e+00 : f32
    %154 = vector.broadcast %cst_53 : f32 to vector<16x512xf32>
    %155 = arith.addf %154, %153 : vector<16x512xf32>
    %cst_54 = arith.constant 5.000000e-01 : f32
    %156 = vector.broadcast %cst_54 : f32 to vector<16x512xf32>
    %157 = arith.mulf %156, %155 : vector<16x512xf32>
    %158 = arith.mulf %145, %157 : vector<16x512xf32>
    %159 = arith.truncf %158 : vector<16x512xf32> to vector<16x512xbf16>
    %c0_55 = arith.constant 0 : index
    %c0_56 = arith.constant 0 : index
    %160 = vector.load %arg11[%c0_55, %c0_56] : memref<512x256xbf16, #tpu.memory_space<vmem>>, vector<512x256xbf16>
    %cst_57 = arith.constant dense<0.000000e+00> : vector<16x256xf32>
    %161 = tpu.matmul %159, %160, %cst_57 {dimension_numbers = #tpu.dot_dimension_numbers<[1], [0], [0], [1], [0, 0, 1, 1], [], []>} : vector<16x512xbf16>, vector<512x256xbf16>, vector<16x256xf32> -> vector<16x256xf32>
    %c0_58 = arith.constant 0 : index
    %c0_59 = arith.constant 0 : index
    %162 = vector.load %arg12[%c0_58, %c0_59] : memref<1x256xf32, #tpu.memory_space<vmem>>, vector<1x256xf32>
    %163 = vector.broadcast %162 : vector<1x256xf32> to vector<16x256xf32>
    %164 = arith.addf %161, %163 : vector<16x256xf32>
    %165 = arith.addf %164, %139 : vector<16x256xf32>
    %c0_60 = arith.constant 0 : index
    %c0_61 = arith.constant 0 : index
    %166 = vector.load %arg13[%c0_60, %c0_61] : memref<1x256xf32, #tpu.memory_space<vmem>>, vector<1x256xf32>
    %c0_62 = arith.constant 0 : index
    %c0_63 = arith.constant 0 : index
    %167 = vector.load %arg14[%c0_62, %c0_63] : memref<1x256xf32, #tpu.memory_space<vmem>>, vector<1x256xf32>
    %cst_64 = arith.constant dense<0.000000e+00> : vector<16xf32>
    %168 = vector.multi_reduction <add>, %165, %cst_64 [1] : vector<16x256xf32> to vector<16xf32>
    %169 = vector.shape_cast %168 : vector<16xf32> to vector<16x1xf32>
    %cst_65 = arith.constant 2.560000e+02 : f32
    %170 = vector.broadcast %cst_65 : f32 to vector<16x1xf32>
    %171 = arith.divf %169, %170 : vector<16x1xf32>
    %172 = vector.broadcast %171 : vector<16x1xf32> to vector<16x256xf32>
    %173 = arith.subf %165, %172 : vector<16x256xf32>
    %174 = arith.mulf %173, %173 : vector<16x256xf32>
    %cst_66 = arith.constant dense<0.000000e+00> : vector<16xf32>
    %175 = vector.multi_reduction <add>, %174, %cst_66 [1] : vector<16x256xf32> to vector<16xf32>
    %176 = vector.shape_cast %175 : vector<16xf32> to vector<16x1xf32>
    %cst_67 = arith.constant 2.560000e+02 : f32
    %177 = vector.broadcast %cst_67 : f32 to vector<16x1xf32>
    %178 = arith.divf %176, %177 : vector<16x1xf32>
    %179 = vector.broadcast %171 : vector<16x1xf32> to vector<16x256xf32>
    %180 = arith.subf %165, %179 : vector<16x256xf32>
    %cst_68 = arith.constant 9.99999996E-13 : f32
    %181 = vector.broadcast %cst_68 : f32 to vector<16x1xf32>
    %182 = arith.addf %178, %181 : vector<16x1xf32>
    %183 = math.rsqrt %182 : vector<16x1xf32>
    %184 = vector.broadcast %183 : vector<16x1xf32> to vector<16x256xf32>
    %185 = arith.mulf %180, %184 : vector<16x256xf32>
    %186 = vector.broadcast %166 : vector<1x256xf32> to vector<16x256xf32>
    %187 = arith.mulf %185, %186 : vector<16x256xf32>
    %188 = vector.broadcast %167 : vector<1x256xf32> to vector<16x256xf32>
    %189 = arith.addf %187, %188 : vector<16x256xf32>
    %190 = arith.truncf %189 : vector<16x256xf32> to vector<16x256xbf16>
    %c0_69 = arith.constant 0 : index
    %c0_70 = arith.constant 0 : index
    %c0_71 = arith.constant 0 : index
    %191 = vector.load %arg15[%c0_69, %c0_70, %c0_71] : memref<1x16x256xbf16, #tpu.memory_space<vmem>>, vector<1x16x256xbf16>
    %192 = vector.shape_cast %191 : vector<1x16x256xbf16> to vector<16x256xbf16>
    %193 = vector.shape_cast %190 : vector<16x256xbf16> to vector<1x16x256xbf16>
    tpu.vector_store %arg15[%c0_69, %c0_70, %c0_71], %193 {strides = array<i32>} : memref<1x16x256xbf16, #tpu.memory_space<vmem>>, vector<1x16x256xbf16>,
    return
  }
  func.func @transform_0(%arg0: i32) -> (i32, i32, i32) {
    %c0_i32 = arith.constant 0 : i32
    %c0_i32_0 = arith.constant 0 : i32
    %c0_i32_1 = arith.constant 0 : i32
    return %arg0, %c0_i32, %c0_i32_0 : i32, i32, i32
  }
  func.func @transform_1(%arg0: i32) -> (i32, i32, i32) {
    %c0_i32 = arith.constant 0 : i32
    %c0_i32_0 = arith.constant 0 : i32
    %c0_i32_1 = arith.constant 0 : i32
    return %arg0, %c0_i32, %c0_i32_0 : i32, i32, i32
  }
  func.func @transform_2(%arg0: i32) -> (i32, i32) {
    %c0_i32 = arith.constant 0 : i32
    %c0_i32_0 = arith.constant 0 : i32
    %c0_i32_1 = arith.constant 0 : i32
    return %c0_i32, %c0_i32_0 : i32, i32
  }
  func.func @transform_3(%arg0: i32) -> (i32, i32) {
    %c0_i32 = arith.constant 0 : i32
    %c0_i32_0 = arith.constant 0 : i32
    %c0_i32_1 = arith.constant 0 : i32
    return %c0_i32, %c0_i32_0 : i32, i32
  }
  func.func @transform_4(%arg0: i32) -> (i32, i32) {
    %c0_i32 = arith.constant 0 : i32
    %c0_i32_0 = arith.constant 0 : i32
    %c0_i32_1 = arith.constant 0 : i32
    return %c0_i32, %c0_i32_0 : i32, i32
  }
  func.func @transform_5(%arg0: i32) -> (i32, i32) {
    %c0_i32 = arith.constant 0 : i32
    %c0_i32_0 = arith.constant 0 : i32
    %c0_i32_1 = arith.constant 0 : i32
    return %c0_i32, %c0_i32_0 : i32, i32
  }
  func.func @transform_6(%arg0: i32) -> (i32, i32) {
    %c0_i32 = arith.constant 0 : i32
    %c0_i32_0 = arith.constant 0 : i32
    %c0_i32_1 = arith.constant 0 : i32
    return %c0_i32, %c0_i32_0 : i32, i32
  }
  func.func @transform_7(%arg0: i32) -> (i32, i32) {
    %c0_i32 = arith.constant 0 : i32
    %c0_i32_0 = arith.constant 0 : i32
    %c0_i32_1 = arith.constant 0 : i32
    return %c0_i32, %c0_i32_0 : i32, i32
  }
  func.func @transform_8(%arg0: i32) -> (i32, i32) {
    %c0_i32 = arith.constant 0 : i32
    %c0_i32_0 = arith.constant 0 : i32
    %c0_i32_1 = arith.constant 0 : i32
    return %c0_i32, %c0_i32_0 : i32, i32
  }
  func.func @transform_9(%arg0: i32) -> (i32, i32) {
    %c0_i32 = arith.constant 0 : i32
    %c0_i32_0 = arith.constant 0 : i32
    %c0_i32_1 = arith.constant 0 : i32
    return %c0_i32, %c0_i32_0 : i32, i32
  }
  func.func @transform_10(%arg0: i32) -> (i32, i32) {
    %c0_i32 = arith.constant 0 : i32
    %c0_i32_0 = arith.constant 0 : i32
    %c0_i32_1 = arith.constant 0 : i32
    return %c0_i32, %c0_i32_0 : i32, i32
  }
  func.func @transform_11(%arg0: i32) -> (i32, i32) {
    %c0_i32 = arith.constant 0 : i32
    %c0_i32_0 = arith.constant 0 : i32
    %c0_i32_1 = arith.constant 0 : i32
    return %c0_i32, %c0_i32_0 : i32, i32
  }
  func.func @transform_12(%arg0: i32) -> (i32, i32) {
    %c0_i32 = arith.constant 0 : i32
    %c0_i32_0 = arith.constant 0 : i32
    %c0_i32_1 = arith.constant 0 : i32
    return %c0_i32, %c0_i32_0 : i32, i32
  }
  func.func @transform_13(%arg0: i32) -> (i32, i32) {
    %c0_i32 = arith.constant 0 : i32
    %c0_i32_0 = arith.constant 0 : i32
    %c0_i32_1 = arith.constant 0 : i32
    return %c0_i32, %c0_i32_0 : i32, i32
  }
  func.func @transform_14(%arg0: i32) -> (i32, i32, i32) {
    %c0_i32 = arith.constant 0 : i32
    %c0_i32_0 = arith.constant 0 : i32
    %c0_i32_1 = arith.constant 0 : i32
    return %arg0, %c0_i32, %c0_i32_0 : i32, i32, i32
  }
}

module attributes {stable_mosaic.version = 11 : i64} {
  func.func @_albert_layer_kernel(%arg0: i32, %arg1: memref<1x16x256xbf16, #tpu.memory_space<vmem>>, %arg2: memref<1x1x16xf32, #tpu.memory_space<vmem>>, %arg3: memref<256x768xbf16, #tpu.memory_space<vmem>>, %arg4: memref<1x768xf32, #tpu.memory_space<vmem>>, %arg5: memref<256x256xbf16, #tpu.memory_space<vmem>>, %arg6: memref<1x256xf32, #tpu.memory_space<vmem>>, %arg7: memref<1x256xf32, #tpu.memory_space<vmem>>, %arg8: memref<1x256xf32, #tpu.memory_space<vmem>>, %arg9: memref<256x512xbf16, #tpu.memory_space<vmem>>, %arg10: memref<1x512xf32, #tpu.memory_space<vmem>>, %arg11: memref<512x256xbf16, #tpu.memory_space<vmem>>, %arg12: memref<1x256xf32, #tpu.memory_space<vmem>>, %arg13: memref<1x256xf32, #tpu.memory_space<vmem>>, %arg14: memref<1x256xf32, #tpu.memory_space<vmem>>, %arg15: memref<1x16x256xbf16, #tpu.memory_space<vmem>>) attributes {dimension_semantics = [#tpu.dimension_semantics<parallel>], iteration_bounds = array<i64: 2>, scalar_prefetch = 0 : i64, scratch_operands = 0 : i64, tpu.core_type = #tpu.core_type<tc>, window_params = [{transform_indices = @transform_0, window_bounds = array<i64: 1, 16, 256>}, {transform_indices = @transform_1, window_bounds = array<i64: 1, 1, 16>}, {pipeline_mode = #tpu.pipeline_mode<synchronous>, transform_indices = @transform_2, window_bounds = array<i64: 256, 768>}, {pipeline_mode = #tpu.pipeline_mode<synchronous>, transform_indices = @transform_3, window_bounds = array<i64: 1, 768>}, {pipeline_mode = #tpu.pipeline_mode<synchronous>, transform_indices = @transform_4, window_bounds = array<i64: 256, 256>}, {pipeline_mode = #tpu.pipeline_mode<synchronous>, transform_indices = @transform_5, window_bounds = array<i64: 1, 256>}, {pipeline_mode = #tpu.pipeline_mode<synchronous>, transform_indices = @transform_6, window_bounds = array<i64: 1, 256>}, {pipeline_mode = #tpu.pipeline_mode<synchronous>, transform_indices = @transform_7, window_bounds = array<i64: 1, 256>}, {pipeline_mode = #tpu.pipeline_mode<synchronous>, transform_indices = @transform_8, window_bounds = array<i64: 256, 512>}, {pipeline_mode = #tpu.pipeline_mode<synchronous>, transform_indices = @transform_9, window_bounds = array<i64: 1, 512>}, {pipeline_mode = #tpu.pipeline_mode<synchronous>, transform_indices = @transform_10, window_bounds = array<i64: 512, 256>}, {pipeline_mode = #tpu.pipeline_mode<synchronous>, transform_indices = @transform_11, window_bounds = array<i64: 1, 256>}, {pipeline_mode = #tpu.pipeline_mode<synchronous>, transform_indices = @transform_12, window_bounds = array<i64: 1, 256>}, {pipeline_mode = #tpu.pipeline_mode<synchronous>, transform_indices = @transform_13, window_bounds = array<i64: 1, 256>}, {transform_indices = @transform_14, window_bounds = array<i64: 1, 16, 256>}]} {
    %c0 = arith.constant 0 : index
    %c0_0 = arith.constant 0 : index
    %c0_1 = arith.constant 0 : index
    %0 = vector.load %arg1[%c0, %c0_0, %c0_1] : memref<1x16x256xbf16, #tpu.memory_space<vmem>>, vector<1x16x256xbf16>
    %1 = vector.shape_cast %0 : vector<1x16x256xbf16> to vector<16x256xbf16>
    %2 = arith.extf %1 : vector<16x256xbf16> to vector<16x256xf32>
    %c0_2 = arith.constant 0 : index
    %c0_3 = arith.constant 0 : index
    %c0_4 = arith.constant 0 : index
    %3 = vector.load %arg1[%c0_2, %c0_3, %c0_4] : memref<1x16x256xbf16, #tpu.memory_space<vmem>>, vector<1x16x256xbf16>
    %4 = vector.shape_cast %3 : vector<1x16x256xbf16> to vector<16x256xbf16>
    %c0_5 = arith.constant 0 : index
    %c0_6 = arith.constant 0 : index
    %5 = vector.load %arg3[%c0_5, %c0_6] : memref<256x768xbf16, #tpu.memory_space<vmem>>, vector<256x768xbf16>
    %cst = arith.constant dense<0.000000e+00> : vector<16x768xf32>
    %6 = tpu.matmul %4, %5, %cst {dimension_numbers = #tpu.dot_dimension_numbers<[1], [0], [0], [1], [0, 0, 1, 1], [], []>} : vector<16x256xbf16>, vector<256x768xbf16>, vector<16x768xf32> -> vector<16x768xf32>
    %c0_7 = arith.constant 0 : index
    %c0_8 = arith.constant 0 : index
    %7 = vector.load %arg4[%c0_7, %c0_8] : memref<1x768xf32, #tpu.memory_space<vmem>>, vector<1x768xf32>
    %8 = vector.broadcast %7 : vector<1x768xf32> to vector<16x768xf32>
    %9 = arith.addf %6, %8 : vector<16x768xf32>
    %c0_9 = arith.constant 0 : index
    %c0_10 = arith.constant 0 : index
    %c0_11 = arith.constant 0 : index
    %10 = vector.load %arg2[%c0_9, %c0_10, %c0_11] : memref<1x1x16xf32, #tpu.memory_space<vmem>>, vector<1x1x16xf32>
    %11 = vector.shape_cast %10 : vector<1x1x16xf32> to vector<1x16xf32>
    %12 = vector.extract_strided_slice %9 {offsets = [0, 0], sizes = [16, 64], strides = [1, 1]} : vector<16x768xf32> to vector<16x64xf32>
    %13 = arith.truncf %12 : vector<16x64xf32> to vector<16x64xbf16>
    %14 = vector.extract_strided_slice %9 {offsets = [0, 256], sizes = [16, 64], strides = [1, 1]} : vector<16x768xf32> to vector<16x64xf32>
    %15 = arith.truncf %14 : vector<16x64xf32> to vector<16x64xbf16>
    %16 = vector.extract_strided_slice %9 {offsets = [0, 512], sizes = [16, 64], strides = [1, 1]} : vector<16x768xf32> to vector<16x64xf32>
    %17 = arith.truncf %16 : vector<16x64xf32> to vector<16x64xbf16>
    %18 = tpu.transpose %15, [1, 0] : vector<16x64xbf16> -> vector<64x16xbf16>
    %cst_12 = arith.constant dense<0.000000e+00> : vector<16x16xf32>
    %19 = tpu.matmul %13, %18, %cst_12 {dimension_numbers = #tpu.dot_dimension_numbers<[1], [0], [0], [1], [0, 0, 1, 1], [], []>} : vector<16x64xbf16>, vector<64x16xbf16>, vector<16x16xf32> -> vector<16x16xf32>
    %cst_13 = arith.constant 1.250000e-01 : f32
    %20 = vector.broadcast %cst_13 : f32 to vector<16x16xf32>
    %21 = arith.mulf %19, %20 : vector<16x16xf32>
    %22 = vector.broadcast %11 : vector<1x16xf32> to vector<16x16xf32>
    %23 = arith.addf %21, %22 : vector<16x16xf32>
    %cst_14 = arith.constant dense<0xFF800000> : vector<16xf32>
    %24 = vector.multi_reduction <maximumf>, %23, %cst_14 [1] : vector<16x16xf32> to vector<16xf32>
    %25 = vector.shape_cast %24 : vector<16xf32> to vector<16x1xf32>
    %26 = vector.broadcast %25 : vector<16x1xf32> to vector<16x16xf32>
    %27 = arith.subf %23, %26 : vector<16x16xf32>
    %28 = math.exp %27 : vector<16x16xf32>
    %cst_15 = arith.constant dense<0.000000e+00> : vector<16xf32>
    %29 = vector.multi_reduction <add>, %28, %cst_15 [1] : vector<16x16xf32> to vector<16xf32>
    %30 = vector.shape_cast %29 : vector<16xf32> to vector<16x1xf32>
    %31 = tpu.reciprocal %30 {approx = true} : vector<16x1xf32> -> vector<16x1xf32>
    %32 = vector.broadcast %31 : vector<16x1xf32> to vector<16x16xf32>
    %33 = arith.mulf %28, %32 : vector<16x16xf32>
    %34 = arith.truncf %33 : vector<16x16xf32> to vector<16x16xbf16>
    %cst_16 = arith.constant dense<0.000000e+00> : vector<16x64xf32>
    %35 = tpu.matmul %34, %17, %cst_16 {dimension_numbers = #tpu.dot_dimension_numbers<[1], [0], [0], [1], [0, 0, 1, 1], [], []>} : vector<16x16xbf16>, vector<16x64xbf16>, vector<16x64xf32> -> vector<16x64xf32>
    %36 = vector.extract_strided_slice %9 {offsets = [0, 64], sizes = [16, 64], strides = [1, 1]} : vector<16x768xf32> to vector<16x64xf32>
    %37 = arith.truncf %36 : vector<16x64xf32> to vector<16x64xbf16>
    %38 = vector.extract_strided_slice %9 {offsets = [0, 320], sizes = [16, 64], strides = [1, 1]} : vector<16x768xf32> to vector<16x64xf32>
    %39 = arith.truncf %38 : vector<16x64xf32> to vector<16x64xbf16>
    %40 = vector.extract_strided_slice %9 {offsets = [0, 576], sizes = [16, 64], strides = [1, 1]} : vector<16x768xf32> to vector<16x64xf32>
    %41 = arith.truncf %40 : vector<16x64xf32> to vector<16x64xbf16>
    %42 = tpu.transpose %39, [1, 0] : vector<16x64xbf16> -> vector<64x16xbf16>
    %cst_17 = arith.constant dense<0.000000e+00> : vector<16x16xf32>
    %43 = tpu.matmul %37, %42, %cst_17 {dimension_numbers = #tpu.dot_dimension_numbers<[1], [0], [0], [1], [0, 0, 1, 1], [], []>} : vector<16x64xbf16>, vector<64x16xbf16>, vector<16x16xf32> -> vector<16x16xf32>
    %cst_18 = arith.constant 1.250000e-01 : f32
    %44 = vector.broadcast %cst_18 : f32 to vector<16x16xf32>
    %45 = arith.mulf %43, %44 : vector<16x16xf32>
    %46 = vector.broadcast %11 : vector<1x16xf32> to vector<16x16xf32>
    %47 = arith.addf %45, %46 : vector<16x16xf32>
    %cst_19 = arith.constant dense<0xFF800000> : vector<16xf32>
    %48 = vector.multi_reduction <maximumf>, %47, %cst_19 [1] : vector<16x16xf32> to vector<16xf32>
    %49 = vector.shape_cast %48 : vector<16xf32> to vector<16x1xf32>
    %50 = vector.broadcast %49 : vector<16x1xf32> to vector<16x16xf32>
    %51 = arith.subf %47, %50 : vector<16x16xf32>
    %52 = math.exp %51 : vector<16x16xf32>
    %cst_20 = arith.constant dense<0.000000e+00> : vector<16xf32>
    %53 = vector.multi_reduction <add>, %52, %cst_20 [1] : vector<16x16xf32> to vector<16xf32>
    %54 = vector.shape_cast %53 : vector<16xf32> to vector<16x1xf32>
    %55 = tpu.reciprocal %54 {approx = true} : vector<16x1xf32> -> vector<16x1xf32>
    %56 = vector.broadcast %55 : vector<16x1xf32> to vector<16x16xf32>
    %57 = arith.mulf %52, %56 : vector<16x16xf32>
    %58 = arith.truncf %57 : vector<16x16xf32> to vector<16x16xbf16>
    %cst_21 = arith.constant dense<0.000000e+00> : vector<16x64xf32>
    %59 = tpu.matmul %58, %41, %cst_21 {dimension_numbers = #tpu.dot_dimension_numbers<[1], [0], [0], [1], [0, 0, 1, 1], [], []>} : vector<16x16xbf16>, vector<16x64xbf16>, vector<16x64xf32> -> vector<16x64xf32>
    %60 = vector.extract_strided_slice %9 {offsets = [0, 128], sizes = [16, 64], strides = [1, 1]} : vector<16x768xf32> to vector<16x64xf32>
    %61 = arith.truncf %60 : vector<16x64xf32> to vector<16x64xbf16>
    %62 = vector.extract_strided_slice %9 {offsets = [0, 384], sizes = [16, 64], strides = [1, 1]} : vector<16x768xf32> to vector<16x64xf32>
    %63 = arith.truncf %62 : vector<16x64xf32> to vector<16x64xbf16>
    %64 = vector.extract_strided_slice %9 {offsets = [0, 640], sizes = [16, 64], strides = [1, 1]} : vector<16x768xf32> to vector<16x64xf32>
    %65 = arith.truncf %64 : vector<16x64xf32> to vector<16x64xbf16>
    %66 = tpu.transpose %63, [1, 0] : vector<16x64xbf16> -> vector<64x16xbf16>
    %cst_22 = arith.constant dense<0.000000e+00> : vector<16x16xf32>
    %67 = tpu.matmul %61, %66, %cst_22 {dimension_numbers = #tpu.dot_dimension_numbers<[1], [0], [0], [1], [0, 0, 1, 1], [], []>} : vector<16x64xbf16>, vector<64x16xbf16>, vector<16x16xf32> -> vector<16x16xf32>
    %cst_23 = arith.constant 1.250000e-01 : f32
    %68 = vector.broadcast %cst_23 : f32 to vector<16x16xf32>
    %69 = arith.mulf %67, %68 : vector<16x16xf32>
    %70 = vector.broadcast %11 : vector<1x16xf32> to vector<16x16xf32>
    %71 = arith.addf %69, %70 : vector<16x16xf32>
    %cst_24 = arith.constant dense<0xFF800000> : vector<16xf32>
    %72 = vector.multi_reduction <maximumf>, %71, %cst_24 [1] : vector<16x16xf32> to vector<16xf32>
    %73 = vector.shape_cast %72 : vector<16xf32> to vector<16x1xf32>
    %74 = vector.broadcast %73 : vector<16x1xf32> to vector<16x16xf32>
    %75 = arith.subf %71, %74 : vector<16x16xf32>
    %76 = math.exp %75 : vector<16x16xf32>
    %cst_25 = arith.constant dense<0.000000e+00> : vector<16xf32>
    %77 = vector.multi_reduction <add>, %76, %cst_25 [1] : vector<16x16xf32> to vector<16xf32>
    %78 = vector.shape_cast %77 : vector<16xf32> to vector<16x1xf32>
    %79 = tpu.reciprocal %78 {approx = true} : vector<16x1xf32> -> vector<16x1xf32>
    %80 = vector.broadcast %79 : vector<16x1xf32> to vector<16x16xf32>
    %81 = arith.mulf %76, %80 : vector<16x16xf32>
    %82 = arith.truncf %81 : vector<16x16xf32> to vector<16x16xbf16>
    %cst_26 = arith.constant dense<0.000000e+00> : vector<16x64xf32>
    %83 = tpu.matmul %82, %65, %cst_26 {dimension_numbers = #tpu.dot_dimension_numbers<[1], [0], [0], [1], [0, 0, 1, 1], [], []>} : vector<16x16xbf16>, vector<16x64xbf16>, vector<16x64xf32> -> vector<16x64xf32>
    %84 = vector.extract_strided_slice %9 {offsets = [0, 192], sizes = [16, 64], strides = [1, 1]} : vector<16x768xf32> to vector<16x64xf32>
    %85 = arith.truncf %84 : vector<16x64xf32> to vector<16x64xbf16>
    %86 = vector.extract_strided_slice %9 {offsets = [0, 448], sizes = [16, 64], strides = [1, 1]} : vector<16x768xf32> to vector<16x64xf32>
    %87 = arith.truncf %86 : vector<16x64xf32> to vector<16x64xbf16>
    %88 = vector.extract_strided_slice %9 {offsets = [0, 704], sizes = [16, 64], strides = [1, 1]} : vector<16x768xf32> to vector<16x64xf32>
    %89 = arith.truncf %88 : vector<16x64xf32> to vector<16x64xbf16>
    %90 = tpu.transpose %87, [1, 0] : vector<16x64xbf16> -> vector<64x16xbf16>
    %cst_27 = arith.constant dense<0.000000e+00> : vector<16x16xf32>
    %91 = tpu.matmul %85, %90, %cst_27 {dimension_numbers = #tpu.dot_dimension_numbers<[1], [0], [0], [1], [0, 0, 1, 1], [], []>} : vector<16x64xbf16>, vector<64x16xbf16>, vector<16x16xf32> -> vector<16x16xf32>
    %cst_28 = arith.constant 1.250000e-01 : f32
    %92 = vector.broadcast %cst_28 : f32 to vector<16x16xf32>
    %93 = arith.mulf %91, %92 : vector<16x16xf32>
    %94 = vector.broadcast %11 : vector<1x16xf32> to vector<16x16xf32>
    %95 = arith.addf %93, %94 : vector<16x16xf32>
    %cst_29 = arith.constant dense<0xFF800000> : vector<16xf32>
    %96 = vector.multi_reduction <maximumf>, %95, %cst_29 [1] : vector<16x16xf32> to vector<16xf32>
    %97 = vector.shape_cast %96 : vector<16xf32> to vector<16x1xf32>
    %98 = vector.broadcast %97 : vector<16x1xf32> to vector<16x16xf32>
    %99 = arith.subf %95, %98 : vector<16x16xf32>
    %100 = math.exp %99 : vector<16x16xf32>
    %cst_30 = arith.constant dense<0.000000e+00> : vector<16xf32>
    %101 = vector.multi_reduction <add>, %100, %cst_30 [1] : vector<16x16xf32> to vector<16xf32>
    %102 = vector.shape_cast %101 : vector<16xf32> to vector<16x1xf32>
    %103 = tpu.reciprocal %102 {approx = true} : vector<16x1xf32> -> vector<16x1xf32>
    %104 = vector.broadcast %103 : vector<16x1xf32> to vector<16x16xf32>
    %105 = arith.mulf %100, %104 : vector<16x16xf32>
    %106 = arith.truncf %105 : vector<16x16xf32> to vector<16x16xbf16>
    %cst_31 = arith.constant dense<0.000000e+00> : vector<16x64xf32>
    %107 = tpu.matmul %106, %89, %cst_31 {dimension_numbers = #tpu.dot_dimension_numbers<[1], [0], [0], [1], [0, 0, 1, 1], [], []>} : vector<16x16xbf16>, vector<16x64xbf16>, vector<16x64xf32> -> vector<16x64xf32>
    %108 = tpu.concatenate %35, %59, %83, %107 in 1 : vector<16x64xf32>, vector<16x64xf32>, vector<16x64xf32>, vector<16x64xf32> -> vector<16x256xf32>
    %109 = arith.truncf %108 : vector<16x256xf32> to vector<16x256xbf16>
    %c0_32 = arith.constant 0 : index
    %c0_33 = arith.constant 0 : index
    %110 = vector.load %arg5[%c0_32, %c0_33] : memref<256x256xbf16, #tpu.memory_space<vmem>>, vector<256x256xbf16>
    %cst_34 = arith.constant dense<0.000000e+00> : vector<16x256xf32>
    %111 = tpu.matmul %109, %110, %cst_34 {dimension_numbers = #tpu.dot_dimension_numbers<[1], [0], [0], [1], [0, 0, 1, 1], [], []>} : vector<16x256xbf16>, vector<256x256xbf16>, vector<16x256xf32> -> vector<16x256xf32>
    %c0_35 = arith.constant 0 : index
    %c0_36 = arith.constant 0 : index
    %112 = vector.load %arg6[%c0_35, %c0_36] : memref<1x256xf32, #tpu.memory_space<vmem>>, vector<1x256xf32>
    %113 = vector.broadcast %112 : vector<1x256xf32> to vector<16x256xf32>
    %114 = arith.addf %111, %113 : vector<16x256xf32>
    %115 = arith.addf %114, %2 : vector<16x256xf32>
    %c0_37 = arith.constant 0 : index
    %c0_38 = arith.constant 0 : index
    %116 = vector.load %arg7[%c0_37, %c0_38] : memref<1x256xf32, #tpu.memory_space<vmem>>, vector<1x256xf32>
    %c0_39 = arith.constant 0 : index
    %c0_40 = arith.constant 0 : index
    %117 = vector.load %arg8[%c0_39, %c0_40] : memref<1x256xf32, #tpu.memory_space<vmem>>, vector<1x256xf32>
    %cst_41 = arith.constant dense<0.000000e+00> : vector<16xf32>
    %118 = vector.multi_reduction <add>, %115, %cst_41 [1] : vector<16x256xf32> to vector<16xf32>
    %119 = vector.shape_cast %118 : vector<16xf32> to vector<16x1xf32>
    %cst_42 = arith.constant 2.560000e+02 : f32
    %120 = vector.broadcast %cst_42 : f32 to vector<16x1xf32>
    %121 = arith.divf %119, %120 : vector<16x1xf32>
    %122 = vector.broadcast %121 : vector<16x1xf32> to vector<16x256xf32>
    %123 = arith.subf %115, %122 : vector<16x256xf32>
    %124 = arith.mulf %123, %123 : vector<16x256xf32>
    %cst_43 = arith.constant dense<0.000000e+00> : vector<16xf32>
    %125 = vector.multi_reduction <add>, %124, %cst_43 [1] : vector<16x256xf32> to vector<16xf32>
    %126 = vector.shape_cast %125 : vector<16xf32> to vector<16x1xf32>
    %cst_44 = arith.constant 2.560000e+02 : f32
    %127 = vector.broadcast %cst_44 : f32 to vector<16x1xf32>
    %128 = arith.divf %126, %127 : vector<16x1xf32>
    %129 = vector.broadcast %121 : vector<16x1xf32> to vector<16x256xf32>
    %130 = arith.subf %115, %129 : vector<16x256xf32>
    %cst_45 = arith.constant 9.99999996E-13 : f32
    %131 = vector.broadcast %cst_45 : f32 to vector<16x1xf32>
    %132 = arith.addf %128, %131 : vector<16x1xf32>
    %133 = math.rsqrt %132 : vector<16x1xf32>
    %134 = vector.broadcast %133 : vector<16x1xf32> to vector<16x256xf32>
    %135 = arith.mulf %130, %134 : vector<16x256xf32>
    %136 = vector.broadcast %116 : vector<1x256xf32> to vector<16x256xf32>
    %137 = arith.mulf %135, %136 : vector<16x256xf32>
    %138 = vector.broadcast %117 : vector<1x256xf32> to vector<16x256xf32>
    %139 = arith.addf %137, %138 : vector<16x256xf32>
    %140 = arith.truncf %139 : vector<16x256xf32> to vector<16x256xbf16>
    %c0_46 = arith.constant 0 : index
    %c0_47 = arith.constant 0 : index
    %141 = vector.load %arg9[%c0_46, %c0_47] : memref<256x512xbf16, #tpu.memory_space<vmem>>, vector<256x512xbf16>
    %cst_48 = arith.constant dense<0.000000e+00> : vector<16x512xf32>
    %142 = tpu.matmul %140, %141, %cst_48 {dimension_numbers = #tpu.dot_dimension_numbers<[1], [0], [0], [1], [0, 0, 1, 1], [], []>} : vector<16x256xbf16>, vector<256x512xbf16>, vector<16x512xf32> -> vector<16x512xf32>
    %c0_49 = arith.constant 0 : index
    %c0_50 = arith.constant 0 : index
    %143 = vector.load %arg10[%c0_49, %c0_50] : memref<1x512xf32, #tpu.memory_space<vmem>>, vector<1x512xf32>
    %144 = vector.broadcast %143 : vector<1x512xf32> to vector<16x512xf32>
    %145 = arith.addf %142, %144 : vector<16x512xf32>
    %146 = arith.mulf %145, %145 : vector<16x512xf32>
    %147 = arith.mulf %145, %146 : vector<16x512xf32>
    %cst_51 = arith.constant 4.471500e-02 : f32
    %148 = vector.broadcast %cst_51 : f32 to vector<16x512xf32>
    %149 = arith.mulf %148, %147 : vector<16x512xf32>
    %150 = arith.addf %145, %149 : vector<16x512xf32>
    %cst_52 = arith.constant 0.797884583 : f32
    %151 = vector.broadcast %cst_52 : f32 to vector<16x512xf32>
    %152 = arith.mulf %151, %150 : vector<16x512xf32>
    %153 = math.tanh %152 : vector<16x512xf32>
    %cst_53 = arith.constant 1.000000e+00 : f32
    %154 = vector.broadcast %cst_53 : f32 to vector<16x512xf32>
    %155 = arith.addf %154, %153 : vector<16x512xf32>
    %cst_54 = arith.constant 5.000000e-01 : f32
    %156 = vector.broadcast %cst_54 : f32 to vector<16x512xf32>
    %157 = arith.mulf %156, %155 : vector<16x512xf32>
    %158 = arith.mulf %145, %157 : vector<16x512xf32>
    %159 = arith.truncf %158 : vector<16x512xf32> to vector<16x512xbf16>
    %c0_55 = arith.constant 0 : index
    %c0_56 = arith.constant 0 : index
    %160 = vector.load %arg11[%c0_55, %c0_56] : memref<512x256xbf16, #tpu.memory_space<vmem>>, vector<512x256xbf16>
    %cst_57 = arith.constant dense<0.000000e+00> : vector<16x256xf32>
    %161 = tpu.matmul %159, %160, %cst_57 {dimension_numbers = #tpu.dot_dimension_numbers<[1], [0], [0], [1], [0, 0, 1, 1], [], []>} : vector<16x512xbf16>, vector<512x256xbf16>, vector<16x256xf32> -> vector<16x256xf32>
    %c0_58 = arith.constant 0 : index
    %c0_59 = arith.constant 0 : index
    %162 = vector.load %arg12[%c0_58, %c0_59] : memref<1x256xf32, #tpu.memory_space<vmem>>, vector<1x256xf32>
    %163 = vector.broadcast %162 : vector<1x256xf32> to vector<16x256xf32>
    %164 = arith.addf %161, %163 : vector<16x256xf32>
    %165 = arith.addf %164, %139 : vector<16x256xf32>
    %c0_60 = arith.constant 0 : index
    %c0_61 = arith.constant 0 : index
    %166 = vector.load %arg13[%c0_60, %c0_61] : memref<1x256xf32, #tpu.memory_space<vmem>>, vector<1x256xf32>
    %c0_62 = arith.constant 0 : index
    %c0_63 = arith.constant 0 : index
    %167 = vector.load %arg14[%c0_62, %c0_63] : memref<1x256xf32, #tpu.memory_space<vmem>>, vector<1x256xf32>
    %cst_64 = arith.constant dense<0.000000e+00> : vector<16xf32>
    %168 = vector.multi_reduction <add>, %165, %cst_64 [1] : vector<16x256xf32> to vector<16xf32>
    %169 = vector.shape_cast %168 : vector<16xf32> to vector<16x1xf32>
    %cst_65 = arith.constant 2.560000e+02 : f32
    %170 = vector.broadcast %cst_65 : f32 to vector<16x1xf32>
    %171 = arith.divf %169, %170 : vector<16x1xf32>
    %172 = vector.broadcast %171 : vector<16x1xf32> to vector<16x256xf32>
    %173 = arith.subf %165, %172 : vector<16x256xf32>
    %174 = arith.mulf %173, %173 : vector<16x256xf32>
    %cst_66 = arith.constant dense<0.000000e+00> : vector<16xf32>
    %175 = vector.multi_reduction <add>, %174, %cst_66 [1] : vector<16x256xf32> to vector<16xf32>
    %176 = vector.shape_cast %175 : vector<16xf32> to vector<16x1xf32>
    %cst_67 = arith.constant 2.560000e+02 : f32
    %177 = vector.broadcast %cst_67 : f32 to vector<16x1xf32>
    %178 = arith.divf %176, %177 : vector<16x1xf32>
    %179 = vector.broadcast %171 : vector<16x1xf32> to vector<16x256xf32>
    %180 = arith.subf %165, %179 : vector<16x256xf32>
    %cst_68 = arith.constant 9.99999996E-13 : f32
    %181 = vector.broadcast %cst_68 : f32 to vector<16x1xf32>
    %182 = arith.addf %178, %181 : vector<16x1xf32>
    %183 = math.rsqrt %182 : vector<16x1xf32>
    %184 = vector.broadcast %183 : vector<16x1xf32> to vector<16x256xf32>
    %185 = arith.mulf %180, %184 : vector<16x256xf32>
    %186 = vector.broadcast %166 : vector<1x256xf32> to vector<16x256xf32>
    %187 = arith.mulf %185, %186 : vector<16x256xf32>
    %188 = vector.broadcast %167 : vector<1x256xf32> to vector<16x256xf32>
    %189 = arith.addf %187, %188 : vector<16x256xf32>
    %190 = arith.truncf %189 : vector<16x256xf32> to vector<16x256xbf16>
    %c0_69 = arith.constant 0 : index
    %c0_70 = arith.constant 0 : index
    %c0_71 = arith.constant 0 : index
    %191 = vector.load %arg15[%c0_69, %c0_70, %c0_71] : memref<1x16x256xbf16, #tpu.memory_space<vmem>>, vector<1x16x256xbf16>
    %192 = vector.shape_cast %191 : vector<1x16x256xbf16> to vector<16x256xbf16>
    %193 = vector.shape_cast %190 : vector<16x256xbf16> to vector<1x16x256xbf16>
    tpu.vector_store %arg15[%c0_69, %c0_70, %c0_71], %193 {strides = array<i32>} : memref<1x16x256xbf16, #tpu.memory_space<vmem>>, vector<1x16x256xbf16>,
    return
  }
  func.func @transform_0(%arg0: i32) -> (i32, i32, i32) {
    %c0_i32 = arith.constant 0 : i32
    %c0_i32_0 = arith.constant 0 : i32
    %c0_i32_1 = arith.constant 0 : i32
    return %arg0, %c0_i32, %c0_i32_0 : i32, i32, i32
  }
  func.func @transform_1(%arg0: i32) -> (i32, i32, i32) {
    %c0_i32 = arith.constant 0 : i32
    %c0_i32_0 = arith.constant 0 : i32
    %c0_i32_1 = arith.constant 0 : i32
    return %arg0, %c0_i32, %c0_i32_0 : i32, i32, i32
  }
  func.func @transform_2(%arg0: i32) -> (i32, i32) {
    %c0_i32 = arith.constant 0 : i32
    %c0_i32_0 = arith.constant 0 : i32
    %c0_i32_1 = arith.constant 0 : i32
    return %c0_i32, %c0_i32_0 : i32, i32
  }
  func.func @transform_3(%arg0: i32) -> (i32, i32) {
    %c0_i32 = arith.constant 0 : i32
    %c0_i32_0 = arith.constant 0 : i32
    %c0_i32_1 = arith.constant 0 : i32
    return %c0_i32, %c0_i32_0 : i32, i32
  }
  func.func @transform_4(%arg0: i32) -> (i32, i32) {
    %c0_i32 = arith.constant 0 : i32
    %c0_i32_0 = arith.constant 0 : i32
    %c0_i32_1 = arith.constant 0 : i32
    return %c0_i32, %c0_i32_0 : i32, i32
  }
  func.func @transform_5(%arg0: i32) -> (i32, i32) {
    %c0_i32 = arith.constant 0 : i32
    %c0_i32_0 = arith.constant 0 : i32
    %c0_i32_1 = arith.constant 0 : i32
    return %c0_i32, %c0_i32_0 : i32, i32
  }
  func.func @transform_6(%arg0: i32) -> (i32, i32) {
    %c0_i32 = arith.constant 0 : i32
    %c0_i32_0 = arith.constant 0 : i32
    %c0_i32_1 = arith.constant 0 : i32
    return %c0_i32, %c0_i32_0 : i32, i32
  }
  func.func @transform_7(%arg0: i32) -> (i32, i32) {
    %c0_i32 = arith.constant 0 : i32
    %c0_i32_0 = arith.constant 0 : i32
    %c0_i32_1 = arith.constant 0 : i32
    return %c0_i32, %c0_i32_0 : i32, i32
  }
  func.func @transform_8(%arg0: i32) -> (i32, i32) {
    %c0_i32 = arith.constant 0 : i32
    %c0_i32_0 = arith.constant 0 : i32
    %c0_i32_1 = arith.constant 0 : i32
    return %c0_i32, %c0_i32_0 : i32, i32
  }
  func.func @transform_9(%arg0: i32) -> (i32, i32) {
    %c0_i32 = arith.constant 0 : i32
    %c0_i32_0 = arith.constant 0 : i32
    %c0_i32_1 = arith.constant 0 : i32
    return %c0_i32, %c0_i32_0 : i32, i32
  }
  func.func @transform_10(%arg0: i32) -> (i32, i32) {
    %c0_i32 = arith.constant 0 : i32
    %c0_i32_0 = arith.constant 0 : i32
    %c0_i32_1 = arith.constant 0 : i32
    return %c0_i32, %c0_i32_0 : i32, i32
  }
  func.func @transform_11(%arg0: i32) -> (i32, i32) {
    %c0_i32 = arith.constant 0 : i32
    %c0_i32_0 = arith.constant 0 : i32
    %c0_i32_1 = arith.constant 0 : i32
    return %c0_i32, %c0_i32_0 : i32, i32
  }
  func.func @transform_12(%arg0: i32) -> (i32, i32) {
    %c0_i32 = arith.constant 0 : i32
    %c0_i32_0 = arith.constant 0 : i32
    %c0_i32_1 = arith.constant 0 : i32
    return %c0_i32, %c0_i32_0 : i32, i32
  }
  func.func @transform_13(%arg0: i32) -> (i32, i32) {
    %c0_i32 = arith.constant 0 : i32
    %c0_i32_0 = arith.constant 0 : i32
    %c0_i32_1 = arith.constant 0 : i32
    return %c0_i32, %c0_i32_0 : i32, i32
  }
  func.func @transform_14(%arg0: i32) -> (i32, i32, i32) {
    %c0_i32 = arith.constant 0 : i32
    %c0_i32_0 = arith.constant 0 : i32
    %c0_i32_1 = arith.constant 0 : i32
    return %arg0, %c0_i32, %c0_i32_0 : i32, i32, i32
  }
}

</mosaic_0001>

<llo_original>
// kernel: tag_value_forward.4
$region0: #{tag_value_forward.4}
  #allocation0 [shape = 'u32[]', space=smem, size = 0x4, offset = 0x4, fixed_abs, tag = 'smem constant byte address 0x4 - core index']
  #allocation1 [shape = 'u32[144,128]{1,0:T(1,128)}', space=vmem, size = 0x12000, scoped, tag = 'internal scratch']
  %s0 = inlined_call_operand.vmem [shape: f32[2,16,128], index: 0, kind: input, shape index: {}]
  %s1 = inlined_call_operand.vmem [shape: f32[1,128], index: 1, kind: input, shape index: {}]
  %s2 = inlined_call_operand.vmem [shape: f32[1,128], index: 2, kind: input, shape index: {}]
  %s3 = inlined_call_operand.vmem [shape: bf16[128,256], index: 3, kind: input, shape index: {}]
  %s4 = inlined_call_operand.vmem [shape: f32[1,256], index: 4, kind: input, shape index: {}]
  %s5 = inlined_call_operand.vmem [shape: bf16[2,16,256], index: 5, kind: output, shape index: {}]
  %s6 = sld [smem:[#allocation0]]
  $region53: #{tag_value_forward.4} parent=0
    _
  %s8 = ssub.s32 1, %s6
  %s9 = scalar_select 0, %s8, %s6
  loop: start=0, step=1, limit=4
  $region2: #{tag_value_forward.4} parent=0 // loop_pre_header
    _
  $region3: #{tag_value_forward.4} parent=0 // loop_header
    %s11 = sphi 0, %s15
    %p12 = scmp.ge.s32.totalorder %s11, 4
    %s21 = sphi 0, %s23
    %s24 = sphi 0, %s21
    %s25 = sphi 0, %s24
    %s41 = sphi 0, %s25
    %s45 = sphi 0, %s45
    %s47 = sphi 0, %s45
    %s48 = sphi 0, %s47
    %s62 = sphi 0, %s48
    %s66 = sphi 0, %s66
    %s68 = sphi 0, %s66
    %s69 = sphi 0, %s68
    %s83 = sphi 0, %s69
    %s87 = sphi 0, %s87
    %s89 = sphi 0, %s87
    %s90 = sphi 0, %s89
    %s104 = sphi 0, %s90
    %s108 = sphi 0, %s108
    %s110 = sphi 0, %s108
    %s111 = sphi 0, %s110
    %s125 = sphi 0, %s111
    %s131 = sphi 0, %s133
    %s134 = sphi 0, %s131
    %s135 = sphi 0, %s134
    %s151 = sphi 0, %s135
  $region4: #{tag_value_forward.4} parent=0 // loop_header_branch
    %14 = sbr.rel (%p12) target = $region8
  $region5: #{tag_value_forward.4} parent=0 // loop_body
    %s16 = ssub.s32 %s11, 1
    %s17 = ssub.s32 %s11, 2
    %s18 = sadd.s32 %s11, 1
    %s19 = ssub.s32 %s11, %s18
    %p20 = scmp.eq.s32.totalorder %s19, 0
    %s22 = sadd.s32 %s21, 1
    %s23 = scalar_select %p20, %s21, %s22
    %p26 = pneg %p20
    %p27 = scmp.eq.s32.totalorder %s11, 1
    %p28 = por %p26, %p27
    %p29 = scmp.ne.s32.totalorder %s21, %s24
    %p30 = scmp.eq.s32.totalorder %s11, 0
    %p31 = por %p29, %p30
    %p32 = scmp.ne.s32.totalorder %s21, %s24
    %p33 = scmp.eq.s32.totalorder %s16, 1
    %p34 = por %p32, %p33
    %p35 = scmp.ne.s32.totalorder %s24, %s25
    %p36 = scmp.eq.s32.totalorder %s16, 0
    %p37 = por %p35, %p36
    %p38 = scmp.ne.s32.totalorder %s24, %s25
    %p39 = scmp.eq.s32.totalorder %s17, 1
    %p40 = por %p38, %p39
    %p42 = scmp.ne.s32.totalorder %s25, %s41
    %p43 = scmp.eq.s32.totalorder %s17, 0
    %p44 = por %p42, %p43
    %s46 = sadd.s32 %s45, 1
    %p49 = scmp.eq.s32.totalorder %s11, 1
    %p50 = scmp.ne.s32.totalorder %s45, %s47
    %p51 = scmp.eq.s32.totalorder %s11, 0
    %p52 = por %p50, %p51
    %p53 = scmp.ne.s32.totalorder %s45, %s47
    %p54 = scmp.eq.s32.totalorder %s16, 1
    %p55 = por %p53, %p54
    %p56 = scmp.ne.s32.totalorder %s47, %s48
    %p57 = scmp.eq.s32.totalorder %s16, 0
    %p58 = por %p56, %p57
    %p59 = scmp.ne.s32.totalorder %s47, %s48
    %p60 = scmp.eq.s32.totalorder %s17, 1
    %p61 = por %p59, %p60
    %p63 = scmp.ne.s32.totalorder %s48, %s62
    %p64 = scmp.eq.s32.totalorder %s17, 0
    %p65 = por %p63, %p64
    %s67 = sadd.s32 %s66, 1
    %p70 = scmp.eq.s32.totalorder %s11, 1
    %p71 = scmp.ne.s32.totalorder %s66, %s68
    %p72 = scmp.eq.s32.totalorder %s11, 0
    %p73 = por %p71, %p72
    %p74 = scmp.ne.s32.totalorder %s66, %s68
    %p75 = scmp.eq.s32.totalorder %s16, 1
    %p76 = por %p74, %p75
    %p77 = scmp.ne.s32.totalorder %s68, %s69
    %p78 = scmp.eq.s32.totalorder %s16, 0
    %p79 = por %p77, %p78
    %p80 = scmp.ne.s32.totalorder %s68, %s69
    %p81 = scmp.eq.s32.totalorder %s17, 1
    %p82 = por %p80, %p81
    %p84 = scmp.ne.s32.totalorder %s69, %s83
    %p85 = scmp.eq.s32.totalorder %s17, 0
    %p86 = por %p84, %p85
    %s88 = sadd.s32 %s87, 1
    %p91 = scmp.eq.s32.totalorder %s11, 1
    %p92 = scmp.ne.s32.totalorder %s87, %s89
    %p93 = scmp.eq.s32.totalorder %s11, 0
    %p94 = por %p92, %p93
    %p95 = scmp.ne.s32.totalorder %s87, %s89
    %p96 = scmp.eq.s32.totalorder %s16, 1
    %p97 = por %p95, %p96
    %p98 = scmp.ne.s32.totalorder %s89, %s90
    %p99 = scmp.eq.s32.totalorder %s16, 0
    %p100 = por %p98, %p99
    %p101 = scmp.ne.s32.totalorder %s89, %s90
    %p102 = scmp.eq.s32.totalorder %s17, 1
    %p103 = por %p101, %p102
    %p105 = scmp.ne.s32.totalorder %s90, %s104
    %p106 = scmp.eq.s32.totalorder %s17, 0
    %p107 = por %p105, %p106
    %s109 = sadd.s32 %s108, 1
    %p112 = scmp.eq.s32.totalorder %s11, 1
    %p113 = scmp.ne.s32.totalorder %s108, %s110
    %p114 = scmp.eq.s32.totalorder %s11, 0
    %p115 = por %p113, %p114
    %p116 = scmp.ne.s32.totalorder %s108, %s110
    %p117 = scmp.eq.s32.totalorder %s16, 1
    %p118 = por %p116, %p117
    %p119 = scmp.ne.s32.totalorder %s110, %s111
    %p120 = scmp.eq.s32.totalorder %s16, 0
    %p121 = por %p119, %p120
    %p122 = scmp.ne.s32.totalorder %s110, %s111
    %p123 = scmp.eq.s32.totalorder %s17, 1
    %p124 = por %p122, %p123
    %p126 = scmp.ne.s32.totalorder %s111, %s125
    %p127 = scmp.eq.s32.totalorder %s17, 0
    %p128 = por %p126, %p127
    %s129 = ssub.s32 %s11, %s18
    %p130 = scmp.eq.s32.totalorder %s129, 0
    %s132 = sadd.s32 %s131, 1
    %s133 = scalar_select %p130, %s131, %s132
    %p136 = pneg %p130
    %p137 = scmp.eq.s32.totalorder %s11, 1
    %p138 = por %p136, %p137
    %p139 = scmp.ne.s32.totalorder %s131, %s134
    %p140 = scmp.eq.s32.totalorder %s11, 0
    %p141 = por %p139, %p140
    %p142 = scmp.ne.s32.totalorder %s131, %s134
    %p143 = scmp.eq.s32.totalorder %s16, 1
    %p144 = por %p142, %p143
    %p145 = scmp.ne.s32.totalorder %s134, %s135
    %p146 = scmp.eq.s32.totalorder %s16, 0
    %p147 = por %p145, %p146
    %p148 = scmp.ne.s32.totalorder %s134, %s135
    %p149 = scmp.eq.s32.totalorder %s17, 1
    %p150 = por %p148, %p149
    %p152 = scmp.ne.s32.totalorder %s135, %s151
    %p153 = scmp.eq.s32.totalorder %s17, 0
    %p154 = por %p152, %p153
    %p155 = scmp.le.s32.totalorder 1, %s11
    %p156 = scmp.lt.s32.totalorder %s11, 3
    %p157 = pnand %p155, %p156
    %p158 = pneg %p157
    // Predicated region
    $region9: #{tag_value_forward.4} parent=5 // pred_check
      _
    $region10: #{tag_value_forward.4} parent=5 // pred_check_branch
      %160 = sbr.rel (%p157) target = $region12
    $region11: #{tag_value_forward.4} parent=5 // pred_region
      %s161 = ssub.s32 %s11, 1
      // Predicated region
      $region13: #{tag_value_forward.4} parent=11 // pred_check
        %p162 = pneg %p58
      $region14: #{tag_value_forward.4} parent=11 // pred_check_branch
        %164 = sbr.rel (%p162) target = $region16
      $region15: #{tag_value_forward.4} parent=11 // pred_region
        _
      $region16: #{tag_value_forward.4} parent=11 // pred_fallthru
        _
      // Predicated region
      $region17: #{tag_value_forward.4} parent=11 // pred_check
        %p165 = pneg %p79
      $region18: #{tag_value_forward.4} parent=11 // pred_check_branch
        %167 = sbr.rel (%p165) target = $region20
      $region19: #{tag_value_forward.4} parent=11 // pred_region
        _
      $region20: #{tag_value_forward.4} parent=11 // pred_fallthru
        _
      // Predicated region
      $region21: #{tag_value_forward.4} parent=11 // pred_check
        %p168 = pneg %p100
      $region22: #{tag_value_forward.4} parent=11 // pred_check_branch
        %170 = sbr.rel (%p168) target = $region24
      $region23: #{tag_value_forward.4} parent=11 // pred_region
        _
      $region24: #{tag_value_forward.4} parent=11 // pred_fallthru
        _
      // Predicated region
      $region25: #{tag_value_forward.4} parent=11 // pred_check
        %p171 = pneg %p121
      $region26: #{tag_value_forward.4} parent=11 // pred_check_branch
        %173 = sbr.rel (%p171) target = $region28
      $region27: #{tag_value_forward.4} parent=11 // pred_region
        _
      $region28: #{tag_value_forward.4} parent=11 // pred_fallthru
        _
    $region12: #{tag_value_forward.4} parent=5 // pred_fallthru
      _
    %p174 = scmp.lt.s32.totalorder %s11, 2
    // Predicated region
    $region29: #{tag_value_forward.4} parent=5 // pred_check
      %p175 = pneg %p174
    $region30: #{tag_value_forward.4} parent=5 // pred_check_branch
      %177 = sbr.rel (%p175) target = $region32
    $region31: #{tag_value_forward.4} parent=5 // pred_region
      // Predicated region
      $region33: #{tag_value_forward.4} parent=31 // pred_check
        %p178 = pneg %p31
      $region34: #{tag_value_forward.4} parent=31 // pred_check_branch
        %180 = sbr.rel (%p178) target = $region36
      $region35: #{tag_value_forward.4} parent=31 // pred_region
        %p181 = scmp.lt.s32.totalorder %s11, 1
        %s182 = scalar_select %p181, %s11, 1
        %s183 = smul.addr %s182, 2
        %s184 = smul.addr %s183, 8
        %s185 = scalar_lea.vmem %s0, %s184
      $region36: #{tag_value_forward.4} parent=31 // pred_fallthru
        _
    $region32: #{tag_value_forward.4} parent=5 // pred_fallthru
      _
    %p186 = scmp.le.s32.totalorder 1, %s11
    %p187 = scmp.lt.s32.totalorder %s11, 3
    %p188 = pnand %p186, %p187
    %p189 = pneg %p188
    // Predicated region
    $region37: #{tag_value_forward.4} parent=5 // pred_check
      _
    $region38: #{tag_value_forward.4} parent=5 // pred_check_branch
      %191 = sbr.rel (%p188) target = $region40
    $region39: #{tag_value_forward.4} parent=5 // pred_region
      %s192 = ssub.s32 %s11, 1
      %p193 = scmp.lt.s32.totalorder %s16, 1
      %s194 = scalar_select %p193, %s16, 1
      %s195 = smul.addr %s194, 2
      %s196 = smul.addr %s195, 8
      %s197 = scalar_lea.vmem %s0, %s196
      %p198 = pneg %p37
      %p199 = pneg %p34
      %p200 = pneg %p58
      %p201 = pneg %p55
      %p202 = pneg %p79
      %p203 = pneg %p76
      %p204 = pneg %p100
      %p205 = pneg %p97
      %p206 = pneg %p121
      %p207 = pneg %p118
      %p208 = pneg %p147
      %p209 = pneg %p144
      %p210 = scmp.lt.s32.totalorder %s16, 1
      %s211 = scalar_select %p210, %s16, 1
      %s212 = smul.addr %s211, 4
      %s213 = smul.addr %s212, 4
      %s214 = scalar_lea.vmem %s5, %s213
      %p215 = scmp.lt.s32.totalorder %s16, 1
      %s216 = scalar_select %p215, %s16, 1
      %s217 = smul.addr %s216, 2
      %s218 = smul.addr %s217, 8
      %s219 = scalar_lea.vmem %s0, %s218
      %p220 = scmp.lt.s32.totalorder %s16, 1
      %s221 = scalar_select %p220, %s16, 1
      %s222 = smul.addr %s221, 4
      %s223 = smul.addr %s222, 4
      %s224 = scalar_lea.vmem %s5, %s223
      %v226 = vld [vmem:[%s219] sm:$0xff]
      %v227 = vld [vmem:[%s219 + $0x8] sm:$0xff]
      %v228 = vld [vmem:[%s1] sm:$0x1]
      %v229 = vld [vmem:[%s2] sm:$0x1]
      %230 = vadd.xlane.f32.xlu0 %v226
      %v231 = vpop.xlane.xlu0 %230
      %232 = vadd.xlane.f32.xlu0 %v227
      %v233 = vpop.xlane.xlu0 %232
      %v234 = vrcp.pop 128.0
      %v235 = vmul.f32 %v231, %v234
      %v236 = vmul.f32 %v233, %v234
      %v237 = vsub.f32 %v226, %v235
      %v238 = vsub.f32 %v227, %v236
      %v239 = vmul.f32 %v237, %v237
      %v240 = vmul.f32 %v238, %v238
      %241 = vadd.xlane.f32.xlu0 %v239
      %v242 = vpop.xlane.xlu0 %241
      %243 = vadd.xlane.f32.xlu0 %v240
      %v244 = vpop.xlane.xlu0 %243
      %v245 = vmul.f32 %v242, %v234
      %v246 = vmul.f32 %v244, %v234
      %v247 = vadd.f32 %v245, 1e-12
      %v248 = vadd.f32 %v246, 1e-12
      %v249 = vrsqrt.pop %v247
      %v250 = vrsqrt.pop %v248
      %v251 = vmul.f32 %v237, %v249
      %v252 = vmul.f32 %v238, %v250
      %v254 = vlaneseq
      %v255 = vshrl.u32 %v254, 7
      %v256 = vsub.s32 0, %v255
      %v257 = vrot.slane %v228, %v256
      %v259 = vmul.f32 %v251, %v257
      %v260 = vmul.f32 %v252, %v257
      %v262 = vlaneseq
      %v263 = vshrl.u32 %v262, 7
      %v264 = vsub.s32 0, %v263
      %v265 = vrot.slane %v229, %v264
      %v267 = vadd.f32 %v259, %v265
      %v268 = vadd.f32 %v260, %v265
      %v269 = vpack.c.bf16 %v268, %v267
      %v270 = vld [vmem:[%s3] sm:$0xff]
      %v271 = vld [vmem:[%s3 + $0x8] sm:$0xff]
      %v272 = vld [vmem:[%s3 + $0x10] sm:$0xff]
      %v273 = vld [vmem:[%s3 + $0x18] sm:$0xff]
      %v274 = vld [vmem:[%s3 + $0x20] sm:$0xff]
      %v275 = vld [vmem:[%s3 + $0x28] sm:$0xff]
      %v276 = vld [vmem:[%s3 + $0x30] sm:$0xff]
      %v277 = vld [vmem:[%s3 + $0x38] sm:$0xff]
      %v278 = vld [vmem:[%s3 + $0x40] sm:$0xff]
      %v279 = vld [vmem:[%s3 + $0x48] sm:$0xff]
      %v280 = vld [vmem:[%s3 + $0x50] sm:$0xff]
      %v281 = vld [vmem:[%s3 + $0x58] sm:$0xff]
      %v282 = vld [vmem:[%s3 + $0x60] sm:$0xff]
      %v283 = vld [vmem:[%s3 + $0x68] sm:$0xff]
      %v284 = vld [vmem:[%s3 + $0x70] sm:$0xff]
      %v285 = vld [vmem:[%s3 + $0x78] sm:$0xff]
      %v286 = vld [vmem:[%s4] sm:$0x3]
      %v288 = vlaneseq
      %v289 = vshrl.u32 %v288, 7
      %v290 = vsub.s32 0, %v289
      %v291 = vrot.slane %v286, %v290
      %v292 = vlaneseq
      %v293 = vshrl.u32 %v292, 7
      %v294 = vsub.s32 1, %v293
      %v295 = vrot.slane %v286, %v294
      %v314 = vunpack.c.l.b16 %v270
      %v315 = vunpack.c.h.b16 %v270
      %v316 = vunpack.c.l.b16 %v271
      %v317 = vunpack.c.h.b16 %v271
      %v318 = vunpack.c.l.b16 %v272
      %v319 = vunpack.c.h.b16 %v272
      %v320 = vunpack.c.l.b16 %v273
      %v321 = vunpack.c.h.b16 %v273
      %v322 = vunpack.c.l.b16 %v274
      %v323 = vunpack.c.h.b16 %v274
      %v324 = vunpack.c.l.b16 %v275
      %v325 = vunpack.c.h.b16 %v275
      %v326 = vunpack.c.l.b16 %v276
      %v327 = vunpack.c.h.b16 %v276
      %v328 = vunpack.c.l.b16 %v277
      %v329 = vunpack.c.h.b16 %v277
      %v330 = vunpack.c.l.b16 %v278
      %v331 = vunpack.c.h.b16 %v278
      %v332 = vunpack.c.l.b16 %v279
      %v333 = vunpack.c.h.b16 %v279
      %v334 = vunpack.c.l.b16 %v280
      %v335 = vunpack.c.h.b16 %v280
      %v336 = vunpack.c.l.b16 %v281
      %v337 = vunpack.c.h.b16 %v281
      %v338 = vunpack.c.l.b16 %v282
      %v339 = vunpack.c.h.b16 %v282
      %v340 = vunpack.c.l.b16 %v283
      %v341 = vunpack.c.h.b16 %v283
      %v342 = vunpack.c.l.b16 %v284
      %v343 = vunpack.c.h.b16 %v284
      %v344 = vunpack.c.l.b16 %v285
      %v345 = vunpack.c.h.b16 %v285
      %v346 = vpack.c.b16 %v316, %v314
      %v347 = vpack.c.b16 %v317, %v315
      %v348 = vpack.c.b16 %v320, %v318
      %v349 = vpack.c.b16 %v321, %v319
      %v350 = vpack.c.b16 %v324, %v322
      %v351 = vpack.c.b16 %v325, %v323
      %v352 = vpack.c.b16 %v328, %v326
      %v353 = vpack.c.b16 %v329, %v327
      %v354 = vpack.c.b16 %v332, %v330
      %v355 = vpack.c.b16 %v333, %v331
      %v356 = vpack.c.b16 %v336, %v334
      %v357 = vpack.c.b16 %v337, %v335
      %v358 = vpack.c.b16 %v340, %v338
      %v359 = vpack.c.b16 %v341, %v339
      %v360 = vpack.c.b16 %v344, %v342
      %v361 = vpack.c.b16 %v345, %v343
      %378 = vmatprep.subr.bf16.mxu0 %v361
      %379 = vmatpush1.bf16.msra.mxu0 %v360
      %380 = vmatprep.subr.bf16.mxu0 %v359
      %381 = vmatpush1.bf16.msra.mxu0 %v358
      %382 = vmatprep.subr.bf16.mxu0 %v357
      %383 = vmatpush1.bf16.msra.mxu0 %v356
      %384 = vmatprep.subr.bf16.mxu0 %v355
      %385 = vmatpush1.bf16.msra.mxu0 %v354
      %386 = vmatprep.subr.bf16.mxu0 %v353
      %387 = vmatpush1.bf16.msra.mxu0 %v352
      %388 = vmatprep.subr.bf16.mxu0 %v351
      %389 = vmatpush1.bf16.msra.mxu0 %v350
      %390 = vmatprep.subr.bf16.mxu0 %v349
      %391 = vmatpush1.bf16.msra.mxu0 %v348
      %392 = vmatprep.subr.bf16.mxu0 %v347
      %393 = vmatpush1.bf16.msra.mxu0 %v346
      %394 = vmatprep.subr.bf16.mxu0 0
      %395 = vmatpush2.bf16.msra.mxu0 0
      %396 = vmatprep.subr.bf16.mxu0 0
      %397 = vmatpush2.bf16.msra.mxu0 0
      %398 = vmatprep.subr.bf16.mxu0 0
      %399 = vmatpush2.bf16.msra.mxu0 0
      %400 = vmatprep.subr.bf16.mxu0 0
      %401 = vmatpush2.bf16.msra.mxu0 0
      %402 = vmatprep.subr.bf16.mxu0 0
      %403 = vmatpush2.bf16.msra.mxu0 0
      %404 = vmatprep.subr.bf16.mxu0 0
      %405 = vmatpush2.bf16.msra.mxu0 0
      %406 = vmatprep.subr.bf16.mxu0 0
      %407 = vmatpush2.bf16.msra.mxu0 0
      %408 = vmatprep.subr.bf16.mxu0 0
      %409 = vmatpush2.bf16.msra.mxu0 0
      %410 = vmatprep.mubr.bf16.mxu0 0
      %411 = vmatmul.mubr.bf16.gmra.mxu0 %v269
      %v412 = vpop.f32.mrf.mxu0
      %v413 = vadd.f32 %v291, %v412
      %v414 = vpop.f32.mrf.mxu0
      %v415 = vadd.f32 %v295, %v414
      %v416 = vpop.f32.mrf.mxu0
      %v417 = vadd.f32 %v291, %v416
      %v418 = vpop.f32.mrf.mxu0
      %v419 = vadd.f32 %v295, %v418
      %420 = vdwg.mxu0
      %v421 = vpack.c.bf16 %v417, %v413
      %v422 = vpack.c.bf16 %v419, %v415
      %v425 = vunpack.c.l.b16 %v421
      %v426 = vunpack.c.l.b16 %v422
      %v427 = vunpack.c.h.b16 %v421
      %v428 = vunpack.c.h.b16 %v422
      %v429 = vpack.c.b16 %v426, %v425
      %v430 = vpack.c.b16 %v428, %v427
      %433 = vst [vmem:[%s224] sm:$0xff] %v429
      %434 = vst [vmem:[%s224 + $0x8] sm:$0xff] %v430
      %p435 = scmp.lt.s32.totalorder %s16, 1
      %s436 = scalar_select %p435, %s16, 1
      %s437 = smul.addr %s436, 4
      %s438 = smul.addr %s437, 4
      %s439 = scalar_lea.vmem %s5, %s438
      // Predicated region
      $region41: #{tag_value_forward.4} parent=39 // pred_check
        %p440 = pneg %p144
      $region42: #{tag_value_forward.4} parent=39 // pred_check_branch
        %442 = sbr.rel (%p440) target = $region44
      $region43: #{tag_value_forward.4} parent=39 // pred_region
        _
      $region44: #{tag_value_forward.4} parent=39 // pred_fallthru
        _
    $region40: #{tag_value_forward.4} parent=5 // pred_fallthru
      _
    %p443 = scmp.le.s32.totalorder 2, %s11
    // Predicated region
    $region45: #{tag_value_forward.4} parent=5 // pred_check
      %p444 = pneg %p443
    $region46: #{tag_value_forward.4} parent=5 // pred_check_branch
      %446 = sbr.rel (%p444) target = $region48
    $region47: #{tag_value_forward.4} parent=5 // pred_region
      %s447 = ssub.s32 %s11, 2
      // Predicated region
      $region49: #{tag_value_forward.4} parent=47 // pred_check
        %p448 = pneg %p150
      $region50: #{tag_value_forward.4} parent=47 // pred_check_branch
        %450 = sbr.rel (%p448) target = $region52
      $region51: #{tag_value_forward.4} parent=47 // pred_region
        %p451 = scmp.lt.s32.totalorder %s17, 1
        %s452 = scalar_select %p451, %s17, 1
        %s453 = smul.addr %s452, 4
        %s454 = smul.addr %s453, 4
        %s455 = scalar_lea.vmem %s5, %s454
      $region52: #{tag_value_forward.4} parent=47 // pred_fallthru
        _
    $region48: #{tag_value_forward.4} parent=5 // pred_fallthru
      _
  $region6: #{tag_value_forward.4} parent=0 // loop_footer
    %s15 = sadd.s32 1, %s11
  $region7: #{tag_value_forward.4} parent=0 // loop_footer_branch
    %10 = sbr.rel target = $region3
  $region8: #{tag_value_forward.4} parent=0 // loop_exit
    _

// kernel: tag_value_forward.7
$region0: #{tag_value_forward.7}
  #allocation0 [shape = 'u32[]', space=smem, size = 0x4, offset = 0x4, fixed_abs, tag = 'smem constant byte address 0x4 - core index']
  #allocation1 [shape = 'u32[144,128]{1,0:T(1,128)}', space=vmem, size = 0x12000, scoped, tag = 'internal scratch']
  %s0 = inlined_call_operand.vmem [shape: bf16[2,16,256], index: 0, kind: input, shape index: {}]
  %s1 = inlined_call_operand.vmem [shape: f32[2,16,1], index: 1, kind: input, shape index: {}]
  %s2 = inlined_call_operand.vmem [shape: bf16[256,256], index: 2, kind: input, shape index: {}]
  %s3 = inlined_call_operand.vmem [shape: f32[1,256], index: 3, kind: input, shape index: {}]
  %s4 = inlined_call_operand.vmem [shape: bf16[256,256], index: 4, kind: input, shape index: {}]
  %s5 = inlined_call_operand.vmem [shape: f32[1,256], index: 5, kind: input, shape index: {}]
  %s6 = inlined_call_operand.vmem [shape: bf16[256,128], index: 6, kind: input, shape index: {}]
  %s7 = inlined_call_operand.vmem [shape: f32[1,128], index: 7, kind: input, shape index: {}]
  %s8 = inlined_call_operand.vmem [shape: f32[2,16,256], index: 8, kind: output, shape index: {0}]
  %s9 = inlined_call_operand.hbm [shape: f32[2,1,128], index: 9, kind: output, shape index: {1}]
  %s10 = inlined_call_operand.vmem [shape: f32[2,1,256], index: 10, kind: output, shape index: {2}]
  %11 = xla_tuple %s8, %s9, %s10
  %s12 = sld [smem:[#allocation0]]
  $region81: #{tag_value_forward.7} parent=0
    _
  %s14 = ssub.s32 1, %s12
  %s15 = scalar_select 0, %s14, %s12
  $region1: #{tag_value_forward.7} parent=0
    #allocation2 [shape = 'u8[1024]{0}', space=vmem, size = 0x400, scoped, tag = 'output window, operand 1']
    #allocation3 [shape = 's32[2]{0}', space=sflag, size = 0x8, scoped, tag = 'scoped memory for tag_value_forward.7']
    %16 = vsyncpa [#allocation3], 0
    %s17 = scalar_lea.sflag [#allocation3], 1
    %18 = vsyncpa %s17, 0
    loop: start=0, step=1, limit=4
    $region2: #{tag_value_forward.7} parent=1 // loop_pre_header
      _
    $region3: #{tag_value_forward.7} parent=1 // loop_header
      %s20 = sphi 0, %s24
      %p21 = scmp.ge.s32.totalorder %s20, 4
      %s30 = sphi 0, %s32
      %s33 = sphi 0, %s30
      %s34 = sphi 0, %s33
      %s50 = sphi 0, %s34
      %s56 = sphi 0, %s58
      %s59 = sphi 0, %s56
      %s60 = sphi 0, %s59
      %s76 = sphi 0, %s60
      %s80 = sphi 0, %s80
      %s82 = sphi 0, %s80
      %s83 = sphi 0, %s82
      %s97 = sphi 0, %s83
      %s101 = sphi 0, %s101
      %s103 = sphi 0, %s101
      %s104 = sphi 0, %s103
      %s118 = sphi 0, %s104
      %s122 = sphi 0, %s122
      %s124 = sphi 0, %s122
      %s125 = sphi 0, %s124
      %s139 = sphi 0, %s125
      %s143 = sphi 0, %s143
      %s145 = sphi 0, %s143
      %s146 = sphi 0, %s145
      %s160 = sphi 0, %s146
      %s164 = sphi 0, %s164
      %s166 = sphi 0, %s164
      %s167 = sphi 0, %s166
      %s181 = sphi 0, %s167
      %s185 = sphi 0, %s185
      %s187 = sphi 0, %s185
      %s188 = sphi 0, %s187
      %s202 = sphi 0, %s188
      %s208 = sphi 0, %s210
      %s211 = sphi 0, %s208
      %s212 = sphi 0, %s211
      %s228 = sphi 0, %s212
      %s234 = sphi 0, %s236
      %s237 = sphi 0, %s234
      %s238 = sphi 0, %s237
      %s254 = sphi 0, %s238
      %s260 = sphi 0, %s262
      %s263 = sphi 0, %s260
      %s264 = sphi 0, %s263
      %s280 = sphi 0, %s264
    $region4: #{tag_value_forward.7} parent=1 // loop_header_branch
      %23 = sbr.rel (%p21) target = $region8
    $region5: #{tag_value_forward.7} parent=1 // loop_body
      %s25 = ssub.s32 %s20, 1
      %s26 = ssub.s32 %s20, 2
      %s27 = sadd.s32 %s20, 1
      %s28 = ssub.s32 %s20, %s27
      %p29 = scmp.eq.s32.totalorder %s28, 0
      %s31 = sadd.s32 %s30, 1
      %s32 = scalar_select %p29, %s30, %s31
      %p35 = pneg %p29
      %p36 = scmp.eq.s32.totalorder %s20, 1
      %p37 = por %p35, %p36
      %p38 = scmp.ne.s32.totalorder %s30, %s33
      %p39 = scmp.eq.s32.totalorder %s20, 0
      %p40 = por %p38, %p39
      %p41 = scmp.ne.s32.totalorder %s30, %s33
      %p42 = scmp.eq.s32.totalorder %s25, 1
      %p43 = por %p41, %p42
      %p44 = scmp.ne.s32.totalorder %s33, %s34
      %p45 = scmp.eq.s32.totalorder %s25, 0
      %p46 = por %p44, %p45
      %p47 = scmp.ne.s32.totalorder %s33, %s34
      %p48 = scmp.eq.s32.totalorder %s26, 1
      %p49 = por %p47, %p48
      %p51 = scmp.ne.s32.totalorder %s34, %s50
      %p52 = scmp.eq.s32.totalorder %s26, 0
      %p53 = por %p51, %p52
      %s54 = ssub.s32 %s20, %s27
      %p55 = scmp.eq.s32.totalorder %s54, 0
      %s57 = sadd.s32 %s56, 1
      %s58 = scalar_select %p55, %s56, %s57
      %p61 = pneg %p55
      %p62 = scmp.eq.s32.totalorder %s20, 1
      %p63 = por %p61, %p62
      %p64 = scmp.ne.s32.totalorder %s56, %s59
      %p65 = scmp.eq.s32.totalorder %s20, 0
      %p66 = por %p64, %p65
      %p67 = scmp.ne.s32.totalorder %s56, %s59
      %p68 = scmp.eq.s32.totalorder %s25, 1
      %p69 = por %p67, %p68
      %p70 = scmp.ne.s32.totalorder %s59, %s60
      %p71 = scmp.eq.s32.totalorder %s25, 0
      %p72 = por %p70, %p71
      %p73 = scmp.ne.s32.totalorder %s59, %s60
      %p74 = scmp.eq.s32.totalorder %s26, 1
      %p75 = por %p73, %p74
      %p77 = scmp.ne.s32.totalorder %s60, %s76
      %p78 = scmp.eq.s32.totalorder %s26, 0
      %p79 = por %p77, %p78
      %s81 = sadd.s32 %s80, 1
      %p84 = scmp.eq.s32.totalorder %s20, 1
      %p85 = scmp.ne.s32.totalorder %s80, %s82
      %p86 = scmp.eq.s32.totalorder %s20, 0
      %p87 = por %p85, %p86
      %p88 = scmp.ne.s32.totalorder %s80, %s82
      %p89 = scmp.eq.s32.totalorder %s25, 1
      %p90 = por %p88, %p89
      %p91 = scmp.ne.s32.totalorder %s82, %s83
      %p92 = scmp.eq.s32.totalorder %s25, 0
      %p93 = por %p91, %p92
      %p94 = scmp.ne.s32.totalorder %s82, %s83
      %p95 = scmp.eq.s32.totalorder %s26, 1
      %p96 = por %p94, %p95
      %p98 = scmp.ne.s32.totalorder %s83, %s97
      %p99 = scmp.eq.s32.totalorder %s26, 0
      %p100 = por %p98, %p99
      %s102 = sadd.s32 %s101, 1
      %p105 = scmp.eq.s32.totalorder %s20, 1
      %p106 = scmp.ne.s32.totalorder %s101, %s103
      %p107 = scmp.eq.s32.totalorder %s20, 0
      %p108 = por %p106, %p107
      %p109 = scmp.ne.s32.totalorder %s101, %s103
      %p110 = scmp.eq.s32.totalorder %s25, 1
      %p111 = por %p109, %p110
      %p112 = scmp.ne.s32.totalorder %s103, %s104
      %p113 = scmp.eq.s32.totalorder %s25, 0
      %p114 = por %p112, %p113
      %p115 = scmp.ne.s32.totalorder %s103, %s104
      %p116 = scmp.eq.s32.totalorder %s26, 1
      %p117 = por %p115, %p116
      %p119 = scmp.ne.s32.totalorder %s104, %s118
      %p120 = scmp.eq.s32.totalorder %s26, 0
      %p121 = por %p119, %p120
      %s123 = sadd.s32 %s122, 1
      %p126 = scmp.eq.s32.totalorder %s20, 1
      %p127 = scmp.ne.s32.totalorder %s122, %s124
      %p128 = scmp.eq.s32.totalorder %s20, 0
      %p129 = por %p127, %p128
      %p130 = scmp.ne.s32.totalorder %s122, %s124
      %p131 = scmp.eq.s32.totalorder %s25, 1
      %p132 = por %p130, %p131
      %p133 = scmp.ne.s32.totalorder %s124, %s125
      %p134 = scmp.eq.s32.totalorder %s25, 0
      %p135 = por %p133, %p134
      %p136 = scmp.ne.s32.totalorder %s124, %s125
      %p137 = scmp.eq.s32.totalorder %s26, 1
      %p138 = por %p136, %p137
      %p140 = scmp.ne.s32.totalorder %s125, %s139
      %p141 = scmp.eq.s32.totalorder %s26, 0
      %p142 = por %p140, %p141
      %s144 = sadd.s32 %s143, 1
      %p147 = scmp.eq.s32.totalorder %s20, 1
      %p148 = scmp.ne.s32.totalorder %s143, %s145
      %p149 = scmp.eq.s32.totalorder %s20, 0
      %p150 = por %p148, %p149
      %p151 = scmp.ne.s32.totalorder %s143, %s145
      %p152 = scmp.eq.s32.totalorder %s25, 1
      %p153 = por %p151, %p152
      %p154 = scmp.ne.s32.totalorder %s145, %s146
      %p155 = scmp.eq.s32.totalorder %s25, 0
      %p156 = por %p154, %p155
      %p157 = scmp.ne.s32.totalorder %s145, %s146
      %p158 = scmp.eq.s32.totalorder %s26, 1
      %p159 = por %p157, %p158
      %p161 = scmp.ne.s32.totalorder %s146, %s160
      %p162 = scmp.eq.s32.totalorder %s26, 0
      %p163 = por %p161, %p162
      %s165 = sadd.s32 %s164, 1
      %p168 = scmp.eq.s32.totalorder %s20, 1
      %p169 = scmp.ne.s32.totalorder %s164, %s166
      %p170 = scmp.eq.s32.totalorder %s20, 0
      %p171 = por %p169, %p170
      %p172 = scmp.ne.s32.totalorder %s164, %s166
      %p173 = scmp.eq.s32.totalorder %s25, 1
      %p174 = por %p172, %p173
      %p175 = scmp.ne.s32.totalorder %s166, %s167
      %p176 = scmp.eq.s32.totalorder %s25, 0
      %p177 = por %p175, %p176
      %p178 = scmp.ne.s32.totalorder %s166, %s167
      %p179 = scmp.eq.s32.totalorder %s26, 1
      %p180 = por %p178, %p179
      %p182 = scmp.ne.s32.totalorder %s167, %s181
      %p183 = scmp.eq.s32.totalorder %s26, 0
      %p184 = por %p182, %p183
      %s186 = sadd.s32 %s185, 1
      %p189 = scmp.eq.s32.totalorder %s20, 1
      %p190 = scmp.ne.s32.totalorder %s185, %s187
      %p191 = scmp.eq.s32.totalorder %s20, 0
      %p192 = por %p190, %p191
      %p193 = scmp.ne.s32.totalorder %s185, %s187
      %p194 = scmp.eq.s32.totalorder %s25, 1
      %p195 = por %p193, %p194
      %p196 = scmp.ne.s32.totalorder %s187, %s188
      %p197 = scmp.eq.s32.totalorder %s25, 0
      %p198 = por %p196, %p197
      %p199 = scmp.ne.s32.totalorder %s187, %s188
      %p200 = scmp.eq.s32.totalorder %s26, 1
      %p201 = por %p199, %p200
      %p203 = scmp.ne.s32.totalorder %s188, %s202
      %p204 = scmp.eq.s32.totalorder %s26, 0
      %p205 = por %p203, %p204
      %s206 = ssub.s32 %s20, %s27
      %p207 = scmp.eq.s32.totalorder %s206, 0
      %s209 = sadd.s32 %s208, 1
      %s210 = scalar_select %p207, %s208, %s209
      %p213 = pneg %p207
      %p214 = scmp.eq.s32.totalorder %s20, 1
      %p215 = por %p213, %p214
      %p216 = scmp.ne.s32.totalorder %s208, %s211
      %p217 = scmp.eq.s32.totalorder %s20, 0
      %p218 = por %p216, %p217
      %p219 = scmp.ne.s32.totalorder %s208, %s211
      %p220 = scmp.eq.s32.totalorder %s25, 1
      %p221 = por %p219, %p220
      %p222 = scmp.ne.s32.totalorder %s211, %s212
      %p223 = scmp.eq.s32.totalorder %s25, 0
      %p224 = por %p222, %p223
      %p225 = scmp.ne.s32.totalorder %s211, %s212
      %p226 = scmp.eq.s32.totalorder %s26, 1
      %p227 = por %p225, %p226
      %p229 = scmp.ne.s32.totalorder %s212, %s228
      %p230 = scmp.eq.s32.totalorder %s26, 0
      %p231 = por %p229, %p230
      %s232 = ssub.s32 %s20, %s27
      %p233 = scmp.eq.s32.totalorder %s232, 0
      %s235 = sadd.s32 %s234, 1
      %s236 = scalar_select %p233, %s234, %s235
      %p239 = pneg %p233
      %p240 = scmp.eq.s32.totalorder %s20, 1
      %p241 = por %p239, %p240
      %p242 = scmp.ne.s32.totalorder %s234, %s237
      %p243 = scmp.eq.s32.totalorder %s20, 0
      %p244 = por %p242, %p243
      %p245 = scmp.ne.s32.totalorder %s234, %s237
      %p246 = scmp.eq.s32.totalorder %s25, 1
      %p247 = por %p245, %p246
      %p248 = scmp.ne.s32.totalorder %s237, %s238
      %p249 = scmp.eq.s32.totalorder %s25, 0
      %p250 = por %p248, %p249
      %p251 = scmp.ne.s32.totalorder %s237, %s238
      %p252 = scmp.eq.s32.totalorder %s26, 1
      %p253 = por %p251, %p252
      %p255 = scmp.ne.s32.totalorder %s238, %s254
      %p256 = scmp.eq.s32.totalorder %s26, 0
      %p257 = por %p255, %p256
      %s258 = ssub.s32 %s20, %s27
      %p259 = scmp.eq.s32.totalorder %s258, 0
      %s261 = sadd.s32 %s260, 1
      %s262 = scalar_select %p259, %s260, %s261
      %p265 = pneg %p259
      %p266 = scmp.eq.s32.totalorder %s20, 1
      %p267 = por %p265, %p266
      %p268 = scmp.ne.s32.totalorder %s260, %s263
      %p269 = scmp.eq.s32.totalorder %s20, 0
      %p270 = por %p268, %p269
      %p271 = scmp.ne.s32.totalorder %s260, %s263
      %p272 = scmp.eq.s32.totalorder %s25, 1
      %p273 = por %p271, %p272
      %p274 = scmp.ne.s32.totalorder %s263, %s264
      %p275 = scmp.eq.s32.totalorder %s25, 0
      %p276 = por %p274, %p275
      %p277 = scmp.ne.s32.totalorder %s263, %s264
      %p278 = scmp.eq.s32.totalorder %s26, 1
      %p279 = por %p277, %p278
      %p281 = scmp.ne.s32.totalorder %s264, %s280
      %p282 = scmp.eq.s32.totalorder %s26, 0
      %p283 = por %p281, %p282
      %p284 = scmp.le.s32.totalorder 1, %s20
      %p285 = scmp.lt.s32.totalorder %s20, 3
      %p286 = pnand %p284, %p285
      %p287 = pneg %p286
      // Predicated region
      $region9: #{tag_value_forward.7} parent=5 // pred_check
        _
      $region10: #{tag_value_forward.7} parent=5 // pred_check_branch
        %289 = sbr.rel (%p286) target = $region12
      $region11: #{tag_value_forward.7} parent=5 // pred_region
        %s290 = ssub.s32 %s20, 1
        // Predicated region
        $region13: #{tag_value_forward.7} parent=11 // pred_check
          %p291 = pneg %p93
        $region14: #{tag_value_forward.7} parent=11 // pred_check_branch
          %293 = sbr.rel (%p291) target = $region16
        $region15: #{tag_value_forward.7} parent=11 // pred_region
          _
        $region16: #{tag_value_forward.7} parent=11 // pred_fallthru
          _
        // Predicated region
        $region17: #{tag_value_forward.7} parent=11 // pred_check
          %p294 = pneg %p114
        $region18: #{tag_value_forward.7} parent=11 // pred_check_branch
          %296 = sbr.rel (%p294) target = $region20
        $region19: #{tag_value_forward.7} parent=11 // pred_region
          _
        $region20: #{tag_value_forward.7} parent=11 // pred_fallthru
          _
        // Predicated region
        $region21: #{tag_value_forward.7} parent=11 // pred_check
          %p297 = pneg %p135
        $region22: #{tag_value_forward.7} parent=11 // pred_check_branch
          %299 = sbr.rel (%p297) target = $region24
        $region23: #{tag_value_forward.7} parent=11 // pred_region
          _
        $region24: #{tag_value_forward.7} parent=11 // pred_fallthru
          _
        // Predicated region
        $region25: #{tag_value_forward.7} parent=11 // pred_check
          %p300 = pneg %p156
        $region26: #{tag_value_forward.7} parent=11 // pred_check_branch
          %302 = sbr.rel (%p300) target = $region28
        $region27: #{tag_value_forward.7} parent=11 // pred_region
          _
        $region28: #{tag_value_forward.7} parent=11 // pred_fallthru
          _
        // Predicated region
        $region29: #{tag_value_forward.7} parent=11 // pred_check
          %p303 = pneg %p177
        $region30: #{tag_value_forward.7} parent=11 // pred_check_branch
          %305 = sbr.rel (%p303) target = $region32
        $region31: #{tag_value_forward.7} parent=11 // pred_region
          _
        $region32: #{tag_value_forward.7} parent=11 // pred_fallthru
          _
        // Predicated region
        $region33: #{tag_value_forward.7} parent=11 // pred_check
          %p306 = pneg %p198
        $region34: #{tag_value_forward.7} parent=11 // pred_check_branch
          %308 = sbr.rel (%p306) target = $region36
        $region35: #{tag_value_forward.7} parent=11 // pred_region
          _
        $region36: #{tag_value_forward.7} parent=11 // pred_fallthru
          _
      $region12: #{tag_value_forward.7} parent=5 // pred_fallthru
        _
      %p309 = scmp.lt.s32.totalorder %s20, 2
      // Predicated region
      $region37: #{tag_value_forward.7} parent=5 // pred_check
        %p310 = pneg %p309
      $region38: #{tag_value_forward.7} parent=5 // pred_check_branch
        %312 = sbr.rel (%p310) target = $region40
      $region39: #{tag_value_forward.7} parent=5 // pred_region
        // Predicated region
        $region41: #{tag_value_forward.7} parent=39 // pred_check
          %p313 = pneg %p40
        $region42: #{tag_value_forward.7} parent=39 // pred_check_branch
          %315 = sbr.rel (%p313) target = $region44
        $region43: #{tag_value_forward.7} parent=39 // pred_region
          %p316 = scmp.lt.s32.totalorder %s20, 1
          %s317 = scalar_select %p316, %s20, 1
          %s318 = smul.addr %s317, 4
          %s319 = smul.addr %s318, 4
          %s320 = scalar_lea.vmem %s0, %s319
        $region44: #{tag_value_forward.7} parent=39 // pred_fallthru
          _
        // Predicated region
        $region45: #{tag_value_forward.7} parent=39 // pred_check
          %p321 = pneg %p66
        $region46: #{tag_value_forward.7} parent=39 // pred_check_branch
          %323 = sbr.rel (%p321) target = $region48
        $region47: #{tag_value_forward.7} parent=39 // pred_region
          %p324 = scmp.lt.s32.totalorder %s20, 1
          %s325 = scalar_select %p324, %s20, 1
          %s326 = smul.addr %s325, 2
          %s327 = smul.addr %s326, 8
          %s328 = scalar_lea.vmem %s1, %s327
        $region48: #{tag_value_forward.7} parent=39 // pred_fallthru
          _
      $region40: #{tag_value_forward.7} parent=5 // pred_fallthru
        _
      %p329 = scmp.le.s32.totalorder 1, %s20
      %p330 = scmp.lt.s32.totalorder %s20, 3
      %p331 = pnand %p329, %p330
      %p332 = pneg %p331
      // Predicated region
      $region49: #{tag_value_forward.7} parent=5 // pred_check
        _
      $region50: #{tag_value_forward.7} parent=5 // pred_check_branch
        %334 = sbr.rel (%p331) target = $region52
      $region51: #{tag_value_forward.7} parent=5 // pred_region
        %s335 = ssub.s32 %s20, 1
        %p336 = scmp.lt.s32.totalorder %s25, 1
        %s337 = scalar_select %p336, %s25, 1
        %s338 = smul.addr %s337, 4
        %s339 = smul.addr %s338, 4
        %s340 = scalar_lea.vmem %s0, %s339
        %p341 = pneg %p46
        %p342 = pneg %p43
        %p343 = scmp.lt.s32.totalorder %s25, 1
        %s344 = scalar_select %p343, %s25, 1
        %s345 = smul.addr %s344, 2
        %s346 = smul.addr %s345, 8
        %s347 = scalar_lea.vmem %s1, %s346
        %p348 = pneg %p72
        %p349 = pneg %p69
        %p350 = pneg %p93
        %p351 = pneg %p90
        %p352 = pneg %p114
        %p353 = pneg %p111
        %p354 = pneg %p135
        %p355 = pneg %p132
        %p356 = pneg %p156
        %p357 = pneg %p153
        %p358 = pneg %p177
        %p359 = pneg %p174
        %p360 = pneg %p198
        %p361 = pneg %p195
        %p362 = pneg %p224
        %p363 = pneg %p221
        %p364 = scmp.lt.s32.totalorder %s25, 1
        %s365 = scalar_select %p364, %s25, 1
        %s366 = smul.addr %s365, 4
        %s367 = smul.addr %s366, 8
        %s368 = scalar_lea.vmem %s8, %s367
        %p369 = pneg %p250
        %p370 = pneg %p247
        %s371 = sand.u32 %s237, 1
        %s372 = scalar_lea.sflag [#allocation3], %s371
        %s373 = sand.u32 %s237, 1
        %s374 = scalar_lea.vmem [#allocation2], %s373
        %p375 = pneg %p276
        %p376 = pneg %p273
        %p377 = scmp.lt.s32.totalorder %s25, 1
        %s378 = scalar_select %p377, %s25, 1
        %s379 = smul.addr %s378, 2
        %s380 = scalar_lea.vmem %s10, %s379
        %p381 = scmp.lt.s32.totalorder %s25, 1
        %s382 = scalar_select %p381, %s25, 1
        %s383 = smul.addr %s382, 4
        %s384 = smul.addr %s383, 4
        %s385 = scalar_lea.vmem %s0, %s384
        %p386 = scmp.lt.s32.totalorder %s25, 1
        %s387 = scalar_select %p386, %s25, 1
        %s388 = smul.addr %s387, 2
        %s389 = smul.addr %s388, 8
        %s390 = scalar_lea.vmem %s1, %s389
        %p391 = scmp.lt.s32.totalorder %s25, 1
        %s392 = scalar_select %p391, %s25, 1
        %s393 = smul.addr %s392, 4
        %s394 = smul.addr %s393, 8
        %s395 = scalar_lea.vmem %s8, %s394
        %p396 = scmp.lt.s32.totalorder %s25, 1
        %s397 = scalar_select %p396, %s25, 1
        %s398 = smul.addr %s397, 2
        %s399 = scalar_lea.vmem %s10, %s398
        %v401 = vld [vmem:[%s385] sm:$0xff]
        %v402 = vld [vmem:[%s385 + $0x8] sm:$0xff]
        %v403 = vunpack.c.l.bf16 %v401
        %v404 = vunpack.c.h.bf16 %v401
        %v405 = vunpack.c.l.bf16 %v402
        %v406 = vunpack.c.h.bf16 %v402
        %v407 = vld [vmem:[%s2] sm:$0xff]
        %v408 = vld [vmem:[%s2 + $0x8] sm:$0xff]
        %v409 = vld [vmem:[%s2 + $0x10] sm:$0xff]
        %v410 = vld [vmem:[%s2 + $0x18] sm:$0xff]
        %v411 = vld [vmem:[%s2 + $0x20] sm:$0xff]
        %v412 = vld [vmem:[%s2 + $0x28] sm:$0xff]
        %v413 = vld [vmem:[%s2 + $0x30] sm:$0xff]
        %v414 = vld [vmem:[%s2 + $0x38] sm:$0xff]
        %v415 = vld [vmem:[%s2 + $0x40] sm:$0xff]
        %v416 = vld [vmem:[%s2 + $0x48] sm:$0xff]
        %v417 = vld [vmem:[%s2 + $0x50] sm:$0xff]
        %v418 = vld [vmem:[%s2 + $0x58] sm:$0xff]
        %v419 = vld [vmem:[%s2 + $0x60] sm:$0xff]
        %v420 = vld [vmem:[%s2 + $0x68] sm:$0xff]
        %v421 = vld [vmem:[%s2 + $0x70] sm:$0xff]
        %v422 = vld [vmem:[%s2 + $0x78] sm:$0xff]
        %v423 = vld [vmem:[%s2 + $0x80] sm:$0xff]
        %v424 = vld [vmem:[%s2 + $0x88] sm:$0xff]
        %v425 = vld [vmem:[%s2 + $0x90] sm:$0xff]
        %v426 = vld [vmem:[%s2 + $0x98] sm:$0xff]
        %v427 = vld [vmem:[%s2 + $0xa0] sm:$0xff]
        %v428 = vld [vmem:[%s2 + $0xa8] sm:$0xff]
        %v429 = vld [vmem:[%s2 + $0xb0] sm:$0xff]
        %v430 = vld [vmem:[%s2 + $0xb8] sm:$0xff]
        %v431 = vld [vmem:[%s2 + $0xc0] sm:$0xff]
        %v432 = vld [vmem:[%s2 + $0xc8] sm:$0xff]
        %v433 = vld [vmem:[%s2 + $0xd0] sm:$0xff]
        %v434 = vld [vmem:[%s2 + $0xd8] sm:$0xff]
        %v435 = vld [vmem:[%s2 + $0xe0] sm:$0xff]
        %v436 = vld [vmem:[%s2 + $0xe8] sm:$0xff]
        %v437 = vld [vmem:[%s2 + $0xf0] sm:$0xff]
        %v438 = vld [vmem:[%s2 + $0xf8] sm:$0xff]
        %v439 = vld [vmem:[%s3] sm:$0x3]
        %v441 = vlaneseq
        %v442 = vshrl.u32 %v441, 7
        %v443 = vsub.s32 0, %v442
        %v444 = vrot.slane %v439, %v443
        %v445 = vlaneseq
        %v446 = vshrl.u32 %v445, 7
        %v447 = vsub.s32 1, %v446
        %v448 = vrot.slane %v439, %v447
        %v453 = vunpack.c.l.b16 %v401
        %v454 = vunpack.c.h.b16 %v401
        %v455 = vunpack.c.l.b16 %v402
        %v456 = vunpack.c.h.b16 %v402
        %v457 = vpack.c.b16 %v455, %v453
        %v458 = vpack.c.b16 %v456, %v454
        %v493 = vunpack.c.l.b16 %v407
        %v494 = vunpack.c.h.b16 %v407
        %v495 = vunpack.c.l.b16 %v408
        %v496 = vunpack.c.h.b16 %v408
        %v497 = vunpack.c.l.b16 %v409
        %v498 = vunpack.c.h.b16 %v409
        %v499 = vunpack.c.l.b16 %v410
        %v500 = vunpack.c.h.b16 %v410
        %v501 = vunpack.c.l.b16 %v411
        %v502 = vunpack.c.h.b16 %v411
        %v503 = vunpack.c.l.b16 %v412
        %v504 = vunpack.c.h.b16 %v412
        %v505 = vunpack.c.l.b16 %v413
        %v506 = vunpack.c.h.b16 %v413
        %v507 = vunpack.c.l.b16 %v414
        %v508 = vunpack.c.h.b16 %v414
        %v509 = vunpack.c.l.b16 %v415
        %v510 = vunpack.c.h.b16 %v415
        %v511 = vunpack.c.l.b16 %v416
        %v512 = vunpack.c.h.b16 %v416
        %v513 = vunpack.c.l.b16 %v417
        %v514 = vunpack.c.h.b16 %v417
        %v515 = vunpack.c.l.b16 %v418
        %v516 = vunpack.c.h.b16 %v418
        %v517 = vunpack.c.l.b16 %v419
        %v518 = vunpack.c.h.b16 %v419
        %v519 = vunpack.c.l.b16 %v420
        %v520 = vunpack.c.h.b16 %v420
        %v521 = vunpack.c.l.b16 %v421
        %v522 = vunpack.c.h.b16 %v421
        %v523 = vunpack.c.l.b16 %v422
        %v524 = vunpack.c.h.b16 %v422
        %v525 = vunpack.c.l.b16 %v423
        %v526 = vunpack.c.h.b16 %v423
        %v527 = vunpack.c.l.b16 %v424
        %v528 = vunpack.c.h.b16 %v424
        %v529 = vunpack.c.l.b16 %v425
        %v530 = vunpack.c.h.b16 %v425
        %v531 = vunpack.c.l.b16 %v426
        %v532 = vunpack.c.h.b16 %v426
        %v533 = vunpack.c.l.b16 %v427
        %v534 = vunpack.c.h.b16 %v427
        %v535 = vunpack.c.l.b16 %v428
        %v536 = vunpack.c.h.b16 %v428
        %v537 = vunpack.c.l.b16 %v429
        %v538 = vunpack.c.h.b16 %v429
        %v539 = vunpack.c.l.b16 %v430
        %v540 = vunpack.c.h.b16 %v430
        %v541 = vunpack.c.l.b16 %v431
        %v542 = vunpack.c.h.b16 %v431
        %v543 = vunpack.c.l.b16 %v432
        %v544 = vunpack.c.h.b16 %v432
        %v545 = vunpack.c.l.b16 %v433
        %v546 = vunpack.c.h.b16 %v433
        %v547 = vunpack.c.l.b16 %v434
        %v548 = vunpack.c.h.b16 %v434
        %v549 = vunpack.c.l.b16 %v435
        %v550 = vunpack.c.h.b16 %v435
        %v551 = vunpack.c.l.b16 %v436
        %v552 = vunpack.c.h.b16 %v436
        %v553 = vunpack.c.l.b16 %v437
        %v554 = vunpack.c.h.b16 %v437
        %v555 = vunpack.c.l.b16 %v438
        %v556 = vunpack.c.h.b16 %v438
        %v557 = vpack.c.b16 %v495, %v493
        %v558 = vpack.c.b16 %v496, %v494
        %v559 = vpack.c.b16 %v499, %v497
        %v560 = vpack.c.b16 %v500, %v498
        %v561 = vpack.c.b16 %v503, %v501
        %v562 = vpack.c.b16 %v504, %v502
        %v563 = vpack.c.b16 %v507, %v505
        %v564 = vpack.c.b16 %v508, %v506
        %v565 = vpack.c.b16 %v511, %v509
        %v566 = vpack.c.b16 %v512, %v510
        %v567 = vpack.c.b16 %v515, %v513
        %v568 = vpack.c.b16 %v516, %v514
        %v569 = vpack.c.b16 %v519, %v517
        %v570 = vpack.c.b16 %v520, %v518
        %v571 = vpack.c.b16 %v523, %v521
        %v572 = vpack.c.b16 %v524, %v522
        %v573 = vpack.c.b16 %v527, %v525
        %v574 = vpack.c.b16 %v528, %v526
        %v575 = vpack.c.b16 %v531, %v529
        %v576 = vpack.c.b16 %v532, %v530
        %v577 = vpack.c.b16 %v535, %v533
        %v578 = vpack.c.b16 %v536, %v534
        %v579 = vpack.c.b16 %v539, %v537
        %v580 = vpack.c.b16 %v540, %v538
        %v581 = vpack.c.b16 %v543, %v541
        %v582 = vpack.c.b16 %v544, %v542
        %v583 = vpack.c.b16 %v547, %v545
        %v584 = vpack.c.b16 %v548, %v546
        %v585 = vpack.c.b16 %v551, %v549
        %v586 = vpack.c.b16 %v552, %v550
        %v587 = vpack.c.b16 %v555, %v553
        %v588 = vpack.c.b16 %v556, %v554
        %621 = vmatprep.subr.bf16.mxu0 %v572
        %622 = vmatpush1.bf16.msra.mxu0 %v571
        %623 = vmatprep.subr.bf16.mxu0 %v570
        %624 = vmatpush1.bf16.msra.mxu0 %v569
        %625 = vmatprep.subr.bf16.mxu0 %v568
        %626 = vmatpush1.bf16.msra.mxu0 %v567
        %627 = vmatprep.subr.bf16.mxu0 %v566
        %628 = vmatpush1.bf16.msra.mxu0 %v565
        %629 = vmatprep.subr.bf16.mxu0 %v564
        %630 = vmatpush1.bf16.msra.mxu0 %v563
        %631 = vmatprep.subr.bf16.mxu0 %v562
        %632 = vmatpush1.bf16.msra.mxu0 %v561
        %633 = vmatprep.subr.bf16.mxu0 %v560
        %634 = vmatpush1.bf16.msra.mxu0 %v559
        %635 = vmatprep.subr.bf16.mxu0 %v558
        %636 = vmatpush1.bf16.msra.mxu0 %v557
        %637 = vmatprep.subr.bf16.mxu0 %v588
        %638 = vmatpush2.bf16.msra.mxu0 %v587
        %639 = vmatprep.subr.bf16.mxu0 %v586
        %640 = vmatpush2.bf16.msra.mxu0 %v585
        %641 = vmatprep.subr.bf16.mxu0 %v584
        %642 = vmatpush2.bf16.msra.mxu0 %v583
        %643 = vmatprep.subr.bf16.mxu0 %v582
        %644 = vmatpush2.bf16.msra.mxu0 %v581
        %645 = vmatprep.subr.bf16.mxu0 %v580
        %646 = vmatpush2.bf16.msra.mxu0 %v579
        %647 = vmatprep.subr.bf16.mxu0 %v578
        %648 = vmatpush2.bf16.msra.mxu0 %v577
        %649 = vmatprep.subr.bf16.mxu0 %v576
        %650 = vmatpush2.bf16.msra.mxu0 %v575
        %651 = vmatprep.subr.bf16.mxu0 %v574
        %652 = vmatpush2.bf16.msra.mxu0 %v573
        %653 = vmatprep.mubr.bf16.mxu0 %v458
        %654 = vmatmul.mubr.bf16.gmra.mxu0 %v457
        %v655 = vpop.f32.mrf.mxu0
        %v656 = vadd.f32 %v444, %v655
        %v657 = vpop.f32.mrf.mxu0
        %v658 = vadd.f32 %v448, %v657
        %v659 = vpop.f32.mrf.mxu0
        %v660 = vadd.f32 %v444, %v659
        %v661 = vpop.f32.mrf.mxu0
        %v662 = vadd.f32 %v448, %v661
        %663 = vdwg.mxu0
        %664 = vst [vmem:[%s395] sm:$0xff] %v656
        %665 = vst [vmem:[%s395 + $0x8] sm:$0xff] %v658
        %666 = vst [vmem:[%s395 + $0x10] sm:$0xff] %v660
        %667 = vst [vmem:[%s395 + $0x18] sm:$0xff] %v662
        %v668 = vld [vmem:[%s4] sm:$0xff]
        %v669 = vld [vmem:[%s4 + $0x8] sm:$0xff]
        %v670 = vld [vmem:[%s4 + $0x10] sm:$0xff]
        %v671 = vld [vmem:[%s4 + $0x18] sm:$0xff]
        %v672 = vld [vmem:[%s4 + $0x20] sm:$0xff]
        %v673 = vld [vmem:[%s4 + $0x28] sm:$0xff]
        %v674 = vld [vmem:[%s4 + $0x30] sm:$0xff]
        %v675 = vld [vmem:[%s4 + $0x38] sm:$0xff]
        %v676 = vld [vmem:[%s4 + $0x40] sm:$0xff]
        %v677 = vld [vmem:[%s4 + $0x48] sm:$0xff]
        %v678 = vld [vmem:[%s4 + $0x50] sm:$0xff]
        %v679 = vld [vmem:[%s4 + $0x58] sm:$0xff]
        %v680 = vld [vmem:[%s4 + $0x60] sm:$0xff]
        %v681 = vld [vmem:[%s4 + $0x68] sm:$0xff]
        %v682 = vld [vmem:[%s4 + $0x70] sm:$0xff]
        %v683 = vld [vmem:[%s4 + $0x78] sm:$0xff]
        %v684 = vld [vmem:[%s4 + $0x80] sm:$0xff]
        %v685 = vld [vmem:[%s4 + $0x88] sm:$0xff]
        %v686 = vld [vmem:[%s4 + $0x90] sm:$0xff]
        %v687 = vld [vmem:[%s4 + $0x98] sm:$0xff]
        %v688 = vld [vmem:[%s4 + $0xa0] sm:$0xff]
        %v689 = vld [vmem:[%s4 + $0xa8] sm:$0xff]
        %v690 = vld [vmem:[%s4 + $0xb0] sm:$0xff]
        %v691 = vld [vmem:[%s4 + $0xb8] sm:$0xff]
        %v692 = vld [vmem:[%s4 + $0xc0] sm:$0xff]
        %v693 = vld [vmem:[%s4 + $0xc8] sm:$0xff]
        %v694 = vld [vmem:[%s4 + $0xd0] sm:$0xff]
        %v695 = vld [vmem:[%s4 + $0xd8] sm:$0xff]
        %v696 = vld [vmem:[%s4 + $0xe0] sm:$0xff]
        %v697 = vld [vmem:[%s4 + $0xe8] sm:$0xff]
        %v698 = vld [vmem:[%s4 + $0xf0] sm:$0xff]
        %v699 = vld [vmem:[%s4 + $0xf8] sm:$0xff]
        %v700 = vld [vmem:[%s5] sm:$0x3]
        %v701 = vpack.c.b16 %v453, %v453
        %v702 = vpack.c.b16 %v454, %v454
        %v737 = vunpack.c.l.b16 %v668
        %v738 = vunpack.c.h.b16 %v668
        %v739 = vunpack.c.l.b16 %v669
        %v740 = vunpack.c.h.b16 %v669
        %v741 = vunpack.c.l.b16 %v670
        %v742 = vunpack.c.h.b16 %v670
        %v743 = vunpack.c.l.b16 %v671
        %v744 = vunpack.c.h.b16 %v671
        %v745 = vunpack.c.l.b16 %v672
        %v746 = vunpack.c.h.b16 %v672
        %v747 = vunpack.c.l.b16 %v673
        %v748 = vunpack.c.h.b16 %v673
        %v749 = vunpack.c.l.b16 %v674
        %v750 = vunpack.c.h.b16 %v674
        %v751 = vunpack.c.l.b16 %v675
        %v752 = vunpack.c.h.b16 %v675
        %v753 = vunpack.c.l.b16 %v676
        %v754 = vunpack.c.h.b16 %v676
        %v755 = vunpack.c.l.b16 %v677
        %v756 = vunpack.c.h.b16 %v677
        %v757 = vunpack.c.l.b16 %v678
        %v758 = vunpack.c.h.b16 %v678
        %v759 = vunpack.c.l.b16 %v679
        %v760 = vunpack.c.h.b16 %v679
        %v761 = vunpack.c.l.b16 %v680
        %v762 = vunpack.c.h.b16 %v680
        %v763 = vunpack.c.l.b16 %v681
        %v764 = vunpack.c.h.b16 %v681
        %v765 = vunpack.c.l.b16 %v682
        %v766 = vunpack.c.h.b16 %v682
        %v767 = vunpack.c.l.b16 %v683
        %v768 = vunpack.c.h.b16 %v683
        %v769 = vunpack.c.l.b16 %v684
        %v770 = vunpack.c.h.b16 %v684
        %v771 = vunpack.c.l.b16 %v685
        %v772 = vunpack.c.h.b16 %v685
        %v773 = vunpack.c.l.b16 %v686
        %v774 = vunpack.c.h.b16 %v686
        %v775 = vunpack.c.l.b16 %v687
        %v776 = vunpack.c.h.b16 %v687
        %v777 = vunpack.c.l.b16 %v688
        %v778 = vunpack.c.h.b16 %v688
        %v779 = vunpack.c.l.b16 %v689
        %v780 = vunpack.c.h.b16 %v689
        %v781 = vunpack.c.l.b16 %v690
        %v782 = vunpack.c.h.b16 %v690
        %v783 = vunpack.c.l.b16 %v691
        %v784 = vunpack.c.h.b16 %v691
        %v785 = vunpack.c.l.b16 %v692
        %v786 = vunpack.c.h.b16 %v692
        %v787 = vunpack.c.l.b16 %v693
        %v788 = vunpack.c.h.b16 %v693
        %v789 = vunpack.c.l.b16 %v694
        %v790 = vunpack.c.h.b16 %v694
        %v791 = vunpack.c.l.b16 %v695
        %v792 = vunpack.c.h.b16 %v695
        %v793 = vunpack.c.l.b16 %v696
        %v794 = vunpack.c.h.b16 %v696
        %v795 = vunpack.c.l.b16 %v697
        %v796 = vunpack.c.h.b16 %v697
        %v797 = vunpack.c.l.b16 %v698
        %v798 = vunpack.c.h.b16 %v698
        %v799 = vunpack.c.l.b16 %v699
        %v800 = vunpack.c.h.b16 %v699
        %v801 = vpack.c.b16 %v739, %v737
        %v802 = vpack.c.b16 %v740, %v738
        %v803 = vpack.c.b16 %v743, %v741
        %v804 = vpack.c.b16 %v744, %v742
        %v805 = vpack.c.b16 %v747, %v745
        %v806 = vpack.c.b16 %v748, %v746
        %v807 = vpack.c.b16 %v751, %v749
        %v808 = vpack.c.b16 %v752, %v750
        %v809 = vpack.c.b16 %v755, %v753
        %v810 = vpack.c.b16 %v756, %v754
        %v811 = vpack.c.b16 %v759, %v757
        %v812 = vpack.c.b16 %v760, %v758
        %v813 = vpack.c.b16 %v763, %v761
        %v814 = vpack.c.b16 %v764, %v762
        %v815 = vpack.c.b16 %v767, %v765
        %v816 = vpack.c.b16 %v768, %v766
        %v817 = vpack.c.b16 %v771, %v769
        %v818 = vpack.c.b16 %v772, %v770
        %v819 = vpack.c.b16 %v775, %v773
        %v820 = vpack.c.b16 %v776, %v774
        %v821 = vpack.c.b16 %v779, %v777
        %v822 = vpack.c.b16 %v780, %v778
        %v823 = vpack.c.b16 %v783, %v781
        %v824 = vpack.c.b16 %v784, %v782
        %v825 = vpack.c.b16 %v787, %v785
        %v826 = vpack.c.b16 %v788, %v786
        %v827 = vpack.c.b16 %v791, %v789
        %v828 = vpack.c.b16 %v792, %v790
        %v829 = vpack.c.b16 %v795, %v793
        %v830 = vpack.c.b16 %v796, %v794
        %v831 = vpack.c.b16 %v799, %v797
        %v832 = vpack.c.b16 %v800, %v798
        %v866 = vlaneseq
        %v867 = vshrl.u32 %v866, 7
        %v868 = vsub.s32 0, %v867
        %v869 = vrot.slane %v700, %v868
        %v870 = vlaneseq
        %v871 = vshrl.u32 %v870, 7
        %v872 = vsub.s32 1, %v871
        %v873 = vrot.slane %v700, %v872
        %876 = vmatprep.subr.bf16.mxu0 %v816
        %877 = vmatpush1.bf16.msra.mxu0 %v815
        %878 = vmatprep.subr.bf16.mxu0 %v814
        %879 = vmatpush1.bf16.msra.mxu0 %v813
        %880 = vmatprep.subr.bf16.mxu0 %v812
        %881 = vmatpush1.bf16.msra.mxu0 %v811
        %882 = vmatprep.subr.bf16.mxu0 %v810
        %883 = vmatpush1.bf16.msra.mxu0 %v809
        %884 = vmatprep.subr.bf16.mxu0 %v808
        %885 = vmatpush1.bf16.msra.mxu0 %v807
        %886 = vmatprep.subr.bf16.mxu0 %v806
        %887 = vmatpush1.bf16.msra.mxu0 %v805
        %888 = vmatprep.subr.bf16.mxu0 %v804
        %889 = vmatpush1.bf16.msra.mxu0 %v803
        %890 = vmatprep.subr.bf16.mxu0 %v802
        %891 = vmatpush1.bf16.msra.mxu0 %v801
        %892 = vmatprep.subr.bf16.mxu0 %v832
        %893 = vmatpush2.bf16.msra.mxu0 %v831
        %894 = vmatprep.subr.bf16.mxu0 %v830
        %895 = vmatpush2.bf16.msra.mxu0 %v829
        %896 = vmatprep.subr.bf16.mxu0 %v828
        %897 = vmatpush2.bf16.msra.mxu0 %v827
        %898 = vmatprep.subr.bf16.mxu0 %v826
        %899 = vmatpush2.bf16.msra.mxu0 %v825
        %900 = vmatprep.subr.bf16.mxu0 %v824
        %901 = vmatpush2.bf16.msra.mxu0 %v823
        %902 = vmatprep.subr.bf16.mxu0 %v822
        %903 = vmatpush2.bf16.msra.mxu0 %v821
        %904 = vmatprep.subr.bf16.mxu0 %v820
        %905 = vmatpush2.bf16.msra.mxu0 %v819
        %906 = vmatprep.subr.bf16.mxu0 %v818
        %907 = vmatpush2.bf16.msra.mxu0 %v817
        %908 = vmatprep.mubr.bf16.mxu0 %v702
        %909 = vmatmul.mubr.bf16.gmra.mxu0 %v701
        %v910 = vpop.f32.mrf.mxu0
        %v911 = vadd.f32 %v869, %v910
        %v912 = vpop.f32.mrf.mxu0
        %v913 = vadd.f32 %v873, %v912
        %v914 = vpop.f32.mrf.mxu0
        %v915 = vpop.f32.mrf.mxu0
        %916 = vdwg.mxu0
        %v917 = vtanh.pop %v911
        %v918 = vtanh.pop %v913
        %v919 = vpack.c.bf16 %v917, %v917
        %v920 = vpack.c.bf16 %v918, %v918
        %v921 = vld [vmem:[%s6] sm:$0xf]
        %v922 = vld [vmem:[%s6 + $0x4] sm:$0xf]
        %v923 = vld [vmem:[%s6 + $0x8] sm:$0xf]
        %v924 = vld [vmem:[%s6 + $0xc] sm:$0xf]
        %v925 = vld [vmem:[%s6 + $0x10] sm:$0xf]
        %v926 = vld [vmem:[%s6 + $0x14] sm:$0xf]
        %v927 = vld [vmem:[%s6 + $0x18] sm:$0xf]
        %v928 = vld [vmem:[%s6 + $0x1c] sm:$0xf]
        %v929 = vld [vmem:[%s6 + $0x20] sm:$0xf]
        %v930 = vld [vmem:[%s6 + $0x24] sm:$0xf]
        %v931 = vld [vmem:[%s6 + $0x28] sm:$0xf]
        %v932 = vld [vmem:[%s6 + $0x2c] sm:$0xf]
        %v933 = vld [vmem:[%s6 + $0x30] sm:$0xf]
        %v934 = vld [vmem:[%s6 + $0x34] sm:$0xf]
        %v935 = vld [vmem:[%s6 + $0x38] sm:$0xf]
        %v936 = vld [vmem:[%s6 + $0x3c] sm:$0xf]
        %v937 = vld [vmem:[%s6 + $0x40] sm:$0xf]
        %v938 = vld [vmem:[%s6 + $0x44] sm:$0xf]
        %v939 = vld [vmem:[%s6 + $0x48] sm:$0xf]
        %v940 = vld [vmem:[%s6 + $0x4c] sm:$0xf]
        %v941 = vld [vmem:[%s6 + $0x50] sm:$0xf]
        %v942 = vld [vmem:[%s6 + $0x54] sm:$0xf]
        %v943 = vld [vmem:[%s6 + $0x58] sm:$0xf]
        %v944 = vld [vmem:[%s6 + $0x5c] sm:$0xf]
        %v945 = vld [vmem:[%s6 + $0x60] sm:$0xf]
        %v946 = vld [vmem:[%s6 + $0x64] sm:$0xf]
        %v947 = vld [vmem:[%s6 + $0x68] sm:$0xf]
        %v948 = vld [vmem:[%s6 + $0x6c] sm:$0xf]
        %v949 = vld [vmem:[%s6 + $0x70] sm:$0xf]
        %v950 = vld [vmem:[%s6 + $0x74] sm:$0xf]
        %v951 = vld [vmem:[%s6 + $0x78] sm:$0xf]
        %v952 = vld [vmem:[%s6 + $0x7c] sm:$0xf]
        %v953 = vld [vmem:[%s7] sm:$0x1]
        %v986 = vunpack.c.l.b16 %v921
        %v987 = vunpack.c.l.b16 %v922
        %v988 = vunpack.c.l.b16 %v923
        %v989 = vunpack.c.l.b16 %v924
        %v990 = vunpack.c.l.b16 %v925
        %v991 = vunpack.c.l.b16 %v926
        %v992 = vunpack.c.l.b16 %v927
        %v993 = vunpack.c.l.b16 %v928
        %v994 = vunpack.c.l.b16 %v929
        %v995 = vunpack.c.l.b16 %v930
        %v996 = vunpack.c.l.b16 %v931
        %v997 = vunpack.c.l.b16 %v932
        %v998 = vunpack.c.l.b16 %v933
        %v999 = vunpack.c.l.b16 %v934
        %v1000 = vunpack.c.l.b16 %v935
        %v1001 = vunpack.c.l.b16 %v936
        %v1002 = vunpack.c.l.b16 %v937
        %v1003 = vunpack.c.l.b16 %v938
        %v1004 = vunpack.c.l.b16 %v939
        %v1005 = vunpack.c.l.b16 %v940
        %v1006 = vunpack.c.l.b16 %v941
        %v1007 = vunpack.c.l.b16 %v942
        %v1008 = vunpack.c.l.b16 %v943
        %v1009 = vunpack.c.l.b16 %v944
        %v1010 = vunpack.c.l.b16 %v945
        %v1011 = vunpack.c.l.b16 %v946
        %v1012 = vunpack.c.l.b16 %v947
        %v1013 = vunpack.c.l.b16 %v948
        %v1014 = vunpack.c.l.b16 %v949
        %v1015 = vunpack.c.l.b16 %v950
        %v1016 = vunpack.c.l.b16 %v951
        %v1017 = vunpack.c.l.b16 %v952
        %v1018 = vpack.c.b16 %v987, %v986
        %v1019 = vpack.c.b16 %v989, %v988
        %v1020 = vpack.c.b16 %v991, %v990
        %v1021 = vpack.c.b16 %v993, %v992
        %v1022 = vpack.c.b16 %v995, %v994
        %v1023 = vpack.c.b16 %v997, %v996
        %v1024 = vpack.c.b16 %v999, %v998
        %v1025 = vpack.c.b16 %v1001, %v1000
        %v1026 = vpack.c.b16 %v1003, %v1002
        %v1027 = vpack.c.b16 %v1005, %v1004
        %v1028 = vpack.c.b16 %v1007, %v1006
        %v1029 = vpack.c.b16 %v1009, %v1008
        %v1030 = vpack.c.b16 %v1011, %v1010
        %v1031 = vpack.c.b16 %v1013, %v1012
        %v1032 = vpack.c.b16 %v1015, %v1014
        %v1033 = vpack.c.b16 %v1017, %v1016
        %1050 = vmatprep.subr.bf16.mxu0 0
        %1051 = vmatpush1.bf16.msra.mxu0 %v1025
        %1052 = vmatprep.subr.bf16.mxu0 0
        %1053 = vmatpush1.bf16.msra.mxu0 %v1024
        %1054 = vmatprep.subr.bf16.mxu0 0
        %1055 = vmatpush1.bf16.msra.mxu0 %v1023
        %1056 = vmatprep.subr.bf16.mxu0 0
        %1057 = vmatpush1.bf16.msra.mxu0 %v1022
        %1058 = vmatprep.subr.bf16.mxu0 0
        %1059 = vmatpush1.bf16.msra.mxu0 %v1021
        %1060 = vmatprep.subr.bf16.mxu0 0
        %1061 = vmatpush1.bf16.msra.mxu0 %v1020
        %1062 = vmatprep.subr.bf16.mxu0 0
        %1063 = vmatpush1.bf16.msra.mxu0 %v1019
        %1064 = vmatprep.subr.bf16.mxu0 0
        %1065 = vmatpush1.bf16.msra.mxu0 %v1018
        %1066 = vmatprep.subr.bf16.mxu0 0
        %1067 = vmatpush2.bf16.msra.mxu0 %v1033
        %1068 = vmatprep.subr.bf16.mxu0 0
        %1069 = vmatpush2.bf16.msra.mxu0 %v1032
        %1070 = vmatprep.subr.bf16.mxu0 0
        %1071 = vmatpush2.bf16.msra.mxu0 %v1031
        %1072 = vmatprep.subr.bf16.mxu0 0
        %1073 = vmatpush2.bf16.msra.mxu0 %v1030
        %1074 = vmatprep.subr.bf16.mxu0 0
        %1075 = vmatpush2.bf16.msra.mxu0 %v1029
        %1076 = vmatprep.subr.bf16.mxu0 0
        %1077 = vmatpush2.bf16.msra.mxu0 %v1028
        %1078 = vmatprep.subr.bf16.mxu0 0
        %1079 = vmatpush2.bf16.msra.mxu0 %v1027
        %1080 = vmatprep.subr.bf16.mxu0 0
        %1081 = vmatpush2.bf16.msra.mxu0 %v1026
        %1082 = vmatprep.mubr.bf16.mxu0 %v920
        %1083 = vmatmul.mubr.bf16.gmra.mxu0 %v919
        %v1084 = vpop.f32.mrf.mxu0
        %v1085 = vadd.f32 %v953, %v1084
        %v1086 = vpop.f32.mrf.mxu0
        %v1087 = vpop.f32.mrf.mxu0
        %v1088 = vpop.f32.mrf.mxu0
        %1089 = vdwg.mxu0
        %1090 = vst [vmem:[%s374] sm:$0x1] %v1085
        %v1091 = vld [vmem:[%s390] sm:$0xff]
        %v1092 = vld [vmem:[%s390 + $0x8] sm:$0xff]
        %1094 = vset.pattern.permute.xlu0 0
        %1095 = vperm.xlu0 %1094, %v1091
        %v1096 = vpop.permute.xlu0 %1095
        %1099 = vset.pattern.permute.xlu0 0
        %1100 = vperm.xlu0 %1099, %v1092
        %v1101 = vpop.permute.xlu0 %1100
        %v1103 = vmul.f32 %v403, %v1096
        %v1104 = vmul.f32 %v404, %v1096
        %v1105 = vmul.f32 %v405, %v1101
        %v1106 = vmul.f32 %v406, %v1101
        %v1107 = vadd.f32 %v1103, %v1105
        %v1108 = vrot.slane %v1107, 4
        %v1109 = vadd.f32 %v1107, %v1108
        %v1110 = vrot.slane %v1109, 2
        %v1111 = vadd.f32 %v1109, %v1110
        %v1112 = vrot.slane %v1111, 1
        %v1113 = vadd.f32 %v1111, %v1112
        %v1114 = vadd.f32 %v1104, %v1106
        %v1115 = vrot.slane %v1114, 4
        %v1116 = vadd.f32 %v1114, %v1115
        %v1117 = vrot.slane %v1116, 2
        %v1118 = vadd.f32 %v1116, %v1117
        %v1119 = vrot.slane %v1118, 1
        %v1120 = vadd.f32 %v1118, %v1119
        %vm1121 = vcmask 7168
        %v1122 = vsel %vm1121, %v1091, 0.0
        %v1123 = vsel %vm1121, %v1092, 0.0
        %v1124 = vadd.f32 %v1122, %v1123
        %v1125 = vrot.slane %v1124, 4
        %v1126 = vadd.f32 %v1124, %v1125
        %v1127 = vrot.slane %v1126, 2
        %v1128 = vadd.f32 %v1126, %v1127
        %v1129 = vrot.slane %v1128, 1
        %v1130 = vadd.f32 %v1128, %v1129
        %1132 = vset.pattern.permute.xlu0 0
        %1133 = vperm.xlu0 %1132, %v1130
        %v1134 = vpop.permute.xlu0 %1133
        %v1136 = vrcp.pop %v1134
        %v1137 = vmul.f32 %v1113, %v1136
        %v1138 = vmul.f32 %v1120, %v1136
        %v1141 = vcombine.low %v1137, %v1138
        %v1143 = vunpack.c.l.s4 1966171168
        %v1144 = vunpack.c.0.s8 %v1143
        %v1145 = vlaneseq
        %v1146 = vshrl.u32 %v1145, 7
        %v1147 = vsub.s32 %v1144, %v1146
        %v1148 = vrot.slane %v1141, %v1147
        %v1150 = vunpack.c.l.s4 1966171168
        %v1151 = vunpack.c.0.s8 %v1150
        %v1152 = vlaneseq
        %v1153 = vshrl.u32 %v1152, 7
        %v1154 = vsub.s32 %v1151, %v1153
        %v1155 = vrot.slane %v1148, %v1154
        %v1157 = vlaneseq
        %vm1158 = vcmp.ge.s32.totalorder %v1157, 0
        %vm1159 = vcmp.lt.s32.totalorder %v1157, 256
        %vm1160 = vmand %vm1158, %vm1159
        %1161 = vst.msk [vmem:[%s399] sm:$0x3] %vm1160, %v1155
        %p1162 = scmp.lt.s32.totalorder %s25, 1
        %s1163 = scalar_select %p1162, %s25, 1
        %s1164 = smul.addr %s1163, 4
        %s1165 = smul.addr %s1164, 8
        %s1166 = scalar_lea.vmem %s8, %s1165
        %s1167 = sand.u32 %s237, 1
        %s1168 = scalar_lea.sflag [#allocation3], %s1167
        %s1169 = sand.u32 %s237, 1
        %s1170 = scalar_lea.vmem [#allocation2], %s1169
        %p1171 = scmp.lt.s32.totalorder %s25, 1
        %s1172 = scalar_select %p1171, %s25, 1
        %s1173 = smul.addr %s1172, 2
        %s1174 = scalar_lea.vmem %s10, %s1173
        // Predicated region
        $region53: #{tag_value_forward.7} parent=51 // pred_check
          %p1175 = pneg %p221
        $region54: #{tag_value_forward.7} parent=51 // pred_check_branch
          %1177 = sbr.rel (%p1175) target = $region56
        $region55: #{tag_value_forward.7} parent=51 // pred_region
          _
        $region56: #{tag_value_forward.7} parent=51 // pred_fallthru
          _
        // Predicated region
        $region57: #{tag_value_forward.7} parent=51 // pred_check
          %p1178 = pneg %p247
        $region58: #{tag_value_forward.7} parent=51 // pred_check_branch
          %1180 = sbr.rel (%p1178) target = $region60
        $region59: #{tag_value_forward.7} parent=51 // pred_region
          %s1182 = ssub.s32 16, 16
          %1183 = vsyncadd %s1168, %s1182
          %s1184 = smul.addr %s25, 16
          %s1185 = scalar_lea.hbm %s9, %s1184
          %s1187 = sshll.u32 %s1170, 4
          %s1188 = int_to_ptr.vmem [resolvable:$true] %s1187
          %1190 = dma.vmem_to_hbm [thread:$0]  %s1188, 16, %s1185, %s1168
        $region60: #{tag_value_forward.7} parent=51 // pred_fallthru
          _
        // Predicated region
        $region61: #{tag_value_forward.7} parent=51 // pred_check
          %p1191 = pneg %p273
        $region62: #{tag_value_forward.7} parent=51 // pred_check_branch
          %1193 = sbr.rel (%p1191) target = $region64
        $region63: #{tag_value_forward.7} parent=51 // pred_region
          _
        $region64: #{tag_value_forward.7} parent=51 // pred_fallthru
          _
      $region52: #{tag_value_forward.7} parent=5 // pred_fallthru
        _
      %p1194 = scmp.le.s32.totalorder 2, %s20
      // Predicated region
      $region65: #{tag_value_forward.7} parent=5 // pred_check
        %p1195 = pneg %p1194
      $region66: #{tag_value_forward.7} parent=5 // pred_check_branch
        %1197 = sbr.rel (%p1195) target = $region68
      $region67: #{tag_value_forward.7} parent=5 // pred_region
        %s1198 = ssub.s32 %s20, 2
        // Predicated region
        $region69: #{tag_value_forward.7} parent=67 // pred_check
          %p1199 = pneg %p227
        $region70: #{tag_value_forward.7} parent=67 // pred_check_branch
          %1201 = sbr.rel (%p1199) target = $region72
        $region71: #{tag_value_forward.7} parent=67 // pred_region
          %p1202 = scmp.lt.s32.totalorder %s26, 1
          %s1203 = scalar_select %p1202, %s26, 1
          %s1204 = smul.addr %s1203, 4
          %s1205 = smul.addr %s1204, 8
          %s1206 = scalar_lea.vmem %s8, %s1205
        $region72: #{tag_value_forward.7} parent=67 // pred_fallthru
          _
        // Predicated region
        $region73: #{tag_value_forward.7} parent=67 // pred_check
          %p1207 = pneg %p253
        $region74: #{tag_value_forward.7} parent=67 // pred_check_branch
          %1209 = sbr.rel (%p1207) target = $region76
        $region75: #{tag_value_forward.7} parent=67 // pred_region
          %s1210 = sand.u32 %s238, 1
          %s1211 = scalar_lea.sflag [#allocation3], %s1210
          %s1212 = sand.u32 %s238, 1
          %s1213 = scalar_lea.vmem [#allocation2], %s1212
          %1214 = dma.done %s1211, 16
        $region76: #{tag_value_forward.7} parent=67 // pred_fallthru
          _
        // Predicated region
        $region77: #{tag_value_forward.7} parent=67 // pred_check
          %p1215 = pneg %p279
        $region78: #{tag_value_forward.7} parent=67 // pred_check_branch
          %1217 = sbr.rel (%p1215) target = $region80
        $region79: #{tag_value_forward.7} parent=67 // pred_region
          %p1218 = scmp.lt.s32.totalorder %s26, 1
          %s1219 = scalar_select %p1218, %s26, 1
          %s1220 = smul.addr %s1219, 2
          %s1221 = scalar_lea.vmem %s10, %s1220
        $region80: #{tag_value_forward.7} parent=67 // pred_fallthru
          _
      $region68: #{tag_value_forward.7} parent=5 // pred_fallthru
        _
    $region6: #{tag_value_forward.7} parent=1 // loop_footer
      %s24 = sadd.s32 1, %s20
    $region7: #{tag_value_forward.7} parent=1 // loop_footer_branch
      %19 = sbr.rel target = $region3
    $region8: #{tag_value_forward.7} parent=1 // loop_exit
      _
    %1222 = vsyncpa [#allocation3], 1
    %s1223 = scalar_lea.sflag [#allocation3], 1
    %1224 = vsyncpa %s1223, 1

// kernel: tag_value_forward.6
$region0: #{tag_value_forward.6}
  #allocation0 [shape = 'u32[]', space=smem, size = 0x4, offset = 0x4, fixed_abs, tag = 'smem constant byte address 0x4 - core index']
  #allocation1 [shape = 'u32[144,128]{1,0:T(1,128)}', space=vmem, size = 0x12000, scoped, tag = 'internal scratch']
  %s0 = inlined_call_operand.vmem [shape: bf16[2,16,256], index: 0, kind: input, shape index: {}]
  %s1 = inlined_call_operand.vmem [shape: f32[2,1,16], index: 1, kind: input, shape index: {}]
  %s2 = inlined_call_operand.vmem [shape: bf16[256,768], index: 2, kind: input, shape index: {}]
  %s3 = inlined_call_operand.vmem [shape: f32[1,768], index: 3, kind: input, shape index: {}]
  %s4 = inlined_call_operand.vmem [shape: bf16[256,256], index: 4, kind: input, shape index: {}]
  %s5 = inlined_call_operand.vmem [shape: f32[1,256], index: 5, kind: input, shape index: {}]
  %s6 = inlined_call_operand.vmem [shape: f32[1,256], index: 6, kind: input, shape index: {}]
  %s7 = inlined_call_operand.vmem [shape: f32[1,256], index: 7, kind: input, shape index: {}]
  %s8 = inlined_call_operand.vmem [shape: bf16[256,512], index: 8, kind: input, shape index: {}]
  %s9 = inlined_call_operand.vmem [shape: f32[1,512], index: 9, kind: input, shape index: {}]
  %s10 = inlined_call_operand.vmem [shape: bf16[512,256], index: 10, kind: input, shape index: {}]
  %s11 = inlined_call_operand.vmem [shape: f32[1,256], index: 11, kind: input, shape index: {}]
  %s12 = inlined_call_operand.vmem [shape: f32[1,256], index: 12, kind: input, shape index: {}]
  %s13 = inlined_call_operand.vmem [shape: f32[1,256], index: 13, kind: input, shape index: {}]
  %s14 = inlined_call_operand.vmem [shape: bf16[2,16,256], index: 14, kind: output, shape index: {}]
  %s15 = sld [smem:[#allocation0]]
  $region89: #{tag_value_forward.6} parent=0
    _
  %s17 = ssub.s32 1, %s15
  %s18 = scalar_select 0, %s17, %s15
  loop: start=0, step=1, limit=4
  $region2: #{tag_value_forward.6} parent=0 // loop_pre_header
    _
  $region3: #{tag_value_forward.6} parent=0 // loop_header
    %s20 = sphi 0, %s24
    %p21 = scmp.ge.s32.totalorder %s20, 4
    %s30 = sphi 0, %s32
    %s33 = sphi 0, %s30
    %s34 = sphi 0, %s33
    %s50 = sphi 0, %s34
    %s56 = sphi 0, %s58
    %s59 = sphi 0, %s56
    %s60 = sphi 0, %s59
    %s76 = sphi 0, %s60
    %s80 = sphi 0, %s80
    %s82 = sphi 0, %s80
    %s83 = sphi 0, %s82
    %s97 = sphi 0, %s83
    %s101 = sphi 0, %s101
    %s103 = sphi 0, %s101
    %s104 = sphi 0, %s103
    %s118 = sphi 0, %s104
    %s122 = sphi 0, %s122
    %s124 = sphi 0, %s122
    %s125 = sphi 0, %s124
    %s139 = sphi 0, %s125
    %s143 = sphi 0, %s143
    %s145 = sphi 0, %s143
    %s146 = sphi 0, %s145
    %s160 = sphi 0, %s146
    %s164 = sphi 0, %s164
    %s166 = sphi 0, %s164
    %s167 = sphi 0, %s166
    %s181 = sphi 0, %s167
    %s185 = sphi 0, %s185
    %s187 = sphi 0, %s185
    %s188 = sphi 0, %s187
    %s202 = sphi 0, %s188
    %s206 = sphi 0, %s206
    %s208 = sphi 0, %s206
    %s209 = sphi 0, %s208
    %s223 = sphi 0, %s209
    %s227 = sphi 0, %s227
    %s229 = sphi 0, %s227
    %s230 = sphi 0, %s229
    %s244 = sphi 0, %s230
    %s248 = sphi 0, %s248
    %s250 = sphi 0, %s248
    %s251 = sphi 0, %s250
    %s265 = sphi 0, %s251
    %s269 = sphi 0, %s269
    %s271 = sphi 0, %s269
    %s272 = sphi 0, %s271
    %s286 = sphi 0, %s272
    %s290 = sphi 0, %s290
    %s292 = sphi 0, %s290
    %s293 = sphi 0, %s292
    %s307 = sphi 0, %s293
    %s311 = sphi 0, %s311
    %s313 = sphi 0, %s311
    %s314 = sphi 0, %s313
    %s328 = sphi 0, %s314
    %s334 = sphi 0, %s336
    %s337 = sphi 0, %s334
    %s338 = sphi 0, %s337
    %s354 = sphi 0, %s338
  $region4: #{tag_value_forward.6} parent=0 // loop_header_branch
    %23 = sbr.rel (%p21) target = $region8
  $region5: #{tag_value_forward.6} parent=0 // loop_body
    %s25 = ssub.s32 %s20, 1
    %s26 = ssub.s32 %s20, 2
    %s27 = sadd.s32 %s20, 1
    %s28 = ssub.s32 %s20, %s27
    %p29 = scmp.eq.s32.totalorder %s28, 0
    %s31 = sadd.s32 %s30, 1
    %s32 = scalar_select %p29, %s30, %s31
    %p35 = pneg %p29
    %p36 = scmp.eq.s32.totalorder %s20, 1
    %p37 = por %p35, %p36
    %p38 = scmp.ne.s32.totalorder %s30, %s33
    %p39 = scmp.eq.s32.totalorder %s20, 0
    %p40 = por %p38, %p39
    %p41 = scmp.ne.s32.totalorder %s30, %s33
    %p42 = scmp.eq.s32.totalorder %s25, 1
    %p43 = por %p41, %p42
    %p44 = scmp.ne.s32.totalorder %s33, %s34
    %p45 = scmp.eq.s32.totalorder %s25, 0
    %p46 = por %p44, %p45
    %p47 = scmp.ne.s32.totalorder %s33, %s34
    %p48 = scmp.eq.s32.totalorder %s26, 1
    %p49 = por %p47, %p48
    %p51 = scmp.ne.s32.totalorder %s34, %s50
    %p52 = scmp.eq.s32.totalorder %s26, 0
    %p53 = por %p51, %p52
    %s54 = ssub.s32 %s20, %s27
    %p55 = scmp.eq.s32.totalorder %s54, 0
    %s57 = sadd.s32 %s56, 1
    %s58 = scalar_select %p55, %s56, %s57
    %p61 = pneg %p55
    %p62 = scmp.eq.s32.totalorder %s20, 1
    %p63 = por %p61, %p62
    %p64 = scmp.ne.s32.totalorder %s56, %s59
    %p65 = scmp.eq.s32.totalorder %s20, 0
    %p66 = por %p64, %p65
    %p67 = scmp.ne.s32.totalorder %s56, %s59
    %p68 = scmp.eq.s32.totalorder %s25, 1
    %p69 = por %p67, %p68
    %p70 = scmp.ne.s32.totalorder %s59, %s60
    %p71 = scmp.eq.s32.totalorder %s25, 0
    %p72 = por %p70, %p71
    %p73 = scmp.ne.s32.totalorder %s59, %s60
    %p74 = scmp.eq.s32.totalorder %s26, 1
    %p75 = por %p73, %p74
    %p77 = scmp.ne.s32.totalorder %s60, %s76
    %p78 = scmp.eq.s32.totalorder %s26, 0
    %p79 = por %p77, %p78
    %s81 = sadd.s32 %s80, 1
    %p84 = scmp.eq.s32.totalorder %s20, 1
    %p85 = scmp.ne.s32.totalorder %s80, %s82
    %p86 = scmp.eq.s32.totalorder %s20, 0
    %p87 = por %p85, %p86
    %p88 = scmp.ne.s32.totalorder %s80, %s82
    %p89 = scmp.eq.s32.totalorder %s25, 1
    %p90 = por %p88, %p89
    %p91 = scmp.ne.s32.totalorder %s82, %s83
    %p92 = scmp.eq.s32.totalorder %s25, 0
    %p93 = por %p91, %p92
    %p94 = scmp.ne.s32.totalorder %s82, %s83
    %p95 = scmp.eq.s32.totalorder %s26, 1
    %p96 = por %p94, %p95
    %p98 = scmp.ne.s32.totalorder %s83, %s97
    %p99 = scmp.eq.s32.totalorder %s26, 0
    %p100 = por %p98, %p99
    %s102 = sadd.s32 %s101, 1
    %p105 = scmp.eq.s32.totalorder %s20, 1
    %p106 = scmp.ne.s32.totalorder %s101, %s103
    %p107 = scmp.eq.s32.totalorder %s20, 0
    %p108 = por %p106, %p107
    %p109 = scmp.ne.s32.totalorder %s101, %s103
    %p110 = scmp.eq.s32.totalorder %s25, 1
    %p111 = por %p109, %p110
    %p112 = scmp.ne.s32.totalorder %s103, %s104
    %p113 = scmp.eq.s32.totalorder %s25, 0
    %p114 = por %p112, %p113
    %p115 = scmp.ne.s32.totalorder %s103, %s104
    %p116 = scmp.eq.s32.totalorder %s26, 1
    %p117 = por %p115, %p116
    %p119 = scmp.ne.s32.totalorder %s104, %s118
    %p120 = scmp.eq.s32.totalorder %s26, 0
    %p121 = por %p119, %p120
    %s123 = sadd.s32 %s122, 1
    %p126 = scmp.eq.s32.totalorder %s20, 1
    %p127 = scmp.ne.s32.totalorder %s122, %s124
    %p128 = scmp.eq.s32.totalorder %s20, 0
    %p129 = por %p127, %p128
    %p130 = scmp.ne.s32.totalorder %s122, %s124
    %p131 = scmp.eq.s32.totalorder %s25, 1
    %p132 = por %p130, %p131
    %p133 = scmp.ne.s32.totalorder %s124, %s125
    %p134 = scmp.eq.s32.totalorder %s25, 0
    %p135 = por %p133, %p134
    %p136 = scmp.ne.s32.totalorder %s124, %s125
    %p137 = scmp.eq.s32.totalorder %s26, 1
    %p138 = por %p136, %p137
    %p140 = scmp.ne.s32.totalorder %s125, %s139
    %p141 = scmp.eq.s32.totalorder %s26, 0
    %p142 = por %p140, %p141
    %s144 = sadd.s32 %s143, 1
    %p147 = scmp.eq.s32.totalorder %s20, 1
    %p148 = scmp.ne.s32.totalorder %s143, %s145
    %p149 = scmp.eq.s32.totalorder %s20, 0
    %p150 = por %p148, %p149
    %p151 = scmp.ne.s32.totalorder %s143, %s145
    %p152 = scmp.eq.s32.totalorder %s25, 1
    %p153 = por %p151, %p152
    %p154 = scmp.ne.s32.totalorder %s145, %s146
    %p155 = scmp.eq.s32.totalorder %s25, 0
    %p156 = por %p154, %p155
    %p157 = scmp.ne.s32.totalorder %s145, %s146
    %p158 = scmp.eq.s32.totalorder %s26, 1
    %p159 = por %p157, %p158
    %p161 = scmp.ne.s32.totalorder %s146, %s160
    %p162 = scmp.eq.s32.totalorder %s26, 0
    %p163 = por %p161, %p162
    %s165 = sadd.s32 %s164, 1
    %p168 = scmp.eq.s32.totalorder %s20, 1
    %p169 = scmp.ne.s32.totalorder %s164, %s166
    %p170 = scmp.eq.s32.totalorder %s20, 0
    %p171 = por %p169, %p170
    %p172 = scmp.ne.s32.totalorder %s164, %s166
    %p173 = scmp.eq.s32.totalorder %s25, 1
    %p174 = por %p172, %p173
    %p175 = scmp.ne.s32.totalorder %s166, %s167
    %p176 = scmp.eq.s32.totalorder %s25, 0
    %p177 = por %p175, %p176
    %p178 = scmp.ne.s32.totalorder %s166, %s167
    %p179 = scmp.eq.s32.totalorder %s26, 1
    %p180 = por %p178, %p179
    %p182 = scmp.ne.s32.totalorder %s167, %s181
    %p183 = scmp.eq.s32.totalorder %s26, 0
    %p184 = por %p182, %p183
    %s186 = sadd.s32 %s185, 1
    %p189 = scmp.eq.s32.totalorder %s20, 1
    %p190 = scmp.ne.s32.totalorder %s185, %s187
    %p191 = scmp.eq.s32.totalorder %s20, 0
    %p192 = por %p190, %p191
    %p193 = scmp.ne.s32.totalorder %s185, %s187
    %p194 = scmp.eq.s32.totalorder %s25, 1
    %p195 = por %p193, %p194
    %p196 = scmp.ne.s32.totalorder %s187, %s188
    %p197 = scmp.eq.s32.totalorder %s25, 0
    %p198 = por %p196, %p197
    %p199 = scmp.ne.s32.totalorder %s187, %s188
    %p200 = scmp.eq.s32.totalorder %s26, 1
    %p201 = por %p199, %p200
    %p203 = scmp.ne.s32.totalorder %s188, %s202
    %p204 = scmp.eq.s32.totalorder %s26, 0
    %p205 = por %p203, %p204
    %s207 = sadd.s32 %s206, 1
    %p210 = scmp.eq.s32.totalorder %s20, 1
    %p211 = scmp.ne.s32.totalorder %s206, %s208
    %p212 = scmp.eq.s32.totalorder %s20, 0
    %p213 = por %p211, %p212
    %p214 = scmp.ne.s32.totalorder %s206, %s208
    %p215 = scmp.eq.s32.totalorder %s25, 1
    %p216 = por %p214, %p215
    %p217 = scmp.ne.s32.totalorder %s208, %s209
    %p218 = scmp.eq.s32.totalorder %s25, 0
    %p219 = por %p217, %p218
    %p220 = scmp.ne.s32.totalorder %s208, %s209
    %p221 = scmp.eq.s32.totalorder %s26, 1
    %p222 = por %p220, %p221
    %p224 = scmp.ne.s32.totalorder %s209, %s223
    %p225 = scmp.eq.s32.totalorder %s26, 0
    %p226 = por %p224, %p225
    %s228 = sadd.s32 %s227, 1
    %p231 = scmp.eq.s32.totalorder %s20, 1
    %p232 = scmp.ne.s32.totalorder %s227, %s229
    %p233 = scmp.eq.s32.totalorder %s20, 0
    %p234 = por %p232, %p233
    %p235 = scmp.ne.s32.totalorder %s227, %s229
    %p236 = scmp.eq.s32.totalorder %s25, 1
    %p237 = por %p235, %p236
    %p238 = scmp.ne.s32.totalorder %s229, %s230
    %p239 = scmp.eq.s32.totalorder %s25, 0
    %p240 = por %p238, %p239
    %p241 = scmp.ne.s32.totalorder %s229, %s230
    %p242 = scmp.eq.s32.totalorder %s26, 1
    %p243 = por %p241, %p242
    %p245 = scmp.ne.s32.totalorder %s230, %s244
    %p246 = scmp.eq.s32.totalorder %s26, 0
    %p247 = por %p245, %p246
    %s249 = sadd.s32 %s248, 1
    %p252 = scmp.eq.s32.totalorder %s20, 1
    %p253 = scmp.ne.s32.totalorder %s248, %s250
    %p254 = scmp.eq.s32.totalorder %s20, 0
    %p255 = por %p253, %p254
    %p256 = scmp.ne.s32.totalorder %s248, %s250
    %p257 = scmp.eq.s32.totalorder %s25, 1
    %p258 = por %p256, %p257
    %p259 = scmp.ne.s32.totalorder %s250, %s251
    %p260 = scmp.eq.s32.totalorder %s25, 0
    %p261 = por %p259, %p260
    %p262 = scmp.ne.s32.totalorder %s250, %s251
    %p263 = scmp.eq.s32.totalorder %s26, 1
    %p264 = por %p262, %p263
    %p266 = scmp.ne.s32.totalorder %s251, %s265
    %p267 = scmp.eq.s32.totalorder %s26, 0
    %p268 = por %p266, %p267
    %s270 = sadd.s32 %s269, 1
    %p273 = scmp.eq.s32.totalorder %s20, 1
    %p274 = scmp.ne.s32.totalorder %s269, %s271
    %p275 = scmp.eq.s32.totalorder %s20, 0
    %p276 = por %p274, %p275
    %p277 = scmp.ne.s32.totalorder %s269, %s271
    %p278 = scmp.eq.s32.totalorder %s25, 1
    %p279 = por %p277, %p278
    %p280 = scmp.ne.s32.totalorder %s271, %s272
    %p281 = scmp.eq.s32.totalorder %s25, 0
    %p282 = por %p280, %p281
    %p283 = scmp.ne.s32.totalorder %s271, %s272
    %p284 = scmp.eq.s32.totalorder %s26, 1
    %p285 = por %p283, %p284
    %p287 = scmp.ne.s32.totalorder %s272, %s286
    %p288 = scmp.eq.s32.totalorder %s26, 0
    %p289 = por %p287, %p288
    %s291 = sadd.s32 %s290, 1
    %p294 = scmp.eq.s32.totalorder %s20, 1
    %p295 = scmp.ne.s32.totalorder %s290, %s292
    %p296 = scmp.eq.s32.totalorder %s20, 0
    %p297 = por %p295, %p296
    %p298 = scmp.ne.s32.totalorder %s290, %s292
    %p299 = scmp.eq.s32.totalorder %s25, 1
    %p300 = por %p298, %p299
    %p301 = scmp.ne.s32.totalorder %s292, %s293
    %p302 = scmp.eq.s32.totalorder %s25, 0
    %p303 = por %p301, %p302
    %p304 = scmp.ne.s32.totalorder %s292, %s293
    %p305 = scmp.eq.s32.totalorder %s26, 1
    %p306 = por %p304, %p305
    %p308 = scmp.ne.s32.totalorder %s293, %s307
    %p309 = scmp.eq.s32.totalorder %s26, 0
    %p310 = por %p308, %p309
    %s312 = sadd.s32 %s311, 1
    %p315 = scmp.eq.s32.totalorder %s20, 1
    %p316 = scmp.ne.s32.totalorder %s311, %s313
    %p317 = scmp.eq.s32.totalorder %s20, 0
    %p318 = por %p316, %p317
    %p319 = scmp.ne.s32.totalorder %s311, %s313
    %p320 = scmp.eq.s32.totalorder %s25, 1
    %p321 = por %p319, %p320
    %p322 = scmp.ne.s32.totalorder %s313, %s314
    %p323 = scmp.eq.s32.totalorder %s25, 0
    %p324 = por %p322, %p323
    %p325 = scmp.ne.s32.totalorder %s313, %s314
    %p326 = scmp.eq.s32.totalorder %s26, 1
    %p327 = por %p325, %p326
    %p329 = scmp.ne.s32.totalorder %s314, %s328
    %p330 = scmp.eq.s32.totalorder %s26, 0
    %p331 = por %p329, %p330
    %s332 = ssub.s32 %s20, %s27
    %p333 = scmp.eq.s32.totalorder %s332, 0
    %s335 = sadd.s32 %s334, 1
    %s336 = scalar_select %p333, %s334, %s335
    %p339 = pneg %p333
    %p340 = scmp.eq.s32.totalorder %s20, 1
    %p341 = por %p339, %p340
    %p342 = scmp.ne.s32.totalorder %s334, %s337
    %p343 = scmp.eq.s32.totalorder %s20, 0
    %p344 = por %p342, %p343
    %p345 = scmp.ne.s32.totalorder %s334, %s337
    %p346 = scmp.eq.s32.totalorder %s25, 1
    %p347 = por %p345, %p346
    %p348 = scmp.ne.s32.totalorder %s337, %s338
    %p349 = scmp.eq.s32.totalorder %s25, 0
    %p350 = por %p348, %p349
    %p351 = scmp.ne.s32.totalorder %s337, %s338
    %p352 = scmp.eq.s32.totalorder %s26, 1
    %p353 = por %p351, %p352
    %p355 = scmp.ne.s32.totalorder %s338, %s354
    %p356 = scmp.eq.s32.totalorder %s26, 0
    %p357 = por %p355, %p356
    %p358 = scmp.le.s32.totalorder 1, %s20
    %p359 = scmp.lt.s32.totalorder %s20, 3
    %p360 = pnand %p358, %p359
    %p361 = pneg %p360
    // Predicated region
    $region9: #{tag_value_forward.6} parent=5 // pred_check
      _
    $region10: #{tag_value_forward.6} parent=5 // pred_check_branch
      %363 = sbr.rel (%p360) target = $region12
    $region11: #{tag_value_forward.6} parent=5 // pred_region
      %s364 = ssub.s32 %s20, 1
      // Predicated region
      $region13: #{tag_value_forward.6} parent=11 // pred_check
        %p365 = pneg %p93
      $region14: #{tag_value_forward.6} parent=11 // pred_check_branch
        %367 = sbr.rel (%p365) target = $region16
      $region15: #{tag_value_forward.6} parent=11 // pred_region
        _
      $region16: #{tag_value_forward.6} parent=11 // pred_fallthru
        _
      // Predicated region
      $region17: #{tag_value_forward.6} parent=11 // pred_check
        %p368 = pneg %p114
      $region18: #{tag_value_forward.6} parent=11 // pred_check_branch
        %370 = sbr.rel (%p368) target = $region20
      $region19: #{tag_value_forward.6} parent=11 // pred_region
        _
      $region20: #{tag_value_forward.6} parent=11 // pred_fallthru
        _
      // Predicated region
      $region21: #{tag_value_forward.6} parent=11 // pred_check
        %p371 = pneg %p135
      $region22: #{tag_value_forward.6} parent=11 // pred_check_branch
        %373 = sbr.rel (%p371) target = $region24
      $region23: #{tag_value_forward.6} parent=11 // pred_region
        _
      $region24: #{tag_value_forward.6} parent=11 // pred_fallthru
        _
      // Predicated region
      $region25: #{tag_value_forward.6} parent=11 // pred_check
        %p374 = pneg %p156
      $region26: #{tag_value_forward.6} parent=11 // pred_check_branch
        %376 = sbr.rel (%p374) target = $region28
      $region27: #{tag_value_forward.6} parent=11 // pred_region
        _
      $region28: #{tag_value_forward.6} parent=11 // pred_fallthru
        _
      // Predicated region
      $region29: #{tag_value_forward.6} parent=11 // pred_check
        %p377 = pneg %p177
      $region30: #{tag_value_forward.6} parent=11 // pred_check_branch
        %379 = sbr.rel (%p377) target = $region32
      $region31: #{tag_value_forward.6} parent=11 // pred_region
        _
      $region32: #{tag_value_forward.6} parent=11 // pred_fallthru
        _
      // Predicated region
      $region33: #{tag_value_forward.6} parent=11 // pred_check
        %p380 = pneg %p198
      $region34: #{tag_value_forward.6} parent=11 // pred_check_branch
        %382 = sbr.rel (%p380) target = $region36
      $region35: #{tag_value_forward.6} parent=11 // pred_region
        _
      $region36: #{tag_value_forward.6} parent=11 // pred_fallthru
        _
      // Predicated region
      $region37: #{tag_value_forward.6} parent=11 // pred_check
        %p383 = pneg %p219
      $region38: #{tag_value_forward.6} parent=11 // pred_check_branch
        %385 = sbr.rel (%p383) target = $region40
      $region39: #{tag_value_forward.6} parent=11 // pred_region
        _
      $region40: #{tag_value_forward.6} parent=11 // pred_fallthru
        _
      // Predicated region
      $region41: #{tag_value_forward.6} parent=11 // pred_check
        %p386 = pneg %p240
      $region42: #{tag_value_forward.6} parent=11 // pred_check_branch
        %388 = sbr.rel (%p386) target = $region44
      $region43: #{tag_value_forward.6} parent=11 // pred_region
        _
      $region44: #{tag_value_forward.6} parent=11 // pred_fallthru
        _
      // Predicated region
      $region45: #{tag_value_forward.6} parent=11 // pred_check
        %p389 = pneg %p261
      $region46: #{tag_value_forward.6} parent=11 // pred_check_branch
        %391 = sbr.rel (%p389) target = $region48
      $region47: #{tag_value_forward.6} parent=11 // pred_region
        _
      $region48: #{tag_value_forward.6} parent=11 // pred_fallthru
        _
      // Predicated region
      $region49: #{tag_value_forward.6} parent=11 // pred_check
        %p392 = pneg %p282
      $region50: #{tag_value_forward.6} parent=11 // pred_check_branch
        %394 = sbr.rel (%p392) target = $region52
      $region51: #{tag_value_forward.6} parent=11 // pred_region
        _
      $region52: #{tag_value_forward.6} parent=11 // pred_fallthru
        _
      // Predicated region
      $region53: #{tag_value_forward.6} parent=11 // pred_check
        %p395 = pneg %p303
      $region54: #{tag_value_forward.6} parent=11 // pred_check_branch
        %397 = sbr.rel (%p395) target = $region56
      $region55: #{tag_value_forward.6} parent=11 // pred_region
        _
      $region56: #{tag_value_forward.6} parent=11 // pred_fallthru
        _
      // Predicated region
      $region57: #{tag_value_forward.6} parent=11 // pred_check
        %p398 = pneg %p324
      $region58: #{tag_value_forward.6} parent=11 // pred_check_branch
        %400 = sbr.rel (%p398) target = $region60
      $region59: #{tag_value_forward.6} parent=11 // pred_region
        _
      $region60: #{tag_value_forward.6} parent=11 // pred_fallthru
        _
    $region12: #{tag_value_forward.6} parent=5 // pred_fallthru
      _
    %p401 = scmp.lt.s32.totalorder %s20, 2
    // Predicated region
    $region61: #{tag_value_forward.6} parent=5 // pred_check
      %p402 = pneg %p401
    $region62: #{tag_value_forward.6} parent=5 // pred_check_branch
      %404 = sbr.rel (%p402) target = $region64
    $region63: #{tag_value_forward.6} parent=5 // pred_region
      // Predicated region
      $region65: #{tag_value_forward.6} parent=63 // pred_check
        %p405 = pneg %p40
      $region66: #{tag_value_forward.6} parent=63 // pred_check_branch
        %407 = sbr.rel (%p405) target = $region68
      $region67: #{tag_value_forward.6} parent=63 // pred_region
        %p408 = scmp.lt.s32.totalorder %s20, 1
        %s409 = scalar_select %p408, %s20, 1
        %s410 = smul.addr %s409, 4
        %s411 = smul.addr %s410, 4
        %s412 = scalar_lea.vmem %s0, %s411
      $region68: #{tag_value_forward.6} parent=63 // pred_fallthru
        _
      // Predicated region
      $region69: #{tag_value_forward.6} parent=63 // pred_check
        %p413 = pneg %p66
      $region70: #{tag_value_forward.6} parent=63 // pred_check_branch
        %415 = sbr.rel (%p413) target = $region72
      $region71: #{tag_value_forward.6} parent=63 // pred_region
        %p416 = scmp.lt.s32.totalorder %s20, 1
        %s417 = scalar_select %p416, %s20, 1
        %s418 = scalar_lea.vmem %s1, %s417
      $region72: #{tag_value_forward.6} parent=63 // pred_fallthru
        _
    $region64: #{tag_value_forward.6} parent=5 // pred_fallthru
      _
    %p419 = scmp.le.s32.totalorder 1, %s20
    %p420 = scmp.lt.s32.totalorder %s20, 3
    %p421 = pnand %p419, %p420
    %p422 = pneg %p421
    // Predicated region
    $region73: #{tag_value_forward.6} parent=5 // pred_check
      _
    $region74: #{tag_value_forward.6} parent=5 // pred_check_branch
      %424 = sbr.rel (%p421) target = $region76
    $region75: #{tag_value_forward.6} parent=5 // pred_region
      %s425 = ssub.s32 %s20, 1
      %p426 = scmp.lt.s32.totalorder %s25, 1
      %s427 = scalar_select %p426, %s25, 1
      %s428 = smul.addr %s427, 4
      %s429 = smul.addr %s428, 4
      %s430 = scalar_lea.vmem %s0, %s429
      %p431 = pneg %p46
      %p432 = pneg %p43
      %p433 = scmp.lt.s32.totalorder %s25, 1
      %s434 = scalar_select %p433, %s25, 1
      %s435 = scalar_lea.vmem %s1, %s434
      %p436 = pneg %p72
      %p437 = pneg %p69
      %p438 = pneg %p93
      %p439 = pneg %p90
      %p440 = pneg %p114
      %p441 = pneg %p111
      %p442 = pneg %p135
      %p443 = pneg %p132
      %p444 = pneg %p156
      %p445 = pneg %p153
      %p446 = pneg %p177
      %p447 = pneg %p174
      %p448 = pneg %p198
      %p449 = pneg %p195
      %p450 = pneg %p219
      %p451 = pneg %p216
      %p452 = pneg %p240
      %p453 = pneg %p237
      %p454 = pneg %p261
      %p455 = pneg %p258
      %p456 = pneg %p282
      %p457 = pneg %p279
      %p458 = pneg %p303
      %p459 = pneg %p300
      %p460 = pneg %p324
      %p461 = pneg %p321
      %p462 = pneg %p350
      %p463 = pneg %p347
      %p464 = scmp.lt.s32.totalorder %s25, 1
      %s465 = scalar_select %p464, %s25, 1
      %s466 = smul.addr %s465, 4
      %s467 = smul.addr %s466, 4
      %s468 = scalar_lea.vmem %s14, %s467
      %p469 = scmp.lt.s32.totalorder %s25, 1
      %s470 = scalar_select %p469, %s25, 1
      %s471 = smul.addr %s470, 4
      %s472 = smul.addr %s471, 4
      %s473 = scalar_lea.vmem %s0, %s472
      %p474 = scmp.lt.s32.totalorder %s25, 1
      %s475 = scalar_select %p474, %s25, 1
      %s476 = scalar_lea.vmem %s1, %s475
      %p477 = scmp.lt.s32.totalorder %s25, 1
      %s478 = scalar_select %p477, %s25, 1
      %s479 = smul.addr %s478, 4
      %s480 = smul.addr %s479, 4
      %s481 = scalar_lea.vmem %s14, %s480
      %v483 = vld [vmem:[%s473] sm:$0xff]
      %v484 = vld [vmem:[%s473 + $0x8] sm:$0xff]
      %v485 = vunpack.c.l.bf16 %v483
      %v486 = vunpack.c.h.bf16 %v483
      %v487 = vunpack.c.l.bf16 %v484
      %v488 = vunpack.c.h.bf16 %v484
      %v489 = vld [vmem:[%s2] sm:$0xff]
      %v490 = vld [vmem:[%s2 + $0x8] sm:$0xff]
      %v491 = vld [vmem:[%s2 + $0x10] sm:$0xff]
      %v492 = vld [vmem:[%s2 + $0x18] sm:$0xff]
      %v493 = vld [vmem:[%s2 + $0x20] sm:$0xff]
      %v494 = vld [vmem:[%s2 + $0x28] sm:$0xff]
      %v495 = vld [vmem:[%s2 + $0x30] sm:$0xff]
      %v496 = vld [vmem:[%s2 + $0x38] sm:$0xff]
      %v497 = vld [vmem:[%s2 + $0x40] sm:$0xff]
      %v498 = vld [vmem:[%s2 + $0x48] sm:$0xff]
      %v499 = vld [vmem:[%s2 + $0x50] sm:$0xff]
      %v500 = vld [vmem:[%s2 + $0x58] sm:$0xff]
      %v501 = vld [vmem:[%s2 + $0x60] sm:$0xff]
      %v502 = vld [vmem:[%s2 + $0x68] sm:$0xff]
      %v503 = vld [vmem:[%s2 + $0x70] sm:$0xff]
      %v504 = vld [vmem:[%s2 + $0x78] sm:$0xff]
      %v505 = vld [vmem:[%s2 + $0x80] sm:$0xff]
      %v506 = vld [vmem:[%s2 + $0x88] sm:$0xff]
      %v507 = vld [vmem:[%s2 + $0x90] sm:$0xff]
      %v508 = vld [vmem:[%s2 + $0x98] sm:$0xff]
      %v509 = vld [vmem:[%s2 + $0xa0] sm:$0xff]
      %v510 = vld [vmem:[%s2 + $0xa8] sm:$0xff]
      %v511 = vld [vmem:[%s2 + $0xb0] sm:$0xff]
      %v512 = vld [vmem:[%s2 + $0xb8] sm:$0xff]
      %v513 = vld [vmem:[%s2 + $0xc0] sm:$0xff]
      %v514 = vld [vmem:[%s2 + $0xc8] sm:$0xff]
      %v515 = vld [vmem:[%s2 + $0xd0] sm:$0xff]
      %v516 = vld [vmem:[%s2 + $0xd8] sm:$0xff]
      %v517 = vld [vmem:[%s2 + $0xe0] sm:$0xff]
      %v518 = vld [vmem:[%s2 + $0xe8] sm:$0xff]
      %v519 = vld [vmem:[%s2 + $0xf0] sm:$0xff]
      %v520 = vld [vmem:[%s2 + $0xf8] sm:$0xff]
      %v521 = vld [vmem:[%s2 + $0x100] sm:$0xff]
      %v522 = vld [vmem:[%s2 + $0x108] sm:$0xff]
      %v523 = vld [vmem:[%s2 + $0x110] sm:$0xff]
      %v524 = vld [vmem:[%s2 + $0x118] sm:$0xff]
      %v525 = vld [vmem:[%s2 + $0x120] sm:$0xff]
      %v526 = vld [vmem:[%s2 + $0x128] sm:$0xff]
      %v527 = vld [vmem:[%s2 + $0x130] sm:$0xff]
      %v528 = vld [vmem:[%s2 + $0x138] sm:$0xff]
      %v529 = vld [vmem:[%s2 + $0x140] sm:$0xff]
      %v530 = vld [vmem:[%s2 + $0x148] sm:$0xff]
      %v531 = vld [vmem:[%s2 + $0x150] sm:$0xff]
      %v532 = vld [vmem:[%s2 + $0x158] sm:$0xff]
      %v533 = vld [vmem:[%s2 + $0x160] sm:$0xff]
      %v534 = vld [vmem:[%s2 + $0x168] sm:$0xff]
      %v535 = vld [vmem:[%s2 + $0x170] sm:$0xff]
      %v536 = vld [vmem:[%s2 + $0x178] sm:$0xff]
      %v537 = vld [vmem:[%s2 + $0x180] sm:$0xff]
      %v538 = vld [vmem:[%s2 + $0x188] sm:$0xff]
      %v539 = vld [vmem:[%s2 + $0x190] sm:$0xff]
      %v540 = vld [vmem:[%s2 + $0x198] sm:$0xff]
      %v541 = vld [vmem:[%s2 + $0x1a0] sm:$0xff]
      %v542 = vld [vmem:[%s2 + $0x1a8] sm:$0xff]
      %v543 = vld [vmem:[%s2 + $0x1b0] sm:$0xff]
      %v544 = vld [vmem:[%s2 + $0x1b8] sm:$0xff]
      %v545 = vld [vmem:[%s2 + $0x1c0] sm:$0xff]
      %v546 = vld [vmem:[%s2 + $0x1c8] sm:$0xff]
      %v547 = vld [vmem:[%s2 + $0x1d0] sm:$0xff]
      %v548 = vld [vmem:[%s2 + $0x1d8] sm:$0xff]
      %v549 = vld [vmem:[%s2 + $0x1e0] sm:$0xff]
      %v550 = vld [vmem:[%s2 + $0x1e8] sm:$0xff]
      %v551 = vld [vmem:[%s2 + $0x1f0] sm:$0xff]
      %v552 = vld [vmem:[%s2 + $0x1f8] sm:$0xff]
      %v553 = vld [vmem:[%s2 + $0x200] sm:$0xff]
      %v554 = vld [vmem:[%s2 + $0x208] sm:$0xff]
      %v555 = vld [vmem:[%s2 + $0x210] sm:$0xff]
      %v556 = vld [vmem:[%s2 + $0x218] sm:$0xff]
      %v557 = vld [vmem:[%s2 + $0x220] sm:$0xff]
      %v558 = vld [vmem:[%s2 + $0x228] sm:$0xff]
      %v559 = vld [vmem:[%s2 + $0x230] sm:$0xff]
      %v560 = vld [vmem:[%s2 + $0x238] sm:$0xff]
      %v561 = vld [vmem:[%s2 + $0x240] sm:$0xff]
      %v562 = vld [vmem:[%s2 + $0x248] sm:$0xff]
      %v563 = vld [vmem:[%s2 + $0x250] sm:$0xff]
      %v564 = vld [vmem:[%s2 + $0x258] sm:$0xff]
      %v565 = vld [vmem:[%s2 + $0x260] sm:$0xff]
      %v566 = vld [vmem:[%s2 + $0x268] sm:$0xff]
      %v567 = vld [vmem:[%s2 + $0x270] sm:$0xff]
      %v568 = vld [vmem:[%s2 + $0x278] sm:$0xff]
      %v569 = vld [vmem:[%s2 + $0x280] sm:$0xff]
      %v570 = vld [vmem:[%s2 + $0x288] sm:$0xff]
      %v571 = vld [vmem:[%s2 + $0x290] sm:$0xff]
      %v572 = vld [vmem:[%s2 + $0x298] sm:$0xff]
      %v573 = vld [vmem:[%s2 + $0x2a0] sm:$0xff]
      %v574 = vld [vmem:[%s2 + $0x2a8] sm:$0xff]
      %v575 = vld [vmem:[%s2 + $0x2b0] sm:$0xff]
      %v576 = vld [vmem:[%s2 + $0x2b8] sm:$0xff]
      %v577 = vld [vmem:[%s2 + $0x2c0] sm:$0xff]
      %v578 = vld [vmem:[%s2 + $0x2c8] sm:$0xff]
      %v579 = vld [vmem:[%s2 + $0x2d0] sm:$0xff]
      %v580 = vld [vmem:[%s2 + $0x2d8] sm:$0xff]
      %v581 = vld [vmem:[%s2 + $0x2e0] sm:$0xff]
      %v582 = vld [vmem:[%s2 + $0x2e8] sm:$0xff]
      %v583 = vld [vmem:[%s2 + $0x2f0] sm:$0xff]
      %v584 = vld [vmem:[%s2 + $0x2f8] sm:$0xff]
      %v585 = vld [vmem:[%s3] sm:$0x3f]
      %v587 = vlaneseq
      %v588 = vshrl.u32 %v587, 7
      %v589 = vsub.s32 0, %v588
      %v590 = vrot.slane %v585, %v589
      %v591 = vlaneseq
      %v592 = vshrl.u32 %v591, 7
      %v593 = vsub.s32 1, %v592
      %v594 = vrot.slane %v585, %v593
      %v595 = vlaneseq
      %v596 = vshrl.u32 %v595, 7
      %v597 = vsub.s32 2, %v596
      %v598 = vrot.slane %v585, %v597
      %v599 = vlaneseq
      %v600 = vshrl.u32 %v599, 7
      %v601 = vsub.s32 3, %v600
      %v602 = vrot.slane %v585, %v601
      %v603 = vlaneseq
      %v604 = vshrl.u32 %v603, 7
      %v605 = vsub.s32 4, %v604
      %v606 = vrot.slane %v585, %v605
      %v607 = vlaneseq
      %v608 = vshrl.u32 %v607, 7
      %v609 = vsub.s32 5, %v608
      %v610 = vrot.slane %v585, %v609
      %v619 = vunpack.c.l.b16 %v483
      %v620 = vunpack.c.h.b16 %v483
      %v621 = vunpack.c.l.b16 %v484
      %v622 = vunpack.c.h.b16 %v484
      %v623 = vpack.c.b16 %v621, %v619
      %v624 = vpack.c.b16 %v622, %v620
      %v723 = vunpack.c.l.b16 %v489
      %v724 = vunpack.c.h.b16 %v489
      %v725 = vunpack.c.l.b16 %v490
      %v726 = vunpack.c.h.b16 %v490
      %v727 = vunpack.c.l.b16 %v491
      %v728 = vunpack.c.h.b16 %v491
      %v729 = vunpack.c.l.b16 %v492
      %v730 = vunpack.c.h.b16 %v492
      %v731 = vunpack.c.l.b16 %v493
      %v732 = vunpack.c.h.b16 %v493
      %v733 = vunpack.c.l.b16 %v494
      %v734 = vunpack.c.h.b16 %v494
      %v735 = vunpack.c.l.b16 %v495
      %v736 = vunpack.c.h.b16 %v495
      %v737 = vunpack.c.l.b16 %v496
      %v738 = vunpack.c.h.b16 %v496
      %v739 = vunpack.c.l.b16 %v497
      %v740 = vunpack.c.h.b16 %v497
      %v741 = vunpack.c.l.b16 %v498
      %v742 = vunpack.c.h.b16 %v498
      %v743 = vunpack.c.l.b16 %v499
      %v744 = vunpack.c.h.b16 %v499
      %v745 = vunpack.c.l.b16 %v500
      %v746 = vunpack.c.h.b16 %v500
      %v747 = vunpack.c.l.b16 %v501
      %v748 = vunpack.c.h.b16 %v501
      %v749 = vunpack.c.l.b16 %v502
      %v750 = vunpack.c.h.b16 %v502
      %v751 = vunpack.c.l.b16 %v503
      %v752 = vunpack.c.h.b16 %v503
      %v753 = vunpack.c.l.b16 %v504
      %v754 = vunpack.c.h.b16 %v504
      %v755 = vunpack.c.l.b16 %v505
      %v756 = vunpack.c.h.b16 %v505
      %v757 = vunpack.c.l.b16 %v506
      %v758 = vunpack.c.h.b16 %v506
      %v759 = vunpack.c.l.b16 %v507
      %v760 = vunpack.c.h.b16 %v507
      %v761 = vunpack.c.l.b16 %v508
      %v762 = vunpack.c.h.b16 %v508
      %v763 = vunpack.c.l.b16 %v509
      %v764 = vunpack.c.h.b16 %v509
      %v765 = vunpack.c.l.b16 %v510
      %v766 = vunpack.c.h.b16 %v510
      %v767 = vunpack.c.l.b16 %v511
      %v768 = vunpack.c.h.b16 %v511
      %v769 = vunpack.c.l.b16 %v512
      %v770 = vunpack.c.h.b16 %v512
      %v771 = vunpack.c.l.b16 %v513
      %v772 = vunpack.c.h.b16 %v513
      %v773 = vunpack.c.l.b16 %v514
      %v774 = vunpack.c.h.b16 %v514
      %v775 = vunpack.c.l.b16 %v515
      %v776 = vunpack.c.h.b16 %v515
      %v777 = vunpack.c.l.b16 %v516
      %v778 = vunpack.c.h.b16 %v516
      %v779 = vunpack.c.l.b16 %v517
      %v780 = vunpack.c.h.b16 %v517
      %v781 = vunpack.c.l.b16 %v518
      %v782 = vunpack.c.h.b16 %v518
      %v783 = vunpack.c.l.b16 %v519
      %v784 = vunpack.c.h.b16 %v519
      %v785 = vunpack.c.l.b16 %v520
      %v786 = vunpack.c.h.b16 %v520
      %v787 = vunpack.c.l.b16 %v521
      %v788 = vunpack.c.h.b16 %v521
      %v789 = vunpack.c.l.b16 %v522
      %v790 = vunpack.c.h.b16 %v522
      %v791 = vunpack.c.l.b16 %v523
      %v792 = vunpack.c.h.b16 %v523
      %v793 = vunpack.c.l.b16 %v524
      %v794 = vunpack.c.h.b16 %v524
      %v795 = vunpack.c.l.b16 %v525
      %v796 = vunpack.c.h.b16 %v525
      %v797 = vunpack.c.l.b16 %v526
      %v798 = vunpack.c.h.b16 %v526
      %v799 = vunpack.c.l.b16 %v527
      %v800 = vunpack.c.h.b16 %v527
      %v801 = vunpack.c.l.b16 %v528
      %v802 = vunpack.c.h.b16 %v528
      %v803 = vunpack.c.l.b16 %v529
      %v804 = vunpack.c.h.b16 %v529
      %v805 = vunpack.c.l.b16 %v530
      %v806 = vunpack.c.h.b16 %v530
      %v807 = vunpack.c.l.b16 %v531
      %v808 = vunpack.c.h.b16 %v531
      %v809 = vunpack.c.l.b16 %v532
      %v810 = vunpack.c.h.b16 %v532
      %v811 = vunpack.c.l.b16 %v533
      %v812 = vunpack.c.h.b16 %v533
      %v813 = vunpack.c.l.b16 %v534
      %v814 = vunpack.c.h.b16 %v534
      %v815 = vunpack.c.l.b16 %v535
      %v816 = vunpack.c.h.b16 %v535
      %v817 = vunpack.c.l.b16 %v536
      %v818 = vunpack.c.h.b16 %v536
      %v819 = vunpack.c.l.b16 %v537
      %v820 = vunpack.c.h.b16 %v537
      %v821 = vunpack.c.l.b16 %v538
      %v822 = vunpack.c.h.b16 %v538
      %v823 = vunpack.c.l.b16 %v539
      %v824 = vunpack.c.h.b16 %v539
      %v825 = vunpack.c.l.b16 %v540
      %v826 = vunpack.c.h.b16 %v540
      %v827 = vunpack.c.l.b16 %v541
      %v828 = vunpack.c.h.b16 %v541
      %v829 = vunpack.c.l.b16 %v542
      %v830 = vunpack.c.h.b16 %v542
      %v831 = vunpack.c.l.b16 %v543
      %v832 = vunpack.c.h.b16 %v543
      %v833 = vunpack.c.l.b16 %v544
      %v834 = vunpack.c.h.b16 %v544
      %v835 = vunpack.c.l.b16 %v545
      %v836 = vunpack.c.h.b16 %v545
      %v837 = vunpack.c.l.b16 %v546
      %v838 = vunpack.c.h.b16 %v546
      %v839 = vunpack.c.l.b16 %v547
      %v840 = vunpack.c.h.b16 %v547
      %v841 = vunpack.c.l.b16 %v548
      %v842 = vunpack.c.h.b16 %v548
      %v843 = vunpack.c.l.b16 %v549
      %v844 = vunpack.c.h.b16 %v549
      %v845 = vunpack.c.l.b16 %v550
      %v846 = vunpack.c.h.b16 %v550
      %v847 = vunpack.c.l.b16 %v551
      %v848 = vunpack.c.h.b16 %v551
      %v849 = vunpack.c.l.b16 %v552
      %v850 = vunpack.c.h.b16 %v552
      %v851 = vunpack.c.l.b16 %v553
      %v852 = vunpack.c.h.b16 %v553
      %v853 = vunpack.c.l.b16 %v554
      %v854 = vunpack.c.h.b16 %v554
      %v855 = vunpack.c.l.b16 %v555
      %v856 = vunpack.c.h.b16 %v555
      %v857 = vunpack.c.l.b16 %v556
      %v858 = vunpack.c.h.b16 %v556
      %v859 = vunpack.c.l.b16 %v557
      %v860 = vunpack.c.h.b16 %v557
      %v861 = vunpack.c.l.b16 %v558
      %v862 = vunpack.c.h.b16 %v558
      %v863 = vunpack.c.l.b16 %v559
      %v864 = vunpack.c.h.b16 %v559
      %v865 = vunpack.c.l.b16 %v560
      %v866 = vunpack.c.h.b16 %v560
      %v867 = vunpack.c.l.b16 %v561
      %v868 = vunpack.c.h.b16 %v561
      %v869 = vunpack.c.l.b16 %v562
      %v870 = vunpack.c.h.b16 %v562
      %v871 = vunpack.c.l.b16 %v563
      %v872 = vunpack.c.h.b16 %v563
      %v873 = vunpack.c.l.b16 %v564
      %v874 = vunpack.c.h.b16 %v564
      %v875 = vunpack.c.l.b16 %v565
      %v876 = vunpack.c.h.b16 %v565
      %v877 = vunpack.c.l.b16 %v566
      %v878 = vunpack.c.h.b16 %v566
      %v879 = vunpack.c.l.b16 %v567
      %v880 = vunpack.c.h.b16 %v567
      %v881 = vunpack.c.l.b16 %v568
      %v882 = vunpack.c.h.b16 %v568
      %v883 = vunpack.c.l.b16 %v569
      %v884 = vunpack.c.h.b16 %v569
      %v885 = vunpack.c.l.b16 %v570
      %v886 = vunpack.c.h.b16 %v570
      %v887 = vunpack.c.l.b16 %v571
      %v888 = vunpack.c.h.b16 %v571
      %v889 = vunpack.c.l.b16 %v572
      %v890 = vunpack.c.h.b16 %v572
      %v891 = vunpack.c.l.b16 %v573
      %v892 = vunpack.c.h.b16 %v573
      %v893 = vunpack.c.l.b16 %v574
      %v894 = vunpack.c.h.b16 %v574
      %v895 = vunpack.c.l.b16 %v575
      %v896 = vunpack.c.h.b16 %v575
      %v897 = vunpack.c.l.b16 %v576
      %v898 = vunpack.c.h.b16 %v576
      %v899 = vunpack.c.l.b16 %v577
      %v900 = vunpack.c.h.b16 %v577
      %v901 = vunpack.c.l.b16 %v578
      %v902 = vunpack.c.h.b16 %v578
      %v903 = vunpack.c.l.b16 %v579
      %v904 = vunpack.c.h.b16 %v579
      %v905 = vunpack.c.l.b16 %v580
      %v906 = vunpack.c.h.b16 %v580
      %v907 = vunpack.c.l.b16 %v581
      %v908 = vunpack.c.h.b16 %v581
      %v909 = vunpack.c.l.b16 %v582
      %v910 = vunpack.c.h.b16 %v582
      %v911 = vunpack.c.l.b16 %v583
      %v912 = vunpack.c.h.b16 %v583
      %v913 = vunpack.c.l.b16 %v584
      %v914 = vunpack.c.h.b16 %v584
      %v915 = vpack.c.b16 %v729, %v723
      %v916 = vpack.c.b16 %v730, %v724
      %v917 = vpack.c.b16 %v731, %v725
      %v918 = vpack.c.b16 %v732, %v726
      %v919 = vpack.c.b16 %v733, %v727
      %v920 = vpack.c.b16 %v734, %v728
      %v921 = vpack.c.b16 %v741, %v735
      %v922 = vpack.c.b16 %v742, %v736
      %v923 = vpack.c.b16 %v743, %v737
      %v924 = vpack.c.b16 %v744, %v738
      %v925 = vpack.c.b16 %v745, %v739
      %v926 = vpack.c.b16 %v746, %v740
      %v927 = vpack.c.b16 %v753, %v747
      %v928 = vpack.c.b16 %v754, %v748
      %v929 = vpack.c.b16 %v755, %v749
      %v930 = vpack.c.b16 %v756, %v750
      %v931 = vpack.c.b16 %v757, %v751
      %v932 = vpack.c.b16 %v758, %v752
      %v933 = vpack.c.b16 %v765, %v759
      %v934 = vpack.c.b16 %v766, %v760
      %v935 = vpack.c.b16 %v767, %v761
      %v936 = vpack.c.b16 %v768, %v762
      %v937 = vpack.c.b16 %v769, %v763
      %v938 = vpack.c.b16 %v770, %v764
      %v939 = vpack.c.b16 %v777, %v771
      %v940 = vpack.c.b16 %v778, %v772
      %v941 = vpack.c.b16 %v779, %v773
      %v942 = vpack.c.b16 %v780, %v774
      %v943 = vpack.c.b16 %v781, %v775
      %v944 = vpack.c.b16 %v782, %v776
      %v945 = vpack.c.b16 %v789, %v783
      %v946 = vpack.c.b16 %v790, %v784
      %v947 = vpack.c.b16 %v791, %v785
      %v948 = vpack.c.b16 %v792, %v786
      %v949 = vpack.c.b16 %v793, %v787
      %v950 = vpack.c.b16 %v794, %v788
      %v951 = vpack.c.b16 %v801, %v795
      %v952 = vpack.c.b16 %v802, %v796
      %v953 = vpack.c.b16 %v803, %v797
      %v954 = vpack.c.b16 %v804, %v798
      %v955 = vpack.c.b16 %v805, %v799
      %v956 = vpack.c.b16 %v806, %v800
      %v957 = vpack.c.b16 %v813, %v807
      %v958 = vpack.c.b16 %v814, %v808
      %v959 = vpack.c.b16 %v815, %v809
      %v960 = vpack.c.b16 %v816, %v810
      %v961 = vpack.c.b16 %v817, %v811
      %v962 = vpack.c.b16 %v818, %v812
      %v963 = vpack.c.b16 %v825, %v819
      %v964 = vpack.c.b16 %v826, %v820
      %v965 = vpack.c.b16 %v827, %v821
      %v966 = vpack.c.b16 %v828, %v822
      %v967 = vpack.c.b16 %v829, %v823
      %v968 = vpack.c.b16 %v830, %v824
      %v969 = vpack.c.b16 %v837, %v831
      %v970 = vpack.c.b16 %v838, %v832
      %v971 = vpack.c.b16 %v839, %v833
      %v972 = vpack.c.b16 %v840, %v834
      %v973 = vpack.c.b16 %v841, %v835
      %v974 = vpack.c.b16 %v842, %v836
      %v975 = vpack.c.b16 %v849, %v843
      %v976 = vpack.c.b16 %v850, %v844
      %v977 = vpack.c.b16 %v851, %v845
      %v978 = vpack.c.b16 %v852, %v846
      %v979 = vpack.c.b16 %v853, %v847
      %v980 = vpack.c.b16 %v854, %v848
      %v981 = vpack.c.b16 %v861, %v855
      %v982 = vpack.c.b16 %v862, %v856
      %v983 = vpack.c.b16 %v863, %v857
      %v984 = vpack.c.b16 %v864, %v858
      %v985 = vpack.c.b16 %v865, %v859
      %v986 = vpack.c.b16 %v866, %v860
      %v987 = vpack.c.b16 %v873, %v867
      %v988 = vpack.c.b16 %v874, %v868
      %v989 = vpack.c.b16 %v875, %v869
      %v990 = vpack.c.b16 %v876, %v870
      %v991 = vpack.c.b16 %v877, %v871
      %v992 = vpack.c.b16 %v878, %v872
      %v993 = vpack.c.b16 %v885, %v879
      %v994 = vpack.c.b16 %v886, %v880
      %v995 = vpack.c.b16 %v887, %v881
      %v996 = vpack.c.b16 %v888, %v882
      %v997 = vpack.c.b16 %v889, %v883
      %v998 = vpack.c.b16 %v890, %v884
      %v999 = vpack.c.b16 %v897, %v891
      %v1000 = vpack.c.b16 %v898, %v892
      %v1001 = vpack.c.b16 %v899, %v893
      %v1002 = vpack.c.b16 %v900, %v894
      %v1003 = vpack.c.b16 %v901, %v895
      %v1004 = vpack.c.b16 %v902, %v896
      %v1005 = vpack.c.b16 %v909, %v903
      %v1006 = vpack.c.b16 %v910, %v904
      %v1007 = vpack.c.b16 %v911, %v905
      %v1008 = vpack.c.b16 %v912, %v906
      %v1009 = vpack.c.b16 %v913, %v907
      %v1010 = vpack.c.b16 %v914, %v908
      %1107 = vmatprep.subr.bf16.mxu0 %v958
      %1108 = vmatpush1.bf16.msra.mxu0 %v957
      %1109 = vmatprep.subr.bf16.mxu0 %v952
      %1110 = vmatpush1.bf16.msra.mxu0 %v951
      %1111 = vmatprep.subr.bf16.mxu0 %v946
      %1112 = vmatpush1.bf16.msra.mxu0 %v945
      %1113 = vmatprep.subr.bf16.mxu0 %v940
      %1114 = vmatpush1.bf16.msra.mxu0 %v939
      %1115 = vmatprep.subr.bf16.mxu0 %v934
      %1116 = vmatpush1.bf16.msra.mxu0 %v933
      %1117 = vmatprep.subr.bf16.mxu0 %v928
      %1118 = vmatpush1.bf16.msra.mxu0 %v927
      %1119 = vmatprep.subr.bf16.mxu0 %v922
      %1120 = vmatpush1.bf16.msra.mxu0 %v921
      %1121 = vmatprep.subr.bf16.mxu0 %v916
      %1122 = vmatpush1.bf16.msra.mxu0 %v915
      %1123 = vmatprep.subr.bf16.mxu0 %v1006
      %1124 = vmatpush2.bf16.msra.mxu0 %v1005
      %1125 = vmatprep.subr.bf16.mxu0 %v1000
      %1126 = vmatpush2.bf16.msra.mxu0 %v999
      %1127 = vmatprep.subr.bf16.mxu0 %v994
      %1128 = vmatpush2.bf16.msra.mxu0 %v993
      %1129 = vmatprep.subr.bf16.mxu0 %v988
      %1130 = vmatpush2.bf16.msra.mxu0 %v987
      %1131 = vmatprep.subr.bf16.mxu0 %v982
      %1132 = vmatpush2.bf16.msra.mxu0 %v981
      %1133 = vmatprep.subr.bf16.mxu0 %v976
      %1134 = vmatpush2.bf16.msra.mxu0 %v975
      %1135 = vmatprep.subr.bf16.mxu0 %v970
      %1136 = vmatpush2.bf16.msra.mxu0 %v969
      %1137 = vmatprep.subr.bf16.mxu0 %v964
      %1138 = vmatpush2.bf16.msra.mxu0 %v963
      %1139 = vmatprep.mubr.bf16.mxu0 %v624
      %1140 = vmatmul.mubr.bf16.gmra.mxu0 %v623
      %v1141 = vpop.f32.mrf.mxu0
      %v1142 = vadd.f32 %v590, %v1141
      %v1143 = vpop.f32.mrf.mxu0
      %v1144 = vadd.f32 %v594, %v1143
      %v1145 = vpop.f32.mrf.mxu0
      %v1146 = vadd.f32 %v590, %v1145
      %v1147 = vpop.f32.mrf.mxu0
      %v1148 = vadd.f32 %v594, %v1147
      %1149 = vdwg.mxu0
      %1150 = vmatprep.subr.bf16.mxu0 %v960
      %1151 = vmatpush1.bf16.msra.mxu0 %v959
      %1152 = vmatprep.subr.bf16.mxu0 %v954
      %1153 = vmatpush1.bf16.msra.mxu0 %v953
      %1154 = vmatprep.subr.bf16.mxu0 %v948
      %1155 = vmatpush1.bf16.msra.mxu0 %v947
      %1156 = vmatprep.subr.bf16.mxu0 %v942
      %1157 = vmatpush1.bf16.msra.mxu0 %v941
      %1158 = vmatprep.subr.bf16.mxu0 %v936
      %1159 = vmatpush1.bf16.msra.mxu0 %v935
      %1160 = vmatprep.subr.bf16.mxu0 %v930
      %1161 = vmatpush1.bf16.msra.mxu0 %v929
      %1162 = vmatprep.subr.bf16.mxu0 %v924
      %1163 = vmatpush1.bf16.msra.mxu0 %v923
      %1164 = vmatprep.subr.bf16.mxu0 %v918
      %1165 = vmatpush1.bf16.msra.mxu0 %v917
      %1166 = vmatprep.subr.bf16.mxu0 %v1008
      %1167 = vmatpush2.bf16.msra.mxu0 %v1007
      %1168 = vmatprep.subr.bf16.mxu0 %v1002
      %1169 = vmatpush2.bf16.msra.mxu0 %v1001
      %1170 = vmatprep.subr.bf16.mxu0 %v996
      %1171 = vmatpush2.bf16.msra.mxu0 %v995
      %1172 = vmatprep.subr.bf16.mxu0 %v990
      %1173 = vmatpush2.bf16.msra.mxu0 %v989
      %1174 = vmatprep.subr.bf16.mxu0 %v984
      %1175 = vmatpush2.bf16.msra.mxu0 %v983
      %1176 = vmatprep.subr.bf16.mxu0 %v978
      %1177 = vmatpush2.bf16.msra.mxu0 %v977
      %1178 = vmatprep.subr.bf16.mxu0 %v972
      %1179 = vmatpush2.bf16.msra.mxu0 %v971
      %1180 = vmatprep.subr.bf16.mxu0 %v966
      %1181 = vmatpush2.bf16.msra.mxu0 %v965
      %1182 = vmatprep.mubr.bf16.mxu0 %v624
      %1183 = vmatmul.mubr.bf16.gmra.mxu0 %v623
      %v1184 = vpop.f32.mrf.mxu0
      %v1185 = vadd.f32 %v598, %v1184
      %v1186 = vpop.f32.mrf.mxu0
      %v1187 = vadd.f32 %v602, %v1186
      %v1188 = vpop.f32.mrf.mxu0
      %v1189 = vadd.f32 %v598, %v1188
      %v1190 = vpop.f32.mrf.mxu0
      %v1191 = vadd.f32 %v602, %v1190
      %1192 = vdwg.mxu0
      %1193 = vmatprep.subr.bf16.mxu0 %v962
      %1194 = vmatpush1.bf16.msra.mxu0 %v961
      %1195 = vmatprep.subr.bf16.mxu0 %v956
      %1196 = vmatpush1.bf16.msra.mxu0 %v955
      %1197 = vmatprep.subr.bf16.mxu0 %v950
      %1198 = vmatpush1.bf16.msra.mxu0 %v949
      %1199 = vmatprep.subr.bf16.mxu0 %v944
      %1200 = vmatpush1.bf16.msra.mxu0 %v943
      %1201 = vmatprep.subr.bf16.mxu0 %v938
      %1202 = vmatpush1.bf16.msra.mxu0 %v937
      %1203 = vmatprep.subr.bf16.mxu0 %v932
      %1204 = vmatpush1.bf16.msra.mxu0 %v931
      %1205 = vmatprep.subr.bf16.mxu0 %v926
      %1206 = vmatpush1.bf16.msra.mxu0 %v925
      %1207 = vmatprep.subr.bf16.mxu0 %v920
      %1208 = vmatpush1.bf16.msra.mxu0 %v919
      %1209 = vmatprep.subr.bf16.mxu0 %v1010
      %1210 = vmatpush2.bf16.msra.mxu0 %v1009
      %1211 = vmatprep.subr.bf16.mxu0 %v1004
      %1212 = vmatpush2.bf16.msra.mxu0 %v1003
      %1213 = vmatprep.subr.bf16.mxu0 %v998
      %1214 = vmatpush2.bf16.msra.mxu0 %v997
      %1215 = vmatprep.subr.bf16.mxu0 %v992
      %1216 = vmatpush2.bf16.msra.mxu0 %v991
      %1217 = vmatprep.subr.bf16.mxu0 %v986
      %1218 = vmatpush2.bf16.msra.mxu0 %v985
      %1219 = vmatprep.subr.bf16.mxu0 %v980
      %1220 = vmatpush2.bf16.msra.mxu0 %v979
      %1221 = vmatprep.subr.bf16.mxu0 %v974
      %1222 = vmatpush2.bf16.msra.mxu0 %v973
      %1223 = vmatprep.subr.bf16.mxu0 %v968
      %1224 = vmatpush2.bf16.msra.mxu0 %v967
      %1225 = vmatprep.mubr.bf16.mxu0 %v624
      %1226 = vmatmul.mubr.bf16.gmra.mxu0 %v623
      %v1227 = vpop.f32.mrf.mxu0
      %v1228 = vadd.f32 %v606, %v1227
      %v1229 = vpop.f32.mrf.mxu0
      %v1230 = vadd.f32 %v610, %v1229
      %v1231 = vpop.f32.mrf.mxu0
      %v1232 = vadd.f32 %v606, %v1231
      %v1233 = vpop.f32.mrf.mxu0
      %v1234 = vadd.f32 %v610, %v1233
      %1235 = vdwg.mxu0
      %v1236 = vld [vmem:[%s476] sm:$0x1]
      %v1237 = vpack.c.bf16 %v1146, %v1142
      %v1238 = vpack.c.bf16 %v1189, %v1185
      %v1239 = vpack.c.bf16 %v1232, %v1228
      %vm1240 = vcmask 523264
      %v1242 = vsel %vm1240, %v1237, 0
      %v1245 = vsel %vm1240, %v1238, 0
      %1247 = vmatprep.subr.bf16.mxu0 0
      %1248 = vmatpush1.bf16.xpose.msra.mxu0 0
      %1249 = vmatprep.subr.bf16.mxu0 0
      %1250 = vmatpush1.bf16.xpose.msra.mxu0 0
      %1251 = vmatprep.subr.bf16.mxu0 0
      %1252 = vmatpush1.bf16.xpose.msra.mxu0 0
      %1253 = vmatprep.subr.bf16.mxu0 0
      %1254 = vmatpush1.bf16.xpose.msra.mxu0 0
      %1255 = vmatprep.subr.bf16.mxu0 0
      %1256 = vmatpush1.bf16.xpose.msra.mxu0 0
      %1257 = vmatprep.subr.bf16.mxu0 0
      %1258 = vmatpush1.bf16.xpose.msra.mxu0 0
      %1259 = vmatprep.subr.bf16.mxu0 0
      %1260 = vmatpush1.bf16.xpose.msra.mxu0 0
      %1261 = vmatprep.subr.bf16.mxu0 0
      %1262 = vmatpush1.bf16.xpose.msra.mxu0 %v1245
      %1263 = vmatprep.subr.bf16.mxu0 0
      %1264 = vmatpush2.bf16.xpose.msra.mxu0 0
      %1265 = vmatprep.subr.bf16.mxu0 0
      %1266 = vmatpush2.bf16.xpose.msra.mxu0 0
      %1267 = vmatprep.subr.bf16.mxu0 0
      %1268 = vmatpush2.bf16.xpose.msra.mxu0 0
      %1269 = vmatprep.subr.bf16.mxu0 0
      %1270 = vmatpush2.bf16.xpose.msra.mxu0 0
      %1271 = vmatprep.subr.bf16.mxu0 0
      %1272 = vmatpush2.bf16.xpose.msra.mxu0 0
      %1273 = vmatprep.subr.bf16.mxu0 0
      %1274 = vmatpush2.bf16.xpose.msra.mxu0 0
      %1275 = vmatprep.subr.bf16.mxu0 0
      %1276 = vmatpush2.bf16.xpose.msra.mxu0 0
      %1277 = vmatprep.subr.bf16.mxu0 0
      %1278 = vmatpush2.bf16.xpose.msra.mxu0 0
      %1279 = vmatprep.mubr.bf16.mxu0 0
      %1280 = vmatmul.mubr.bf16.gmra.mxu0 %v1242
      %v1281 = vpop.f32.mrf.mxu0
      %v1282 = vadd.f32 0.0, %v1281
      %v1283 = vpop.f32.mrf.mxu0
      %v1284 = vpop.f32.mrf.mxu0
      %v1285 = vadd.f32 0.0, %v1284
      %v1286 = vpop.f32.mrf.mxu0
      %1287 = vdwg.mxu0
      %v1288 = vmul.f32 %v1282, 0.125
      %v1289 = vmul.f32 %v1285, 0.125
      %v1291 = vlaneseq
      %v1292 = vshrl.u32 %v1291, 7
      %v1293 = vsub.s32 0, %v1292
      %v1294 = vrot.slane %v1236, %v1293
      %v1296 = vadd.f32 %v1288, %v1294
      %v1297 = vadd.f32 %v1289, %v1294
      %vm1298 = vcmask 130048
      %v1299 = vsel %vm1298, %v1296, -inf
      %1300 = vmax.xlane.f32.xlu0 %v1299
      %v1301 = vpop.xlane.xlu0 %1300
      %v1302 = vsel %vm1298, %v1297, -inf
      %1303 = vmax.xlane.f32.xlu0 %v1302
      %v1304 = vpop.xlane.xlu0 %1303
      %v1305 = vsub.f32 %v1296, %v1301
      %v1306 = vsub.f32 %v1297, %v1304
      %v1307 = vmul.f32 %v1305, 1.442695
      %v1308 = vpow.pop %v1307
      %v1309 = vmul.f32 %v1306, 1.442695
      %v1310 = vpow.pop %v1309
      %v1311 = vsel %vm1298, %v1308, 0.0
      %1312 = vadd.xlane.f32.xlu0 %v1311
      %v1313 = vpop.xlane.xlu0 %1312
      %v1314 = vsel %vm1298, %v1310, 0.0
      %1315 = vadd.xlane.f32.xlu0 %v1314
      %v1316 = vpop.xlane.xlu0 %1315
      %v1317 = vrcp.pop %v1313
      %v1318 = vrcp.pop %v1316
      %v1319 = vmul.f32 %v1308, %v1317
      %v1320 = vmul.f32 %v1310, %v1318
      %v1321 = vpack.c.bf16 %v1320, %v1319
      %v1323 = vsel %vm1298, %v1321, 0
      %1325 = vmatprep.subr.bf16.mxu0 0
      %1326 = vmatpush1.bf16.msra.mxu0 0
      %1327 = vmatprep.subr.bf16.mxu0 0
      %1328 = vmatpush1.bf16.msra.mxu0 0
      %1329 = vmatprep.subr.bf16.mxu0 0
      %1330 = vmatpush1.bf16.msra.mxu0 0
      %1331 = vmatprep.subr.bf16.mxu0 0
      %1332 = vmatpush1.bf16.msra.mxu0 0
      %1333 = vmatprep.subr.bf16.mxu0 0
      %1334 = vmatpush1.bf16.msra.mxu0 0
      %1335 = vmatprep.subr.bf16.mxu0 0
      %1336 = vmatpush1.bf16.msra.mxu0 0
      %1337 = vmatprep.subr.bf16.mxu0 0
      %1338 = vmatpush1.bf16.msra.mxu0 0
      %1339 = vmatprep.subr.bf16.mxu0 0
      %1340 = vmatpush1.bf16.msra.mxu0 %v1239
      %1341 = vmatprep.subr.bf16.mxu0 0
      %1342 = vmatpush2.bf16.msra.mxu0 0
      %1343 = vmatprep.subr.bf16.mxu0 0
      %1344 = vmatpush2.bf16.msra.mxu0 0
      %1345 = vmatprep.subr.bf16.mxu0 0
      %1346 = vmatpush2.bf16.msra.mxu0 0
      %1347 = vmatprep.subr.bf16.mxu0 0
      %1348 = vmatpush2.bf16.msra.mxu0 0
      %1349 = vmatprep.subr.bf16.mxu0 0
      %1350 = vmatpush2.bf16.msra.mxu0 0
      %1351 = vmatprep.subr.bf16.mxu0 0
      %1352 = vmatpush2.bf16.msra.mxu0 0
      %1353 = vmatprep.subr.bf16.mxu0 0
      %1354 = vmatpush2.bf16.msra.mxu0 0
      %1355 = vmatprep.subr.bf16.mxu0 0
      %1356 = vmatpush2.bf16.msra.mxu0 0
      %1357 = vmatprep.mubr.bf16.mxu0 0
      %1358 = vmatmul.mubr.bf16.gmra.mxu0 %v1323
      %v1359 = vpop.f32.mrf.mxu0
      %v1360 = vadd.f32 0.0, %v1359
      %v1361 = vpop.f32.mrf.mxu0
      %v1362 = vpop.f32.mrf.mxu0
      %v1363 = vadd.f32 0.0, %v1362
      %v1364 = vpop.f32.mrf.mxu0
      %1365 = vdwg.mxu0
      %1367 = vrot.lane.b32.xlu0 %v1237, 64
      %v1368 = vpop.permute.xlu0 %1367
      %1370 = vrot.lane.b32.xlu0 %v1238, 64
      %v1371 = vpop.permute.xlu0 %1370
      %v1373 = vsel %vm1240, %v1368, 0
      %v1376 = vsel %vm1240, %v1371, 0
      %1378 = vmatprep.subr.bf16.mxu0 0
      %1379 = vmatpush1.bf16.xpose.msra.mxu0 0
      %1380 = vmatprep.subr.bf16.mxu0 0
      %1381 = vmatpush1.bf16.xpose.msra.mxu0 0
      %1382 = vmatprep.subr.bf16.mxu0 0
      %1383 = vmatpush1.bf16.xpose.msra.mxu0 0
      %1384 = vmatprep.subr.bf16.mxu0 0
      %1385 = vmatpush1.bf16.xpose.msra.mxu0 0
      %1386 = vmatprep.subr.bf16.mxu0 0
      %1387 = vmatpush1.bf16.xpose.msra.mxu0 0
      %1388 = vmatprep.subr.bf16.mxu0 0
      %1389 = vmatpush1.bf16.xpose.msra.mxu0 0
      %1390 = vmatprep.subr.bf16.mxu0 0
      %1391 = vmatpush1.bf16.xpose.msra.mxu0 0
      %1392 = vmatprep.subr.bf16.mxu0 0
      %1393 = vmatpush1.bf16.xpose.msra.mxu0 %v1376
      %1394 = vmatprep.subr.bf16.mxu0 0
      %1395 = vmatpush2.bf16.xpose.msra.mxu0 0
      %1396 = vmatprep.subr.bf16.mxu0 0
      %1397 = vmatpush2.bf16.xpose.msra.mxu0 0
      %1398 = vmatprep.subr.bf16.mxu0 0
      %1399 = vmatpush2.bf16.xpose.msra.mxu0 0
      %1400 = vmatprep.subr.bf16.mxu0 0
      %1401 = vmatpush2.bf16.xpose.msra.mxu0 0
      %1402 = vmatprep.subr.bf16.mxu0 0
      %1403 = vmatpush2.bf16.xpose.msra.mxu0 0
      %1404 = vmatprep.subr.bf16.mxu0 0
      %1405 = vmatpush2.bf16.xpose.msra.mxu0 0
      %1406 = vmatprep.subr.bf16.mxu0 0
      %1407 = vmatpush2.bf16.xpose.msra.mxu0 0
      %1408 = vmatprep.subr.bf16.mxu0 0
      %1409 = vmatpush2.bf16.xpose.msra.mxu0 0
      %1410 = vmatprep.mubr.bf16.mxu0 0
      %1411 = vmatmul.mubr.bf16.gmra.mxu0 %v1373
      %v1412 = vpop.f32.mrf.mxu0
      %v1413 = vadd.f32 0.0, %v1412
      %v1414 = vpop.f32.mrf.mxu0
      %v1415 = vpop.f32.mrf.mxu0
      %v1416 = vadd.f32 0.0, %v1415
      %v1417 = vpop.f32.mrf.mxu0
      %1418 = vdwg.mxu0
      %v1419 = vmul.f32 %v1413, 0.125
      %v1420 = vmul.f32 %v1416, 0.125
      %v1421 = vadd.f32 %v1419, %v1294
      %v1422 = vadd.f32 %v1420, %v1294
      %v1423 = vsel %vm1298, %v1421, -inf
      %1424 = vmax.xlane.f32.xlu0 %v1423
      %v1425 = vpop.xlane.xlu0 %1424
      %v1426 = vsel %vm1298, %v1422, -inf
      %1427 = vmax.xlane.f32.xlu0 %v1426
      %v1428 = vpop.xlane.xlu0 %1427
      %v1429 = vsub.f32 %v1421, %v1425
      %v1430 = vsub.f32 %v1422, %v1428
      %v1431 = vmul.f32 %v1429, 1.442695
      %v1432 = vpow.pop %v1431
      %v1433 = vmul.f32 %v1430, 1.442695
      %v1434 = vpow.pop %v1433
      %v1435 = vsel %vm1298, %v1432, 0.0
      %1436 = vadd.xlane.f32.xlu0 %v1435
      %v1437 = vpop.xlane.xlu0 %1436
      %v1438 = vsel %vm1298, %v1434, 0.0
      %1439 = vadd.xlane.f32.xlu0 %v1438
      %v1440 = vpop.xlane.xlu0 %1439
      %v1441 = vrcp.pop %v1437
      %v1442 = vrcp.pop %v1440
      %v1443 = vmul.f32 %v1432, %v1441
      %v1444 = vmul.f32 %v1434, %v1442
      %v1445 = vpack.c.bf16 %v1444, %v1443
      %1447 = vrot.lane.b32.xlu0 %v1239, 64
      %v1448 = vpop.permute.xlu0 %1447
      %v1451 = vsel %vm1298, %v1445, 0
      %1453 = vmatprep.subr.bf16.mxu0 0
      %1454 = vmatpush1.bf16.msra.mxu0 0
      %1455 = vmatprep.subr.bf16.mxu0 0
      %1456 = vmatpush1.bf16.msra.mxu0 0
      %1457 = vmatprep.subr.bf16.mxu0 0
      %1458 = vmatpush1.bf16.msra.mxu0 0
      %1459 = vmatprep.subr.bf16.mxu0 0
      %1460 = vmatpush1.bf16.msra.mxu0 0
      %1461 = vmatprep.subr.bf16.mxu0 0
      %1462 = vmatpush1.bf16.msra.mxu0 0
      %1463 = vmatprep.subr.bf16.mxu0 0
      %1464 = vmatpush1.bf16.msra.mxu0 0
      %1465 = vmatprep.subr.bf16.mxu0 0
      %1466 = vmatpush1.bf16.msra.mxu0 0
      %1467 = vmatprep.subr.bf16.mxu0 0
      %1468 = vmatpush1.bf16.msra.mxu0 %v1448
      %1469 = vmatprep.subr.bf16.mxu0 0
      %1470 = vmatpush2.bf16.msra.mxu0 0
      %1471 = vmatprep.subr.bf16.mxu0 0
      %1472 = vmatpush2.bf16.msra.mxu0 0
      %1473 = vmatprep.subr.bf16.mxu0 0
      %1474 = vmatpush2.bf16.msra.mxu0 0
      %1475 = vmatprep.subr.bf16.mxu0 0
      %1476 = vmatpush2.bf16.msra.mxu0 0
      %1477 = vmatprep.subr.bf16.mxu0 0
      %1478 = vmatpush2.bf16.msra.mxu0 0
      %1479 = vmatprep.subr.bf16.mxu0 0
      %1480 = vmatpush2.bf16.msra.mxu0 0
      %1481 = vmatprep.subr.bf16.mxu0 0
      %1482 = vmatpush2.bf16.msra.mxu0 0
      %1483 = vmatprep.subr.bf16.mxu0 0
      %1484 = vmatpush2.bf16.msra.mxu0 0
      %1485 = vmatprep.mubr.bf16.mxu0 0
      %1486 = vmatmul.mubr.bf16.gmra.mxu0 %v1451
      %v1487 = vpop.f32.mrf.mxu0
      %v1488 = vadd.f32 0.0, %v1487
      %v1489 = vpop.f32.mrf.mxu0
      %v1490 = vpop.f32.mrf.mxu0
      %v1491 = vadd.f32 0.0, %v1490
      %v1492 = vpop.f32.mrf.mxu0
      %1493 = vdwg.mxu0
      %v1494 = vpack.c.bf16 %v1148, %v1144
      %v1495 = vpack.c.bf16 %v1191, %v1187
      %v1496 = vpack.c.bf16 %v1234, %v1230
      %v1498 = vsel %vm1240, %v1494, 0
      %v1501 = vsel %vm1240, %v1495, 0
      %1503 = vmatprep.subr.bf16.mxu0 0
      %1504 = vmatpush1.bf16.xpose.msra.mxu0 0
      %1505 = vmatprep.subr.bf16.mxu0 0
      %1506 = vmatpush1.bf16.xpose.msra.mxu0 0
      %1507 = vmatprep.subr.bf16.mxu0 0
      %1508 = vmatpush1.bf16.xpose.msra.mxu0 0
      %1509 = vmatprep.subr.bf16.mxu0 0
      %1510 = vmatpush1.bf16.xpose.msra.mxu0 0
      %1511 = vmatprep.subr.bf16.mxu0 0
      %1512 = vmatpush1.bf16.xpose.msra.mxu0 0
      %1513 = vmatprep.subr.bf16.mxu0 0
      %1514 = vmatpush1.bf16.xpose.msra.mxu0 0
      %1515 = vmatprep.subr.bf16.mxu0 0
      %1516 = vmatpush1.bf16.xpose.msra.mxu0 0
      %1517 = vmatprep.subr.bf16.mxu0 0
      %1518 = vmatpush1.bf16.xpose.msra.mxu0 %v1501
      %1519 = vmatprep.subr.bf16.mxu0 0
      %1520 = vmatpush2.bf16.xpose.msra.mxu0 0
      %1521 = vmatprep.subr.bf16.mxu0 0
      %1522 = vmatpush2.bf16.xpose.msra.mxu0 0
      %1523 = vmatprep.subr.bf16.mxu0 0
      %1524 = vmatpush2.bf16.xpose.msra.mxu0 0
      %1525 = vmatprep.subr.bf16.mxu0 0
      %1526 = vmatpush2.bf16.xpose.msra.mxu0 0
      %1527 = vmatprep.subr.bf16.mxu0 0
      %1528 = vmatpush2.bf16.xpose.msra.mxu0 0
      %1529 = vmatprep.subr.bf16.mxu0 0
      %1530 = vmatpush2.bf16.xpose.msra.mxu0 0
      %1531 = vmatprep.subr.bf16.mxu0 0
      %1532 = vmatpush2.bf16.xpose.msra.mxu0 0
      %1533 = vmatprep.subr.bf16.mxu0 0
      %1534 = vmatpush2.bf16.xpose.msra.mxu0 0
      %1535 = vmatprep.mubr.bf16.mxu0 0
      %1536 = vmatmul.mubr.bf16.gmra.mxu0 %v1498
      %v1537 = vpop.f32.mrf.mxu0
      %v1538 = vadd.f32 0.0, %v1537
      %v1539 = vpop.f32.mrf.mxu0
      %v1540 = vpop.f32.mrf.mxu0
      %v1541 = vadd.f32 0.0, %v1540
      %v1542 = vpop.f32.mrf.mxu0
      %1543 = vdwg.mxu0
      %v1544 = vmul.f32 %v1538, 0.125
      %v1545 = vmul.f32 %v1541, 0.125
      %v1546 = vadd.f32 %v1544, %v1294
      %v1547 = vadd.f32 %v1545, %v1294
      %v1548 = vsel %vm1298, %v1546, -inf
      %1549 = vmax.xlane.f32.xlu0 %v1548
      %v1550 = vpop.xlane.xlu0 %1549
      %v1551 = vsel %vm1298, %v1547, -inf
      %1552 = vmax.xlane.f32.xlu0 %v1551
      %v1553 = vpop.xlane.xlu0 %1552
      %v1554 = vsub.f32 %v1546, %v1550
      %v1555 = vsub.f32 %v1547, %v1553
      %v1556 = vmul.f32 %v1554, 1.442695
      %v1557 = vpow.pop %v1556
      %v1558 = vmul.f32 %v1555, 1.442695
      %v1559 = vpow.pop %v1558
      %v1560 = vsel %vm1298, %v1557, 0.0
      %1561 = vadd.xlane.f32.xlu0 %v1560
      %v1562 = vpop.xlane.xlu0 %1561
      %v1563 = vsel %vm1298, %v1559, 0.0
      %1564 = vadd.xlane.f32.xlu0 %v1563
      %v1565 = vpop.xlane.xlu0 %1564
      %v1566 = vrcp.pop %v1562
      %v1567 = vrcp.pop %v1565
      %v1568 = vmul.f32 %v1557, %v1566
      %v1569 = vmul.f32 %v1559, %v1567
      %v1570 = vpack.c.bf16 %v1569, %v1568
      %v1572 = vsel %vm1298, %v1570, 0
      %1574 = vmatprep.subr.bf16.mxu0 0
      %1575 = vmatpush1.bf16.msra.mxu0 0
      %1576 = vmatprep.subr.bf16.mxu0 0
      %1577 = vmatpush1.bf16.msra.mxu0 0
      %1578 = vmatprep.subr.bf16.mxu0 0
      %1579 = vmatpush1.bf16.msra.mxu0 0
      %1580 = vmatprep.subr.bf16.mxu0 0
      %1581 = vmatpush1.bf16.msra.mxu0 0
      %1582 = vmatprep.subr.bf16.mxu0 0
      %1583 = vmatpush1.bf16.msra.mxu0 0
      %1584 = vmatprep.subr.bf16.mxu0 0
      %1585 = vmatpush1.bf16.msra.mxu0 0
      %1586 = vmatprep.subr.bf16.mxu0 0
      %1587 = vmatpush1.bf16.msra.mxu0 0
      %1588 = vmatprep.subr.bf16.mxu0 0
      %1589 = vmatpush1.bf16.msra.mxu0 %v1496
      %1590 = vmatprep.subr.bf16.mxu0 0
      %1591 = vmatpush2.bf16.msra.mxu0 0
      %1592 = vmatprep.subr.bf16.mxu0 0
      %1593 = vmatpush2.bf16.msra.mxu0 0
      %1594 = vmatprep.subr.bf16.mxu0 0
      %1595 = vmatpush2.bf16.msra.mxu0 0
      %1596 = vmatprep.subr.bf16.mxu0 0
      %1597 = vmatpush2.bf16.msra.mxu0 0
      %1598 = vmatprep.subr.bf16.mxu0 0
      %1599 = vmatpush2.bf16.msra.mxu0 0
      %1600 = vmatprep.subr.bf16.mxu0 0
      %1601 = vmatpush2.bf16.msra.mxu0 0
      %1602 = vmatprep.subr.bf16.mxu0 0
      %1603 = vmatpush2.bf16.msra.mxu0 0
      %1604 = vmatprep.subr.bf16.mxu0 0
      %1605 = vmatpush2.bf16.msra.mxu0 0
      %1606 = vmatprep.mubr.bf16.mxu0 0
      %1607 = vmatmul.mubr.bf16.gmra.mxu0 %v1572
      %v1608 = vpop.f32.mrf.mxu0
      %v1609 = vadd.f32 0.0, %v1608
      %v1610 = vpop.f32.mrf.mxu0
      %v1611 = vpop.f32.mrf.mxu0
      %v1612 = vadd.f32 0.0, %v1611
      %v1613 = vpop.f32.mrf.mxu0
      %1614 = vdwg.mxu0
      %1616 = vrot.lane.b32.xlu0 %v1494, 64
      %v1617 = vpop.permute.xlu0 %1616
      %1619 = vrot.lane.b32.xlu0 %v1495, 64
      %v1620 = vpop.permute.xlu0 %1619
      %v1622 = vsel %vm1240, %v1617, 0
      %v1625 = vsel %vm1240, %v1620, 0
      %1627 = vmatprep.subr.bf16.mxu0 0
      %1628 = vmatpush1.bf16.xpose.msra.mxu0 0
      %1629 = vmatprep.subr.bf16.mxu0 0
      %1630 = vmatpush1.bf16.xpose.msra.mxu0 0
      %1631 = vmatprep.subr.bf16.mxu0 0
      %1632 = vmatpush1.bf16.xpose.msra.mxu0 0
      %1633 = vmatprep.subr.bf16.mxu0 0
      %1634 = vmatpush1.bf16.xpose.msra.mxu0 0
      %1635 = vmatprep.subr.bf16.mxu0 0
      %1636 = vmatpush1.bf16.xpose.msra.mxu0 0
      %1637 = vmatprep.subr.bf16.mxu0 0
      %1638 = vmatpush1.bf16.xpose.msra.mxu0 0
      %1639 = vmatprep.subr.bf16.mxu0 0
      %1640 = vmatpush1.bf16.xpose.msra.mxu0 0
      %1641 = vmatprep.subr.bf16.mxu0 0
      %1642 = vmatpush1.bf16.xpose.msra.mxu0 %v1625
      %1643 = vmatprep.subr.bf16.mxu0 0
      %1644 = vmatpush2.bf16.xpose.msra.mxu0 0
      %1645 = vmatprep.subr.bf16.mxu0 0
      %1646 = vmatpush2.bf16.xpose.msra.mxu0 0
      %1647 = vmatprep.subr.bf16.mxu0 0
      %1648 = vmatpush2.bf16.xpose.msra.mxu0 0
      %1649 = vmatprep.subr.bf16.mxu0 0
      %1650 = vmatpush2.bf16.xpose.msra.mxu0 0
      %1651 = vmatprep.subr.bf16.mxu0 0
      %1652 = vmatpush2.bf16.xpose.msra.mxu0 0
      %1653 = vmatprep.subr.bf16.mxu0 0
      %1654 = vmatpush2.bf16.xpose.msra.mxu0 0
      %1655 = vmatprep.subr.bf16.mxu0 0
      %1656 = vmatpush2.bf16.xpose.msra.mxu0 0
      %1657 = vmatprep.subr.bf16.mxu0 0
      %1658 = vmatpush2.bf16.xpose.msra.mxu0 0
      %1659 = vmatprep.mubr.bf16.mxu0 0
      %1660 = vmatmul.mubr.bf16.gmra.mxu0 %v1622
      %v1661 = vpop.f32.mrf.mxu0
      %v1662 = vadd.f32 0.0, %v1661
      %v1663 = vpop.f32.mrf.mxu0
      %v1664 = vpop.f32.mrf.mxu0
      %v1665 = vadd.f32 0.0, %v1664
      %v1666 = vpop.f32.mrf.mxu0
      %1667 = vdwg.mxu0
      %v1668 = vmul.f32 %v1662, 0.125
      %v1669 = vmul.f32 %v1665, 0.125
      %v1670 = vadd.f32 %v1668, %v1294
      %v1671 = vadd.f32 %v1669, %v1294
      %v1672 = vsel %vm1298, %v1670, -inf
      %1673 = vmax.xlane.f32.xlu0 %v1672
      %v1674 = vpop.xlane.xlu0 %1673
      %v1675 = vsel %vm1298, %v1671, -inf
      %1676 = vmax.xlane.f32.xlu0 %v1675
      %v1677 = vpop.xlane.xlu0 %1676
      %v1678 = vsub.f32 %v1670, %v1674
      %v1679 = vsub.f32 %v1671, %v1677
      %v1680 = vmul.f32 %v1678, 1.442695
      %v1681 = vpow.pop %v1680
      %v1682 = vmul.f32 %v1679, 1.442695
      %v1683 = vpow.pop %v1682
      %v1684 = vsel %vm1298, %v1681, 0.0
      %1685 = vadd.xlane.f32.xlu0 %v1684
      %v1686 = vpop.xlane.xlu0 %1685
      %v1687 = vsel %vm1298, %v1683, 0.0
      %1688 = vadd.xlane.f32.xlu0 %v1687
      %v1689 = vpop.xlane.xlu0 %1688
      %v1690 = vrcp.pop %v1686
      %v1691 = vrcp.pop %v1689
      %v1692 = vmul.f32 %v1681, %v1690
      %v1693 = vmul.f32 %v1683, %v1691
      %v1694 = vpack.c.bf16 %v1693, %v1692
      %1696 = vrot.lane.b32.xlu0 %v1496, 64
      %v1697 = vpop.permute.xlu0 %1696
      %v1700 = vsel %vm1298, %v1694, 0
      %1702 = vmatprep.subr.bf16.mxu0 0
      %1703 = vmatpush1.bf16.msra.mxu0 0
      %1704 = vmatprep.subr.bf16.mxu0 0
      %1705 = vmatpush1.bf16.msra.mxu0 0
      %1706 = vmatprep.subr.bf16.mxu0 0
      %1707 = vmatpush1.bf16.msra.mxu0 0
      %1708 = vmatprep.subr.bf16.mxu0 0
      %1709 = vmatpush1.bf16.msra.mxu0 0
      %1710 = vmatprep.subr.bf16.mxu0 0
      %1711 = vmatpush1.bf16.msra.mxu0 0
      %1712 = vmatprep.subr.bf16.mxu0 0
      %1713 = vmatpush1.bf16.msra.mxu0 0
      %1714 = vmatprep.subr.bf16.mxu0 0
      %1715 = vmatpush1.bf16.msra.mxu0 0
      %1716 = vmatprep.subr.bf16.mxu0 0
      %1717 = vmatpush1.bf16.msra.mxu0 %v1697
      %1718 = vmatprep.subr.bf16.mxu0 0
      %1719 = vmatpush2.bf16.msra.mxu0 0
      %1720 = vmatprep.subr.bf16.mxu0 0
      %1721 = vmatpush2.bf16.msra.mxu0 0
      %1722 = vmatprep.subr.bf16.mxu0 0
      %1723 = vmatpush2.bf16.msra.mxu0 0
      %1724 = vmatprep.subr.bf16.mxu0 0
      %1725 = vmatpush2.bf16.msra.mxu0 0
      %1726 = vmatprep.subr.bf16.mxu0 0
      %1727 = vmatpush2.bf16.msra.mxu0 0
      %1728 = vmatprep.subr.bf16.mxu0 0
      %1729 = vmatpush2.bf16.msra.mxu0 0
      %1730 = vmatprep.subr.bf16.mxu0 0
      %1731 = vmatpush2.bf16.msra.mxu0 0
      %1732 = vmatprep.subr.bf16.mxu0 0
      %1733 = vmatpush2.bf16.msra.mxu0 0
      %1734 = vmatprep.mubr.bf16.mxu0 0
      %1735 = vmatmul.mubr.bf16.gmra.mxu0 %v1700
      %v1736 = vpop.f32.mrf.mxu0
      %v1737 = vadd.f32 0.0, %v1736
      %v1738 = vpop.f32.mrf.mxu0
      %v1739 = vpop.f32.mrf.mxu0
      %v1740 = vadd.f32 0.0, %v1739
      %v1741 = vpop.f32.mrf.mxu0
      %1742 = vdwg.mxu0
      %1745 = vrot.lane.b32.xlu0 %v1488, 64
      %v1746 = vpop.permute.xlu0 %1745
      %1747 = vrot.lane.b32.xlu0 %v1491, 64
      %v1748 = vpop.permute.xlu0 %1747
      %1753 = vrot.lane.b32.xlu0 %v1737, 64
      %v1754 = vpop.permute.xlu0 %1753
      %1755 = vrot.lane.b32.xlu0 %v1740, 64
      %v1756 = vpop.permute.xlu0 %1755
      %v1759 = vsel %vm1240, %v1360, %v1746
      %v1760 = vsel %vm1240, %v1363, %v1748
      %v1761 = vsel %vm1240, %v1609, %v1754
      %v1762 = vsel %vm1240, %v1612, %v1756
      %v1763 = vpack.c.bf16 %v1760, %v1759
      %v1764 = vpack.c.bf16 %v1762, %v1761
      %v1765 = vld [vmem:[%s4] sm:$0xff]
      %v1766 = vld [vmem:[%s4 + $0x8] sm:$0xff]
      %v1767 = vld [vmem:[%s4 + $0x10] sm:$0xff]
      %v1768 = vld [vmem:[%s4 + $0x18] sm:$0xff]
      %v1769 = vld [vmem:[%s4 + $0x20] sm:$0xff]
      %v1770 = vld [vmem:[%s4 + $0x28] sm:$0xff]
      %v1771 = vld [vmem:[%s4 + $0x30] sm:$0xff]
      %v1772 = vld [vmem:[%s4 + $0x38] sm:$0xff]
      %v1773 = vld [vmem:[%s4 + $0x40] sm:$0xff]
      %v1774 = vld [vmem:[%s4 + $0x48] sm:$0xff]
      %v1775 = vld [vmem:[%s4 + $0x50] sm:$0xff]
      %v1776 = vld [vmem:[%s4 + $0x58] sm:$0xff]
      %v1777 = vld [vmem:[%s4 + $0x60] sm:$0xff]
      %v1778 = vld [vmem:[%s4 + $0x68] sm:$0xff]
      %v1779 = vld [vmem:[%s4 + $0x70] sm:$0xff]
      %v1780 = vld [vmem:[%s4 + $0x78] sm:$0xff]
      %v1781 = vld [vmem:[%s4 + $0x80] sm:$0xff]
      %v1782 = vld [vmem:[%s4 + $0x88] sm:$0xff]
      %v1783 = vld [vmem:[%s4 + $0x90] sm:$0xff]
      %v1784 = vld [vmem:[%s4 + $0x98] sm:$0xff]
      %v1785 = vld [vmem:[%s4 + $0xa0] sm:$0xff]
      %v1786 = vld [vmem:[%s4 + $0xa8] sm:$0xff]
      %v1787 = vld [vmem:[%s4 + $0xb0] sm:$0xff]
      %v1788 = vld [vmem:[%s4 + $0xb8] sm:$0xff]
      %v1789 = vld [vmem:[%s4 + $0xc0] sm:$0xff]
      %v1790 = vld [vmem:[%s4 + $0xc8] sm:$0xff]
      %v1791 = vld [vmem:[%s4 + $0xd0] sm:$0xff]
      %v1792 = vld [vmem:[%s4 + $0xd8] sm:$0xff]
      %v1793 = vld [vmem:[%s4 + $0xe0] sm:$0xff]
      %v1794 = vld [vmem:[%s4 + $0xe8] sm:$0xff]
      %v1795 = vld [vmem:[%s4 + $0xf0] sm:$0xff]
      %v1796 = vld [vmem:[%s4 + $0xf8] sm:$0xff]
      %v1797 = vld [vmem:[%s5] sm:$0x3]
      %v1799 = vlaneseq
      %v1800 = vshrl.u32 %v1799, 7
      %v1801 = vsub.s32 0, %v1800
      %v1802 = vrot.slane %v1797, %v1801
      %v1803 = vlaneseq
      %v1804 = vshrl.u32 %v1803, 7
      %v1805 = vsub.s32 1, %v1804
      %v1806 = vrot.slane %v1797, %v1805
      %v1841 = vunpack.c.l.b16 %v1765
      %v1842 = vunpack.c.h.b16 %v1765
      %v1843 = vunpack.c.l.b16 %v1766
      %v1844 = vunpack.c.h.b16 %v1766
      %v1845 = vunpack.c.l.b16 %v1767
      %v1846 = vunpack.c.h.b16 %v1767
      %v1847 = vunpack.c.l.b16 %v1768
      %v1848 = vunpack.c.h.b16 %v1768
      %v1849 = vunpack.c.l.b16 %v1769
      %v1850 = vunpack.c.h.b16 %v1769
      %v1851 = vunpack.c.l.b16 %v1770
      %v1852 = vunpack.c.h.b16 %v1770
      %v1853 = vunpack.c.l.b16 %v1771
      %v1854 = vunpack.c.h.b16 %v1771
      %v1855 = vunpack.c.l.b16 %v1772
      %v1856 = vunpack.c.h.b16 %v1772
      %v1857 = vunpack.c.l.b16 %v1773
      %v1858 = vunpack.c.h.b16 %v1773
      %v1859 = vunpack.c.l.b16 %v1774
      %v1860 = vunpack.c.h.b16 %v1774
      %v1861 = vunpack.c.l.b16 %v1775
      %v1862 = vunpack.c.h.b16 %v1775
      %v1863 = vunpack.c.l.b16 %v1776
      %v1864 = vunpack.c.h.b16 %v1776
      %v1865 = vunpack.c.l.b16 %v1777
      %v1866 = vunpack.c.h.b16 %v1777
      %v1867 = vunpack.c.l.b16 %v1778
      %v1868 = vunpack.c.h.b16 %v1778
      %v1869 = vunpack.c.l.b16 %v1779
      %v1870 = vunpack.c.h.b16 %v1779
      %v1871 = vunpack.c.l.b16 %v1780
      %v1872 = vunpack.c.h.b16 %v1780
      %v1873 = vunpack.c.l.b16 %v1781
      %v1874 = vunpack.c.h.b16 %v1781
      %v1875 = vunpack.c.l.b16 %v1782
      %v1876 = vunpack.c.h.b16 %v1782
      %v1877 = vunpack.c.l.b16 %v1783
      %v1878 = vunpack.c.h.b16 %v1783
      %v1879 = vunpack.c.l.b16 %v1784
      %v1880 = vunpack.c.h.b16 %v1784
      %v1881 = vunpack.c.l.b16 %v1785
      %v1882 = vunpack.c.h.b16 %v1785
      %v1883 = vunpack.c.l.b16 %v1786
      %v1884 = vunpack.c.h.b16 %v1786
      %v1885 = vunpack.c.l.b16 %v1787
      %v1886 = vunpack.c.h.b16 %v1787
      %v1887 = vunpack.c.l.b16 %v1788
      %v1888 = vunpack.c.h.b16 %v1788
      %v1889 = vunpack.c.l.b16 %v1789
      %v1890 = vunpack.c.h.b16 %v1789
      %v1891 = vunpack.c.l.b16 %v1790
      %v1892 = vunpack.c.h.b16 %v1790
      %v1893 = vunpack.c.l.b16 %v1791
      %v1894 = vunpack.c.h.b16 %v1791
      %v1895 = vunpack.c.l.b16 %v1792
      %v1896 = vunpack.c.h.b16 %v1792
      %v1897 = vunpack.c.l.b16 %v1793
      %v1898 = vunpack.c.h.b16 %v1793
      %v1899 = vunpack.c.l.b16 %v1794
      %v1900 = vunpack.c.h.b16 %v1794
      %v1901 = vunpack.c.l.b16 %v1795
      %v1902 = vunpack.c.h.b16 %v1795
      %v1903 = vunpack.c.l.b16 %v1796
      %v1904 = vunpack.c.h.b16 %v1796
      %v1905 = vpack.c.b16 %v1843, %v1841
      %v1906 = vpack.c.b16 %v1844, %v1842
      %v1907 = vpack.c.b16 %v1847, %v1845
      %v1908 = vpack.c.b16 %v1848, %v1846
      %v1909 = vpack.c.b16 %v1851, %v1849
      %v1910 = vpack.c.b16 %v1852, %v1850
      %v1911 = vpack.c.b16 %v1855, %v1853
      %v1912 = vpack.c.b16 %v1856, %v1854
      %v1913 = vpack.c.b16 %v1859, %v1857
      %v1914 = vpack.c.b16 %v1860, %v1858
      %v1915 = vpack.c.b16 %v1863, %v1861
      %v1916 = vpack.c.b16 %v1864, %v1862
      %v1917 = vpack.c.b16 %v1867, %v1865
      %v1918 = vpack.c.b16 %v1868, %v1866
      %v1919 = vpack.c.b16 %v1871, %v1869
      %v1920 = vpack.c.b16 %v1872, %v1870
      %v1921 = vpack.c.b16 %v1875, %v1873
      %v1922 = vpack.c.b16 %v1876, %v1874
      %v1923 = vpack.c.b16 %v1879, %v1877
      %v1924 = vpack.c.b16 %v1880, %v1878
      %v1925 = vpack.c.b16 %v1883, %v1881
      %v1926 = vpack.c.b16 %v1884, %v1882
      %v1927 = vpack.c.b16 %v1887, %v1885
      %v1928 = vpack.c.b16 %v1888, %v1886
      %v1929 = vpack.c.b16 %v1891, %v1889
      %v1930 = vpack.c.b16 %v1892, %v1890
      %v1931 = vpack.c.b16 %v1895, %v1893
      %v1932 = vpack.c.b16 %v1896, %v1894
      %v1933 = vpack.c.b16 %v1899, %v1897
      %v1934 = vpack.c.b16 %v1900, %v1898
      %v1935 = vpack.c.b16 %v1903, %v1901
      %v1936 = vpack.c.b16 %v1904, %v1902
      %1969 = vmatprep.subr.bf16.mxu0 %v1920
      %1970 = vmatpush1.bf16.msra.mxu0 %v1919
      %1971 = vmatprep.subr.bf16.mxu0 %v1918
      %1972 = vmatpush1.bf16.msra.mxu0 %v1917
      %1973 = vmatprep.subr.bf16.mxu0 %v1916
      %1974 = vmatpush1.bf16.msra.mxu0 %v1915
      %1975 = vmatprep.subr.bf16.mxu0 %v1914
      %1976 = vmatpush1.bf16.msra.mxu0 %v1913
      %1977 = vmatprep.subr.bf16.mxu0 %v1912
      %1978 = vmatpush1.bf16.msra.mxu0 %v1911
      %1979 = vmatprep.subr.bf16.mxu0 %v1910
      %1980 = vmatpush1.bf16.msra.mxu0 %v1909
      %1981 = vmatprep.subr.bf16.mxu0 %v1908
      %1982 = vmatpush1.bf16.msra.mxu0 %v1907
      %1983 = vmatprep.subr.bf16.mxu0 %v1906
      %1984 = vmatpush1.bf16.msra.mxu0 %v1905
      %1985 = vmatprep.subr.bf16.mxu0 %v1936
      %1986 = vmatpush2.bf16.msra.mxu0 %v1935
      %1987 = vmatprep.subr.bf16.mxu0 %v1934
      %1988 = vmatpush2.bf16.msra.mxu0 %v1933
      %1989 = vmatprep.subr.bf16.mxu0 %v1932
      %1990 = vmatpush2.bf16.msra.mxu0 %v1931
      %1991 = vmatprep.subr.bf16.mxu0 %v1930
      %1992 = vmatpush2.bf16.msra.mxu0 %v1929
      %1993 = vmatprep.subr.bf16.mxu0 %v1928
      %1994 = vmatpush2.bf16.msra.mxu0 %v1927
      %1995 = vmatprep.subr.bf16.mxu0 %v1926
      %1996 = vmatpush2.bf16.msra.mxu0 %v1925
      %1997 = vmatprep.subr.bf16.mxu0 %v1924
      %1998 = vmatpush2.bf16.msra.mxu0 %v1923
      %1999 = vmatprep.subr.bf16.mxu0 %v1922
      %2000 = vmatpush2.bf16.msra.mxu0 %v1921
      %2001 = vmatprep.mubr.bf16.mxu0 %v1764
      %2002 = vmatmul.mubr.bf16.gmra.mxu0 %v1763
      %v2003 = vpop.f32.mrf.mxu0
      %v2004 = vadd.f32 %v1802, %v2003
      %v2005 = vpop.f32.mrf.mxu0
      %v2006 = vadd.f32 %v1806, %v2005
      %v2007 = vpop.f32.mrf.mxu0
      %v2008 = vadd.f32 %v1802, %v2007
      %v2009 = vpop.f32.mrf.mxu0
      %v2010 = vadd.f32 %v1806, %v2009
      %2011 = vdwg.mxu0
      %v2012 = vadd.f32 %v2004, %v485
      %v2013 = vadd.f32 %v2006, %v486
      %v2014 = vadd.f32 %v2008, %v487
      %v2015 = vadd.f32 %v2010, %v488
      %v2016 = vld [vmem:[%s6] sm:$0x3]
      %v2017 = vld [vmem:[%s7] sm:$0x3]
      %v2018 = vadd.f32 %v2012, %v2013
      %2019 = vadd.xlane.f32.xlu0 %v2018
      %v2020 = vpop.xlane.xlu0 %2019
      %v2021 = vadd.f32 %v2014, %v2015
      %2022 = vadd.xlane.f32.xlu0 %v2021
      %v2023 = vpop.xlane.xlu0 %2022
      %v2024 = vrcp.pop 256.0
      %v2025 = vmul.f32 %v2020, %v2024
      %v2026 = vmul.f32 %v2023, %v2024
      %v2027 = vsub.f32 %v2012, %v2025
      %v2028 = vsub.f32 %v2013, %v2025
      %v2029 = vsub.f32 %v2014, %v2026
      %v2030 = vsub.f32 %v2015, %v2026
      %v2031 = vmul.f32 %v2027, %v2027
      %v2032 = vmul.f32 %v2028, %v2028
      %v2033 = vmul.f32 %v2029, %v2029
      %v2034 = vmul.f32 %v2030, %v2030
      %v2035 = vadd.f32 %v2031, %v2032
      %2036 = vadd.xlane.f32.xlu0 %v2035
      %v2037 = vpop.xlane.xlu0 %2036
      %v2038 = vadd.f32 %v2033, %v2034
      %2039 = vadd.xlane.f32.xlu0 %v2038
      %v2040 = vpop.xlane.xlu0 %2039
      %v2041 = vmul.f32 %v2037, %v2024
      %v2042 = vmul.f32 %v2040, %v2024
      %v2043 = vadd.f32 %v2041, 1e-12
      %v2044 = vadd.f32 %v2042, 1e-12
      %v2045 = vrsqrt.pop %v2043
      %v2046 = vrsqrt.pop %v2044
      %v2047 = vmul.f32 %v2027, %v2045
      %v2048 = vmul.f32 %v2028, %v2045
      %v2049 = vmul.f32 %v2029, %v2046
      %v2050 = vmul.f32 %v2030, %v2046
      %v2052 = vlaneseq
      %v2053 = vshrl.u32 %v2052, 7
      %v2054 = vsub.s32 0, %v2053
      %v2055 = vrot.slane %v2016, %v2054
      %v2056 = vlaneseq
      %v2057 = vshrl.u32 %v2056, 7
      %v2058 = vsub.s32 1, %v2057
      %v2059 = vrot.slane %v2016, %v2058
      %v2062 = vmul.f32 %v2047, %v2055
      %v2063 = vmul.f32 %v2048, %v2059
      %v2064 = vmul.f32 %v2049, %v2055
      %v2065 = vmul.f32 %v2050, %v2059
      %v2067 = vlaneseq
      %v2068 = vshrl.u32 %v2067, 7
      %v2069 = vsub.s32 0, %v2068
      %v2070 = vrot.slane %v2017, %v2069
      %v2071 = vlaneseq
      %v2072 = vshrl.u32 %v2071, 7
      %v2073 = vsub.s32 1, %v2072
      %v2074 = vrot.slane %v2017, %v2073
      %v2077 = vadd.f32 %v2062, %v2070
      %v2078 = vadd.f32 %v2063, %v2074
      %v2079 = vadd.f32 %v2064, %v2070
      %v2080 = vadd.f32 %v2065, %v2074
      %v2081 = vpack.c.bf16 %v2079, %v2077
      %v2082 = vpack.c.bf16 %v2080, %v2078
      %v2083 = vld [vmem:[%s8] sm:$0xff]
      %v2084 = vld [vmem:[%s8 + $0x8] sm:$0xff]
      %v2085 = vld [vmem:[%s8 + $0x10] sm:$0xff]
      %v2086 = vld [vmem:[%s8 + $0x18] sm:$0xff]
      %v2087 = vld [vmem:[%s8 + $0x20] sm:$0xff]
      %v2088 = vld [vmem:[%s8 + $0x28] sm:$0xff]
      %v2089 = vld [vmem:[%s8 + $0x30] sm:$0xff]
      %v2090 = vld [vmem:[%s8 + $0x38] sm:$0xff]
      %v2091 = vld [vmem:[%s8 + $0x40] sm:$0xff]
      %v2092 = vld [vmem:[%s8 + $0x48] sm:$0xff]
      %v2093 = vld [vmem:[%s8 + $0x50] sm:$0xff]
      %v2094 = vld [vmem:[%s8 + $0x58] sm:$0xff]
      %v2095 = vld [vmem:[%s8 + $0x60] sm:$0xff]
      %v2096 = vld [vmem:[%s8 + $0x68] sm:$0xff]
      %v2097 = vld [vmem:[%s8 + $0x70] sm:$0xff]
      %v2098 = vld [vmem:[%s8 + $0x78] sm:$0xff]
      %v2099 = vld [vmem:[%s8 + $0x80] sm:$0xff]
      %v2100 = vld [vmem:[%s8 + $0x88] sm:$0xff]
      %v2101 = vld [vmem:[%s8 + $0x90] sm:$0xff]
      %v2102 = vld [vmem:[%s8 + $0x98] sm:$0xff]
      %v2103 = vld [vmem:[%s8 + $0xa0] sm:$0xff]
      %v2104 = vld [vmem:[%s8 + $0xa8] sm:$0xff]
      %v2105 = vld [vmem:[%s8 + $0xb0] sm:$0xff]
      %v2106 = vld [vmem:[%s8 + $0xb8] sm:$0xff]
      %v2107 = vld [vmem:[%s8 + $0xc0] sm:$0xff]
      %v2108 = vld [vmem:[%s8 + $0xc8] sm:$0xff]
      %v2109 = vld [vmem:[%s8 + $0xd0] sm:$0xff]
      %v2110 = vld [vmem:[%s8 + $0xd8] sm:$0xff]
      %v2111 = vld [vmem:[%s8 + $0xe0] sm:$0xff]
      %v2112 = vld [vmem:[%s8 + $0xe8] sm:$0xff]
      %v2113 = vld [vmem:[%s8 + $0xf0] sm:$0xff]
      %v2114 = vld [vmem:[%s8 + $0xf8] sm:$0xff]
      %v2115 = vld [vmem:[%s8 + $0x100] sm:$0xff]
      %v2116 = vld [vmem:[%s8 + $0x108] sm:$0xff]
      %v2117 = vld [vmem:[%s8 + $0x110] sm:$0xff]
      %v2118 = vld [vmem:[%s8 + $0x118] sm:$0xff]
      %v2119 = vld [vmem:[%s8 + $0x120] sm:$0xff]
      %v2120 = vld [vmem:[%s8 + $0x128] sm:$0xff]
      %v2121 = vld [vmem:[%s8 + $0x130] sm:$0xff]
      %v2122 = vld [vmem:[%s8 + $0x138] sm:$0xff]
      %v2123 = vld [vmem:[%s8 + $0x140] sm:$0xff]
      %v2124 = vld [vmem:[%s8 + $0x148] sm:$0xff]
      %v2125 = vld [vmem:[%s8 + $0x150] sm:$0xff]
      %v2126 = vld [vmem:[%s8 + $0x158] sm:$0xff]
      %v2127 = vld [vmem:[%s8 + $0x160] sm:$0xff]
      %v2128 = vld [vmem:[%s8 + $0x168] sm:$0xff]
      %v2129 = vld [vmem:[%s8 + $0x170] sm:$0xff]
      %v2130 = vld [vmem:[%s8 + $0x178] sm:$0xff]
      %v2131 = vld [vmem:[%s8 + $0x180] sm:$0xff]
      %v2132 = vld [vmem:[%s8 + $0x188] sm:$0xff]
      %v2133 = vld [vmem:[%s8 + $0x190] sm:$0xff]
      %v2134 = vld [vmem:[%s8 + $0x198] sm:$0xff]
      %v2135 = vld [vmem:[%s8 + $0x1a0] sm:$0xff]
      %v2136 = vld [vmem:[%s8 + $0x1a8] sm:$0xff]
      %v2137 = vld [vmem:[%s8 + $0x1b0] sm:$0xff]
      %v2138 = vld [vmem:[%s8 + $0x1b8] sm:$0xff]
      %v2139 = vld [vmem:[%s8 + $0x1c0] sm:$0xff]
      %v2140 = vld [vmem:[%s8 + $0x1c8] sm:$0xff]
      %v2141 = vld [vmem:[%s8 + $0x1d0] sm:$0xff]
      %v2142 = vld [vmem:[%s8 + $0x1d8] sm:$0xff]
      %v2143 = vld [vmem:[%s8 + $0x1e0] sm:$0xff]
      %v2144 = vld [vmem:[%s8 + $0x1e8] sm:$0xff]
      %v2145 = vld [vmem:[%s8 + $0x1f0] sm:$0xff]
      %v2146 = vld [vmem:[%s8 + $0x1f8] sm:$0xff]
      %v2147 = vld [vmem:[%s9] sm:$0xf]
      %v2149 = vlaneseq
      %v2150 = vshrl.u32 %v2149, 7
      %v2151 = vsub.s32 0, %v2150
      %v2152 = vrot.slane %v2147, %v2151
      %v2153 = vlaneseq
      %v2154 = vshrl.u32 %v2153, 7
      %v2155 = vsub.s32 1, %v2154
      %v2156 = vrot.slane %v2147, %v2155
      %v2157 = vlaneseq
      %v2158 = vshrl.u32 %v2157, 7
      %v2159 = vsub.s32 2, %v2158
      %v2160 = vrot.slane %v2147, %v2159
      %v2161 = vlaneseq
      %v2162 = vshrl.u32 %v2161, 7
      %v2163 = vsub.s32 3, %v2162
      %v2164 = vrot.slane %v2147, %v2163
      %v2233 = vunpack.c.l.b16 %v2083
      %v2234 = vunpack.c.h.b16 %v2083
      %v2235 = vunpack.c.l.b16 %v2084
      %v2236 = vunpack.c.h.b16 %v2084
      %v2237 = vunpack.c.l.b16 %v2085
      %v2238 = vunpack.c.h.b16 %v2085
      %v2239 = vunpack.c.l.b16 %v2086
      %v2240 = vunpack.c.h.b16 %v2086
      %v2241 = vunpack.c.l.b16 %v2087
      %v2242 = vunpack.c.h.b16 %v2087
      %v2243 = vunpack.c.l.b16 %v2088
      %v2244 = vunpack.c.h.b16 %v2088
      %v2245 = vunpack.c.l.b16 %v2089
      %v2246 = vunpack.c.h.b16 %v2089
      %v2247 = vunpack.c.l.b16 %v2090
      %v2248 = vunpack.c.h.b16 %v2090
      %v2249 = vunpack.c.l.b16 %v2091
      %v2250 = vunpack.c.h.b16 %v2091
      %v2251 = vunpack.c.l.b16 %v2092
      %v2252 = vunpack.c.h.b16 %v2092
      %v2253 = vunpack.c.l.b16 %v2093
      %v2254 = vunpack.c.h.b16 %v2093
      %v2255 = vunpack.c.l.b16 %v2094
      %v2256 = vunpack.c.h.b16 %v2094
      %v2257 = vunpack.c.l.b16 %v2095
      %v2258 = vunpack.c.h.b16 %v2095
      %v2259 = vunpack.c.l.b16 %v2096
      %v2260 = vunpack.c.h.b16 %v2096
      %v2261 = vunpack.c.l.b16 %v2097
      %v2262 = vunpack.c.h.b16 %v2097
      %v2263 = vunpack.c.l.b16 %v2098
      %v2264 = vunpack.c.h.b16 %v2098
      %v2265 = vunpack.c.l.b16 %v2099
      %v2266 = vunpack.c.h.b16 %v2099
      %v2267 = vunpack.c.l.b16 %v2100
      %v2268 = vunpack.c.h.b16 %v2100
      %v2269 = vunpack.c.l.b16 %v2101
      %v2270 = vunpack.c.h.b16 %v2101
      %v2271 = vunpack.c.l.b16 %v2102
      %v2272 = vunpack.c.h.b16 %v2102
      %v2273 = vunpack.c.l.b16 %v2103
      %v2274 = vunpack.c.h.b16 %v2103
      %v2275 = vunpack.c.l.b16 %v2104
      %v2276 = vunpack.c.h.b16 %v2104
      %v2277 = vunpack.c.l.b16 %v2105
      %v2278 = vunpack.c.h.b16 %v2105
      %v2279 = vunpack.c.l.b16 %v2106
      %v2280 = vunpack.c.h.b16 %v2106
      %v2281 = vunpack.c.l.b16 %v2107
      %v2282 = vunpack.c.h.b16 %v2107
      %v2283 = vunpack.c.l.b16 %v2108
      %v2284 = vunpack.c.h.b16 %v2108
      %v2285 = vunpack.c.l.b16 %v2109
      %v2286 = vunpack.c.h.b16 %v2109
      %v2287 = vunpack.c.l.b16 %v2110
      %v2288 = vunpack.c.h.b16 %v2110
      %v2289 = vunpack.c.l.b16 %v2111
      %v2290 = vunpack.c.h.b16 %v2111
      %v2291 = vunpack.c.l.b16 %v2112
      %v2292 = vunpack.c.h.b16 %v2112
      %v2293 = vunpack.c.l.b16 %v2113
      %v2294 = vunpack.c.h.b16 %v2113
      %v2295 = vunpack.c.l.b16 %v2114
      %v2296 = vunpack.c.h.b16 %v2114
      %v2297 = vunpack.c.l.b16 %v2115
      %v2298 = vunpack.c.h.b16 %v2115
      %v2299 = vunpack.c.l.b16 %v2116
      %v2300 = vunpack.c.h.b16 %v2116
      %v2301 = vunpack.c.l.b16 %v2117
      %v2302 = vunpack.c.h.b16 %v2117
      %v2303 = vunpack.c.l.b16 %v2118
      %v2304 = vunpack.c.h.b16 %v2118
      %v2305 = vunpack.c.l.b16 %v2119
      %v2306 = vunpack.c.h.b16 %v2119
      %v2307 = vunpack.c.l.b16 %v2120
      %v2308 = vunpack.c.h.b16 %v2120
      %v2309 = vunpack.c.l.b16 %v2121
      %v2310 = vunpack.c.h.b16 %v2121
      %v2311 = vunpack.c.l.b16 %v2122
      %v2312 = vunpack.c.h.b16 %v2122
      %v2313 = vunpack.c.l.b16 %v2123
      %v2314 = vunpack.c.h.b16 %v2123
      %v2315 = vunpack.c.l.b16 %v2124
      %v2316 = vunpack.c.h.b16 %v2124
      %v2317 = vunpack.c.l.b16 %v2125
      %v2318 = vunpack.c.h.b16 %v2125
      %v2319 = vunpack.c.l.b16 %v2126
      %v2320 = vunpack.c.h.b16 %v2126
      %v2321 = vunpack.c.l.b16 %v2127
      %v2322 = vunpack.c.h.b16 %v2127
      %v2323 = vunpack.c.l.b16 %v2128
      %v2324 = vunpack.c.h.b16 %v2128
      %v2325 = vunpack.c.l.b16 %v2129
      %v2326 = vunpack.c.h.b16 %v2129
      %v2327 = vunpack.c.l.b16 %v2130
      %v2328 = vunpack.c.h.b16 %v2130
      %v2329 = vunpack.c.l.b16 %v2131
      %v2330 = vunpack.c.h.b16 %v2131
      %v2331 = vunpack.c.l.b16 %v2132
      %v2332 = vunpack.c.h.b16 %v2132
      %v2333 = vunpack.c.l.b16 %v2133
      %v2334 = vunpack.c.h.b16 %v2133
      %v2335 = vunpack.c.l.b16 %v2134
      %v2336 = vunpack.c.h.b16 %v2134
      %v2337 = vunpack.c.l.b16 %v2135
      %v2338 = vunpack.c.h.b16 %v2135
      %v2339 = vunpack.c.l.b16 %v2136
      %v2340 = vunpack.c.h.b16 %v2136
      %v2341 = vunpack.c.l.b16 %v2137
      %v2342 = vunpack.c.h.b16 %v2137
      %v2343 = vunpack.c.l.b16 %v2138
      %v2344 = vunpack.c.h.b16 %v2138
      %v2345 = vunpack.c.l.b16 %v2139
      %v2346 = vunpack.c.h.b16 %v2139
      %v2347 = vunpack.c.l.b16 %v2140
      %v2348 = vunpack.c.h.b16 %v2140
      %v2349 = vunpack.c.l.b16 %v2141
      %v2350 = vunpack.c.h.b16 %v2141
      %v2351 = vunpack.c.l.b16 %v2142
      %v2352 = vunpack.c.h.b16 %v2142
      %v2353 = vunpack.c.l.b16 %v2143
      %v2354 = vunpack.c.h.b16 %v2143
      %v2355 = vunpack.c.l.b16 %v2144
      %v2356 = vunpack.c.h.b16 %v2144
      %v2357 = vunpack.c.l.b16 %v2145
      %v2358 = vunpack.c.h.b16 %v2145
      %v2359 = vunpack.c.l.b16 %v2146
      %v2360 = vunpack.c.h.b16 %v2146
      %v2361 = vpack.c.b16 %v2237, %v2233
      %v2362 = vpack.c.b16 %v2238, %v2234
      %v2363 = vpack.c.b16 %v2239, %v2235
      %v2364 = vpack.c.b16 %v2240, %v2236
      %v2365 = vpack.c.b16 %v2245, %v2241
      %v2366 = vpack.c.b16 %v2246, %v2242
      %v2367 = vpack.c.b16 %v2247, %v2243
      %v2368 = vpack.c.b16 %v2248, %v2244
      %v2369 = vpack.c.b16 %v2253, %v2249
      %v2370 = vpack.c.b16 %v2254, %v2250
      %v2371 = vpack.c.b16 %v2255, %v2251
      %v2372 = vpack.c.b16 %v2256, %v2252
      %v2373 = vpack.c.b16 %v2261, %v2257
      %v2374 = vpack.c.b16 %v2262, %v2258
      %v2375 = vpack.c.b16 %v2263, %v2259
      %v2376 = vpack.c.b16 %v2264, %v2260
      %v2377 = vpack.c.b16 %v2269, %v2265
      %v2378 = vpack.c.b16 %v2270, %v2266
      %v2379 = vpack.c.b16 %v2271, %v2267
      %v2380 = vpack.c.b16 %v2272, %v2268
      %v2381 = vpack.c.b16 %v2277, %v2273
      %v2382 = vpack.c.b16 %v2278, %v2274
      %v2383 = vpack.c.b16 %v2279, %v2275
      %v2384 = vpack.c.b16 %v2280, %v2276
      %v2385 = vpack.c.b16 %v2285, %v2281
      %v2386 = vpack.c.b16 %v2286, %v2282
      %v2387 = vpack.c.b16 %v2287, %v2283
      %v2388 = vpack.c.b16 %v2288, %v2284
      %v2389 = vpack.c.b16 %v2293, %v2289
      %v2390 = vpack.c.b16 %v2294, %v2290
      %v2391 = vpack.c.b16 %v2295, %v2291
      %v2392 = vpack.c.b16 %v2296, %v2292
      %v2393 = vpack.c.b16 %v2301, %v2297
      %v2394 = vpack.c.b16 %v2302, %v2298
      %v2395 = vpack.c.b16 %v2303, %v2299
      %v2396 = vpack.c.b16 %v2304, %v2300
      %v2397 = vpack.c.b16 %v2309, %v2305
      %v2398 = vpack.c.b16 %v2310, %v2306
      %v2399 = vpack.c.b16 %v2311, %v2307
      %v2400 = vpack.c.b16 %v2312, %v2308
      %v2401 = vpack.c.b16 %v2317, %v2313
      %v2402 = vpack.c.b16 %v2318, %v2314
      %v2403 = vpack.c.b16 %v2319, %v2315
      %v2404 = vpack.c.b16 %v2320, %v2316
      %v2405 = vpack.c.b16 %v2325, %v2321
      %v2406 = vpack.c.b16 %v2326, %v2322
      %v2407 = vpack.c.b16 %v2327, %v2323
      %v2408 = vpack.c.b16 %v2328, %v2324
      %v2409 = vpack.c.b16 %v2333, %v2329
      %v2410 = vpack.c.b16 %v2334, %v2330
      %v2411 = vpack.c.b16 %v2335, %v2331
      %v2412 = vpack.c.b16 %v2336, %v2332
      %v2413 = vpack.c.b16 %v2341, %v2337
      %v2414 = vpack.c.b16 %v2342, %v2338
      %v2415 = vpack.c.b16 %v2343, %v2339
      %v2416 = vpack.c.b16 %v2344, %v2340
      %v2417 = vpack.c.b16 %v2349, %v2345
      %v2418 = vpack.c.b16 %v2350, %v2346
      %v2419 = vpack.c.b16 %v2351, %v2347
      %v2420 = vpack.c.b16 %v2352, %v2348
      %v2421 = vpack.c.b16 %v2357, %v2353
      %v2422 = vpack.c.b16 %v2358, %v2354
      %v2423 = vpack.c.b16 %v2359, %v2355
      %v2424 = vpack.c.b16 %v2360, %v2356
      %2489 = vmatprep.subr.bf16.mxu0 %v2390
      %2490 = vmatpush1.bf16.msra.mxu0 %v2389
      %2491 = vmatprep.subr.bf16.mxu0 %v2386
      %2492 = vmatpush1.bf16.msra.mxu0 %v2385
      %2493 = vmatprep.subr.bf16.mxu0 %v2382
      %2494 = vmatpush1.bf16.msra.mxu0 %v2381
      %2495 = vmatprep.subr.bf16.mxu0 %v2378
      %2496 = vmatpush1.bf16.msra.mxu0 %v2377
      %2497 = vmatprep.subr.bf16.mxu0 %v2374
      %2498 = vmatpush1.bf16.msra.mxu0 %v2373
      %2499 = vmatprep.subr.bf16.mxu0 %v2370
      %2500 = vmatpush1.bf16.msra.mxu0 %v2369
      %2501 = vmatprep.subr.bf16.mxu0 %v2366
      %2502 = vmatpush1.bf16.msra.mxu0 %v2365
      %2503 = vmatprep.subr.bf16.mxu0 %v2362
      %2504 = vmatpush1.bf16.msra.mxu0 %v2361
      %2505 = vmatprep.subr.bf16.mxu0 %v2422
      %2506 = vmatpush2.bf16.msra.mxu0 %v2421
      %2507 = vmatprep.subr.bf16.mxu0 %v2418
      %2508 = vmatpush2.bf16.msra.mxu0 %v2417
      %2509 = vmatprep.subr.bf16.mxu0 %v2414
      %2510 = vmatpush2.bf16.msra.mxu0 %v2413
      %2511 = vmatprep.subr.bf16.mxu0 %v2410
      %2512 = vmatpush2.bf16.msra.mxu0 %v2409
      %2513 = vmatprep.subr.bf16.mxu0 %v2406
      %2514 = vmatpush2.bf16.msra.mxu0 %v2405
      %2515 = vmatprep.subr.bf16.mxu0 %v2402
      %2516 = vmatpush2.bf16.msra.mxu0 %v2401
      %2517 = vmatprep.subr.bf16.mxu0 %v2398
      %2518 = vmatpush2.bf16.msra.mxu0 %v2397
      %2519 = vmatprep.subr.bf16.mxu0 %v2394
      %2520 = vmatpush2.bf16.msra.mxu0 %v2393
      %2521 = vmatprep.mubr.bf16.mxu0 %v2082
      %2522 = vmatmul.mubr.bf16.gmra.mxu0 %v2081
      %v2523 = vpop.f32.mrf.mxu0
      %v2524 = vadd.f32 %v2152, %v2523
      %v2525 = vpop.f32.mrf.mxu0
      %v2526 = vadd.f32 %v2156, %v2525
      %v2527 = vpop.f32.mrf.mxu0
      %v2528 = vadd.f32 %v2152, %v2527
      %v2529 = vpop.f32.mrf.mxu0
      %v2530 = vadd.f32 %v2156, %v2529
      %2531 = vdwg.mxu0
      %2532 = vmatprep.subr.bf16.mxu0 %v2392
      %2533 = vmatpush1.bf16.msra.mxu0 %v2391
      %2534 = vmatprep.subr.bf16.mxu0 %v2388
      %2535 = vmatpush1.bf16.msra.mxu0 %v2387
      %2536 = vmatprep.subr.bf16.mxu0 %v2384
      %2537 = vmatpush1.bf16.msra.mxu0 %v2383
      %2538 = vmatprep.subr.bf16.mxu0 %v2380
      %2539 = vmatpush1.bf16.msra.mxu0 %v2379
      %2540 = vmatprep.subr.bf16.mxu0 %v2376
      %2541 = vmatpush1.bf16.msra.mxu0 %v2375
      %2542 = vmatprep.subr.bf16.mxu0 %v2372
      %2543 = vmatpush1.bf16.msra.mxu0 %v2371
      %2544 = vmatprep.subr.bf16.mxu0 %v2368
      %2545 = vmatpush1.bf16.msra.mxu0 %v2367
      %2546 = vmatprep.subr.bf16.mxu0 %v2364
      %2547 = vmatpush1.bf16.msra.mxu0 %v2363
      %2548 = vmatprep.subr.bf16.mxu0 %v2424
      %2549 = vmatpush2.bf16.msra.mxu0 %v2423
      %2550 = vmatprep.subr.bf16.mxu0 %v2420
      %2551 = vmatpush2.bf16.msra.mxu0 %v2419
      %2552 = vmatprep.subr.bf16.mxu0 %v2416
      %2553 = vmatpush2.bf16.msra.mxu0 %v2415
      %2554 = vmatprep.subr.bf16.mxu0 %v2412
      %2555 = vmatpush2.bf16.msra.mxu0 %v2411
      %2556 = vmatprep.subr.bf16.mxu0 %v2408
      %2557 = vmatpush2.bf16.msra.mxu0 %v2407
      %2558 = vmatprep.subr.bf16.mxu0 %v2404
      %2559 = vmatpush2.bf16.msra.mxu0 %v2403
      %2560 = vmatprep.subr.bf16.mxu0 %v2400
      %2561 = vmatpush2.bf16.msra.mxu0 %v2399
      %2562 = vmatprep.subr.bf16.mxu0 %v2396
      %2563 = vmatpush2.bf16.msra.mxu0 %v2395
      %2564 = vmatprep.mubr.bf16.mxu0 %v2082
      %2565 = vmatmul.mubr.bf16.gmra.mxu0 %v2081
      %v2566 = vpop.f32.mrf.mxu0
      %v2567 = vadd.f32 %v2160, %v2566
      %v2568 = vpop.f32.mrf.mxu0
      %v2569 = vadd.f32 %v2164, %v2568
      %v2570 = vpop.f32.mrf.mxu0
      %v2571 = vadd.f32 %v2160, %v2570
      %v2572 = vpop.f32.mrf.mxu0
      %v2573 = vadd.f32 %v2164, %v2572
      %2574 = vdwg.mxu0
      %v2575 = vmul.f32 %v2524, %v2524
      %v2576 = vmul.f32 %v2526, %v2526
      %v2577 = vmul.f32 %v2567, %v2567
      %v2578 = vmul.f32 %v2569, %v2569
      %v2579 = vmul.f32 %v2528, %v2528
      %v2580 = vmul.f32 %v2530, %v2530
      %v2581 = vmul.f32 %v2571, %v2571
      %v2582 = vmul.f32 %v2573, %v2573
      %v2583 = vmul.f32 %v2524, %v2575
      %v2584 = vmul.f32 %v2526, %v2576
      %v2585 = vmul.f32 %v2567, %v2577
      %v2586 = vmul.f32 %v2569, %v2578
      %v2587 = vmul.f32 %v2528, %v2579
      %v2588 = vmul.f32 %v2530, %v2580
      %v2589 = vmul.f32 %v2571, %v2581
      %v2590 = vmul.f32 %v2573, %v2582
      %v2591 = vmul.f32 %v2583, 0.044715
      %v2592 = vmul.f32 %v2584, 0.044715
      %v2593 = vmul.f32 %v2585, 0.044715
      %v2594 = vmul.f32 %v2586, 0.044715
      %v2595 = vmul.f32 %v2587, 0.044715
      %v2596 = vmul.f32 %v2588, 0.044715
      %v2597 = vmul.f32 %v2589, 0.044715
      %v2598 = vmul.f32 %v2590, 0.044715
      %v2599 = vadd.f32 %v2524, %v2591
      %v2600 = vadd.f32 %v2526, %v2592
      %v2601 = vadd.f32 %v2567, %v2593
      %v2602 = vadd.f32 %v2569, %v2594
      %v2603 = vadd.f32 %v2528, %v2595
      %v2604 = vadd.f32 %v2530, %v2596
      %v2605 = vadd.f32 %v2571, %v2597
      %v2606 = vadd.f32 %v2573, %v2598
      %v2607 = vmul.f32 %v2599, 0.7978846
      %v2608 = vmul.f32 %v2600, 0.7978846
      %v2609 = vmul.f32 %v2601, 0.7978846
      %v2610 = vmul.f32 %v2602, 0.7978846
      %v2611 = vmul.f32 %v2603, 0.7978846
      %v2612 = vmul.f32 %v2604, 0.7978846
      %v2613 = vmul.f32 %v2605, 0.7978846
      %v2614 = vmul.f32 %v2606, 0.7978846
      %v2615 = vtanh.pop %v2607
      %v2616 = vtanh.pop %v2608
      %v2617 = vtanh.pop %v2609
      %v2618 = vtanh.pop %v2610
      %v2619 = vtanh.pop %v2611
      %v2620 = vtanh.pop %v2612
      %v2621 = vtanh.pop %v2613
      %v2622 = vtanh.pop %v2614
      %v2623 = vadd.f32 %v2615, 1.0
      %v2624 = vadd.f32 %v2616, 1.0
      %v2625 = vadd.f32 %v2617, 1.0
      %v2626 = vadd.f32 %v2618, 1.0
      %v2627 = vadd.f32 %v2619, 1.0
      %v2628 = vadd.f32 %v2620, 1.0
      %v2629 = vadd.f32 %v2621, 1.0
      %v2630 = vadd.f32 %v2622, 1.0
      %v2631 = vmul.f32 %v2623, 0.5
      %v2632 = vmul.f32 %v2624, 0.5
      %v2633 = vmul.f32 %v2625, 0.5
      %v2634 = vmul.f32 %v2626, 0.5
      %v2635 = vmul.f32 %v2627, 0.5
      %v2636 = vmul.f32 %v2628, 0.5
      %v2637 = vmul.f32 %v2629, 0.5
      %v2638 = vmul.f32 %v2630, 0.5
      %v2639 = vmul.f32 %v2524, %v2631
      %v2640 = vmul.f32 %v2526, %v2632
      %v2641 = vmul.f32 %v2567, %v2633
      %v2642 = vmul.f32 %v2569, %v2634
      %v2643 = vmul.f32 %v2528, %v2635
      %v2644 = vmul.f32 %v2530, %v2636
      %v2645 = vmul.f32 %v2571, %v2637
      %v2646 = vmul.f32 %v2573, %v2638
      %v2647 = vpack.c.bf16 %v2643, %v2639
      %v2648 = vpack.c.bf16 %v2644, %v2640
      %v2649 = vpack.c.bf16 %v2645, %v2641
      %v2650 = vpack.c.bf16 %v2646, %v2642
      %v2651 = vld [vmem:[%s10] sm:$0xff]
      %v2652 = vld [vmem:[%s10 + $0x8] sm:$0xff]
      %v2653 = vld [vmem:[%s10 + $0x10] sm:$0xff]
      %v2654 = vld [vmem:[%s10 + $0x18] sm:$0xff]
      %v2655 = vld [vmem:[%s10 + $0x20] sm:$0xff]
      %v2656 = vld [vmem:[%s10 + $0x28] sm:$0xff]
      %v2657 = vld [vmem:[%s10 + $0x30] sm:$0xff]
      %v2658 = vld [vmem:[%s10 + $0x38] sm:$0xff]
      %v2659 = vld [vmem:[%s10 + $0x40] sm:$0xff]
      %v2660 = vld [vmem:[%s10 + $0x48] sm:$0xff]
      %v2661 = vld [vmem:[%s10 + $0x50] sm:$0xff]
      %v2662 = vld [vmem:[%s10 + $0x58] sm:$0xff]
      %v2663 = vld [vmem:[%s10 + $0x60] sm:$0xff]
      %v2664 = vld [vmem:[%s10 + $0x68] sm:$0xff]
      %v2665 = vld [vmem:[%s10 + $0x70] sm:$0xff]
      %v2666 = vld [vmem:[%s10 + $0x78] sm:$0xff]
      %v2667 = vld [vmem:[%s10 + $0x80] sm:$0xff]
      %v2668 = vld [vmem:[%s10 + $0x88] sm:$0xff]
      %v2669 = vld [vmem:[%s10 + $0x90] sm:$0xff]
      %v2670 = vld [vmem:[%s10 + $0x98] sm:$0xff]
      %v2671 = vld [vmem:[%s10 + $0xa0] sm:$0xff]
      %v2672 = vld [vmem:[%s10 + $0xa8] sm:$0xff]
      %v2673 = vld [vmem:[%s10 + $0xb0] sm:$0xff]
      %v2674 = vld [vmem:[%s10 + $0xb8] sm:$0xff]
      %v2675 = vld [vmem:[%s10 + $0xc0] sm:$0xff]
      %v2676 = vld [vmem:[%s10 + $0xc8] sm:$0xff]
      %v2677 = vld [vmem:[%s10 + $0xd0] sm:$0xff]
      %v2678 = vld [vmem:[%s10 + $0xd8] sm:$0xff]
      %v2679 = vld [vmem:[%s10 + $0xe0] sm:$0xff]
      %v2680 = vld [vmem:[%s10 + $0xe8] sm:$0xff]
      %v2681 = vld [vmem:[%s10 + $0xf0] sm:$0xff]
      %v2682 = vld [vmem:[%s10 + $0xf8] sm:$0xff]
      %v2683 = vld [vmem:[%s10 + $0x100] sm:$0xff]
      %v2684 = vld [vmem:[%s10 + $0x108] sm:$0xff]
      %v2685 = vld [vmem:[%s10 + $0x110] sm:$0xff]
      %v2686 = vld [vmem:[%s10 + $0x118] sm:$0xff]
      %v2687 = vld [vmem:[%s10 + $0x120] sm:$0xff]
      %v2688 = vld [vmem:[%s10 + $0x128] sm:$0xff]
      %v2689 = vld [vmem:[%s10 + $0x130] sm:$0xff]
      %v2690 = vld [vmem:[%s10 + $0x138] sm:$0xff]
      %v2691 = vld [vmem:[%s10 + $0x140] sm:$0xff]
      %v2692 = vld [vmem:[%s10 + $0x148] sm:$0xff]
      %v2693 = vld [vmem:[%s10 + $0x150] sm:$0xff]
      %v2694 = vld [vmem:[%s10 + $0x158] sm:$0xff]
      %v2695 = vld [vmem:[%s10 + $0x160] sm:$0xff]
      %v2696 = vld [vmem:[%s10 + $0x168] sm:$0xff]
      %v2697 = vld [vmem:[%s10 + $0x170] sm:$0xff]
      %v2698 = vld [vmem:[%s10 + $0x178] sm:$0xff]
      %v2699 = vld [vmem:[%s10 + $0x180] sm:$0xff]
      %v2700 = vld [vmem:[%s10 + $0x188] sm:$0xff]
      %v2701 = vld [vmem:[%s10 + $0x190] sm:$0xff]
      %v2702 = vld [vmem:[%s10 + $0x198] sm:$0xff]
      %v2703 = vld [vmem:[%s10 + $0x1a0] sm:$0xff]
      %v2704 = vld [vmem:[%s10 + $0x1a8] sm:$0xff]
      %v2705 = vld [vmem:[%s10 + $0x1b0] sm:$0xff]
      %v2706 = vld [vmem:[%s10 + $0x1b8] sm:$0xff]
      %v2707 = vld [vmem:[%s10 + $0x1c0] sm:$0xff]
      %v2708 = vld [vmem:[%s10 + $0x1c8] sm:$0xff]
      %v2709 = vld [vmem:[%s10 + $0x1d0] sm:$0xff]
      %v2710 = vld [vmem:[%s10 + $0x1d8] sm:$0xff]
      %v2711 = vld [vmem:[%s10 + $0x1e0] sm:$0xff]
      %v2712 = vld [vmem:[%s10 + $0x1e8] sm:$0xff]
      %v2713 = vld [vmem:[%s10 + $0x1f0] sm:$0xff]
      %v2714 = vld [vmem:[%s10 + $0x1f8] sm:$0xff]
      %v2715 = vld [vmem:[%s11] sm:$0x3]
      %v2717 = vlaneseq
      %v2718 = vshrl.u32 %v2717, 7
      %v2719 = vsub.s32 0, %v2718
      %v2720 = vrot.slane %v2715, %v2719
      %v2721 = vlaneseq
      %v2722 = vshrl.u32 %v2721, 7
      %v2723 = vsub.s32 1, %v2722
      %v2724 = vrot.slane %v2715, %v2723
      %v2791 = vunpack.c.l.b16 %v2651
      %v2792 = vunpack.c.h.b16 %v2651
      %v2793 = vunpack.c.l.b16 %v2652
      %v2794 = vunpack.c.h.b16 %v2652
      %v2795 = vunpack.c.l.b16 %v2653
      %v2796 = vunpack.c.h.b16 %v2653
      %v2797 = vunpack.c.l.b16 %v2654
      %v2798 = vunpack.c.h.b16 %v2654
      %v2799 = vunpack.c.l.b16 %v2655
      %v2800 = vunpack.c.h.b16 %v2655
      %v2801 = vunpack.c.l.b16 %v2656
      %v2802 = vunpack.c.h.b16 %v2656
      %v2803 = vunpack.c.l.b16 %v2657
      %v2804 = vunpack.c.h.b16 %v2657
      %v2805 = vunpack.c.l.b16 %v2658
      %v2806 = vunpack.c.h.b16 %v2658
      %v2807 = vunpack.c.l.b16 %v2659
      %v2808 = vunpack.c.h.b16 %v2659
      %v2809 = vunpack.c.l.b16 %v2660
      %v2810 = vunpack.c.h.b16 %v2660
      %v2811 = vunpack.c.l.b16 %v2661
      %v2812 = vunpack.c.h.b16 %v2661
      %v2813 = vunpack.c.l.b16 %v2662
      %v2814 = vunpack.c.h.b16 %v2662
      %v2815 = vunpack.c.l.b16 %v2663
      %v2816 = vunpack.c.h.b16 %v2663
      %v2817 = vunpack.c.l.b16 %v2664
      %v2818 = vunpack.c.h.b16 %v2664
      %v2819 = vunpack.c.l.b16 %v2665
      %v2820 = vunpack.c.h.b16 %v2665
      %v2821 = vunpack.c.l.b16 %v2666
      %v2822 = vunpack.c.h.b16 %v2666
      %v2823 = vunpack.c.l.b16 %v2667
      %v2824 = vunpack.c.h.b16 %v2667
      %v2825 = vunpack.c.l.b16 %v2668
      %v2826 = vunpack.c.h.b16 %v2668
      %v2827 = vunpack.c.l.b16 %v2669
      %v2828 = vunpack.c.h.b16 %v2669
      %v2829 = vunpack.c.l.b16 %v2670
      %v2830 = vunpack.c.h.b16 %v2670
      %v2831 = vunpack.c.l.b16 %v2671
      %v2832 = vunpack.c.h.b16 %v2671
      %v2833 = vunpack.c.l.b16 %v2672
      %v2834 = vunpack.c.h.b16 %v2672
      %v2835 = vunpack.c.l.b16 %v2673
      %v2836 = vunpack.c.h.b16 %v2673
      %v2837 = vunpack.c.l.b16 %v2674
      %v2838 = vunpack.c.h.b16 %v2674
      %v2839 = vunpack.c.l.b16 %v2675
      %v2840 = vunpack.c.h.b16 %v2675
      %v2841 = vunpack.c.l.b16 %v2676
      %v2842 = vunpack.c.h.b16 %v2676
      %v2843 = vunpack.c.l.b16 %v2677
      %v2844 = vunpack.c.h.b16 %v2677
      %v2845 = vunpack.c.l.b16 %v2678
      %v2846 = vunpack.c.h.b16 %v2678
      %v2847 = vunpack.c.l.b16 %v2679
      %v2848 = vunpack.c.h.b16 %v2679
      %v2849 = vunpack.c.l.b16 %v2680
      %v2850 = vunpack.c.h.b16 %v2680
      %v2851 = vunpack.c.l.b16 %v2681
      %v2852 = vunpack.c.h.b16 %v2681
      %v2853 = vunpack.c.l.b16 %v2682
      %v2854 = vunpack.c.h.b16 %v2682
      %v2855 = vunpack.c.l.b16 %v2683
      %v2856 = vunpack.c.h.b16 %v2683
      %v2857 = vunpack.c.l.b16 %v2684
      %v2858 = vunpack.c.h.b16 %v2684
      %v2859 = vunpack.c.l.b16 %v2685
      %v2860 = vunpack.c.h.b16 %v2685
      %v2861 = vunpack.c.l.b16 %v2686
      %v2862 = vunpack.c.h.b16 %v2686
      %v2863 = vunpack.c.l.b16 %v2687
      %v2864 = vunpack.c.h.b16 %v2687
      %v2865 = vunpack.c.l.b16 %v2688
      %v2866 = vunpack.c.h.b16 %v2688
      %v2867 = vunpack.c.l.b16 %v2689
      %v2868 = vunpack.c.h.b16 %v2689
      %v2869 = vunpack.c.l.b16 %v2690
      %v2870 = vunpack.c.h.b16 %v2690
      %v2871 = vunpack.c.l.b16 %v2691
      %v2872 = vunpack.c.h.b16 %v2691
      %v2873 = vunpack.c.l.b16 %v2692
      %v2874 = vunpack.c.h.b16 %v2692
      %v2875 = vunpack.c.l.b16 %v2693
      %v2876 = vunpack.c.h.b16 %v2693
      %v2877 = vunpack.c.l.b16 %v2694
      %v2878 = vunpack.c.h.b16 %v2694
      %v2879 = vunpack.c.l.b16 %v2695
      %v2880 = vunpack.c.h.b16 %v2695
      %v2881 = vunpack.c.l.b16 %v2696
      %v2882 = vunpack.c.h.b16 %v2696
      %v2883 = vunpack.c.l.b16 %v2697
      %v2884 = vunpack.c.h.b16 %v2697
      %v2885 = vunpack.c.l.b16 %v2698
      %v2886 = vunpack.c.h.b16 %v2698
      %v2887 = vunpack.c.l.b16 %v2699
      %v2888 = vunpack.c.h.b16 %v2699
      %v2889 = vunpack.c.l.b16 %v2700
      %v2890 = vunpack.c.h.b16 %v2700
      %v2891 = vunpack.c.l.b16 %v2701
      %v2892 = vunpack.c.h.b16 %v2701
      %v2893 = vunpack.c.l.b16 %v2702
      %v2894 = vunpack.c.h.b16 %v2702
      %v2895 = vunpack.c.l.b16 %v2703
      %v2896 = vunpack.c.h.b16 %v2703
      %v2897 = vunpack.c.l.b16 %v2704
      %v2898 = vunpack.c.h.b16 %v2704
      %v2899 = vunpack.c.l.b16 %v2705
      %v2900 = vunpack.c.h.b16 %v2705
      %v2901 = vunpack.c.l.b16 %v2706
      %v2902 = vunpack.c.h.b16 %v2706
      %v2903 = vunpack.c.l.b16 %v2707
      %v2904 = vunpack.c.h.b16 %v2707
      %v2905 = vunpack.c.l.b16 %v2708
      %v2906 = vunpack.c.h.b16 %v2708
      %v2907 = vunpack.c.l.b16 %v2709
      %v2908 = vunpack.c.h.b16 %v2709
      %v2909 = vunpack.c.l.b16 %v2710
      %v2910 = vunpack.c.h.b16 %v2710
      %v2911 = vunpack.c.l.b16 %v2711
      %v2912 = vunpack.c.h.b16 %v2711
      %v2913 = vunpack.c.l.b16 %v2712
      %v2914 = vunpack.c.h.b16 %v2712
      %v2915 = vunpack.c.l.b16 %v2713
      %v2916 = vunpack.c.h.b16 %v2713
      %v2917 = vunpack.c.l.b16 %v2714
      %v2918 = vunpack.c.h.b16 %v2714
      %v2919 = vpack.c.b16 %v2793, %v2791
      %v2920 = vpack.c.b16 %v2794, %v2792
      %v2921 = vpack.c.b16 %v2797, %v2795
      %v2922 = vpack.c.b16 %v2798, %v2796
      %v2923 = vpack.c.b16 %v2801, %v2799
      %v2924 = vpack.c.b16 %v2802, %v2800
      %v2925 = vpack.c.b16 %v2805, %v2803
      %v2926 = vpack.c.b16 %v2806, %v2804
      %v2927 = vpack.c.b16 %v2809, %v2807
      %v2928 = vpack.c.b16 %v2810, %v2808
      %v2929 = vpack.c.b16 %v2813, %v2811
      %v2930 = vpack.c.b16 %v2814, %v2812
      %v2931 = vpack.c.b16 %v2817, %v2815
      %v2932 = vpack.c.b16 %v2818, %v2816
      %v2933 = vpack.c.b16 %v2821, %v2819
      %v2934 = vpack.c.b16 %v2822, %v2820
      %v2935 = vpack.c.b16 %v2825, %v2823
      %v2936 = vpack.c.b16 %v2826, %v2824
      %v2937 = vpack.c.b16 %v2829, %v2827
      %v2938 = vpack.c.b16 %v2830, %v2828
      %v2939 = vpack.c.b16 %v2833, %v2831
      %v2940 = vpack.c.b16 %v2834, %v2832
      %v2941 = vpack.c.b16 %v2837, %v2835
      %v2942 = vpack.c.b16 %v2838, %v2836
      %v2943 = vpack.c.b16 %v2841, %v2839
      %v2944 = vpack.c.b16 %v2842, %v2840
      %v2945 = vpack.c.b16 %v2845, %v2843
      %v2946 = vpack.c.b16 %v2846, %v2844
      %v2947 = vpack.c.b16 %v2849, %v2847
      %v2948 = vpack.c.b16 %v2850, %v2848
      %v2949 = vpack.c.b16 %v2853, %v2851
      %v2950 = vpack.c.b16 %v2854, %v2852
      %v2951 = vpack.c.b16 %v2857, %v2855
      %v2952 = vpack.c.b16 %v2858, %v2856
      %v2953 = vpack.c.b16 %v2861, %v2859
      %v2954 = vpack.c.b16 %v2862, %v2860
      %v2955 = vpack.c.b16 %v2865, %v2863
      %v2956 = vpack.c.b16 %v2866, %v2864
      %v2957 = vpack.c.b16 %v2869, %v2867
      %v2958 = vpack.c.b16 %v2870, %v2868
      %v2959 = vpack.c.b16 %v2873, %v2871
      %v2960 = vpack.c.b16 %v2874, %v2872
      %v2961 = vpack.c.b16 %v2877, %v2875
      %v2962 = vpack.c.b16 %v2878, %v2876
      %v2963 = vpack.c.b16 %v2881, %v2879
      %v2964 = vpack.c.b16 %v2882, %v2880
      %v2965 = vpack.c.b16 %v2885, %v2883
      %v2966 = vpack.c.b16 %v2886, %v2884
      %v2967 = vpack.c.b16 %v2889, %v2887
      %v2968 = vpack.c.b16 %v2890, %v2888
      %v2969 = vpack.c.b16 %v2893, %v2891
      %v2970 = vpack.c.b16 %v2894, %v2892
      %v2971 = vpack.c.b16 %v2897, %v2895
      %v2972 = vpack.c.b16 %v2898, %v2896
      %v2973 = vpack.c.b16 %v2901, %v2899
      %v2974 = vpack.c.b16 %v2902, %v2900
      %v2975 = vpack.c.b16 %v2905, %v2903
      %v2976 = vpack.c.b16 %v2906, %v2904
      %v2977 = vpack.c.b16 %v2909, %v2907
      %v2978 = vpack.c.b16 %v2910, %v2908
      %v2979 = vpack.c.b16 %v2913, %v2911
      %v2980 = vpack.c.b16 %v2914, %v2912
      %v2981 = vpack.c.b16 %v2917, %v2915
      %v2982 = vpack.c.b16 %v2918, %v2916
      %3047 = vmatprep.subr.bf16.mxu0 %v2934
      %3048 = vmatpush1.bf16.msra.mxu0 %v2933
      %3049 = vmatprep.subr.bf16.mxu0 %v2932
      %3050 = vmatpush1.bf16.msra.mxu0 %v2931
      %3051 = vmatprep.subr.bf16.mxu0 %v2930
      %3052 = vmatpush1.bf16.msra.mxu0 %v2929
      %3053 = vmatprep.subr.bf16.mxu0 %v2928
      %3054 = vmatpush1.bf16.msra.mxu0 %v2927
      %3055 = vmatprep.subr.bf16.mxu0 %v2926
      %3056 = vmatpush1.bf16.msra.mxu0 %v2925
      %3057 = vmatprep.subr.bf16.mxu0 %v2924
      %3058 = vmatpush1.bf16.msra.mxu0 %v2923
      %3059 = vmatprep.subr.bf16.mxu0 %v2922
      %3060 = vmatpush1.bf16.msra.mxu0 %v2921
      %3061 = vmatprep.subr.bf16.mxu0 %v2920
      %3062 = vmatpush1.bf16.msra.mxu0 %v2919
      %3063 = vmatprep.subr.bf16.mxu0 %v2950
      %3064 = vmatpush2.bf16.msra.mxu0 %v2949
      %3065 = vmatprep.subr.bf16.mxu0 %v2948
      %3066 = vmatpush2.bf16.msra.mxu0 %v2947
      %3067 = vmatprep.subr.bf16.mxu0 %v2946
      %3068 = vmatpush2.bf16.msra.mxu0 %v2945
      %3069 = vmatprep.subr.bf16.mxu0 %v2944
      %3070 = vmatpush2.bf16.msra.mxu0 %v2943
      %3071 = vmatprep.subr.bf16.mxu0 %v2942
      %3072 = vmatpush2.bf16.msra.mxu0 %v2941
      %3073 = vmatprep.subr.bf16.mxu0 %v2940
      %3074 = vmatpush2.bf16.msra.mxu0 %v2939
      %3075 = vmatprep.subr.bf16.mxu0 %v2938
      %3076 = vmatpush2.bf16.msra.mxu0 %v2937
      %3077 = vmatprep.subr.bf16.mxu0 %v2936
      %3078 = vmatpush2.bf16.msra.mxu0 %v2935
      %3079 = vmatprep.mubr.bf16.mxu0 %v2648
      %3080 = vmatmul.mubr.bf16.gmra.mxu0 %v2647
      %v3081 = vpop.f32.mrf.mxu0
      %v3082 = vadd.f32 %v2720, %v3081
      %v3083 = vpop.f32.mrf.mxu0
      %v3084 = vadd.f32 %v2724, %v3083
      %v3085 = vpop.f32.mrf.mxu0
      %v3086 = vadd.f32 %v2720, %v3085
      %v3087 = vpop.f32.mrf.mxu0
      %v3088 = vadd.f32 %v2724, %v3087
      %3089 = vdwg.mxu0
      %3090 = vmatprep.subr.bf16.mxu0 %v2966
      %3091 = vmatpush1.bf16.msra.mxu0 %v2965
      %3092 = vmatprep.subr.bf16.mxu0 %v2964
      %3093 = vmatpush1.bf16.msra.mxu0 %v2963
      %3094 = vmatprep.subr.bf16.mxu0 %v2962
      %3095 = vmatpush1.bf16.msra.mxu0 %v2961
      %3096 = vmatprep.subr.bf16.mxu0 %v2960
      %3097 = vmatpush1.bf16.msra.mxu0 %v2959
      %3098 = vmatprep.subr.bf16.mxu0 %v2958
      %3099 = vmatpush1.bf16.msra.mxu0 %v2957
      %3100 = vmatprep.subr.bf16.mxu0 %v2956
      %3101 = vmatpush1.bf16.msra.mxu0 %v2955
      %3102 = vmatprep.subr.bf16.mxu0 %v2954
      %3103 = vmatpush1.bf16.msra.mxu0 %v2953
      %3104 = vmatprep.subr.bf16.mxu0 %v2952
      %3105 = vmatpush1.bf16.msra.mxu0 %v2951
      %3106 = vmatprep.subr.bf16.mxu0 %v2982
      %3107 = vmatpush2.bf16.msra.mxu0 %v2981
      %3108 = vmatprep.subr.bf16.mxu0 %v2980
      %3109 = vmatpush2.bf16.msra.mxu0 %v2979
      %3110 = vmatprep.subr.bf16.mxu0 %v2978
      %3111 = vmatpush2.bf16.msra.mxu0 %v2977
      %3112 = vmatprep.subr.bf16.mxu0 %v2976
      %3113 = vmatpush2.bf16.msra.mxu0 %v2975
      %3114 = vmatprep.subr.bf16.mxu0 %v2974
      %3115 = vmatpush2.bf16.msra.mxu0 %v2973
      %3116 = vmatprep.subr.bf16.mxu0 %v2972
      %3117 = vmatpush2.bf16.msra.mxu0 %v2971
      %3118 = vmatprep.subr.bf16.mxu0 %v2970
      %3119 = vmatpush2.bf16.msra.mxu0 %v2969
      %3120 = vmatprep.subr.bf16.mxu0 %v2968
      %3121 = vmatpush2.bf16.msra.mxu0 %v2967
      %3122 = vmatprep.mubr.bf16.mxu0 %v2650
      %3123 = vmatmul.mubr.bf16.gmra.mxu0 %v2649
      %v3124 = vpop.f32.mrf.mxu0
      %v3125 = vadd.f32 %v3082, %v3124
      %v3126 = vpop.f32.mrf.mxu0
      %v3127 = vadd.f32 %v3084, %v3126
      %v3128 = vpop.f32.mrf.mxu0
      %v3129 = vadd.f32 %v3086, %v3128
      %v3130 = vpop.f32.mrf.mxu0
      %v3131 = vadd.f32 %v3088, %v3130
      %3132 = vdwg.mxu0
      %v3133 = vadd.f32 %v3125, %v2077
      %v3134 = vadd.f32 %v3127, %v2078
      %v3135 = vadd.f32 %v3129, %v2079
      %v3136 = vadd.f32 %v3131, %v2080
      %v3137 = vld [vmem:[%s12] sm:$0x3]
      %v3138 = vld [vmem:[%s13] sm:$0x3]
      %v3139 = vadd.f32 %v3133, %v3134
      %3140 = vadd.xlane.f32.xlu0 %v3139
      %v3141 = vpop.xlane.xlu0 %3140
      %v3142 = vadd.f32 %v3135, %v3136
      %3143 = vadd.xlane.f32.xlu0 %v3142
      %v3144 = vpop.xlane.xlu0 %3143
      %v3145 = vmul.f32 %v3141, %v2024
      %v3146 = vmul.f32 %v3144, %v2024
      %v3147 = vsub.f32 %v3133, %v3145
      %v3148 = vsub.f32 %v3134, %v3145
      %v3149 = vsub.f32 %v3135, %v3146
      %v3150 = vsub.f32 %v3136, %v3146
      %v3151 = vmul.f32 %v3147, %v3147
      %v3152 = vmul.f32 %v3148, %v3148
      %v3153 = vmul.f32 %v3149, %v3149
      %v3154 = vmul.f32 %v3150, %v3150
      %v3155 = vadd.f32 %v3151, %v3152
      %3156 = vadd.xlane.f32.xlu0 %v3155
      %v3157 = vpop.xlane.xlu0 %3156
      %v3158 = vadd.f32 %v3153, %v3154
      %3159 = vadd.xlane.f32.xlu0 %v3158
      %v3160 = vpop.xlane.xlu0 %3159
      %v3161 = vmul.f32 %v3157, %v2024
      %v3162 = vmul.f32 %v3160, %v2024
      %v3163 = vadd.f32 %v3161, 1e-12
      %v3164 = vadd.f32 %v3162, 1e-12
      %v3165 = vrsqrt.pop %v3163
      %v3166 = vrsqrt.pop %v3164
      %v3167 = vmul.f32 %v3147, %v3165
      %v3168 = vmul.f32 %v3148, %v3165
      %v3169 = vmul.f32 %v3149, %v3166
      %v3170 = vmul.f32 %v3150, %v3166
      %v3172 = vlaneseq
      %v3173 = vshrl.u32 %v3172, 7
      %v3174 = vsub.s32 0, %v3173
      %v3175 = vrot.slane %v3137, %v3174
      %v3176 = vlaneseq
      %v3177 = vshrl.u32 %v3176, 7
      %v3178 = vsub.s32 1, %v3177
      %v3179 = vrot.slane %v3137, %v3178
      %v3182 = vmul.f32 %v3167, %v3175
      %v3183 = vmul.f32 %v3168, %v3179
      %v3184 = vmul.f32 %v3169, %v3175
      %v3185 = vmul.f32 %v3170, %v3179
      %v3187 = vlaneseq
      %v3188 = vshrl.u32 %v3187, 7
      %v3189 = vsub.s32 0, %v3188
      %v3190 = vrot.slane %v3138, %v3189
      %v3191 = vlaneseq
      %v3192 = vshrl.u32 %v3191, 7
      %v3193 = vsub.s32 1, %v3192
      %v3194 = vrot.slane %v3138, %v3193
      %v3197 = vadd.f32 %v3182, %v3190
      %v3198 = vadd.f32 %v3183, %v3194
      %v3199 = vadd.f32 %v3184, %v3190
      %v3200 = vadd.f32 %v3185, %v3194
      %v3201 = vpack.c.bf16 %v3199, %v3197
      %v3202 = vpack.c.bf16 %v3200, %v3198
      %v3205 = vunpack.c.l.b16 %v3201
      %v3206 = vunpack.c.l.b16 %v3202
      %v3207 = vunpack.c.h.b16 %v3201
      %v3208 = vunpack.c.h.b16 %v3202
      %v3209 = vpack.c.b16 %v3206, %v3205
      %v3210 = vpack.c.b16 %v3208, %v3207
      %3213 = vst [vmem:[%s481] sm:$0xff] %v3209
      %3214 = vst [vmem:[%s481 + $0x8] sm:$0xff] %v3210
      %p3215 = scmp.lt.s32.totalorder %s25, 1
      %s3216 = scalar_select %p3215, %s25, 1
      %s3217 = smul.addr %s3216, 4
      %s3218 = smul.addr %s3217, 4
      %s3219 = scalar_lea.vmem %s14, %s3218
      // Predicated region
      $region77: #{tag_value_forward.6} parent=75 // pred_check
        %p3220 = pneg %p347
      $region78: #{tag_value_forward.6} parent=75 // pred_check_branch
        %3222 = sbr.rel (%p3220) target = $region80
      $region79: #{tag_value_forward.6} parent=75 // pred_region
        _
      $region80: #{tag_value_forward.6} parent=75 // pred_fallthru
        _
    $region76: #{tag_value_forward.6} parent=5 // pred_fallthru
      _
    %p3223 = scmp.le.s32.totalorder 2, %s20
    // Predicated region
    $region81: #{tag_value_forward.6} parent=5 // pred_check
      %p3224 = pneg %p3223
    $region82: #{tag_value_forward.6} parent=5 // pred_check_branch
      %3226 = sbr.rel (%p3224) target = $region84
    $region83: #{tag_value_forward.6} parent=5 // pred_region
      %s3227 = ssub.s32 %s20, 2
      // Predicated region
      $region85: #{tag_value_forward.6} parent=83 // pred_check
        %p3228 = pneg %p353
      $region86: #{tag_value_forward.6} parent=83 // pred_check_branch
        %3230 = sbr.rel (%p3228) target = $region88
      $region87: #{tag_value_forward.6} parent=83 // pred_region
        %p3231 = scmp.lt.s32.totalorder %s26, 1
        %s3232 = scalar_select %p3231, %s26, 1
        %s3233 = smul.addr %s3232, 4
        %s3234 = smul.addr %s3233, 4
        %s3235 = scalar_lea.vmem %s14, %s3234
      $region88: #{tag_value_forward.6} parent=83 // pred_fallthru
        _
    $region84: #{tag_value_forward.6} parent=5 // pred_fallthru
      _
  $region6: #{tag_value_forward.6} parent=0 // loop_footer
    %s24 = sadd.s32 1, %s20
  $region7: #{tag_value_forward.6} parent=0 // loop_footer_branch
    %19 = sbr.rel target = $region3
  $region8: #{tag_value_forward.6} parent=0 // loop_exit
    _

// kernel: tag_value_forward.5
$region0: #{tag_value_forward.5}
  #allocation0 [shape = 'u32[]', space=smem, size = 0x4, offset = 0x4, fixed_abs, tag = 'smem constant byte address 0x4 - core index']
  #allocation1 [shape = 'u32[144,128]{1,0:T(1,128)}', space=vmem, size = 0x12000, scoped, tag = 'internal scratch']
  %s0 = inlined_call_operand.vmem [shape: bf16[2,16,256], index: 0, kind: input, shape index: {}]
  %s1 = inlined_call_operand.vmem [shape: f32[2,1,16], index: 1, kind: input, shape index: {}]
  %s2 = inlined_call_operand.vmem [shape: bf16[256,768], index: 2, kind: input, shape index: {}]
  %s3 = inlined_call_operand.vmem [shape: f32[1,768], index: 3, kind: input, shape index: {}]
  %s4 = inlined_call_operand.hbm [shape: bf16[256,256], index: 4, kind: input, shape index: {}]
  %s5 = inlined_call_operand.vmem [shape: f32[1,256], index: 5, kind: input, shape index: {}]
  %s6 = inlined_call_operand.vmem [shape: f32[1,256], index: 6, kind: input, shape index: {}]
  %s7 = inlined_call_operand.vmem [shape: f32[1,256], index: 7, kind: input, shape index: {}]
  %s8 = inlined_call_operand.hbm [shape: bf16[256,512], index: 8, kind: input, shape index: {}]
  %s9 = inlined_call_operand.vmem [shape: f32[1,512], index: 9, kind: input, shape index: {}]
  %s10 = inlined_call_operand.hbm [shape: bf16[512,256], index: 10, kind: input, shape index: {}]
  %s11 = inlined_call_operand.vmem [shape: f32[1,256], index: 11, kind: input, shape index: {}]
  %s12 = inlined_call_operand.vmem [shape: f32[1,256], index: 12, kind: input, shape index: {}]
  %s13 = inlined_call_operand.vmem [shape: f32[1,256], index: 13, kind: input, shape index: {}]
  %s14 = inlined_call_operand.vmem [shape: bf16[2,16,256], index: 14, kind: output, shape index: {}]
  %s15 = sld [smem:[#allocation0]]
  $region101: #{tag_value_forward.5} parent=0
    _
  %s17 = ssub.s32 1, %s15
  %s18 = scalar_select 0, %s17, %s15
  $region1: #{tag_value_forward.5} parent=0
    #allocation2 [shape = 'u8[131072]{0}', space=vmem, size = 0x20000, scoped, tag = 'input window, operand 4, single buffered']
    #allocation3 [shape = 's32[2]{0}', space=sflag, size = 0x8, scoped, tag = 'scoped memory for tag_value_forward.5']
    #allocation4 [shape = 'u8[262144]{0}', space=vmem, size = 0x40000, scoped, tag = 'input window, operand 8, single buffered']
    #allocation5 [shape = 's32[1]{0}', space=sflag, size = 0x4, scoped, tag = 'scoped memory for tag_value_forward.5']
    #allocation6 [shape = 'u8[262144]{0}', space=vmem, size = 0x40000, scoped, tag = 'input window, operand 10, single buffered']
    %19 = vsyncpa [#allocation3], 0
    %20 = vsyncpa [#allocation5], 0
    loop: start=0, step=1, limit=4
    $region2: #{tag_value_forward.5} parent=1 // loop_pre_header
      _
    $region3: #{tag_value_forward.5} parent=1 // loop_header
      %s22 = sphi 0, %s26
      %p23 = scmp.ge.s32.totalorder %s22, 4
      %s32 = sphi 0, %s34
      %s35 = sphi 0, %s32
      %s36 = sphi 0, %s35
      %s52 = sphi 0, %s36
      %s58 = sphi 0, %s60
      %s61 = sphi 0, %s58
      %s62 = sphi 0, %s61
      %s78 = sphi 0, %s62
      %s82 = sphi 0, %s82
      %s84 = sphi 0, %s82
      %s85 = sphi 0, %s84
      %s99 = sphi 0, %s85
      %s103 = sphi 0, %s103
      %s105 = sphi 0, %s103
      %s106 = sphi 0, %s105
      %s120 = sphi 0, %s106
      %s124 = sphi 0, %s124
      %s126 = sphi 0, %s124
      %s127 = sphi 0, %s126
      %s141 = sphi 0, %s127
      %s145 = sphi 0, %s145
      %s147 = sphi 0, %s145
      %s148 = sphi 0, %s147
      %s162 = sphi 0, %s148
      %s166 = sphi 0, %s166
      %s168 = sphi 0, %s166
      %s169 = sphi 0, %s168
      %s183 = sphi 0, %s169
      %s187 = sphi 0, %s187
      %s189 = sphi 0, %s187
      %s190 = sphi 0, %s189
      %s204 = sphi 0, %s190
      %s208 = sphi 0, %s208
      %s210 = sphi 0, %s208
      %s211 = sphi 0, %s210
      %s225 = sphi 0, %s211
      %s229 = sphi 0, %s229
      %s231 = sphi 0, %s229
      %s232 = sphi 0, %s231
      %s246 = sphi 0, %s232
      %s250 = sphi 0, %s250
      %s252 = sphi 0, %s250
      %s253 = sphi 0, %s252
      %s267 = sphi 0, %s253
      %s271 = sphi 0, %s271
      %s273 = sphi 0, %s271
      %s274 = sphi 0, %s273
      %s288 = sphi 0, %s274
      %s292 = sphi 0, %s292
      %s294 = sphi 0, %s292
      %s295 = sphi 0, %s294
      %s309 = sphi 0, %s295
      %s313 = sphi 0, %s313
      %s315 = sphi 0, %s313
      %s316 = sphi 0, %s315
      %s330 = sphi 0, %s316
      %s336 = sphi 0, %s338
      %s339 = sphi 0, %s336
      %s340 = sphi 0, %s339
      %s356 = sphi 0, %s340
    $region4: #{tag_value_forward.5} parent=1 // loop_header_branch
      %25 = sbr.rel (%p23) target = $region8
    $region5: #{tag_value_forward.5} parent=1 // loop_body
      %s27 = ssub.s32 %s22, 1
      %s28 = ssub.s32 %s22, 2
      %s29 = sadd.s32 %s22, 1
      %s30 = ssub.s32 %s22, %s29
      %p31 = scmp.eq.s32.totalorder %s30, 0
      %s33 = sadd.s32 %s32, 1
      %s34 = scalar_select %p31, %s32, %s33
      %p37 = pneg %p31
      %p38 = scmp.eq.s32.totalorder %s22, 1
      %p39 = por %p37, %p38
      %p40 = scmp.ne.s32.totalorder %s32, %s35
      %p41 = scmp.eq.s32.totalorder %s22, 0
      %p42 = por %p40, %p41
      %p43 = scmp.ne.s32.totalorder %s32, %s35
      %p44 = scmp.eq.s32.totalorder %s27, 1
      %p45 = por %p43, %p44
      %p46 = scmp.ne.s32.totalorder %s35, %s36
      %p47 = scmp.eq.s32.totalorder %s27, 0
      %p48 = por %p46, %p47
      %p49 = scmp.ne.s32.totalorder %s35, %s36
      %p50 = scmp.eq.s32.totalorder %s28, 1
      %p51 = por %p49, %p50
      %p53 = scmp.ne.s32.totalorder %s36, %s52
      %p54 = scmp.eq.s32.totalorder %s28, 0
      %p55 = por %p53, %p54
      %s56 = ssub.s32 %s22, %s29
      %p57 = scmp.eq.s32.totalorder %s56, 0
      %s59 = sadd.s32 %s58, 1
      %s60 = scalar_select %p57, %s58, %s59
      %p63 = pneg %p57
      %p64 = scmp.eq.s32.totalorder %s22, 1
      %p65 = por %p63, %p64
      %p66 = scmp.ne.s32.totalorder %s58, %s61
      %p67 = scmp.eq.s32.totalorder %s22, 0
      %p68 = por %p66, %p67
      %p69 = scmp.ne.s32.totalorder %s58, %s61
      %p70 = scmp.eq.s32.totalorder %s27, 1
      %p71 = por %p69, %p70
      %p72 = scmp.ne.s32.totalorder %s61, %s62
      %p73 = scmp.eq.s32.totalorder %s27, 0
      %p74 = por %p72, %p73
      %p75 = scmp.ne.s32.totalorder %s61, %s62
      %p76 = scmp.eq.s32.totalorder %s28, 1
      %p77 = por %p75, %p76
      %p79 = scmp.ne.s32.totalorder %s62, %s78
      %p80 = scmp.eq.s32.totalorder %s28, 0
      %p81 = por %p79, %p80
      %s83 = sadd.s32 %s82, 1
      %p86 = scmp.eq.s32.totalorder %s22, 1
      %p87 = scmp.ne.s32.totalorder %s82, %s84
      %p88 = scmp.eq.s32.totalorder %s22, 0
      %p89 = por %p87, %p88
      %p90 = scmp.ne.s32.totalorder %s82, %s84
      %p91 = scmp.eq.s32.totalorder %s27, 1
      %p92 = por %p90, %p91
      %p93 = scmp.ne.s32.totalorder %s84, %s85
      %p94 = scmp.eq.s32.totalorder %s27, 0
      %p95 = por %p93, %p94
      %p96 = scmp.ne.s32.totalorder %s84, %s85
      %p97 = scmp.eq.s32.totalorder %s28, 1
      %p98 = por %p96, %p97
      %p100 = scmp.ne.s32.totalorder %s85, %s99
      %p101 = scmp.eq.s32.totalorder %s28, 0
      %p102 = por %p100, %p101
      %s104 = sadd.s32 %s103, 1
      %p107 = scmp.eq.s32.totalorder %s22, 1
      %p108 = scmp.ne.s32.totalorder %s103, %s105
      %p109 = scmp.eq.s32.totalorder %s22, 0
      %p110 = por %p108, %p109
      %p111 = scmp.ne.s32.totalorder %s103, %s105
      %p112 = scmp.eq.s32.totalorder %s27, 1
      %p113 = por %p111, %p112
      %p114 = scmp.ne.s32.totalorder %s105, %s106
      %p115 = scmp.eq.s32.totalorder %s27, 0
      %p116 = por %p114, %p115
      %p117 = scmp.ne.s32.totalorder %s105, %s106
      %p118 = scmp.eq.s32.totalorder %s28, 1
      %p119 = por %p117, %p118
      %p121 = scmp.ne.s32.totalorder %s106, %s120
      %p122 = scmp.eq.s32.totalorder %s28, 0
      %p123 = por %p121, %p122
      %s125 = sadd.s32 %s124, 1
      %p128 = scmp.eq.s32.totalorder %s22, 1
      %p129 = scmp.ne.s32.totalorder %s124, %s126
      %p130 = scmp.eq.s32.totalorder %s22, 0
      %p131 = por %p129, %p130
      %p132 = scmp.ne.s32.totalorder %s124, %s126
      %p133 = scmp.eq.s32.totalorder %s27, 1
      %p134 = por %p132, %p133
      %p135 = scmp.ne.s32.totalorder %s126, %s127
      %p136 = scmp.eq.s32.totalorder %s27, 0
      %p137 = por %p135, %p136
      %p138 = scmp.ne.s32.totalorder %s126, %s127
      %p139 = scmp.eq.s32.totalorder %s28, 1
      %p140 = por %p138, %p139
      %p142 = scmp.ne.s32.totalorder %s127, %s141
      %p143 = scmp.eq.s32.totalorder %s28, 0
      %p144 = por %p142, %p143
      %s146 = sadd.s32 %s145, 1
      %p149 = scmp.eq.s32.totalorder %s22, 1
      %p150 = scmp.ne.s32.totalorder %s145, %s147
      %p151 = scmp.eq.s32.totalorder %s22, 0
      %p152 = por %p150, %p151
      %p153 = scmp.ne.s32.totalorder %s145, %s147
      %p154 = scmp.eq.s32.totalorder %s27, 1
      %p155 = por %p153, %p154
      %p156 = scmp.ne.s32.totalorder %s147, %s148
      %p157 = scmp.eq.s32.totalorder %s27, 0
      %p158 = por %p156, %p157
      %p159 = scmp.ne.s32.totalorder %s147, %s148
      %p160 = scmp.eq.s32.totalorder %s28, 1
      %p161 = por %p159, %p160
      %p163 = scmp.ne.s32.totalorder %s148, %s162
      %p164 = scmp.eq.s32.totalorder %s28, 0
      %p165 = por %p163, %p164
      %s167 = sadd.s32 %s166, 1
      %p170 = scmp.eq.s32.totalorder %s22, 1
      %p171 = scmp.ne.s32.totalorder %s166, %s168
      %p172 = scmp.eq.s32.totalorder %s22, 0
      %p173 = por %p171, %p172
      %p174 = scmp.ne.s32.totalorder %s166, %s168
      %p175 = scmp.eq.s32.totalorder %s27, 1
      %p176 = por %p174, %p175
      %p177 = scmp.ne.s32.totalorder %s168, %s169
      %p178 = scmp.eq.s32.totalorder %s27, 0
      %p179 = por %p177, %p178
      %p180 = scmp.ne.s32.totalorder %s168, %s169
      %p181 = scmp.eq.s32.totalorder %s28, 1
      %p182 = por %p180, %p181
      %p184 = scmp.ne.s32.totalorder %s169, %s183
      %p185 = scmp.eq.s32.totalorder %s28, 0
      %p186 = por %p184, %p185
      %s188 = sadd.s32 %s187, 1
      %p191 = scmp.eq.s32.totalorder %s22, 1
      %p192 = scmp.ne.s32.totalorder %s187, %s189
      %p193 = scmp.eq.s32.totalorder %s22, 0
      %p194 = por %p192, %p193
      %p195 = scmp.ne.s32.totalorder %s187, %s189
      %p196 = scmp.eq.s32.totalorder %s27, 1
      %p197 = por %p195, %p196
      %p198 = scmp.ne.s32.totalorder %s189, %s190
      %p199 = scmp.eq.s32.totalorder %s27, 0
      %p200 = por %p198, %p199
      %p201 = scmp.ne.s32.totalorder %s189, %s190
      %p202 = scmp.eq.s32.totalorder %s28, 1
      %p203 = por %p201, %p202
      %p205 = scmp.ne.s32.totalorder %s190, %s204
      %p206 = scmp.eq.s32.totalorder %s28, 0
      %p207 = por %p205, %p206
      %s209 = sadd.s32 %s208, 1
      %p212 = scmp.eq.s32.totalorder %s22, 1
      %p213 = scmp.ne.s32.totalorder %s208, %s210
      %p214 = scmp.eq.s32.totalorder %s22, 0
      %p215 = por %p213, %p214
      %p216 = scmp.ne.s32.totalorder %s208, %s210
      %p217 = scmp.eq.s32.totalorder %s27, 1
      %p218 = por %p216, %p217
      %p219 = scmp.ne.s32.totalorder %s210, %s211
      %p220 = scmp.eq.s32.totalorder %s27, 0
      %p221 = por %p219, %p220
      %p222 = scmp.ne.s32.totalorder %s210, %s211
      %p223 = scmp.eq.s32.totalorder %s28, 1
      %p224 = por %p222, %p223
      %p226 = scmp.ne.s32.totalorder %s211, %s225
      %p227 = scmp.eq.s32.totalorder %s28, 0
      %p228 = por %p226, %p227
      %s230 = sadd.s32 %s229, 1
      %p233 = scmp.eq.s32.totalorder %s22, 1
      %p234 = scmp.ne.s32.totalorder %s229, %s231
      %p235 = scmp.eq.s32.totalorder %s22, 0
      %p236 = por %p234, %p235
      %p237 = scmp.ne.s32.totalorder %s229, %s231
      %p238 = scmp.eq.s32.totalorder %s27, 1
      %p239 = por %p237, %p238
      %p240 = scmp.ne.s32.totalorder %s231, %s232
      %p241 = scmp.eq.s32.totalorder %s27, 0
      %p242 = por %p240, %p241
      %p243 = scmp.ne.s32.totalorder %s231, %s232
      %p244 = scmp.eq.s32.totalorder %s28, 1
      %p245 = por %p243, %p244
      %p247 = scmp.ne.s32.totalorder %s232, %s246
      %p248 = scmp.eq.s32.totalorder %s28, 0
      %p249 = por %p247, %p248
      %s251 = sadd.s32 %s250, 1
      %p254 = scmp.eq.s32.totalorder %s22, 1
      %p255 = scmp.ne.s32.totalorder %s250, %s252
      %p256 = scmp.eq.s32.totalorder %s22, 0
      %p257 = por %p255, %p256
      %p258 = scmp.ne.s32.totalorder %s250, %s252
      %p259 = scmp.eq.s32.totalorder %s27, 1
      %p260 = por %p258, %p259
      %p261 = scmp.ne.s32.totalorder %s252, %s253
      %p262 = scmp.eq.s32.totalorder %s27, 0
      %p263 = por %p261, %p262
      %p264 = scmp.ne.s32.totalorder %s252, %s253
      %p265 = scmp.eq.s32.totalorder %s28, 1
      %p266 = por %p264, %p265
      %p268 = scmp.ne.s32.totalorder %s253, %s267
      %p269 = scmp.eq.s32.totalorder %s28, 0
      %p270 = por %p268, %p269
      %s272 = sadd.s32 %s271, 1
      %p275 = scmp.eq.s32.totalorder %s22, 1
      %p276 = scmp.ne.s32.totalorder %s271, %s273
      %p277 = scmp.eq.s32.totalorder %s22, 0
      %p278 = por %p276, %p277
      %p279 = scmp.ne.s32.totalorder %s271, %s273
      %p280 = scmp.eq.s32.totalorder %s27, 1
      %p281 = por %p279, %p280
      %p282 = scmp.ne.s32.totalorder %s273, %s274
      %p283 = scmp.eq.s32.totalorder %s27, 0
      %p284 = por %p282, %p283
      %p285 = scmp.ne.s32.totalorder %s273, %s274
      %p286 = scmp.eq.s32.totalorder %s28, 1
      %p287 = por %p285, %p286
      %p289 = scmp.ne.s32.totalorder %s274, %s288
      %p290 = scmp.eq.s32.totalorder %s28, 0
      %p291 = por %p289, %p290
      %s293 = sadd.s32 %s292, 1
      %p296 = scmp.eq.s32.totalorder %s22, 1
      %p297 = scmp.ne.s32.totalorder %s292, %s294
      %p298 = scmp.eq.s32.totalorder %s22, 0
      %p299 = por %p297, %p298
      %p300 = scmp.ne.s32.totalorder %s292, %s294
      %p301 = scmp.eq.s32.totalorder %s27, 1
      %p302 = por %p300, %p301
      %p303 = scmp.ne.s32.totalorder %s294, %s295
      %p304 = scmp.eq.s32.totalorder %s27, 0
      %p305 = por %p303, %p304
      %p306 = scmp.ne.s32.totalorder %s294, %s295
      %p307 = scmp.eq.s32.totalorder %s28, 1
      %p308 = por %p306, %p307
      %p310 = scmp.ne.s32.totalorder %s295, %s309
      %p311 = scmp.eq.s32.totalorder %s28, 0
      %p312 = por %p310, %p311
      %s314 = sadd.s32 %s313, 1
      %p317 = scmp.eq.s32.totalorder %s22, 1
      %p318 = scmp.ne.s32.totalorder %s313, %s315
      %p319 = scmp.eq.s32.totalorder %s22, 0
      %p320 = por %p318, %p319
      %p321 = scmp.ne.s32.totalorder %s313, %s315
      %p322 = scmp.eq.s32.totalorder %s27, 1
      %p323 = por %p321, %p322
      %p324 = scmp.ne.s32.totalorder %s315, %s316
      %p325 = scmp.eq.s32.totalorder %s27, 0
      %p326 = por %p324, %p325
      %p327 = scmp.ne.s32.totalorder %s315, %s316
      %p328 = scmp.eq.s32.totalorder %s28, 1
      %p329 = por %p327, %p328
      %p331 = scmp.ne.s32.totalorder %s316, %s330
      %p332 = scmp.eq.s32.totalorder %s28, 0
      %p333 = por %p331, %p332
      %s334 = ssub.s32 %s22, %s29
      %p335 = scmp.eq.s32.totalorder %s334, 0
      %s337 = sadd.s32 %s336, 1
      %s338 = scalar_select %p335, %s336, %s337
      %p341 = pneg %p335
      %p342 = scmp.eq.s32.totalorder %s22, 1
      %p343 = por %p341, %p342
      %p344 = scmp.ne.s32.totalorder %s336, %s339
      %p345 = scmp.eq.s32.totalorder %s22, 0
      %p346 = por %p344, %p345
      %p347 = scmp.ne.s32.totalorder %s336, %s339
      %p348 = scmp.eq.s32.totalorder %s27, 1
      %p349 = por %p347, %p348
      %p350 = scmp.ne.s32.totalorder %s339, %s340
      %p351 = scmp.eq.s32.totalorder %s27, 0
      %p352 = por %p350, %p351
      %p353 = scmp.ne.s32.totalorder %s339, %s340
      %p354 = scmp.eq.s32.totalorder %s28, 1
      %p355 = por %p353, %p354
      %p357 = scmp.ne.s32.totalorder %s340, %s356
      %p358 = scmp.eq.s32.totalorder %s28, 0
      %p359 = por %p357, %p358
      %p360 = scmp.le.s32.totalorder 1, %s22
      %p361 = scmp.lt.s32.totalorder %s22, 3
      %p362 = pnand %p360, %p361
      %p363 = pneg %p362
      // Predicated region
      $region9: #{tag_value_forward.5} parent=5 // pred_check
        _
      $region10: #{tag_value_forward.5} parent=5 // pred_check_branch
        %365 = sbr.rel (%p362) target = $region12
      $region11: #{tag_value_forward.5} parent=5 // pred_region
        %s366 = ssub.s32 %s22, 1
        // Predicated region
        $region13: #{tag_value_forward.5} parent=11 // pred_check
          %p367 = pneg %p95
        $region14: #{tag_value_forward.5} parent=11 // pred_check_branch
          %369 = sbr.rel (%p367) target = $region16
        $region15: #{tag_value_forward.5} parent=11 // pred_region
          _
        $region16: #{tag_value_forward.5} parent=11 // pred_fallthru
          _
        // Predicated region
        $region17: #{tag_value_forward.5} parent=11 // pred_check
          %p370 = pneg %p116
        $region18: #{tag_value_forward.5} parent=11 // pred_check_branch
          %372 = sbr.rel (%p370) target = $region20
        $region19: #{tag_value_forward.5} parent=11 // pred_region
          _
        $region20: #{tag_value_forward.5} parent=11 // pred_fallthru
          _
        // Predicated region
        $region21: #{tag_value_forward.5} parent=11 // pred_check
          %p373 = pneg %p137
        $region22: #{tag_value_forward.5} parent=11 // pred_check_branch
          %375 = sbr.rel (%p373) target = $region24
        $region23: #{tag_value_forward.5} parent=11 // pred_region
          %s377 = ssub.s32 4096, 4096
          %378 = vsyncadd [#allocation3], %s377
          %s379 = sshll.u32 [#allocation2], 4
          %s380 = int_to_ptr.vmem [resolvable:$true] %s379
          %385 = dma.hbm_to_vmem [thread:$0]  %s4, 4096, %s380, [#allocation3], 128, 128, 8
        $region24: #{tag_value_forward.5} parent=11 // pred_fallthru
          _
        // Predicated region
        $region25: #{tag_value_forward.5} parent=11 // pred_check
          %p386 = pneg %p158
        $region26: #{tag_value_forward.5} parent=11 // pred_check_branch
          %388 = sbr.rel (%p386) target = $region28
        $region27: #{tag_value_forward.5} parent=11 // pred_region
          _
        $region28: #{tag_value_forward.5} parent=11 // pred_fallthru
          _
        // Predicated region
        $region29: #{tag_value_forward.5} parent=11 // pred_check
          %p389 = pneg %p179
        $region30: #{tag_value_forward.5} parent=11 // pred_check_branch
          %391 = sbr.rel (%p389) target = $region32
        $region31: #{tag_value_forward.5} parent=11 // pred_region
          _
        $region32: #{tag_value_forward.5} parent=11 // pred_fallthru
          _
        // Predicated region
        $region33: #{tag_value_forward.5} parent=11 // pred_check
          %p392 = pneg %p200
        $region34: #{tag_value_forward.5} parent=11 // pred_check_branch
          %394 = sbr.rel (%p392) target = $region36
        $region35: #{tag_value_forward.5} parent=11 // pred_region
          _
        $region36: #{tag_value_forward.5} parent=11 // pred_fallthru
          _
        // Predicated region
        $region37: #{tag_value_forward.5} parent=11 // pred_check
          %p395 = pneg %p221
        $region38: #{tag_value_forward.5} parent=11 // pred_check_branch
          %397 = sbr.rel (%p395) target = $region40
        $region39: #{tag_value_forward.5} parent=11 // pred_region
          %s399 = ssub.s32 8192, 8192
          %400 = vsyncadd [#allocation5], %s399
          %s401 = sshll.u32 [#allocation4], 4
          %s402 = int_to_ptr.vmem [resolvable:$true] %s401
          %407 = dma.hbm_to_vmem [thread:$0]  %s8, 8192, %s402, [#allocation5], 256, 256, 16
        $region40: #{tag_value_forward.5} parent=11 // pred_fallthru
          _
        // Predicated region
        $region41: #{tag_value_forward.5} parent=11 // pred_check
          %p408 = pneg %p242
        $region42: #{tag_value_forward.5} parent=11 // pred_check_branch
          %410 = sbr.rel (%p408) target = $region44
        $region43: #{tag_value_forward.5} parent=11 // pred_region
          _
        $region44: #{tag_value_forward.5} parent=11 // pred_fallthru
          _
        // Predicated region
        $region45: #{tag_value_forward.5} parent=11 // pred_check
          %p411 = pneg %p263
        $region46: #{tag_value_forward.5} parent=11 // pred_check_branch
          %413 = sbr.rel (%p411) target = $region48
        $region47: #{tag_value_forward.5} parent=11 // pred_region
          %s415 = ssub.s32 8192, 8192
          %416 = vsyncadd [#allocation5], %s415
          %s417 = sshll.u32 [#allocation6], 4
          %s418 = int_to_ptr.vmem [resolvable:$true] %s417
          %423 = dma.hbm_to_vmem [thread:$0]  %s10, 8192, %s418, [#allocation5], 128, 128, 8
        $region48: #{tag_value_forward.5} parent=11 // pred_fallthru
          _
        // Predicated region
        $region49: #{tag_value_forward.5} parent=11 // pred_check
          %p424 = pneg %p284
        $region50: #{tag_value_forward.5} parent=11 // pred_check_branch
          %426 = sbr.rel (%p424) target = $region52
        $region51: #{tag_value_forward.5} parent=11 // pred_region
          _
        $region52: #{tag_value_forward.5} parent=11 // pred_fallthru
          _
        // Predicated region
        $region53: #{tag_value_forward.5} parent=11 // pred_check
          %p427 = pneg %p305
        $region54: #{tag_value_forward.5} parent=11 // pred_check_branch
          %429 = sbr.rel (%p427) target = $region56
        $region55: #{tag_value_forward.5} parent=11 // pred_region
          _
        $region56: #{tag_value_forward.5} parent=11 // pred_fallthru
          _
        // Predicated region
        $region57: #{tag_value_forward.5} parent=11 // pred_check
          %p430 = pneg %p326
        $region58: #{tag_value_forward.5} parent=11 // pred_check_branch
          %432 = sbr.rel (%p430) target = $region60
        $region59: #{tag_value_forward.5} parent=11 // pred_region
          _
        $region60: #{tag_value_forward.5} parent=11 // pred_fallthru
          _
      $region12: #{tag_value_forward.5} parent=5 // pred_fallthru
        _
      %p433 = scmp.lt.s32.totalorder %s22, 2
      // Predicated region
      $region61: #{tag_value_forward.5} parent=5 // pred_check
        %p434 = pneg %p433
      $region62: #{tag_value_forward.5} parent=5 // pred_check_branch
        %436 = sbr.rel (%p434) target = $region64
      $region63: #{tag_value_forward.5} parent=5 // pred_region
        // Predicated region
        $region65: #{tag_value_forward.5} parent=63 // pred_check
          %p437 = pneg %p42
        $region66: #{tag_value_forward.5} parent=63 // pred_check_branch
          %439 = sbr.rel (%p437) target = $region68
        $region67: #{tag_value_forward.5} parent=63 // pred_region
          %p440 = scmp.lt.s32.totalorder %s22, 1
          %s441 = scalar_select %p440, %s22, 1
          %s442 = smul.addr %s441, 4
          %s443 = smul.addr %s442, 4
          %s444 = scalar_lea.vmem %s0, %s443
        $region68: #{tag_value_forward.5} parent=63 // pred_fallthru
          _
        // Predicated region
        $region69: #{tag_value_forward.5} parent=63 // pred_check
          %p445 = pneg %p68
        $region70: #{tag_value_forward.5} parent=63 // pred_check_branch
          %447 = sbr.rel (%p445) target = $region72
        $region71: #{tag_value_forward.5} parent=63 // pred_region
          %p448 = scmp.lt.s32.totalorder %s22, 1
          %s449 = scalar_select %p448, %s22, 1
          %s450 = scalar_lea.vmem %s1, %s449
        $region72: #{tag_value_forward.5} parent=63 // pred_fallthru
          _
      $region64: #{tag_value_forward.5} parent=5 // pred_fallthru
        _
      %p451 = scmp.le.s32.totalorder 1, %s22
      %p452 = scmp.lt.s32.totalorder %s22, 3
      %p453 = pnand %p451, %p452
      %p454 = pneg %p453
      // Predicated region
      $region73: #{tag_value_forward.5} parent=5 // pred_check
        _
      $region74: #{tag_value_forward.5} parent=5 // pred_check_branch
        %456 = sbr.rel (%p453) target = $region76
      $region75: #{tag_value_forward.5} parent=5 // pred_region
        %s457 = ssub.s32 %s22, 1
        // Predicated region
        $region77: #{tag_value_forward.5} parent=75 // pred_check
          %p458 = pneg %p137
        $region78: #{tag_value_forward.5} parent=75 // pred_check_branch
          %460 = sbr.rel (%p458) target = $region80
        $region79: #{tag_value_forward.5} parent=75 // pred_region
          %461 = dma.done [#allocation3], 4096
        $region80: #{tag_value_forward.5} parent=75 // pred_fallthru
          _
        // Predicated region
        $region81: #{tag_value_forward.5} parent=75 // pred_check
          %p462 = pneg %p221
        $region82: #{tag_value_forward.5} parent=75 // pred_check_branch
          %464 = sbr.rel (%p462) target = $region84
        $region83: #{tag_value_forward.5} parent=75 // pred_region
          %465 = dma.done [#allocation5], 8192
        $region84: #{tag_value_forward.5} parent=75 // pred_fallthru
          _
        // Predicated region
        $region85: #{tag_value_forward.5} parent=75 // pred_check
          %p466 = pneg %p263
        $region86: #{tag_value_forward.5} parent=75 // pred_check_branch
          %468 = sbr.rel (%p466) target = $region88
        $region87: #{tag_value_forward.5} parent=75 // pred_region
          %469 = dma.done [#allocation5], 8192
        $region88: #{tag_value_forward.5} parent=75 // pred_fallthru
          _
        %p470 = scmp.lt.s32.totalorder %s27, 1
        %s471 = scalar_select %p470, %s27, 1
        %s472 = smul.addr %s471, 4
        %s473 = smul.addr %s472, 4
        %s474 = scalar_lea.vmem %s0, %s473
        %p475 = pneg %p48
        %p476 = pneg %p45
        %p477 = scmp.lt.s32.totalorder %s27, 1
        %s478 = scalar_select %p477, %s27, 1
        %s479 = scalar_lea.vmem %s1, %s478
        %p480 = pneg %p74
        %p481 = pneg %p71
        %p482 = pneg %p95
        %p483 = pneg %p92
        %p484 = pneg %p116
        %p485 = pneg %p113
        %p486 = pneg %p137
        %p487 = pneg %p134
        %p488 = pneg %p158
        %p489 = pneg %p155
        %p490 = pneg %p179
        %p491 = pneg %p176
        %p492 = pneg %p200
        %p493 = pneg %p197
        %p494 = pneg %p221
        %p495 = pneg %p218
        %p496 = pneg %p242
        %p497 = pneg %p239
        %p498 = pneg %p263
        %p499 = pneg %p260
        %p500 = pneg %p284
        %p501 = pneg %p281
        %p502 = pneg %p305
        %p503 = pneg %p302
        %p504 = pneg %p326
        %p505 = pneg %p323
        %p506 = pneg %p352
        %p507 = pneg %p349
        %p508 = scmp.lt.s32.totalorder %s27, 1
        %s509 = scalar_select %p508, %s27, 1
        %s510 = smul.addr %s509, 4
        %s511 = smul.addr %s510, 4
        %s512 = scalar_lea.vmem %s14, %s511
        %p513 = scmp.lt.s32.totalorder %s27, 1
        %s514 = scalar_select %p513, %s27, 1
        %s515 = smul.addr %s514, 4
        %s516 = smul.addr %s515, 4
        %s517 = scalar_lea.vmem %s0, %s516
        %p518 = scmp.lt.s32.totalorder %s27, 1
        %s519 = scalar_select %p518, %s27, 1
        %s520 = scalar_lea.vmem %s1, %s519
        %p521 = scmp.lt.s32.totalorder %s27, 1
        %s522 = scalar_select %p521, %s27, 1
        %s523 = smul.addr %s522, 4
        %s524 = smul.addr %s523, 4
        %s525 = scalar_lea.vmem %s14, %s524
        %v527 = vld [vmem:[%s517] sm:$0xff]
        %v528 = vld [vmem:[%s517 + $0x8] sm:$0xff]
        %v529 = vunpack.c.l.bf16 %v527
        %v530 = vunpack.c.h.bf16 %v527
        %v531 = vunpack.c.l.bf16 %v528
        %v532 = vunpack.c.h.bf16 %v528
        %v533 = vld [vmem:[%s2] sm:$0xff]
        %v534 = vld [vmem:[%s2 + $0x8] sm:$0xff]
        %v535 = vld [vmem:[%s2 + $0x10] sm:$0xff]
        %v536 = vld [vmem:[%s2 + $0x18] sm:$0xff]
        %v537 = vld [vmem:[%s2 + $0x20] sm:$0xff]
        %v538 = vld [vmem:[%s2 + $0x28] sm:$0xff]
        %v539 = vld [vmem:[%s2 + $0x30] sm:$0xff]
        %v540 = vld [vmem:[%s2 + $0x38] sm:$0xff]
        %v541 = vld [vmem:[%s2 + $0x40] sm:$0xff]
        %v542 = vld [vmem:[%s2 + $0x48] sm:$0xff]
        %v543 = vld [vmem:[%s2 + $0x50] sm:$0xff]
        %v544 = vld [vmem:[%s2 + $0x58] sm:$0xff]
        %v545 = vld [vmem:[%s2 + $0x60] sm:$0xff]
        %v546 = vld [vmem:[%s2 + $0x68] sm:$0xff]
        %v547 = vld [vmem:[%s2 + $0x70] sm:$0xff]
        %v548 = vld [vmem:[%s2 + $0x78] sm:$0xff]
        %v549 = vld [vmem:[%s2 + $0x80] sm:$0xff]
        %v550 = vld [vmem:[%s2 + $0x88] sm:$0xff]
        %v551 = vld [vmem:[%s2 + $0x90] sm:$0xff]
        %v552 = vld [vmem:[%s2 + $0x98] sm:$0xff]
        %v553 = vld [vmem:[%s2 + $0xa0] sm:$0xff]
        %v554 = vld [vmem:[%s2 + $0xa8] sm:$0xff]
        %v555 = vld [vmem:[%s2 + $0xb0] sm:$0xff]
        %v556 = vld [vmem:[%s2 + $0xb8] sm:$0xff]
        %v557 = vld [vmem:[%s2 + $0xc0] sm:$0xff]
        %v558 = vld [vmem:[%s2 + $0xc8] sm:$0xff]
        %v559 = vld [vmem:[%s2 + $0xd0] sm:$0xff]
        %v560 = vld [vmem:[%s2 + $0xd8] sm:$0xff]
        %v561 = vld [vmem:[%s2 + $0xe0] sm:$0xff]
        %v562 = vld [vmem:[%s2 + $0xe8] sm:$0xff]
        %v563 = vld [vmem:[%s2 + $0xf0] sm:$0xff]
        %v564 = vld [vmem:[%s2 + $0xf8] sm:$0xff]
        %v565 = vld [vmem:[%s2 + $0x100] sm:$0xff]
        %v566 = vld [vmem:[%s2 + $0x108] sm:$0xff]
        %v567 = vld [vmem:[%s2 + $0x110] sm:$0xff]
        %v568 = vld [vmem:[%s2 + $0x118] sm:$0xff]
        %v569 = vld [vmem:[%s2 + $0x120] sm:$0xff]
        %v570 = vld [vmem:[%s2 + $0x128] sm:$0xff]
        %v571 = vld [vmem:[%s2 + $0x130] sm:$0xff]
        %v572 = vld [vmem:[%s2 + $0x138] sm:$0xff]
        %v573 = vld [vmem:[%s2 + $0x140] sm:$0xff]
        %v574 = vld [vmem:[%s2 + $0x148] sm:$0xff]
        %v575 = vld [vmem:[%s2 + $0x150] sm:$0xff]
        %v576 = vld [vmem:[%s2 + $0x158] sm:$0xff]
        %v577 = vld [vmem:[%s2 + $0x160] sm:$0xff]
        %v578 = vld [vmem:[%s2 + $0x168] sm:$0xff]
        %v579 = vld [vmem:[%s2 + $0x170] sm:$0xff]
        %v580 = vld [vmem:[%s2 + $0x178] sm:$0xff]
        %v581 = vld [vmem:[%s2 + $0x180] sm:$0xff]
        %v582 = vld [vmem:[%s2 + $0x188] sm:$0xff]
        %v583 = vld [vmem:[%s2 + $0x190] sm:$0xff]
        %v584 = vld [vmem:[%s2 + $0x198] sm:$0xff]
        %v585 = vld [vmem:[%s2 + $0x1a0] sm:$0xff]
        %v586 = vld [vmem:[%s2 + $0x1a8] sm:$0xff]
        %v587 = vld [vmem:[%s2 + $0x1b0] sm:$0xff]
        %v588 = vld [vmem:[%s2 + $0x1b8] sm:$0xff]
        %v589 = vld [vmem:[%s2 + $0x1c0] sm:$0xff]
        %v590 = vld [vmem:[%s2 + $0x1c8] sm:$0xff]
        %v591 = vld [vmem:[%s2 + $0x1d0] sm:$0xff]
        %v592 = vld [vmem:[%s2 + $0x1d8] sm:$0xff]
        %v593 = vld [vmem:[%s2 + $0x1e0] sm:$0xff]
        %v594 = vld [vmem:[%s2 + $0x1e8] sm:$0xff]
        %v595 = vld [vmem:[%s2 + $0x1f0] sm:$0xff]
        %v596 = vld [vmem:[%s2 + $0x1f8] sm:$0xff]
        %v597 = vld [vmem:[%s2 + $0x200] sm:$0xff]
        %v598 = vld [vmem:[%s2 + $0x208] sm:$0xff]
        %v599 = vld [vmem:[%s2 + $0x210] sm:$0xff]
        %v600 = vld [vmem:[%s2 + $0x218] sm:$0xff]
        %v601 = vld [vmem:[%s2 + $0x220] sm:$0xff]
        %v602 = vld [vmem:[%s2 + $0x228] sm:$0xff]
        %v603 = vld [vmem:[%s2 + $0x230] sm:$0xff]
        %v604 = vld [vmem:[%s2 + $0x238] sm:$0xff]
        %v605 = vld [vmem:[%s2 + $0x240] sm:$0xff]
        %v606 = vld [vmem:[%s2 + $0x248] sm:$0xff]
        %v607 = vld [vmem:[%s2 + $0x250] sm:$0xff]
        %v608 = vld [vmem:[%s2 + $0x258] sm:$0xff]
        %v609 = vld [vmem:[%s2 + $0x260] sm:$0xff]
        %v610 = vld [vmem:[%s2 + $0x268] sm:$0xff]
        %v611 = vld [vmem:[%s2 + $0x270] sm:$0xff]
        %v612 = vld [vmem:[%s2 + $0x278] sm:$0xff]
        %v613 = vld [vmem:[%s2 + $0x280] sm:$0xff]
        %v614 = vld [vmem:[%s2 + $0x288] sm:$0xff]
        %v615 = vld [vmem:[%s2 + $0x290] sm:$0xff]
        %v616 = vld [vmem:[%s2 + $0x298] sm:$0xff]
        %v617 = vld [vmem:[%s2 + $0x2a0] sm:$0xff]
        %v618 = vld [vmem:[%s2 + $0x2a8] sm:$0xff]
        %v619 = vld [vmem:[%s2 + $0x2b0] sm:$0xff]
        %v620 = vld [vmem:[%s2 + $0x2b8] sm:$0xff]
        %v621 = vld [vmem:[%s2 + $0x2c0] sm:$0xff]
        %v622 = vld [vmem:[%s2 + $0x2c8] sm:$0xff]
        %v623 = vld [vmem:[%s2 + $0x2d0] sm:$0xff]
        %v624 = vld [vmem:[%s2 + $0x2d8] sm:$0xff]
        %v625 = vld [vmem:[%s2 + $0x2e0] sm:$0xff]
        %v626 = vld [vmem:[%s2 + $0x2e8] sm:$0xff]
        %v627 = vld [vmem:[%s2 + $0x2f0] sm:$0xff]
        %v628 = vld [vmem:[%s2 + $0x2f8] sm:$0xff]
        %v629 = vld [vmem:[%s3] sm:$0x3f]
        %v631 = vlaneseq
        %v632 = vshrl.u32 %v631, 7
        %v633 = vsub.s32 0, %v632
        %v634 = vrot.slane %v629, %v633
        %v635 = vlaneseq
        %v636 = vshrl.u32 %v635, 7
        %v637 = vsub.s32 1, %v636
        %v638 = vrot.slane %v629, %v637
        %v639 = vlaneseq
        %v640 = vshrl.u32 %v639, 7
        %v641 = vsub.s32 2, %v640
        %v642 = vrot.slane %v629, %v641
        %v643 = vlaneseq
        %v644 = vshrl.u32 %v643, 7
        %v645 = vsub.s32 3, %v644
        %v646 = vrot.slane %v629, %v645
        %v647 = vlaneseq
        %v648 = vshrl.u32 %v647, 7
        %v649 = vsub.s32 4, %v648
        %v650 = vrot.slane %v629, %v649
        %v651 = vlaneseq
        %v652 = vshrl.u32 %v651, 7
        %v653 = vsub.s32 5, %v652
        %v654 = vrot.slane %v629, %v653
        %v663 = vunpack.c.l.b16 %v527
        %v664 = vunpack.c.h.b16 %v527
        %v665 = vunpack.c.l.b16 %v528
        %v666 = vunpack.c.h.b16 %v528
        %v667 = vpack.c.b16 %v665, %v663
        %v668 = vpack.c.b16 %v666, %v664
        %v767 = vunpack.c.l.b16 %v533
        %v768 = vunpack.c.h.b16 %v533
        %v769 = vunpack.c.l.b16 %v534
        %v770 = vunpack.c.h.b16 %v534
        %v771 = vunpack.c.l.b16 %v535
        %v772 = vunpack.c.h.b16 %v535
        %v773 = vunpack.c.l.b16 %v536
        %v774 = vunpack.c.h.b16 %v536
        %v775 = vunpack.c.l.b16 %v537
        %v776 = vunpack.c.h.b16 %v537
        %v777 = vunpack.c.l.b16 %v538
        %v778 = vunpack.c.h.b16 %v538
        %v779 = vunpack.c.l.b16 %v539
        %v780 = vunpack.c.h.b16 %v539
        %v781 = vunpack.c.l.b16 %v540
        %v782 = vunpack.c.h.b16 %v540
        %v783 = vunpack.c.l.b16 %v541
        %v784 = vunpack.c.h.b16 %v541
        %v785 = vunpack.c.l.b16 %v542
        %v786 = vunpack.c.h.b16 %v542
        %v787 = vunpack.c.l.b16 %v543
        %v788 = vunpack.c.h.b16 %v543
        %v789 = vunpack.c.l.b16 %v544
        %v790 = vunpack.c.h.b16 %v544
        %v791 = vunpack.c.l.b16 %v545
        %v792 = vunpack.c.h.b16 %v545
        %v793 = vunpack.c.l.b16 %v546
        %v794 = vunpack.c.h.b16 %v546
        %v795 = vunpack.c.l.b16 %v547
        %v796 = vunpack.c.h.b16 %v547
        %v797 = vunpack.c.l.b16 %v548
        %v798 = vunpack.c.h.b16 %v548
        %v799 = vunpack.c.l.b16 %v549
        %v800 = vunpack.c.h.b16 %v549
        %v801 = vunpack.c.l.b16 %v550
        %v802 = vunpack.c.h.b16 %v550
        %v803 = vunpack.c.l.b16 %v551
        %v804 = vunpack.c.h.b16 %v551
        %v805 = vunpack.c.l.b16 %v552
        %v806 = vunpack.c.h.b16 %v552
        %v807 = vunpack.c.l.b16 %v553
        %v808 = vunpack.c.h.b16 %v553
        %v809 = vunpack.c.l.b16 %v554
        %v810 = vunpack.c.h.b16 %v554
        %v811 = vunpack.c.l.b16 %v555
        %v812 = vunpack.c.h.b16 %v555
        %v813 = vunpack.c.l.b16 %v556
        %v814 = vunpack.c.h.b16 %v556
        %v815 = vunpack.c.l.b16 %v557
        %v816 = vunpack.c.h.b16 %v557
        %v817 = vunpack.c.l.b16 %v558
        %v818 = vunpack.c.h.b16 %v558
        %v819 = vunpack.c.l.b16 %v559
        %v820 = vunpack.c.h.b16 %v559
        %v821 = vunpack.c.l.b16 %v560
        %v822 = vunpack.c.h.b16 %v560
        %v823 = vunpack.c.l.b16 %v561
        %v824 = vunpack.c.h.b16 %v561
        %v825 = vunpack.c.l.b16 %v562
        %v826 = vunpack.c.h.b16 %v562
        %v827 = vunpack.c.l.b16 %v563
        %v828 = vunpack.c.h.b16 %v563
        %v829 = vunpack.c.l.b16 %v564
        %v830 = vunpack.c.h.b16 %v564
        %v831 = vunpack.c.l.b16 %v565
        %v832 = vunpack.c.h.b16 %v565
        %v833 = vunpack.c.l.b16 %v566
        %v834 = vunpack.c.h.b16 %v566
        %v835 = vunpack.c.l.b16 %v567
        %v836 = vunpack.c.h.b16 %v567
        %v837 = vunpack.c.l.b16 %v568
        %v838 = vunpack.c.h.b16 %v568
        %v839 = vunpack.c.l.b16 %v569
        %v840 = vunpack.c.h.b16 %v569
        %v841 = vunpack.c.l.b16 %v570
        %v842 = vunpack.c.h.b16 %v570
        %v843 = vunpack.c.l.b16 %v571
        %v844 = vunpack.c.h.b16 %v571
        %v845 = vunpack.c.l.b16 %v572
        %v846 = vunpack.c.h.b16 %v572
        %v847 = vunpack.c.l.b16 %v573
        %v848 = vunpack.c.h.b16 %v573
        %v849 = vunpack.c.l.b16 %v574
        %v850 = vunpack.c.h.b16 %v574
        %v851 = vunpack.c.l.b16 %v575
        %v852 = vunpack.c.h.b16 %v575
        %v853 = vunpack.c.l.b16 %v576
        %v854 = vunpack.c.h.b16 %v576
        %v855 = vunpack.c.l.b16 %v577
        %v856 = vunpack.c.h.b16 %v577
        %v857 = vunpack.c.l.b16 %v578
        %v858 = vunpack.c.h.b16 %v578
        %v859 = vunpack.c.l.b16 %v579
        %v860 = vunpack.c.h.b16 %v579
        %v861 = vunpack.c.l.b16 %v580
        %v862 = vunpack.c.h.b16 %v580
        %v863 = vunpack.c.l.b16 %v581
        %v864 = vunpack.c.h.b16 %v581
        %v865 = vunpack.c.l.b16 %v582
        %v866 = vunpack.c.h.b16 %v582
        %v867 = vunpack.c.l.b16 %v583
        %v868 = vunpack.c.h.b16 %v583
        %v869 = vunpack.c.l.b16 %v584
        %v870 = vunpack.c.h.b16 %v584
        %v871 = vunpack.c.l.b16 %v585
        %v872 = vunpack.c.h.b16 %v585
        %v873 = vunpack.c.l.b16 %v586
        %v874 = vunpack.c.h.b16 %v586
        %v875 = vunpack.c.l.b16 %v587
        %v876 = vunpack.c.h.b16 %v587
        %v877 = vunpack.c.l.b16 %v588
        %v878 = vunpack.c.h.b16 %v588
        %v879 = vunpack.c.l.b16 %v589
        %v880 = vunpack.c.h.b16 %v589
        %v881 = vunpack.c.l.b16 %v590
        %v882 = vunpack.c.h.b16 %v590
        %v883 = vunpack.c.l.b16 %v591
        %v884 = vunpack.c.h.b16 %v591
        %v885 = vunpack.c.l.b16 %v592
        %v886 = vunpack.c.h.b16 %v592
        %v887 = vunpack.c.l.b16 %v593
        %v888 = vunpack.c.h.b16 %v593
        %v889 = vunpack.c.l.b16 %v594
        %v890 = vunpack.c.h.b16 %v594
        %v891 = vunpack.c.l.b16 %v595
        %v892 = vunpack.c.h.b16 %v595
        %v893 = vunpack.c.l.b16 %v596
        %v894 = vunpack.c.h.b16 %v596
        %v895 = vunpack.c.l.b16 %v597
        %v896 = vunpack.c.h.b16 %v597
        %v897 = vunpack.c.l.b16 %v598
        %v898 = vunpack.c.h.b16 %v598
        %v899 = vunpack.c.l.b16 %v599
        %v900 = vunpack.c.h.b16 %v599
        %v901 = vunpack.c.l.b16 %v600
        %v902 = vunpack.c.h.b16 %v600
        %v903 = vunpack.c.l.b16 %v601
        %v904 = vunpack.c.h.b16 %v601
        %v905 = vunpack.c.l.b16 %v602
        %v906 = vunpack.c.h.b16 %v602
        %v907 = vunpack.c.l.b16 %v603
        %v908 = vunpack.c.h.b16 %v603
        %v909 = vunpack.c.l.b16 %v604
        %v910 = vunpack.c.h.b16 %v604
        %v911 = vunpack.c.l.b16 %v605
        %v912 = vunpack.c.h.b16 %v605
        %v913 = vunpack.c.l.b16 %v606
        %v914 = vunpack.c.h.b16 %v606
        %v915 = vunpack.c.l.b16 %v607
        %v916 = vunpack.c.h.b16 %v607
        %v917 = vunpack.c.l.b16 %v608
        %v918 = vunpack.c.h.b16 %v608
        %v919 = vunpack.c.l.b16 %v609
        %v920 = vunpack.c.h.b16 %v609
        %v921 = vunpack.c.l.b16 %v610
        %v922 = vunpack.c.h.b16 %v610
        %v923 = vunpack.c.l.b16 %v611
        %v924 = vunpack.c.h.b16 %v611
        %v925 = vunpack.c.l.b16 %v612
        %v926 = vunpack.c.h.b16 %v612
        %v927 = vunpack.c.l.b16 %v613
        %v928 = vunpack.c.h.b16 %v613
        %v929 = vunpack.c.l.b16 %v614
        %v930 = vunpack.c.h.b16 %v614
        %v931 = vunpack.c.l.b16 %v615
        %v932 = vunpack.c.h.b16 %v615
        %v933 = vunpack.c.l.b16 %v616
        %v934 = vunpack.c.h.b16 %v616
        %v935 = vunpack.c.l.b16 %v617
        %v936 = vunpack.c.h.b16 %v617
        %v937 = vunpack.c.l.b16 %v618
        %v938 = vunpack.c.h.b16 %v618
        %v939 = vunpack.c.l.b16 %v619
        %v940 = vunpack.c.h.b16 %v619
        %v941 = vunpack.c.l.b16 %v620
        %v942 = vunpack.c.h.b16 %v620
        %v943 = vunpack.c.l.b16 %v621
        %v944 = vunpack.c.h.b16 %v621
        %v945 = vunpack.c.l.b16 %v622
        %v946 = vunpack.c.h.b16 %v622
        %v947 = vunpack.c.l.b16 %v623
        %v948 = vunpack.c.h.b16 %v623
        %v949 = vunpack.c.l.b16 %v624
        %v950 = vunpack.c.h.b16 %v624
        %v951 = vunpack.c.l.b16 %v625
        %v952 = vunpack.c.h.b16 %v625
        %v953 = vunpack.c.l.b16 %v626
        %v954 = vunpack.c.h.b16 %v626
        %v955 = vunpack.c.l.b16 %v627
        %v956 = vunpack.c.h.b16 %v627
        %v957 = vunpack.c.l.b16 %v628
        %v958 = vunpack.c.h.b16 %v628
        %v959 = vpack.c.b16 %v773, %v767
        %v960 = vpack.c.b16 %v774, %v768
        %v961 = vpack.c.b16 %v775, %v769
        %v962 = vpack.c.b16 %v776, %v770
        %v963 = vpack.c.b16 %v777, %v771
        %v964 = vpack.c.b16 %v778, %v772
        %v965 = vpack.c.b16 %v785, %v779
        %v966 = vpack.c.b16 %v786, %v780
        %v967 = vpack.c.b16 %v787, %v781
        %v968 = vpack.c.b16 %v788, %v782
        %v969 = vpack.c.b16 %v789, %v783
        %v970 = vpack.c.b16 %v790, %v784
        %v971 = vpack.c.b16 %v797, %v791
        %v972 = vpack.c.b16 %v798, %v792
        %v973 = vpack.c.b16 %v799, %v793
        %v974 = vpack.c.b16 %v800, %v794
        %v975 = vpack.c.b16 %v801, %v795
        %v976 = vpack.c.b16 %v802, %v796
        %v977 = vpack.c.b16 %v809, %v803
        %v978 = vpack.c.b16 %v810, %v804
        %v979 = vpack.c.b16 %v811, %v805
        %v980 = vpack.c.b16 %v812, %v806
        %v981 = vpack.c.b16 %v813, %v807
        %v982 = vpack.c.b16 %v814, %v808
        %v983 = vpack.c.b16 %v821, %v815
        %v984 = vpack.c.b16 %v822, %v816
        %v985 = vpack.c.b16 %v823, %v817
        %v986 = vpack.c.b16 %v824, %v818
        %v987 = vpack.c.b16 %v825, %v819
        %v988 = vpack.c.b16 %v826, %v820
        %v989 = vpack.c.b16 %v833, %v827
        %v990 = vpack.c.b16 %v834, %v828
        %v991 = vpack.c.b16 %v835, %v829
        %v992 = vpack.c.b16 %v836, %v830
        %v993 = vpack.c.b16 %v837, %v831
        %v994 = vpack.c.b16 %v838, %v832
        %v995 = vpack.c.b16 %v845, %v839
        %v996 = vpack.c.b16 %v846, %v840
        %v997 = vpack.c.b16 %v847, %v841
        %v998 = vpack.c.b16 %v848, %v842
        %v999 = vpack.c.b16 %v849, %v843
        %v1000 = vpack.c.b16 %v850, %v844
        %v1001 = vpack.c.b16 %v857, %v851
        %v1002 = vpack.c.b16 %v858, %v852
        %v1003 = vpack.c.b16 %v859, %v853
        %v1004 = vpack.c.b16 %v860, %v854
        %v1005 = vpack.c.b16 %v861, %v855
        %v1006 = vpack.c.b16 %v862, %v856
        %v1007 = vpack.c.b16 %v869, %v863
        %v1008 = vpack.c.b16 %v870, %v864
        %v1009 = vpack.c.b16 %v871, %v865
        %v1010 = vpack.c.b16 %v872, %v866
        %v1011 = vpack.c.b16 %v873, %v867
        %v1012 = vpack.c.b16 %v874, %v868
        %v1013 = vpack.c.b16 %v881, %v875
        %v1014 = vpack.c.b16 %v882, %v876
        %v1015 = vpack.c.b16 %v883, %v877
        %v1016 = vpack.c.b16 %v884, %v878
        %v1017 = vpack.c.b16 %v885, %v879
        %v1018 = vpack.c.b16 %v886, %v880
        %v1019 = vpack.c.b16 %v893, %v887
        %v1020 = vpack.c.b16 %v894, %v888
        %v1021 = vpack.c.b16 %v895, %v889
        %v1022 = vpack.c.b16 %v896, %v890
        %v1023 = vpack.c.b16 %v897, %v891
        %v1024 = vpack.c.b16 %v898, %v892
        %v1025 = vpack.c.b16 %v905, %v899
        %v1026 = vpack.c.b16 %v906, %v900
        %v1027 = vpack.c.b16 %v907, %v901
        %v1028 = vpack.c.b16 %v908, %v902
        %v1029 = vpack.c.b16 %v909, %v903
        %v1030 = vpack.c.b16 %v910, %v904
        %v1031 = vpack.c.b16 %v917, %v911
        %v1032 = vpack.c.b16 %v918, %v912
        %v1033 = vpack.c.b16 %v919, %v913
        %v1034 = vpack.c.b16 %v920, %v914
        %v1035 = vpack.c.b16 %v921, %v915
        %v1036 = vpack.c.b16 %v922, %v916
        %v1037 = vpack.c.b16 %v929, %v923
        %v1038 = vpack.c.b16 %v930, %v924
        %v1039 = vpack.c.b16 %v931, %v925
        %v1040 = vpack.c.b16 %v932, %v926
        %v1041 = vpack.c.b16 %v933, %v927
        %v1042 = vpack.c.b16 %v934, %v928
        %v1043 = vpack.c.b16 %v941, %v935
        %v1044 = vpack.c.b16 %v942, %v936
        %v1045 = vpack.c.b16 %v943, %v937
        %v1046 = vpack.c.b16 %v944, %v938
        %v1047 = vpack.c.b16 %v945, %v939
        %v1048 = vpack.c.b16 %v946, %v940
        %v1049 = vpack.c.b16 %v953, %v947
        %v1050 = vpack.c.b16 %v954, %v948
        %v1051 = vpack.c.b16 %v955, %v949
        %v1052 = vpack.c.b16 %v956, %v950
        %v1053 = vpack.c.b16 %v957, %v951
        %v1054 = vpack.c.b16 %v958, %v952
        %1151 = vmatprep.subr.bf16.mxu0 %v1002
        %1152 = vmatpush1.bf16.msra.mxu0 %v1001
        %1153 = vmatprep.subr.bf16.mxu0 %v996
        %1154 = vmatpush1.bf16.msra.mxu0 %v995
        %1155 = vmatprep.subr.bf16.mxu0 %v990
        %1156 = vmatpush1.bf16.msra.mxu0 %v989
        %1157 = vmatprep.subr.bf16.mxu0 %v984
        %1158 = vmatpush1.bf16.msra.mxu0 %v983
        %1159 = vmatprep.subr.bf16.mxu0 %v978
        %1160 = vmatpush1.bf16.msra.mxu0 %v977
        %1161 = vmatprep.subr.bf16.mxu0 %v972
        %1162 = vmatpush1.bf16.msra.mxu0 %v971
        %1163 = vmatprep.subr.bf16.mxu0 %v966
        %1164 = vmatpush1.bf16.msra.mxu0 %v965
        %1165 = vmatprep.subr.bf16.mxu0 %v960
        %1166 = vmatpush1.bf16.msra.mxu0 %v959
        %1167 = vmatprep.subr.bf16.mxu0 %v1050
        %1168 = vmatpush2.bf16.msra.mxu0 %v1049
        %1169 = vmatprep.subr.bf16.mxu0 %v1044
        %1170 = vmatpush2.bf16.msra.mxu0 %v1043
        %1171 = vmatprep.subr.bf16.mxu0 %v1038
        %1172 = vmatpush2.bf16.msra.mxu0 %v1037
        %1173 = vmatprep.subr.bf16.mxu0 %v1032
        %1174 = vmatpush2.bf16.msra.mxu0 %v1031
        %1175 = vmatprep.subr.bf16.mxu0 %v1026
        %1176 = vmatpush2.bf16.msra.mxu0 %v1025
        %1177 = vmatprep.subr.bf16.mxu0 %v1020
        %1178 = vmatpush2.bf16.msra.mxu0 %v1019
        %1179 = vmatprep.subr.bf16.mxu0 %v1014
        %1180 = vmatpush2.bf16.msra.mxu0 %v1013
        %1181 = vmatprep.subr.bf16.mxu0 %v1008
        %1182 = vmatpush2.bf16.msra.mxu0 %v1007
        %1183 = vmatprep.mubr.bf16.mxu0 %v668
        %1184 = vmatmul.mubr.bf16.gmra.mxu0 %v667
        %v1185 = vpop.f32.mrf.mxu0
        %v1186 = vadd.f32 %v634, %v1185
        %v1187 = vpop.f32.mrf.mxu0
        %v1188 = vadd.f32 %v638, %v1187
        %v1189 = vpop.f32.mrf.mxu0
        %v1190 = vadd.f32 %v634, %v1189
        %v1191 = vpop.f32.mrf.mxu0
        %v1192 = vadd.f32 %v638, %v1191
        %1193 = vdwg.mxu0
        %1194 = vmatprep.subr.bf16.mxu0 %v1004
        %1195 = vmatpush1.bf16.msra.mxu0 %v1003
        %1196 = vmatprep.subr.bf16.mxu0 %v998
        %1197 = vmatpush1.bf16.msra.mxu0 %v997
        %1198 = vmatprep.subr.bf16.mxu0 %v992
        %1199 = vmatpush1.bf16.msra.mxu0 %v991
        %1200 = vmatprep.subr.bf16.mxu0 %v986
        %1201 = vmatpush1.bf16.msra.mxu0 %v985
        %1202 = vmatprep.subr.bf16.mxu0 %v980
        %1203 = vmatpush1.bf16.msra.mxu0 %v979
        %1204 = vmatprep.subr.bf16.mxu0 %v974
        %1205 = vmatpush1.bf16.msra.mxu0 %v973
        %1206 = vmatprep.subr.bf16.mxu0 %v968
        %1207 = vmatpush1.bf16.msra.mxu0 %v967
        %1208 = vmatprep.subr.bf16.mxu0 %v962
        %1209 = vmatpush1.bf16.msra.mxu0 %v961
        %1210 = vmatprep.subr.bf16.mxu0 %v1052
        %1211 = vmatpush2.bf16.msra.mxu0 %v1051
        %1212 = vmatprep.subr.bf16.mxu0 %v1046
        %1213 = vmatpush2.bf16.msra.mxu0 %v1045
        %1214 = vmatprep.subr.bf16.mxu0 %v1040
        %1215 = vmatpush2.bf16.msra.mxu0 %v1039
        %1216 = vmatprep.subr.bf16.mxu0 %v1034
        %1217 = vmatpush2.bf16.msra.mxu0 %v1033
        %1218 = vmatprep.subr.bf16.mxu0 %v1028
        %1219 = vmatpush2.bf16.msra.mxu0 %v1027
        %1220 = vmatprep.subr.bf16.mxu0 %v1022
        %1221 = vmatpush2.bf16.msra.mxu0 %v1021
        %1222 = vmatprep.subr.bf16.mxu0 %v1016
        %1223 = vmatpush2.bf16.msra.mxu0 %v1015
        %1224 = vmatprep.subr.bf16.mxu0 %v1010
        %1225 = vmatpush2.bf16.msra.mxu0 %v1009
        %1226 = vmatprep.mubr.bf16.mxu0 %v668
        %1227 = vmatmul.mubr.bf16.gmra.mxu0 %v667
        %v1228 = vpop.f32.mrf.mxu0
        %v1229 = vadd.f32 %v642, %v1228
        %v1230 = vpop.f32.mrf.mxu0
        %v1231 = vadd.f32 %v646, %v1230
        %v1232 = vpop.f32.mrf.mxu0
        %v1233 = vadd.f32 %v642, %v1232
        %v1234 = vpop.f32.mrf.mxu0
        %v1235 = vadd.f32 %v646, %v1234
        %1236 = vdwg.mxu0
        %1237 = vmatprep.subr.bf16.mxu0 %v1006
        %1238 = vmatpush1.bf16.msra.mxu0 %v1005
        %1239 = vmatprep.subr.bf16.mxu0 %v1000
        %1240 = vmatpush1.bf16.msra.mxu0 %v999
        %1241 = vmatprep.subr.bf16.mxu0 %v994
        %1242 = vmatpush1.bf16.msra.mxu0 %v993
        %1243 = vmatprep.subr.bf16.mxu0 %v988
        %1244 = vmatpush1.bf16.msra.mxu0 %v987
        %1245 = vmatprep.subr.bf16.mxu0 %v982
        %1246 = vmatpush1.bf16.msra.mxu0 %v981
        %1247 = vmatprep.subr.bf16.mxu0 %v976
        %1248 = vmatpush1.bf16.msra.mxu0 %v975
        %1249 = vmatprep.subr.bf16.mxu0 %v970
        %1250 = vmatpush1.bf16.msra.mxu0 %v969
        %1251 = vmatprep.subr.bf16.mxu0 %v964
        %1252 = vmatpush1.bf16.msra.mxu0 %v963
        %1253 = vmatprep.subr.bf16.mxu0 %v1054
        %1254 = vmatpush2.bf16.msra.mxu0 %v1053
        %1255 = vmatprep.subr.bf16.mxu0 %v1048
        %1256 = vmatpush2.bf16.msra.mxu0 %v1047
        %1257 = vmatprep.subr.bf16.mxu0 %v1042
        %1258 = vmatpush2.bf16.msra.mxu0 %v1041
        %1259 = vmatprep.subr.bf16.mxu0 %v1036
        %1260 = vmatpush2.bf16.msra.mxu0 %v1035
        %1261 = vmatprep.subr.bf16.mxu0 %v1030
        %1262 = vmatpush2.bf16.msra.mxu0 %v1029
        %1263 = vmatprep.subr.bf16.mxu0 %v1024
        %1264 = vmatpush2.bf16.msra.mxu0 %v1023
        %1265 = vmatprep.subr.bf16.mxu0 %v1018
        %1266 = vmatpush2.bf16.msra.mxu0 %v1017
        %1267 = vmatprep.subr.bf16.mxu0 %v1012
        %1268 = vmatpush2.bf16.msra.mxu0 %v1011
        %1269 = vmatprep.mubr.bf16.mxu0 %v668
        %1270 = vmatmul.mubr.bf16.gmra.mxu0 %v667
        %v1271 = vpop.f32.mrf.mxu0
        %v1272 = vadd.f32 %v650, %v1271
        %v1273 = vpop.f32.mrf.mxu0
        %v1274 = vadd.f32 %v654, %v1273
        %v1275 = vpop.f32.mrf.mxu0
        %v1276 = vadd.f32 %v650, %v1275
        %v1277 = vpop.f32.mrf.mxu0
        %v1278 = vadd.f32 %v654, %v1277
        %1279 = vdwg.mxu0
        %v1280 = vld [vmem:[%s520] sm:$0x1]
        %v1281 = vpack.c.bf16 %v1190, %v1186
        %v1282 = vpack.c.bf16 %v1233, %v1229
        %v1283 = vpack.c.bf16 %v1276, %v1272
        %vm1284 = vcmask 523264
        %v1286 = vsel %vm1284, %v1281, 0
        %v1289 = vsel %vm1284, %v1282, 0
        %1291 = vmatprep.subr.bf16.mxu0 0
        %1292 = vmatpush1.bf16.xpose.msra.mxu0 0
        %1293 = vmatprep.subr.bf16.mxu0 0
        %1294 = vmatpush1.bf16.xpose.msra.mxu0 0
        %1295 = vmatprep.subr.bf16.mxu0 0
        %1296 = vmatpush1.bf16.xpose.msra.mxu0 0
        %1297 = vmatprep.subr.bf16.mxu0 0
        %1298 = vmatpush1.bf16.xpose.msra.mxu0 0
        %1299 = vmatprep.subr.bf16.mxu0 0
        %1300 = vmatpush1.bf16.xpose.msra.mxu0 0
        %1301 = vmatprep.subr.bf16.mxu0 0
        %1302 = vmatpush1.bf16.xpose.msra.mxu0 0
        %1303 = vmatprep.subr.bf16.mxu0 0
        %1304 = vmatpush1.bf16.xpose.msra.mxu0 0
        %1305 = vmatprep.subr.bf16.mxu0 0
        %1306 = vmatpush1.bf16.xpose.msra.mxu0 %v1289
        %1307 = vmatprep.subr.bf16.mxu0 0
        %1308 = vmatpush2.bf16.xpose.msra.mxu0 0
        %1309 = vmatprep.subr.bf16.mxu0 0
        %1310 = vmatpush2.bf16.xpose.msra.mxu0 0
        %1311 = vmatprep.subr.bf16.mxu0 0
        %1312 = vmatpush2.bf16.xpose.msra.mxu0 0
        %1313 = vmatprep.subr.bf16.mxu0 0
        %1314 = vmatpush2.bf16.xpose.msra.mxu0 0
        %1315 = vmatprep.subr.bf16.mxu0 0
        %1316 = vmatpush2.bf16.xpose.msra.mxu0 0
        %1317 = vmatprep.subr.bf16.mxu0 0
        %1318 = vmatpush2.bf16.xpose.msra.mxu0 0
        %1319 = vmatprep.subr.bf16.mxu0 0
        %1320 = vmatpush2.bf16.xpose.msra.mxu0 0
        %1321 = vmatprep.subr.bf16.mxu0 0
        %1322 = vmatpush2.bf16.xpose.msra.mxu0 0
        %1323 = vmatprep.mubr.bf16.mxu0 0
        %1324 = vmatmul.mubr.bf16.gmra.mxu0 %v1286
        %v1325 = vpop.f32.mrf.mxu0
        %v1326 = vadd.f32 0.0, %v1325
        %v1327 = vpop.f32.mrf.mxu0
        %v1328 = vpop.f32.mrf.mxu0
        %v1329 = vadd.f32 0.0, %v1328
        %v1330 = vpop.f32.mrf.mxu0
        %1331 = vdwg.mxu0
        %v1332 = vmul.f32 %v1326, 0.125
        %v1333 = vmul.f32 %v1329, 0.125
        %v1335 = vlaneseq
        %v1336 = vshrl.u32 %v1335, 7
        %v1337 = vsub.s32 0, %v1336
        %v1338 = vrot.slane %v1280, %v1337
        %v1340 = vadd.f32 %v1332, %v1338
        %v1341 = vadd.f32 %v1333, %v1338
        %vm1342 = vcmask 130048
        %v1343 = vsel %vm1342, %v1340, -inf
        %1344 = vmax.xlane.f32.xlu0 %v1343
        %v1345 = vpop.xlane.xlu0 %1344
        %v1346 = vsel %vm1342, %v1341, -inf
        %1347 = vmax.xlane.f32.xlu0 %v1346
        %v1348 = vpop.xlane.xlu0 %1347
        %v1349 = vsub.f32 %v1340, %v1345
        %v1350 = vsub.f32 %v1341, %v1348
        %v1351 = vmul.f32 %v1349, 1.442695
        %v1352 = vpow.pop %v1351
        %v1353 = vmul.f32 %v1350, 1.442695
        %v1354 = vpow.pop %v1353
        %v1355 = vsel %vm1342, %v1352, 0.0
        %1356 = vadd.xlane.f32.xlu0 %v1355
        %v1357 = vpop.xlane.xlu0 %1356
        %v1358 = vsel %vm1342, %v1354, 0.0
        %1359 = vadd.xlane.f32.xlu0 %v1358
        %v1360 = vpop.xlane.xlu0 %1359
        %v1361 = vrcp.pop %v1357
        %v1362 = vrcp.pop %v1360
        %v1363 = vmul.f32 %v1352, %v1361
        %v1364 = vmul.f32 %v1354, %v1362
        %v1365 = vpack.c.bf16 %v1364, %v1363
        %v1367 = vsel %vm1342, %v1365, 0
        %1369 = vmatprep.subr.bf16.mxu0 0
        %1370 = vmatpush1.bf16.msra.mxu0 0
        %1371 = vmatprep.subr.bf16.mxu0 0
        %1372 = vmatpush1.bf16.msra.mxu0 0
        %1373 = vmatprep.subr.bf16.mxu0 0
        %1374 = vmatpush1.bf16.msra.mxu0 0
        %1375 = vmatprep.subr.bf16.mxu0 0
        %1376 = vmatpush1.bf16.msra.mxu0 0
        %1377 = vmatprep.subr.bf16.mxu0 0
        %1378 = vmatpush1.bf16.msra.mxu0 0
        %1379 = vmatprep.subr.bf16.mxu0 0
        %1380 = vmatpush1.bf16.msra.mxu0 0
        %1381 = vmatprep.subr.bf16.mxu0 0
        %1382 = vmatpush1.bf16.msra.mxu0 0
        %1383 = vmatprep.subr.bf16.mxu0 0
        %1384 = vmatpush1.bf16.msra.mxu0 %v1283
        %1385 = vmatprep.subr.bf16.mxu0 0
        %1386 = vmatpush2.bf16.msra.mxu0 0
        %1387 = vmatprep.subr.bf16.mxu0 0
        %1388 = vmatpush2.bf16.msra.mxu0 0
        %1389 = vmatprep.subr.bf16.mxu0 0
        %1390 = vmatpush2.bf16.msra.mxu0 0
        %1391 = vmatprep.subr.bf16.mxu0 0
        %1392 = vmatpush2.bf16.msra.mxu0 0
        %1393 = vmatprep.subr.bf16.mxu0 0
        %1394 = vmatpush2.bf16.msra.mxu0 0
        %1395 = vmatprep.subr.bf16.mxu0 0
        %1396 = vmatpush2.bf16.msra.mxu0 0
        %1397 = vmatprep.subr.bf16.mxu0 0
        %1398 = vmatpush2.bf16.msra.mxu0 0
        %1399 = vmatprep.subr.bf16.mxu0 0
        %1400 = vmatpush2.bf16.msra.mxu0 0
        %1401 = vmatprep.mubr.bf16.mxu0 0
        %1402 = vmatmul.mubr.bf16.gmra.mxu0 %v1367
        %v1403 = vpop.f32.mrf.mxu0
        %v1404 = vadd.f32 0.0, %v1403
        %v1405 = vpop.f32.mrf.mxu0
        %v1406 = vpop.f32.mrf.mxu0
        %v1407 = vadd.f32 0.0, %v1406
        %v1408 = vpop.f32.mrf.mxu0
        %1409 = vdwg.mxu0
        %1411 = vrot.lane.b32.xlu0 %v1281, 64
        %v1412 = vpop.permute.xlu0 %1411
        %1414 = vrot.lane.b32.xlu0 %v1282, 64
        %v1415 = vpop.permute.xlu0 %1414
        %v1417 = vsel %vm1284, %v1412, 0
        %v1420 = vsel %vm1284, %v1415, 0
        %1422 = vmatprep.subr.bf16.mxu0 0
        %1423 = vmatpush1.bf16.xpose.msra.mxu0 0
        %1424 = vmatprep.subr.bf16.mxu0 0
        %1425 = vmatpush1.bf16.xpose.msra.mxu0 0
        %1426 = vmatprep.subr.bf16.mxu0 0
        %1427 = vmatpush1.bf16.xpose.msra.mxu0 0
        %1428 = vmatprep.subr.bf16.mxu0 0
        %1429 = vmatpush1.bf16.xpose.msra.mxu0 0
        %1430 = vmatprep.subr.bf16.mxu0 0
        %1431 = vmatpush1.bf16.xpose.msra.mxu0 0
        %1432 = vmatprep.subr.bf16.mxu0 0
        %1433 = vmatpush1.bf16.xpose.msra.mxu0 0
        %1434 = vmatprep.subr.bf16.mxu0 0
        %1435 = vmatpush1.bf16.xpose.msra.mxu0 0
        %1436 = vmatprep.subr.bf16.mxu0 0
        %1437 = vmatpush1.bf16.xpose.msra.mxu0 %v1420
        %1438 = vmatprep.subr.bf16.mxu0 0
        %1439 = vmatpush2.bf16.xpose.msra.mxu0 0
        %1440 = vmatprep.subr.bf16.mxu0 0
        %1441 = vmatpush2.bf16.xpose.msra.mxu0 0
        %1442 = vmatprep.subr.bf16.mxu0 0
        %1443 = vmatpush2.bf16.xpose.msra.mxu0 0
        %1444 = vmatprep.subr.bf16.mxu0 0
        %1445 = vmatpush2.bf16.xpose.msra.mxu0 0
        %1446 = vmatprep.subr.bf16.mxu0 0
        %1447 = vmatpush2.bf16.xpose.msra.mxu0 0
        %1448 = vmatprep.subr.bf16.mxu0 0
        %1449 = vmatpush2.bf16.xpose.msra.mxu0 0
        %1450 = vmatprep.subr.bf16.mxu0 0
        %1451 = vmatpush2.bf16.xpose.msra.mxu0 0
        %1452 = vmatprep.subr.bf16.mxu0 0
        %1453 = vmatpush2.bf16.xpose.msra.mxu0 0
        %1454 = vmatprep.mubr.bf16.mxu0 0
        %1455 = vmatmul.mubr.bf16.gmra.mxu0 %v1417
        %v1456 = vpop.f32.mrf.mxu0
        %v1457 = vadd.f32 0.0, %v1456
        %v1458 = vpop.f32.mrf.mxu0
        %v1459 = vpop.f32.mrf.mxu0
        %v1460 = vadd.f32 0.0, %v1459
        %v1461 = vpop.f32.mrf.mxu0
        %1462 = vdwg.mxu0
        %v1463 = vmul.f32 %v1457, 0.125
        %v1464 = vmul.f32 %v1460, 0.125
        %v1465 = vadd.f32 %v1463, %v1338
        %v1466 = vadd.f32 %v1464, %v1338
        %v1467 = vsel %vm1342, %v1465, -inf
        %1468 = vmax.xlane.f32.xlu0 %v1467
        %v1469 = vpop.xlane.xlu0 %1468
        %v1470 = vsel %vm1342, %v1466, -inf
        %1471 = vmax.xlane.f32.xlu0 %v1470
        %v1472 = vpop.xlane.xlu0 %1471
        %v1473 = vsub.f32 %v1465, %v1469
        %v1474 = vsub.f32 %v1466, %v1472
        %v1475 = vmul.f32 %v1473, 1.442695
        %v1476 = vpow.pop %v1475
        %v1477 = vmul.f32 %v1474, 1.442695
        %v1478 = vpow.pop %v1477
        %v1479 = vsel %vm1342, %v1476, 0.0
        %1480 = vadd.xlane.f32.xlu0 %v1479
        %v1481 = vpop.xlane.xlu0 %1480
        %v1482 = vsel %vm1342, %v1478, 0.0
        %1483 = vadd.xlane.f32.xlu0 %v1482
        %v1484 = vpop.xlane.xlu0 %1483
        %v1485 = vrcp.pop %v1481
        %v1486 = vrcp.pop %v1484
        %v1487 = vmul.f32 %v1476, %v1485
        %v1488 = vmul.f32 %v1478, %v1486
        %v1489 = vpack.c.bf16 %v1488, %v1487
        %1491 = vrot.lane.b32.xlu0 %v1283, 64
        %v1492 = vpop.permute.xlu0 %1491
        %v1495 = vsel %vm1342, %v1489, 0
        %1497 = vmatprep.subr.bf16.mxu0 0
        %1498 = vmatpush1.bf16.msra.mxu0 0
        %1499 = vmatprep.subr.bf16.mxu0 0
        %1500 = vmatpush1.bf16.msra.mxu0 0
        %1501 = vmatprep.subr.bf16.mxu0 0
        %1502 = vmatpush1.bf16.msra.mxu0 0
        %1503 = vmatprep.subr.bf16.mxu0 0
        %1504 = vmatpush1.bf16.msra.mxu0 0
        %1505 = vmatprep.subr.bf16.mxu0 0
        %1506 = vmatpush1.bf16.msra.mxu0 0
        %1507 = vmatprep.subr.bf16.mxu0 0
        %1508 = vmatpush1.bf16.msra.mxu0 0
        %1509 = vmatprep.subr.bf16.mxu0 0
        %1510 = vmatpush1.bf16.msra.mxu0 0
        %1511 = vmatprep.subr.bf16.mxu0 0
        %1512 = vmatpush1.bf16.msra.mxu0 %v1492
        %1513 = vmatprep.subr.bf16.mxu0 0
        %1514 = vmatpush2.bf16.msra.mxu0 0
        %1515 = vmatprep.subr.bf16.mxu0 0
        %1516 = vmatpush2.bf16.msra.mxu0 0
        %1517 = vmatprep.subr.bf16.mxu0 0
        %1518 = vmatpush2.bf16.msra.mxu0 0
        %1519 = vmatprep.subr.bf16.mxu0 0
        %1520 = vmatpush2.bf16.msra.mxu0 0
        %1521 = vmatprep.subr.bf16.mxu0 0
        %1522 = vmatpush2.bf16.msra.mxu0 0
        %1523 = vmatprep.subr.bf16.mxu0 0
        %1524 = vmatpush2.bf16.msra.mxu0 0
        %1525 = vmatprep.subr.bf16.mxu0 0
        %1526 = vmatpush2.bf16.msra.mxu0 0
        %1527 = vmatprep.subr.bf16.mxu0 0
        %1528 = vmatpush2.bf16.msra.mxu0 0
        %1529 = vmatprep.mubr.bf16.mxu0 0
        %1530 = vmatmul.mubr.bf16.gmra.mxu0 %v1495
        %v1531 = vpop.f32.mrf.mxu0
        %v1532 = vadd.f32 0.0, %v1531
        %v1533 = vpop.f32.mrf.mxu0
        %v1534 = vpop.f32.mrf.mxu0
        %v1535 = vadd.f32 0.0, %v1534
        %v1536 = vpop.f32.mrf.mxu0
        %1537 = vdwg.mxu0
        %v1538 = vpack.c.bf16 %v1192, %v1188
        %v1539 = vpack.c.bf16 %v1235, %v1231
        %v1540 = vpack.c.bf16 %v1278, %v1274
        %v1542 = vsel %vm1284, %v1538, 0
        %v1545 = vsel %vm1284, %v1539, 0
        %1547 = vmatprep.subr.bf16.mxu0 0
        %1548 = vmatpush1.bf16.xpose.msra.mxu0 0
        %1549 = vmatprep.subr.bf16.mxu0 0
        %1550 = vmatpush1.bf16.xpose.msra.mxu0 0
        %1551 = vmatprep.subr.bf16.mxu0 0
        %1552 = vmatpush1.bf16.xpose.msra.mxu0 0
        %1553 = vmatprep.subr.bf16.mxu0 0
        %1554 = vmatpush1.bf16.xpose.msra.mxu0 0
        %1555 = vmatprep.subr.bf16.mxu0 0
        %1556 = vmatpush1.bf16.xpose.msra.mxu0 0
        %1557 = vmatprep.subr.bf16.mxu0 0
        %1558 = vmatpush1.bf16.xpose.msra.mxu0 0
        %1559 = vmatprep.subr.bf16.mxu0 0
        %1560 = vmatpush1.bf16.xpose.msra.mxu0 0
        %1561 = vmatprep.subr.bf16.mxu0 0
        %1562 = vmatpush1.bf16.xpose.msra.mxu0 %v1545
        %1563 = vmatprep.subr.bf16.mxu0 0
        %1564 = vmatpush2.bf16.xpose.msra.mxu0 0
        %1565 = vmatprep.subr.bf16.mxu0 0
        %1566 = vmatpush2.bf16.xpose.msra.mxu0 0
        %1567 = vmatprep.subr.bf16.mxu0 0
        %1568 = vmatpush2.bf16.xpose.msra.mxu0 0
        %1569 = vmatprep.subr.bf16.mxu0 0
        %1570 = vmatpush2.bf16.xpose.msra.mxu0 0
        %1571 = vmatprep.subr.bf16.mxu0 0
        %1572 = vmatpush2.bf16.xpose.msra.mxu0 0
        %1573 = vmatprep.subr.bf16.mxu0 0
        %1574 = vmatpush2.bf16.xpose.msra.mxu0 0
        %1575 = vmatprep.subr.bf16.mxu0 0
        %1576 = vmatpush2.bf16.xpose.msra.mxu0 0
        %1577 = vmatprep.subr.bf16.mxu0 0
        %1578 = vmatpush2.bf16.xpose.msra.mxu0 0
        %1579 = vmatprep.mubr.bf16.mxu0 0
        %1580 = vmatmul.mubr.bf16.gmra.mxu0 %v1542
        %v1581 = vpop.f32.mrf.mxu0
        %v1582 = vadd.f32 0.0, %v1581
        %v1583 = vpop.f32.mrf.mxu0
        %v1584 = vpop.f32.mrf.mxu0
        %v1585 = vadd.f32 0.0, %v1584
        %v1586 = vpop.f32.mrf.mxu0
        %1587 = vdwg.mxu0
        %v1588 = vmul.f32 %v1582, 0.125
        %v1589 = vmul.f32 %v1585, 0.125
        %v1590 = vadd.f32 %v1588, %v1338
        %v1591 = vadd.f32 %v1589, %v1338
        %v1592 = vsel %vm1342, %v1590, -inf
        %1593 = vmax.xlane.f32.xlu0 %v1592
        %v1594 = vpop.xlane.xlu0 %1593
        %v1595 = vsel %vm1342, %v1591, -inf
        %1596 = vmax.xlane.f32.xlu0 %v1595
        %v1597 = vpop.xlane.xlu0 %1596
        %v1598 = vsub.f32 %v1590, %v1594
        %v1599 = vsub.f32 %v1591, %v1597
        %v1600 = vmul.f32 %v1598, 1.442695
        %v1601 = vpow.pop %v1600
        %v1602 = vmul.f32 %v1599, 1.442695
        %v1603 = vpow.pop %v1602
        %v1604 = vsel %vm1342, %v1601, 0.0
        %1605 = vadd.xlane.f32.xlu0 %v1604
        %v1606 = vpop.xlane.xlu0 %1605
        %v1607 = vsel %vm1342, %v1603, 0.0
        %1608 = vadd.xlane.f32.xlu0 %v1607
        %v1609 = vpop.xlane.xlu0 %1608
        %v1610 = vrcp.pop %v1606
        %v1611 = vrcp.pop %v1609
        %v1612 = vmul.f32 %v1601, %v1610
        %v1613 = vmul.f32 %v1603, %v1611
        %v1614 = vpack.c.bf16 %v1613, %v1612
        %v1616 = vsel %vm1342, %v1614, 0
        %1618 = vmatprep.subr.bf16.mxu0 0
        %1619 = vmatpush1.bf16.msra.mxu0 0
        %1620 = vmatprep.subr.bf16.mxu0 0
        %1621 = vmatpush1.bf16.msra.mxu0 0
        %1622 = vmatprep.subr.bf16.mxu0 0
        %1623 = vmatpush1.bf16.msra.mxu0 0
        %1624 = vmatprep.subr.bf16.mxu0 0
        %1625 = vmatpush1.bf16.msra.mxu0 0
        %1626 = vmatprep.subr.bf16.mxu0 0
        %1627 = vmatpush1.bf16.msra.mxu0 0
        %1628 = vmatprep.subr.bf16.mxu0 0
        %1629 = vmatpush1.bf16.msra.mxu0 0
        %1630 = vmatprep.subr.bf16.mxu0 0
        %1631 = vmatpush1.bf16.msra.mxu0 0
        %1632 = vmatprep.subr.bf16.mxu0 0
        %1633 = vmatpush1.bf16.msra.mxu0 %v1540
        %1634 = vmatprep.subr.bf16.mxu0 0
        %1635 = vmatpush2.bf16.msra.mxu0 0
        %1636 = vmatprep.subr.bf16.mxu0 0
        %1637 = vmatpush2.bf16.msra.mxu0 0
        %1638 = vmatprep.subr.bf16.mxu0 0
        %1639 = vmatpush2.bf16.msra.mxu0 0
        %1640 = vmatprep.subr.bf16.mxu0 0
        %1641 = vmatpush2.bf16.msra.mxu0 0
        %1642 = vmatprep.subr.bf16.mxu0 0
        %1643 = vmatpush2.bf16.msra.mxu0 0
        %1644 = vmatprep.subr.bf16.mxu0 0
        %1645 = vmatpush2.bf16.msra.mxu0 0
        %1646 = vmatprep.subr.bf16.mxu0 0
        %1647 = vmatpush2.bf16.msra.mxu0 0
        %1648 = vmatprep.subr.bf16.mxu0 0
        %1649 = vmatpush2.bf16.msra.mxu0 0
        %1650 = vmatprep.mubr.bf16.mxu0 0
        %1651 = vmatmul.mubr.bf16.gmra.mxu0 %v1616
        %v1652 = vpop.f32.mrf.mxu0
        %v1653 = vadd.f32 0.0, %v1652
        %v1654 = vpop.f32.mrf.mxu0
        %v1655 = vpop.f32.mrf.mxu0
        %v1656 = vadd.f32 0.0, %v1655
        %v1657 = vpop.f32.mrf.mxu0
        %1658 = vdwg.mxu0
        %1660 = vrot.lane.b32.xlu0 %v1538, 64
        %v1661 = vpop.permute.xlu0 %1660
        %1663 = vrot.lane.b32.xlu0 %v1539, 64
        %v1664 = vpop.permute.xlu0 %1663
        %v1666 = vsel %vm1284, %v1661, 0
        %v1669 = vsel %vm1284, %v1664, 0
        %1671 = vmatprep.subr.bf16.mxu0 0
        %1672 = vmatpush1.bf16.xpose.msra.mxu0 0
        %1673 = vmatprep.subr.bf16.mxu0 0
        %1674 = vmatpush1.bf16.xpose.msra.mxu0 0
        %1675 = vmatprep.subr.bf16.mxu0 0
        %1676 = vmatpush1.bf16.xpose.msra.mxu0 0
        %1677 = vmatprep.subr.bf16.mxu0 0
        %1678 = vmatpush1.bf16.xpose.msra.mxu0 0
        %1679 = vmatprep.subr.bf16.mxu0 0
        %1680 = vmatpush1.bf16.xpose.msra.mxu0 0
        %1681 = vmatprep.subr.bf16.mxu0 0
        %1682 = vmatpush1.bf16.xpose.msra.mxu0 0
        %1683 = vmatprep.subr.bf16.mxu0 0
        %1684 = vmatpush1.bf16.xpose.msra.mxu0 0
        %1685 = vmatprep.subr.bf16.mxu0 0
        %1686 = vmatpush1.bf16.xpose.msra.mxu0 %v1669
        %1687 = vmatprep.subr.bf16.mxu0 0
        %1688 = vmatpush2.bf16.xpose.msra.mxu0 0
        %1689 = vmatprep.subr.bf16.mxu0 0
        %1690 = vmatpush2.bf16.xpose.msra.mxu0 0
        %1691 = vmatprep.subr.bf16.mxu0 0
        %1692 = vmatpush2.bf16.xpose.msra.mxu0 0
        %1693 = vmatprep.subr.bf16.mxu0 0
        %1694 = vmatpush2.bf16.xpose.msra.mxu0 0
        %1695 = vmatprep.subr.bf16.mxu0 0
        %1696 = vmatpush2.bf16.xpose.msra.mxu0 0
        %1697 = vmatprep.subr.bf16.mxu0 0
        %1698 = vmatpush2.bf16.xpose.msra.mxu0 0
        %1699 = vmatprep.subr.bf16.mxu0 0
        %1700 = vmatpush2.bf16.xpose.msra.mxu0 0
        %1701 = vmatprep.subr.bf16.mxu0 0
        %1702 = vmatpush2.bf16.xpose.msra.mxu0 0
        %1703 = vmatprep.mubr.bf16.mxu0 0
        %1704 = vmatmul.mubr.bf16.gmra.mxu0 %v1666
        %v1705 = vpop.f32.mrf.mxu0
        %v1706 = vadd.f32 0.0, %v1705
        %v1707 = vpop.f32.mrf.mxu0
        %v1708 = vpop.f32.mrf.mxu0
        %v1709 = vadd.f32 0.0, %v1708
        %v1710 = vpop.f32.mrf.mxu0
        %1711 = vdwg.mxu0
        %v1712 = vmul.f32 %v1706, 0.125
        %v1713 = vmul.f32 %v1709, 0.125
        %v1714 = vadd.f32 %v1712, %v1338
        %v1715 = vadd.f32 %v1713, %v1338
        %v1716 = vsel %vm1342, %v1714, -inf
        %1717 = vmax.xlane.f32.xlu0 %v1716
        %v1718 = vpop.xlane.xlu0 %1717
        %v1719 = vsel %vm1342, %v1715, -inf
        %1720 = vmax.xlane.f32.xlu0 %v1719
        %v1721 = vpop.xlane.xlu0 %1720
        %v1722 = vsub.f32 %v1714, %v1718
        %v1723 = vsub.f32 %v1715, %v1721
        %v1724 = vmul.f32 %v1722, 1.442695
        %v1725 = vpow.pop %v1724
        %v1726 = vmul.f32 %v1723, 1.442695
        %v1727 = vpow.pop %v1726
        %v1728 = vsel %vm1342, %v1725, 0.0
        %1729 = vadd.xlane.f32.xlu0 %v1728
        %v1730 = vpop.xlane.xlu0 %1729
        %v1731 = vsel %vm1342, %v1727, 0.0
        %1732 = vadd.xlane.f32.xlu0 %v1731
        %v1733 = vpop.xlane.xlu0 %1732
        %v1734 = vrcp.pop %v1730
        %v1735 = vrcp.pop %v1733
        %v1736 = vmul.f32 %v1725, %v1734
        %v1737 = vmul.f32 %v1727, %v1735
        %v1738 = vpack.c.bf16 %v1737, %v1736
        %1740 = vrot.lane.b32.xlu0 %v1540, 64
        %v1741 = vpop.permute.xlu0 %1740
        %v1744 = vsel %vm1342, %v1738, 0
        %1746 = vmatprep.subr.bf16.mxu0 0
        %1747 = vmatpush1.bf16.msra.mxu0 0
        %1748 = vmatprep.subr.bf16.mxu0 0
        %1749 = vmatpush1.bf16.msra.mxu0 0
        %1750 = vmatprep.subr.bf16.mxu0 0
        %1751 = vmatpush1.bf16.msra.mxu0 0
        %1752 = vmatprep.subr.bf16.mxu0 0
        %1753 = vmatpush1.bf16.msra.mxu0 0
        %1754 = vmatprep.subr.bf16.mxu0 0
        %1755 = vmatpush1.bf16.msra.mxu0 0
        %1756 = vmatprep.subr.bf16.mxu0 0
        %1757 = vmatpush1.bf16.msra.mxu0 0
        %1758 = vmatprep.subr.bf16.mxu0 0
        %1759 = vmatpush1.bf16.msra.mxu0 0
        %1760 = vmatprep.subr.bf16.mxu0 0
        %1761 = vmatpush1.bf16.msra.mxu0 %v1741
        %1762 = vmatprep.subr.bf16.mxu0 0
        %1763 = vmatpush2.bf16.msra.mxu0 0
        %1764 = vmatprep.subr.bf16.mxu0 0
        %1765 = vmatpush2.bf16.msra.mxu0 0
        %1766 = vmatprep.subr.bf16.mxu0 0
        %1767 = vmatpush2.bf16.msra.mxu0 0
        %1768 = vmatprep.subr.bf16.mxu0 0
        %1769 = vmatpush2.bf16.msra.mxu0 0
        %1770 = vmatprep.subr.bf16.mxu0 0
        %1771 = vmatpush2.bf16.msra.mxu0 0
        %1772 = vmatprep.subr.bf16.mxu0 0
        %1773 = vmatpush2.bf16.msra.mxu0 0
        %1774 = vmatprep.subr.bf16.mxu0 0
        %1775 = vmatpush2.bf16.msra.mxu0 0
        %1776 = vmatprep.subr.bf16.mxu0 0
        %1777 = vmatpush2.bf16.msra.mxu0 0
        %1778 = vmatprep.mubr.bf16.mxu0 0
        %1779 = vmatmul.mubr.bf16.gmra.mxu0 %v1744
        %v1780 = vpop.f32.mrf.mxu0
        %v1781 = vadd.f32 0.0, %v1780
        %v1782 = vpop.f32.mrf.mxu0
        %v1783 = vpop.f32.mrf.mxu0
        %v1784 = vadd.f32 0.0, %v1783
        %v1785 = vpop.f32.mrf.mxu0
        %1786 = vdwg.mxu0
        %1789 = vrot.lane.b32.xlu0 %v1532, 64
        %v1790 = vpop.permute.xlu0 %1789
        %1791 = vrot.lane.b32.xlu0 %v1535, 64
        %v1792 = vpop.permute.xlu0 %1791
        %1797 = vrot.lane.b32.xlu0 %v1781, 64
        %v1798 = vpop.permute.xlu0 %1797
        %1799 = vrot.lane.b32.xlu0 %v1784, 64
        %v1800 = vpop.permute.xlu0 %1799
        %v1803 = vsel %vm1284, %v1404, %v1790
        %v1804 = vsel %vm1284, %v1407, %v1792
        %v1805 = vsel %vm1284, %v1653, %v1798
        %v1806 = vsel %vm1284, %v1656, %v1800
        %v1807 = vpack.c.bf16 %v1804, %v1803
        %v1808 = vpack.c.bf16 %v1806, %v1805
        %v1809 = vld [vmem:[#allocation2] sm:$0xff]
        %v1810 = vld [vmem:[#allocation2 + $0x8] sm:$0xff]
        %v1811 = vld [vmem:[#allocation2 + $0x10] sm:$0xff]
        %v1812 = vld [vmem:[#allocation2 + $0x18] sm:$0xff]
        %v1813 = vld [vmem:[#allocation2 + $0x20] sm:$0xff]
        %v1814 = vld [vmem:[#allocation2 + $0x28] sm:$0xff]
        %v1815 = vld [vmem:[#allocation2 + $0x30] sm:$0xff]
        %v1816 = vld [vmem:[#allocation2 + $0x38] sm:$0xff]
        %v1817 = vld [vmem:[#allocation2 + $0x40] sm:$0xff]
        %v1818 = vld [vmem:[#allocation2 + $0x48] sm:$0xff]
        %v1819 = vld [vmem:[#allocation2 + $0x50] sm:$0xff]
        %v1820 = vld [vmem:[#allocation2 + $0x58] sm:$0xff]
        %v1821 = vld [vmem:[#allocation2 + $0x60] sm:$0xff]
        %v1822 = vld [vmem:[#allocation2 + $0x68] sm:$0xff]
        %v1823 = vld [vmem:[#allocation2 + $0x70] sm:$0xff]
        %v1824 = vld [vmem:[#allocation2 + $0x78] sm:$0xff]
        %v1825 = vld [vmem:[#allocation2 + $0x80] sm:$0xff]
        %v1826 = vld [vmem:[#allocation2 + $0x88] sm:$0xff]
        %v1827 = vld [vmem:[#allocation2 + $0x90] sm:$0xff]
        %v1828 = vld [vmem:[#allocation2 + $0x98] sm:$0xff]
        %v1829 = vld [vmem:[#allocation2 + $0xa0] sm:$0xff]
        %v1830 = vld [vmem:[#allocation2 + $0xa8] sm:$0xff]
        %v1831 = vld [vmem:[#allocation2 + $0xb0] sm:$0xff]
        %v1832 = vld [vmem:[#allocation2 + $0xb8] sm:$0xff]
        %v1833 = vld [vmem:[#allocation2 + $0xc0] sm:$0xff]
        %v1834 = vld [vmem:[#allocation2 + $0xc8] sm:$0xff]
        %v1835 = vld [vmem:[#allocation2 + $0xd0] sm:$0xff]
        %v1836 = vld [vmem:[#allocation2 + $0xd8] sm:$0xff]
        %v1837 = vld [vmem:[#allocation2 + $0xe0] sm:$0xff]
        %v1838 = vld [vmem:[#allocation2 + $0xe8] sm:$0xff]
        %v1839 = vld [vmem:[#allocation2 + $0xf0] sm:$0xff]
        %v1840 = vld [vmem:[#allocation2 + $0xf8] sm:$0xff]
        %v1841 = vld [vmem:[%s5] sm:$0x3]
        %v1843 = vlaneseq
        %v1844 = vshrl.u32 %v1843, 7
        %v1845 = vsub.s32 0, %v1844
        %v1846 = vrot.slane %v1841, %v1845
        %v1847 = vlaneseq
        %v1848 = vshrl.u32 %v1847, 7
        %v1849 = vsub.s32 1, %v1848
        %v1850 = vrot.slane %v1841, %v1849
        %v1885 = vunpack.c.l.b16 %v1809
        %v1886 = vunpack.c.h.b16 %v1809
        %v1887 = vunpack.c.l.b16 %v1810
        %v1888 = vunpack.c.h.b16 %v1810
        %v1889 = vunpack.c.l.b16 %v1811
        %v1890 = vunpack.c.h.b16 %v1811
        %v1891 = vunpack.c.l.b16 %v1812
        %v1892 = vunpack.c.h.b16 %v1812
        %v1893 = vunpack.c.l.b16 %v1813
        %v1894 = vunpack.c.h.b16 %v1813
        %v1895 = vunpack.c.l.b16 %v1814
        %v1896 = vunpack.c.h.b16 %v1814
        %v1897 = vunpack.c.l.b16 %v1815
        %v1898 = vunpack.c.h.b16 %v1815
        %v1899 = vunpack.c.l.b16 %v1816
        %v1900 = vunpack.c.h.b16 %v1816
        %v1901 = vunpack.c.l.b16 %v1817
        %v1902 = vunpack.c.h.b16 %v1817
        %v1903 = vunpack.c.l.b16 %v1818
        %v1904 = vunpack.c.h.b16 %v1818
        %v1905 = vunpack.c.l.b16 %v1819
        %v1906 = vunpack.c.h.b16 %v1819
        %v1907 = vunpack.c.l.b16 %v1820
        %v1908 = vunpack.c.h.b16 %v1820
        %v1909 = vunpack.c.l.b16 %v1821
        %v1910 = vunpack.c.h.b16 %v1821
        %v1911 = vunpack.c.l.b16 %v1822
        %v1912 = vunpack.c.h.b16 %v1822
        %v1913 = vunpack.c.l.b16 %v1823
        %v1914 = vunpack.c.h.b16 %v1823
        %v1915 = vunpack.c.l.b16 %v1824
        %v1916 = vunpack.c.h.b16 %v1824
        %v1917 = vunpack.c.l.b16 %v1825
        %v1918 = vunpack.c.h.b16 %v1825
        %v1919 = vunpack.c.l.b16 %v1826
        %v1920 = vunpack.c.h.b16 %v1826
        %v1921 = vunpack.c.l.b16 %v1827
        %v1922 = vunpack.c.h.b16 %v1827
        %v1923 = vunpack.c.l.b16 %v1828
        %v1924 = vunpack.c.h.b16 %v1828
        %v1925 = vunpack.c.l.b16 %v1829
        %v1926 = vunpack.c.h.b16 %v1829
        %v1927 = vunpack.c.l.b16 %v1830
        %v1928 = vunpack.c.h.b16 %v1830
        %v1929 = vunpack.c.l.b16 %v1831
        %v1930 = vunpack.c.h.b16 %v1831
        %v1931 = vunpack.c.l.b16 %v1832
        %v1932 = vunpack.c.h.b16 %v1832
        %v1933 = vunpack.c.l.b16 %v1833
        %v1934 = vunpack.c.h.b16 %v1833
        %v1935 = vunpack.c.l.b16 %v1834
        %v1936 = vunpack.c.h.b16 %v1834
        %v1937 = vunpack.c.l.b16 %v1835
        %v1938 = vunpack.c.h.b16 %v1835
        %v1939 = vunpack.c.l.b16 %v1836
        %v1940 = vunpack.c.h.b16 %v1836
        %v1941 = vunpack.c.l.b16 %v1837
        %v1942 = vunpack.c.h.b16 %v1837
        %v1943 = vunpack.c.l.b16 %v1838
        %v1944 = vunpack.c.h.b16 %v1838
        %v1945 = vunpack.c.l.b16 %v1839
        %v1946 = vunpack.c.h.b16 %v1839
        %v1947 = vunpack.c.l.b16 %v1840
        %v1948 = vunpack.c.h.b16 %v1840
        %v1949 = vpack.c.b16 %v1887, %v1885
        %v1950 = vpack.c.b16 %v1888, %v1886
        %v1951 = vpack.c.b16 %v1891, %v1889
        %v1952 = vpack.c.b16 %v1892, %v1890
        %v1953 = vpack.c.b16 %v1895, %v1893
        %v1954 = vpack.c.b16 %v1896, %v1894
        %v1955 = vpack.c.b16 %v1899, %v1897
        %v1956 = vpack.c.b16 %v1900, %v1898
        %v1957 = vpack.c.b16 %v1903, %v1901
        %v1958 = vpack.c.b16 %v1904, %v1902
        %v1959 = vpack.c.b16 %v1907, %v1905
        %v1960 = vpack.c.b16 %v1908, %v1906
        %v1961 = vpack.c.b16 %v1911, %v1909
        %v1962 = vpack.c.b16 %v1912, %v1910
        %v1963 = vpack.c.b16 %v1915, %v1913
        %v1964 = vpack.c.b16 %v1916, %v1914
        %v1965 = vpack.c.b16 %v1919, %v1917
        %v1966 = vpack.c.b16 %v1920, %v1918
        %v1967 = vpack.c.b16 %v1923, %v1921
        %v1968 = vpack.c.b16 %v1924, %v1922
        %v1969 = vpack.c.b16 %v1927, %v1925
        %v1970 = vpack.c.b16 %v1928, %v1926
        %v1971 = vpack.c.b16 %v1931, %v1929
        %v1972 = vpack.c.b16 %v1932, %v1930
        %v1973 = vpack.c.b16 %v1935, %v1933
        %v1974 = vpack.c.b16 %v1936, %v1934
        %v1975 = vpack.c.b16 %v1939, %v1937
        %v1976 = vpack.c.b16 %v1940, %v1938
        %v1977 = vpack.c.b16 %v1943, %v1941
        %v1978 = vpack.c.b16 %v1944, %v1942
        %v1979 = vpack.c.b16 %v1947, %v1945
        %v1980 = vpack.c.b16 %v1948, %v1946
        %2013 = vmatprep.subr.bf16.mxu0 %v1964
        %2014 = vmatpush1.bf16.msra.mxu0 %v1963
        %2015 = vmatprep.subr.bf16.mxu0 %v1962
        %2016 = vmatpush1.bf16.msra.mxu0 %v1961
        %2017 = vmatprep.subr.bf16.mxu0 %v1960
        %2018 = vmatpush1.bf16.msra.mxu0 %v1959
        %2019 = vmatprep.subr.bf16.mxu0 %v1958
        %2020 = vmatpush1.bf16.msra.mxu0 %v1957
        %2021 = vmatprep.subr.bf16.mxu0 %v1956
        %2022 = vmatpush1.bf16.msra.mxu0 %v1955
        %2023 = vmatprep.subr.bf16.mxu0 %v1954
        %2024 = vmatpush1.bf16.msra.mxu0 %v1953
        %2025 = vmatprep.subr.bf16.mxu0 %v1952
        %2026 = vmatpush1.bf16.msra.mxu0 %v1951
        %2027 = vmatprep.subr.bf16.mxu0 %v1950
        %2028 = vmatpush1.bf16.msra.mxu0 %v1949
        %2029 = vmatprep.subr.bf16.mxu0 %v1980
        %2030 = vmatpush2.bf16.msra.mxu0 %v1979
        %2031 = vmatprep.subr.bf16.mxu0 %v1978
        %2032 = vmatpush2.bf16.msra.mxu0 %v1977
        %2033 = vmatprep.subr.bf16.mxu0 %v1976
        %2034 = vmatpush2.bf16.msra.mxu0 %v1975
        %2035 = vmatprep.subr.bf16.mxu0 %v1974
        %2036 = vmatpush2.bf16.msra.mxu0 %v1973
        %2037 = vmatprep.subr.bf16.mxu0 %v1972
        %2038 = vmatpush2.bf16.msra.mxu0 %v1971
        %2039 = vmatprep.subr.bf16.mxu0 %v1970
        %2040 = vmatpush2.bf16.msra.mxu0 %v1969
        %2041 = vmatprep.subr.bf16.mxu0 %v1968
        %2042 = vmatpush2.bf16.msra.mxu0 %v1967
        %2043 = vmatprep.subr.bf16.mxu0 %v1966
        %2044 = vmatpush2.bf16.msra.mxu0 %v1965
        %2045 = vmatprep.mubr.bf16.mxu0 %v1808
        %2046 = vmatmul.mubr.bf16.gmra.mxu0 %v1807
        %v2047 = vpop.f32.mrf.mxu0
        %v2048 = vadd.f32 %v1846, %v2047
        %v2049 = vpop.f32.mrf.mxu0
        %v2050 = vadd.f32 %v1850, %v2049
        %v2051 = vpop.f32.mrf.mxu0
        %v2052 = vadd.f32 %v1846, %v2051
        %v2053 = vpop.f32.mrf.mxu0
        %v2054 = vadd.f32 %v1850, %v2053
        %2055 = vdwg.mxu0
        %v2056 = vadd.f32 %v2048, %v529
        %v2057 = vadd.f32 %v2050, %v530
        %v2058 = vadd.f32 %v2052, %v531
        %v2059 = vadd.f32 %v2054, %v532
        %v2060 = vld [vmem:[%s6] sm:$0x3]
        %v2061 = vld [vmem:[%s7] sm:$0x3]
        %v2062 = vadd.f32 %v2056, %v2057
        %2063 = vadd.xlane.f32.xlu0 %v2062
        %v2064 = vpop.xlane.xlu0 %2063
        %v2065 = vadd.f32 %v2058, %v2059
        %2066 = vadd.xlane.f32.xlu0 %v2065
        %v2067 = vpop.xlane.xlu0 %2066
        %v2068 = vrcp.pop 256.0
        %v2069 = vmul.f32 %v2064, %v2068
        %v2070 = vmul.f32 %v2067, %v2068
        %v2071 = vsub.f32 %v2056, %v2069
        %v2072 = vsub.f32 %v2057, %v2069
        %v2073 = vsub.f32 %v2058, %v2070
        %v2074 = vsub.f32 %v2059, %v2070
        %v2075 = vmul.f32 %v2071, %v2071
        %v2076 = vmul.f32 %v2072, %v2072
        %v2077 = vmul.f32 %v2073, %v2073
        %v2078 = vmul.f32 %v2074, %v2074
        %v2079 = vadd.f32 %v2075, %v2076
        %2080 = vadd.xlane.f32.xlu0 %v2079
        %v2081 = vpop.xlane.xlu0 %2080
        %v2082 = vadd.f32 %v2077, %v2078
        %2083 = vadd.xlane.f32.xlu0 %v2082
        %v2084 = vpop.xlane.xlu0 %2083
        %v2085 = vmul.f32 %v2081, %v2068
        %v2086 = vmul.f32 %v2084, %v2068
        %v2087 = vadd.f32 %v2085, 1e-12
        %v2088 = vadd.f32 %v2086, 1e-12
        %v2089 = vrsqrt.pop %v2087
        %v2090 = vrsqrt.pop %v2088
        %v2091 = vmul.f32 %v2071, %v2089
        %v2092 = vmul.f32 %v2072, %v2089
        %v2093 = vmul.f32 %v2073, %v2090
        %v2094 = vmul.f32 %v2074, %v2090
        %v2096 = vlaneseq
        %v2097 = vshrl.u32 %v2096, 7
        %v2098 = vsub.s32 0, %v2097
        %v2099 = vrot.slane %v2060, %v2098
        %v2100 = vlaneseq
        %v2101 = vshrl.u32 %v2100, 7
        %v2102 = vsub.s32 1, %v2101
        %v2103 = vrot.slane %v2060, %v2102
        %v2106 = vmul.f32 %v2091, %v2099
        %v2107 = vmul.f32 %v2092, %v2103
        %v2108 = vmul.f32 %v2093, %v2099
        %v2109 = vmul.f32 %v2094, %v2103
        %v2111 = vlaneseq
        %v2112 = vshrl.u32 %v2111, 7
        %v2113 = vsub.s32 0, %v2112
        %v2114 = vrot.slane %v2061, %v2113
        %v2115 = vlaneseq
        %v2116 = vshrl.u32 %v2115, 7
        %v2117 = vsub.s32 1, %v2116
        %v2118 = vrot.slane %v2061, %v2117
        %v2121 = vadd.f32 %v2106, %v2114
        %v2122 = vadd.f32 %v2107, %v2118
        %v2123 = vadd.f32 %v2108, %v2114
        %v2124 = vadd.f32 %v2109, %v2118
        %v2125 = vpack.c.bf16 %v2123, %v2121
        %v2126 = vpack.c.bf16 %v2124, %v2122
        %v2127 = vld [vmem:[#allocation4] sm:$0xff]
        %v2128 = vld [vmem:[#allocation4 + $0x8] sm:$0xff]
        %v2129 = vld [vmem:[#allocation4 + $0x10] sm:$0xff]
        %v2130 = vld [vmem:[#allocation4 + $0x18] sm:$0xff]
        %v2131 = vld [vmem:[#allocation4 + $0x20] sm:$0xff]
        %v2132 = vld [vmem:[#allocation4 + $0x28] sm:$0xff]
        %v2133 = vld [vmem:[#allocation4 + $0x30] sm:$0xff]
        %v2134 = vld [vmem:[#allocation4 + $0x38] sm:$0xff]
        %v2135 = vld [vmem:[#allocation4 + $0x40] sm:$0xff]
        %v2136 = vld [vmem:[#allocation4 + $0x48] sm:$0xff]
        %v2137 = vld [vmem:[#allocation4 + $0x50] sm:$0xff]
        %v2138 = vld [vmem:[#allocation4 + $0x58] sm:$0xff]
        %v2139 = vld [vmem:[#allocation4 + $0x60] sm:$0xff]
        %v2140 = vld [vmem:[#allocation4 + $0x68] sm:$0xff]
        %v2141 = vld [vmem:[#allocation4 + $0x70] sm:$0xff]
        %v2142 = vld [vmem:[#allocation4 + $0x78] sm:$0xff]
        %v2143 = vld [vmem:[#allocation4 + $0x80] sm:$0xff]
        %v2144 = vld [vmem:[#allocation4 + $0x88] sm:$0xff]
        %v2145 = vld [vmem:[#allocation4 + $0x90] sm:$0xff]
        %v2146 = vld [vmem:[#allocation4 + $0x98] sm:$0xff]
        %v2147 = vld [vmem:[#allocation4 + $0xa0] sm:$0xff]
        %v2148 = vld [vmem:[#allocation4 + $0xa8] sm:$0xff]
        %v2149 = vld [vmem:[#allocation4 + $0xb0] sm:$0xff]
        %v2150 = vld [vmem:[#allocation4 + $0xb8] sm:$0xff]
        %v2151 = vld [vmem:[#allocation4 + $0xc0] sm:$0xff]
        %v2152 = vld [vmem:[#allocation4 + $0xc8] sm:$0xff]
        %v2153 = vld [vmem:[#allocation4 + $0xd0] sm:$0xff]
        %v2154 = vld [vmem:[#allocation4 + $0xd8] sm:$0xff]
        %v2155 = vld [vmem:[#allocation4 + $0xe0] sm:$0xff]
        %v2156 = vld [vmem:[#allocation4 + $0xe8] sm:$0xff]
        %v2157 = vld [vmem:[#allocation4 + $0xf0] sm:$0xff]
        %v2158 = vld [vmem:[#allocation4 + $0xf8] sm:$0xff]
        %v2159 = vld [vmem:[#allocation4 + $0x100] sm:$0xff]
        %v2160 = vld [vmem:[#allocation4 + $0x108] sm:$0xff]
        %v2161 = vld [vmem:[#allocation4 + $0x110] sm:$0xff]
        %v2162 = vld [vmem:[#allocation4 + $0x118] sm:$0xff]
        %v2163 = vld [vmem:[#allocation4 + $0x120] sm:$0xff]
        %v2164 = vld [vmem:[#allocation4 + $0x128] sm:$0xff]
        %v2165 = vld [vmem:[#allocation4 + $0x130] sm:$0xff]
        %v2166 = vld [vmem:[#allocation4 + $0x138] sm:$0xff]
        %v2167 = vld [vmem:[#allocation4 + $0x140] sm:$0xff]
        %v2168 = vld [vmem:[#allocation4 + $0x148] sm:$0xff]
        %v2169 = vld [vmem:[#allocation4 + $0x150] sm:$0xff]
        %v2170 = vld [vmem:[#allocation4 + $0x158] sm:$0xff]
        %v2171 = vld [vmem:[#allocation4 + $0x160] sm:$0xff]
        %v2172 = vld [vmem:[#allocation4 + $0x168] sm:$0xff]
        %v2173 = vld [vmem:[#allocation4 + $0x170] sm:$0xff]
        %v2174 = vld [vmem:[#allocation4 + $0x178] sm:$0xff]
        %v2175 = vld [vmem:[#allocation4 + $0x180] sm:$0xff]
        %v2176 = vld [vmem:[#allocation4 + $0x188] sm:$0xff]
        %v2177 = vld [vmem:[#allocation4 + $0x190] sm:$0xff]
        %v2178 = vld [vmem:[#allocation4 + $0x198] sm:$0xff]
        %v2179 = vld [vmem:[#allocation4 + $0x1a0] sm:$0xff]
        %v2180 = vld [vmem:[#allocation4 + $0x1a8] sm:$0xff]
        %v2181 = vld [vmem:[#allocation4 + $0x1b0] sm:$0xff]
        %v2182 = vld [vmem:[#allocation4 + $0x1b8] sm:$0xff]
        %v2183 = vld [vmem:[#allocation4 + $0x1c0] sm:$0xff]
        %v2184 = vld [vmem:[#allocation4 + $0x1c8] sm:$0xff]
        %v2185 = vld [vmem:[#allocation4 + $0x1d0] sm:$0xff]
        %v2186 = vld [vmem:[#allocation4 + $0x1d8] sm:$0xff]
        %v2187 = vld [vmem:[#allocation4 + $0x1e0] sm:$0xff]
        %v2188 = vld [vmem:[#allocation4 + $0x1e8] sm:$0xff]
        %v2189 = vld [vmem:[#allocation4 + $0x1f0] sm:$0xff]
        %v2190 = vld [vmem:[#allocation4 + $0x1f8] sm:$0xff]
        %v2191 = vld [vmem:[%s9] sm:$0xf]
        %v2193 = vlaneseq
        %v2194 = vshrl.u32 %v2193, 7
        %v2195 = vsub.s32 0, %v2194
        %v2196 = vrot.slane %v2191, %v2195
        %v2197 = vlaneseq
        %v2198 = vshrl.u32 %v2197, 7
        %v2199 = vsub.s32 1, %v2198
        %v2200 = vrot.slane %v2191, %v2199
        %v2201 = vlaneseq
        %v2202 = vshrl.u32 %v2201, 7
        %v2203 = vsub.s32 2, %v2202
        %v2204 = vrot.slane %v2191, %v2203
        %v2205 = vlaneseq
        %v2206 = vshrl.u32 %v2205, 7
        %v2207 = vsub.s32 3, %v2206
        %v2208 = vrot.slane %v2191, %v2207
        %v2277 = vunpack.c.l.b16 %v2127
        %v2278 = vunpack.c.h.b16 %v2127
        %v2279 = vunpack.c.l.b16 %v2128
        %v2280 = vunpack.c.h.b16 %v2128
        %v2281 = vunpack.c.l.b16 %v2129
        %v2282 = vunpack.c.h.b16 %v2129
        %v2283 = vunpack.c.l.b16 %v2130
        %v2284 = vunpack.c.h.b16 %v2130
        %v2285 = vunpack.c.l.b16 %v2131
        %v2286 = vunpack.c.h.b16 %v2131
        %v2287 = vunpack.c.l.b16 %v2132
        %v2288 = vunpack.c.h.b16 %v2132
        %v2289 = vunpack.c.l.b16 %v2133
        %v2290 = vunpack.c.h.b16 %v2133
        %v2291 = vunpack.c.l.b16 %v2134
        %v2292 = vunpack.c.h.b16 %v2134
        %v2293 = vunpack.c.l.b16 %v2135
        %v2294 = vunpack.c.h.b16 %v2135
        %v2295 = vunpack.c.l.b16 %v2136
        %v2296 = vunpack.c.h.b16 %v2136
        %v2297 = vunpack.c.l.b16 %v2137
        %v2298 = vunpack.c.h.b16 %v2137
        %v2299 = vunpack.c.l.b16 %v2138
        %v2300 = vunpack.c.h.b16 %v2138
        %v2301 = vunpack.c.l.b16 %v2139
        %v2302 = vunpack.c.h.b16 %v2139
        %v2303 = vunpack.c.l.b16 %v2140
        %v2304 = vunpack.c.h.b16 %v2140
        %v2305 = vunpack.c.l.b16 %v2141
        %v2306 = vunpack.c.h.b16 %v2141
        %v2307 = vunpack.c.l.b16 %v2142
        %v2308 = vunpack.c.h.b16 %v2142
        %v2309 = vunpack.c.l.b16 %v2143
        %v2310 = vunpack.c.h.b16 %v2143
        %v2311 = vunpack.c.l.b16 %v2144
        %v2312 = vunpack.c.h.b16 %v2144
        %v2313 = vunpack.c.l.b16 %v2145
        %v2314 = vunpack.c.h.b16 %v2145
        %v2315 = vunpack.c.l.b16 %v2146
        %v2316 = vunpack.c.h.b16 %v2146
        %v2317 = vunpack.c.l.b16 %v2147
        %v2318 = vunpack.c.h.b16 %v2147
        %v2319 = vunpack.c.l.b16 %v2148
        %v2320 = vunpack.c.h.b16 %v2148
        %v2321 = vunpack.c.l.b16 %v2149
        %v2322 = vunpack.c.h.b16 %v2149
        %v2323 = vunpack.c.l.b16 %v2150
        %v2324 = vunpack.c.h.b16 %v2150
        %v2325 = vunpack.c.l.b16 %v2151
        %v2326 = vunpack.c.h.b16 %v2151
        %v2327 = vunpack.c.l.b16 %v2152
        %v2328 = vunpack.c.h.b16 %v2152
        %v2329 = vunpack.c.l.b16 %v2153
        %v2330 = vunpack.c.h.b16 %v2153
        %v2331 = vunpack.c.l.b16 %v2154
        %v2332 = vunpack.c.h.b16 %v2154
        %v2333 = vunpack.c.l.b16 %v2155
        %v2334 = vunpack.c.h.b16 %v2155
        %v2335 = vunpack.c.l.b16 %v2156
        %v2336 = vunpack.c.h.b16 %v2156
        %v2337 = vunpack.c.l.b16 %v2157
        %v2338 = vunpack.c.h.b16 %v2157
        %v2339 = vunpack.c.l.b16 %v2158
        %v2340 = vunpack.c.h.b16 %v2158
        %v2341 = vunpack.c.l.b16 %v2159
        %v2342 = vunpack.c.h.b16 %v2159
        %v2343 = vunpack.c.l.b16 %v2160
        %v2344 = vunpack.c.h.b16 %v2160
        %v2345 = vunpack.c.l.b16 %v2161
        %v2346 = vunpack.c.h.b16 %v2161
        %v2347 = vunpack.c.l.b16 %v2162
        %v2348 = vunpack.c.h.b16 %v2162
        %v2349 = vunpack.c.l.b16 %v2163
        %v2350 = vunpack.c.h.b16 %v2163
        %v2351 = vunpack.c.l.b16 %v2164
        %v2352 = vunpack.c.h.b16 %v2164
        %v2353 = vunpack.c.l.b16 %v2165
        %v2354 = vunpack.c.h.b16 %v2165
        %v2355 = vunpack.c.l.b16 %v2166
        %v2356 = vunpack.c.h.b16 %v2166
        %v2357 = vunpack.c.l.b16 %v2167
        %v2358 = vunpack.c.h.b16 %v2167
        %v2359 = vunpack.c.l.b16 %v2168
        %v2360 = vunpack.c.h.b16 %v2168
        %v2361 = vunpack.c.l.b16 %v2169
        %v2362 = vunpack.c.h.b16 %v2169
        %v2363 = vunpack.c.l.b16 %v2170
        %v2364 = vunpack.c.h.b16 %v2170
        %v2365 = vunpack.c.l.b16 %v2171
        %v2366 = vunpack.c.h.b16 %v2171
        %v2367 = vunpack.c.l.b16 %v2172
        %v2368 = vunpack.c.h.b16 %v2172
        %v2369 = vunpack.c.l.b16 %v2173
        %v2370 = vunpack.c.h.b16 %v2173
        %v2371 = vunpack.c.l.b16 %v2174
        %v2372 = vunpack.c.h.b16 %v2174
        %v2373 = vunpack.c.l.b16 %v2175
        %v2374 = vunpack.c.h.b16 %v2175
        %v2375 = vunpack.c.l.b16 %v2176
        %v2376 = vunpack.c.h.b16 %v2176
        %v2377 = vunpack.c.l.b16 %v2177
        %v2378 = vunpack.c.h.b16 %v2177
        %v2379 = vunpack.c.l.b16 %v2178
        %v2380 = vunpack.c.h.b16 %v2178
        %v2381 = vunpack.c.l.b16 %v2179
        %v2382 = vunpack.c.h.b16 %v2179
        %v2383 = vunpack.c.l.b16 %v2180
        %v2384 = vunpack.c.h.b16 %v2180
        %v2385 = vunpack.c.l.b16 %v2181
        %v2386 = vunpack.c.h.b16 %v2181
        %v2387 = vunpack.c.l.b16 %v2182
        %v2388 = vunpack.c.h.b16 %v2182
        %v2389 = vunpack.c.l.b16 %v2183
        %v2390 = vunpack.c.h.b16 %v2183
        %v2391 = vunpack.c.l.b16 %v2184
        %v2392 = vunpack.c.h.b16 %v2184
        %v2393 = vunpack.c.l.b16 %v2185
        %v2394 = vunpack.c.h.b16 %v2185
        %v2395 = vunpack.c.l.b16 %v2186
        %v2396 = vunpack.c.h.b16 %v2186
        %v2397 = vunpack.c.l.b16 %v2187
        %v2398 = vunpack.c.h.b16 %v2187
        %v2399 = vunpack.c.l.b16 %v2188
        %v2400 = vunpack.c.h.b16 %v2188
        %v2401 = vunpack.c.l.b16 %v2189
        %v2402 = vunpack.c.h.b16 %v2189
        %v2403 = vunpack.c.l.b16 %v2190
        %v2404 = vunpack.c.h.b16 %v2190
        %v2405 = vpack.c.b16 %v2281, %v2277
        %v2406 = vpack.c.b16 %v2282, %v2278
        %v2407 = vpack.c.b16 %v2283, %v2279
        %v2408 = vpack.c.b16 %v2284, %v2280
        %v2409 = vpack.c.b16 %v2289, %v2285
        %v2410 = vpack.c.b16 %v2290, %v2286
        %v2411 = vpack.c.b16 %v2291, %v2287
        %v2412 = vpack.c.b16 %v2292, %v2288
        %v2413 = vpack.c.b16 %v2297, %v2293
        %v2414 = vpack.c.b16 %v2298, %v2294
        %v2415 = vpack.c.b16 %v2299, %v2295
        %v2416 = vpack.c.b16 %v2300, %v2296
        %v2417 = vpack.c.b16 %v2305, %v2301
        %v2418 = vpack.c.b16 %v2306, %v2302
        %v2419 = vpack.c.b16 %v2307, %v2303
        %v2420 = vpack.c.b16 %v2308, %v2304
        %v2421 = vpack.c.b16 %v2313, %v2309
        %v2422 = vpack.c.b16 %v2314, %v2310
        %v2423 = vpack.c.b16 %v2315, %v2311
        %v2424 = vpack.c.b16 %v2316, %v2312
        %v2425 = vpack.c.b16 %v2321, %v2317
        %v2426 = vpack.c.b16 %v2322, %v2318
        %v2427 = vpack.c.b16 %v2323, %v2319
        %v2428 = vpack.c.b16 %v2324, %v2320
        %v2429 = vpack.c.b16 %v2329, %v2325
        %v2430 = vpack.c.b16 %v2330, %v2326
        %v2431 = vpack.c.b16 %v2331, %v2327
        %v2432 = vpack.c.b16 %v2332, %v2328
        %v2433 = vpack.c.b16 %v2337, %v2333
        %v2434 = vpack.c.b16 %v2338, %v2334
        %v2435 = vpack.c.b16 %v2339, %v2335
        %v2436 = vpack.c.b16 %v2340, %v2336
        %v2437 = vpack.c.b16 %v2345, %v2341
        %v2438 = vpack.c.b16 %v2346, %v2342
        %v2439 = vpack.c.b16 %v2347, %v2343
        %v2440 = vpack.c.b16 %v2348, %v2344
        %v2441 = vpack.c.b16 %v2353, %v2349
        %v2442 = vpack.c.b16 %v2354, %v2350
        %v2443 = vpack.c.b16 %v2355, %v2351
        %v2444 = vpack.c.b16 %v2356, %v2352
        %v2445 = vpack.c.b16 %v2361, %v2357
        %v2446 = vpack.c.b16 %v2362, %v2358
        %v2447 = vpack.c.b16 %v2363, %v2359
        %v2448 = vpack.c.b16 %v2364, %v2360
        %v2449 = vpack.c.b16 %v2369, %v2365
        %v2450 = vpack.c.b16 %v2370, %v2366
        %v2451 = vpack.c.b16 %v2371, %v2367
        %v2452 = vpack.c.b16 %v2372, %v2368
        %v2453 = vpack.c.b16 %v2377, %v2373
        %v2454 = vpack.c.b16 %v2378, %v2374
        %v2455 = vpack.c.b16 %v2379, %v2375
        %v2456 = vpack.c.b16 %v2380, %v2376
        %v2457 = vpack.c.b16 %v2385, %v2381
        %v2458 = vpack.c.b16 %v2386, %v2382
        %v2459 = vpack.c.b16 %v2387, %v2383
        %v2460 = vpack.c.b16 %v2388, %v2384
        %v2461 = vpack.c.b16 %v2393, %v2389
        %v2462 = vpack.c.b16 %v2394, %v2390
        %v2463 = vpack.c.b16 %v2395, %v2391
        %v2464 = vpack.c.b16 %v2396, %v2392
        %v2465 = vpack.c.b16 %v2401, %v2397
        %v2466 = vpack.c.b16 %v2402, %v2398
        %v2467 = vpack.c.b16 %v2403, %v2399
        %v2468 = vpack.c.b16 %v2404, %v2400
        %2533 = vmatprep.subr.bf16.mxu0 %v2434
        %2534 = vmatpush1.bf16.msra.mxu0 %v2433
        %2535 = vmatprep.subr.bf16.mxu0 %v2430
        %2536 = vmatpush1.bf16.msra.mxu0 %v2429
        %2537 = vmatprep.subr.bf16.mxu0 %v2426
        %2538 = vmatpush1.bf16.msra.mxu0 %v2425
        %2539 = vmatprep.subr.bf16.mxu0 %v2422
        %2540 = vmatpush1.bf16.msra.mxu0 %v2421
        %2541 = vmatprep.subr.bf16.mxu0 %v2418
        %2542 = vmatpush1.bf16.msra.mxu0 %v2417
        %2543 = vmatprep.subr.bf16.mxu0 %v2414
        %2544 = vmatpush1.bf16.msra.mxu0 %v2413
        %2545 = vmatprep.subr.bf16.mxu0 %v2410
        %2546 = vmatpush1.bf16.msra.mxu0 %v2409
        %2547 = vmatprep.subr.bf16.mxu0 %v2406
        %2548 = vmatpush1.bf16.msra.mxu0 %v2405
        %2549 = vmatprep.subr.bf16.mxu0 %v2466
        %2550 = vmatpush2.bf16.msra.mxu0 %v2465
        %2551 = vmatprep.subr.bf16.mxu0 %v2462
        %2552 = vmatpush2.bf16.msra.mxu0 %v2461
        %2553 = vmatprep.subr.bf16.mxu0 %v2458
        %2554 = vmatpush2.bf16.msra.mxu0 %v2457
        %2555 = vmatprep.subr.bf16.mxu0 %v2454
        %2556 = vmatpush2.bf16.msra.mxu0 %v2453
        %2557 = vmatprep.subr.bf16.mxu0 %v2450
        %2558 = vmatpush2.bf16.msra.mxu0 %v2449
        %2559 = vmatprep.subr.bf16.mxu0 %v2446
        %2560 = vmatpush2.bf16.msra.mxu0 %v2445
        %2561 = vmatprep.subr.bf16.mxu0 %v2442
        %2562 = vmatpush2.bf16.msra.mxu0 %v2441
        %2563 = vmatprep.subr.bf16.mxu0 %v2438
        %2564 = vmatpush2.bf16.msra.mxu0 %v2437
        %2565 = vmatprep.mubr.bf16.mxu0 %v2126
        %2566 = vmatmul.mubr.bf16.gmra.mxu0 %v2125
        %v2567 = vpop.f32.mrf.mxu0
        %v2568 = vadd.f32 %v2196, %v2567
        %v2569 = vpop.f32.mrf.mxu0
        %v2570 = vadd.f32 %v2200, %v2569
        %v2571 = vpop.f32.mrf.mxu0
        %v2572 = vadd.f32 %v2196, %v2571
        %v2573 = vpop.f32.mrf.mxu0
        %v2574 = vadd.f32 %v2200, %v2573
        %2575 = vdwg.mxu0
        %2576 = vmatprep.subr.bf16.mxu0 %v2436
        %2577 = vmatpush1.bf16.msra.mxu0 %v2435
        %2578 = vmatprep.subr.bf16.mxu0 %v2432
        %2579 = vmatpush1.bf16.msra.mxu0 %v2431
        %2580 = vmatprep.subr.bf16.mxu0 %v2428
        %2581 = vmatpush1.bf16.msra.mxu0 %v2427
        %2582 = vmatprep.subr.bf16.mxu0 %v2424
        %2583 = vmatpush1.bf16.msra.mxu0 %v2423
        %2584 = vmatprep.subr.bf16.mxu0 %v2420
        %2585 = vmatpush1.bf16.msra.mxu0 %v2419
        %2586 = vmatprep.subr.bf16.mxu0 %v2416
        %2587 = vmatpush1.bf16.msra.mxu0 %v2415
        %2588 = vmatprep.subr.bf16.mxu0 %v2412
        %2589 = vmatpush1.bf16.msra.mxu0 %v2411
        %2590 = vmatprep.subr.bf16.mxu0 %v2408
        %2591 = vmatpush1.bf16.msra.mxu0 %v2407
        %2592 = vmatprep.subr.bf16.mxu0 %v2468
        %2593 = vmatpush2.bf16.msra.mxu0 %v2467
        %2594 = vmatprep.subr.bf16.mxu0 %v2464
        %2595 = vmatpush2.bf16.msra.mxu0 %v2463
        %2596 = vmatprep.subr.bf16.mxu0 %v2460
        %2597 = vmatpush2.bf16.msra.mxu0 %v2459
        %2598 = vmatprep.subr.bf16.mxu0 %v2456
        %2599 = vmatpush2.bf16.msra.mxu0 %v2455
        %2600 = vmatprep.subr.bf16.mxu0 %v2452
        %2601 = vmatpush2.bf16.msra.mxu0 %v2451
        %2602 = vmatprep.subr.bf16.mxu0 %v2448
        %2603 = vmatpush2.bf16.msra.mxu0 %v2447
        %2604 = vmatprep.subr.bf16.mxu0 %v2444
        %2605 = vmatpush2.bf16.msra.mxu0 %v2443
        %2606 = vmatprep.subr.bf16.mxu0 %v2440
        %2607 = vmatpush2.bf16.msra.mxu0 %v2439
        %2608 = vmatprep.mubr.bf16.mxu0 %v2126
        %2609 = vmatmul.mubr.bf16.gmra.mxu0 %v2125
        %v2610 = vpop.f32.mrf.mxu0
        %v2611 = vadd.f32 %v2204, %v2610
        %v2612 = vpop.f32.mrf.mxu0
        %v2613 = vadd.f32 %v2208, %v2612
        %v2614 = vpop.f32.mrf.mxu0
        %v2615 = vadd.f32 %v2204, %v2614
        %v2616 = vpop.f32.mrf.mxu0
        %v2617 = vadd.f32 %v2208, %v2616
        %2618 = vdwg.mxu0
        %v2619 = vmul.f32 %v2568, %v2568
        %v2620 = vmul.f32 %v2570, %v2570
        %v2621 = vmul.f32 %v2611, %v2611
        %v2622 = vmul.f32 %v2613, %v2613
        %v2623 = vmul.f32 %v2572, %v2572
        %v2624 = vmul.f32 %v2574, %v2574
        %v2625 = vmul.f32 %v2615, %v2615
        %v2626 = vmul.f32 %v2617, %v2617
        %v2627 = vmul.f32 %v2568, %v2619
        %v2628 = vmul.f32 %v2570, %v2620
        %v2629 = vmul.f32 %v2611, %v2621
        %v2630 = vmul.f32 %v2613, %v2622
        %v2631 = vmul.f32 %v2572, %v2623
        %v2632 = vmul.f32 %v2574, %v2624
        %v2633 = vmul.f32 %v2615, %v2625
        %v2634 = vmul.f32 %v2617, %v2626
        %v2635 = vmul.f32 %v2627, 0.044715
        %v2636 = vmul.f32 %v2628, 0.044715
        %v2637 = vmul.f32 %v2629, 0.044715
        %v2638 = vmul.f32 %v2630, 0.044715
        %v2639 = vmul.f32 %v2631, 0.044715
        %v2640 = vmul.f32 %v2632, 0.044715
        %v2641 = vmul.f32 %v2633, 0.044715
        %v2642 = vmul.f32 %v2634, 0.044715
        %v2643 = vadd.f32 %v2568, %v2635
        %v2644 = vadd.f32 %v2570, %v2636
        %v2645 = vadd.f32 %v2611, %v2637
        %v2646 = vadd.f32 %v2613, %v2638
        %v2647 = vadd.f32 %v2572, %v2639
        %v2648 = vadd.f32 %v2574, %v2640
        %v2649 = vadd.f32 %v2615, %v2641
        %v2650 = vadd.f32 %v2617, %v2642
        %v2651 = vmul.f32 %v2643, 0.7978846
        %v2652 = vmul.f32 %v2644, 0.7978846
        %v2653 = vmul.f32 %v2645, 0.7978846
        %v2654 = vmul.f32 %v2646, 0.7978846
        %v2655 = vmul.f32 %v2647, 0.7978846
        %v2656 = vmul.f32 %v2648, 0.7978846
        %v2657 = vmul.f32 %v2649, 0.7978846
        %v2658 = vmul.f32 %v2650, 0.7978846
        %v2659 = vtanh.pop %v2651
        %v2660 = vtanh.pop %v2652
        %v2661 = vtanh.pop %v2653
        %v2662 = vtanh.pop %v2654
        %v2663 = vtanh.pop %v2655
        %v2664 = vtanh.pop %v2656
        %v2665 = vtanh.pop %v2657
        %v2666 = vtanh.pop %v2658
        %v2667 = vadd.f32 %v2659, 1.0
        %v2668 = vadd.f32 %v2660, 1.0
        %v2669 = vadd.f32 %v2661, 1.0
        %v2670 = vadd.f32 %v2662, 1.0
        %v2671 = vadd.f32 %v2663, 1.0
        %v2672 = vadd.f32 %v2664, 1.0
        %v2673 = vadd.f32 %v2665, 1.0
        %v2674 = vadd.f32 %v2666, 1.0
        %v2675 = vmul.f32 %v2667, 0.5
        %v2676 = vmul.f32 %v2668, 0.5
        %v2677 = vmul.f32 %v2669, 0.5
        %v2678 = vmul.f32 %v2670, 0.5
        %v2679 = vmul.f32 %v2671, 0.5
        %v2680 = vmul.f32 %v2672, 0.5
        %v2681 = vmul.f32 %v2673, 0.5
        %v2682 = vmul.f32 %v2674, 0.5
        %v2683 = vmul.f32 %v2568, %v2675
        %v2684 = vmul.f32 %v2570, %v2676
        %v2685 = vmul.f32 %v2611, %v2677
        %v2686 = vmul.f32 %v2613, %v2678
        %v2687 = vmul.f32 %v2572, %v2679
        %v2688 = vmul.f32 %v2574, %v2680
        %v2689 = vmul.f32 %v2615, %v2681
        %v2690 = vmul.f32 %v2617, %v2682
        %v2691 = vpack.c.bf16 %v2687, %v2683
        %v2692 = vpack.c.bf16 %v2688, %v2684
        %v2693 = vpack.c.bf16 %v2689, %v2685
        %v2694 = vpack.c.bf16 %v2690, %v2686
        %v2695 = vld [vmem:[#allocation6] sm:$0xff]
        %v2696 = vld [vmem:[#allocation6 + $0x8] sm:$0xff]
        %v2697 = vld [vmem:[#allocation6 + $0x10] sm:$0xff]
        %v2698 = vld [vmem:[#allocation6 + $0x18] sm:$0xff]
        %v2699 = vld [vmem:[#allocation6 + $0x20] sm:$0xff]
        %v2700 = vld [vmem:[#allocation6 + $0x28] sm:$0xff]
        %v2701 = vld [vmem:[#allocation6 + $0x30] sm:$0xff]
        %v2702 = vld [vmem:[#allocation6 + $0x38] sm:$0xff]
        %v2703 = vld [vmem:[#allocation6 + $0x40] sm:$0xff]
        %v2704 = vld [vmem:[#allocation6 + $0x48] sm:$0xff]
        %v2705 = vld [vmem:[#allocation6 + $0x50] sm:$0xff]
        %v2706 = vld [vmem:[#allocation6 + $0x58] sm:$0xff]
        %v2707 = vld [vmem:[#allocation6 + $0x60] sm:$0xff]
        %v2708 = vld [vmem:[#allocation6 + $0x68] sm:$0xff]
        %v2709 = vld [vmem:[#allocation6 + $0x70] sm:$0xff]
        %v2710 = vld [vmem:[#allocation6 + $0x78] sm:$0xff]
        %v2711 = vld [vmem:[#allocation6 + $0x80] sm:$0xff]
        %v2712 = vld [vmem:[#allocation6 + $0x88] sm:$0xff]
        %v2713 = vld [vmem:[#allocation6 + $0x90] sm:$0xff]
        %v2714 = vld [vmem:[#allocation6 + $0x98] sm:$0xff]
        %v2715 = vld [vmem:[#allocation6 + $0xa0] sm:$0xff]
        %v2716 = vld [vmem:[#allocation6 + $0xa8] sm:$0xff]
        %v2717 = vld [vmem:[#allocation6 + $0xb0] sm:$0xff]
        %v2718 = vld [vmem:[#allocation6 + $0xb8] sm:$0xff]
        %v2719 = vld [vmem:[#allocation6 + $0xc0] sm:$0xff]
        %v2720 = vld [vmem:[#allocation6 + $0xc8] sm:$0xff]
        %v2721 = vld [vmem:[#allocation6 + $0xd0] sm:$0xff]
        %v2722 = vld [vmem:[#allocation6 + $0xd8] sm:$0xff]
        %v2723 = vld [vmem:[#allocation6 + $0xe0] sm:$0xff]
        %v2724 = vld [vmem:[#allocation6 + $0xe8] sm:$0xff]
        %v2725 = vld [vmem:[#allocation6 + $0xf0] sm:$0xff]
        %v2726 = vld [vmem:[#allocation6 + $0xf8] sm:$0xff]
        %v2727 = vld [vmem:[#allocation6 + $0x100] sm:$0xff]
        %v2728 = vld [vmem:[#allocation6 + $0x108] sm:$0xff]
        %v2729 = vld [vmem:[#allocation6 + $0x110] sm:$0xff]
        %v2730 = vld [vmem:[#allocation6 + $0x118] sm:$0xff]
        %v2731 = vld [vmem:[#allocation6 + $0x120] sm:$0xff]
        %v2732 = vld [vmem:[#allocation6 + $0x128] sm:$0xff]
        %v2733 = vld [vmem:[#allocation6 + $0x130] sm:$0xff]
        %v2734 = vld [vmem:[#allocation6 + $0x138] sm:$0xff]
        %v2735 = vld [vmem:[#allocation6 + $0x140] sm:$0xff]
        %v2736 = vld [vmem:[#allocation6 + $0x148] sm:$0xff]
        %v2737 = vld [vmem:[#allocation6 + $0x150] sm:$0xff]
        %v2738 = vld [vmem:[#allocation6 + $0x158] sm:$0xff]
        %v2739 = vld [vmem:[#allocation6 + $0x160] sm:$0xff]
        %v2740 = vld [vmem:[#allocation6 + $0x168] sm:$0xff]
        %v2741 = vld [vmem:[#allocation6 + $0x170] sm:$0xff]
        %v2742 = vld [vmem:[#allocation6 + $0x178] sm:$0xff]
        %v2743 = vld [vmem:[#allocation6 + $0x180] sm:$0xff]
        %v2744 = vld [vmem:[#allocation6 + $0x188] sm:$0xff]
        %v2745 = vld [vmem:[#allocation6 + $0x190] sm:$0xff]
        %v2746 = vld [vmem:[#allocation6 + $0x198] sm:$0xff]
        %v2747 = vld [vmem:[#allocation6 + $0x1a0] sm:$0xff]
        %v2748 = vld [vmem:[#allocation6 + $0x1a8] sm:$0xff]
        %v2749 = vld [vmem:[#allocation6 + $0x1b0] sm:$0xff]
        %v2750 = vld [vmem:[#allocation6 + $0x1b8] sm:$0xff]
        %v2751 = vld [vmem:[#allocation6 + $0x1c0] sm:$0xff]
        %v2752 = vld [vmem:[#allocation6 + $0x1c8] sm:$0xff]
        %v2753 = vld [vmem:[#allocation6 + $0x1d0] sm:$0xff]
        %v2754 = vld [vmem:[#allocation6 + $0x1d8] sm:$0xff]
        %v2755 = vld [vmem:[#allocation6 + $0x1e0] sm:$0xff]
        %v2756 = vld [vmem:[#allocation6 + $0x1e8] sm:$0xff]
        %v2757 = vld [vmem:[#allocation6 + $0x1f0] sm:$0xff]
        %v2758 = vld [vmem:[#allocation6 + $0x1f8] sm:$0xff]
        %v2759 = vld [vmem:[%s11] sm:$0x3]
        %v2761 = vlaneseq
        %v2762 = vshrl.u32 %v2761, 7
        %v2763 = vsub.s32 0, %v2762
        %v2764 = vrot.slane %v2759, %v2763
        %v2765 = vlaneseq
        %v2766 = vshrl.u32 %v2765, 7
        %v2767 = vsub.s32 1, %v2766
        %v2768 = vrot.slane %v2759, %v2767
        %v2835 = vunpack.c.l.b16 %v2695
        %v2836 = vunpack.c.h.b16 %v2695
        %v2837 = vunpack.c.l.b16 %v2696
        %v2838 = vunpack.c.h.b16 %v2696
        %v2839 = vunpack.c.l.b16 %v2697
        %v2840 = vunpack.c.h.b16 %v2697
        %v2841 = vunpack.c.l.b16 %v2698
        %v2842 = vunpack.c.h.b16 %v2698
        %v2843 = vunpack.c.l.b16 %v2699
        %v2844 = vunpack.c.h.b16 %v2699
        %v2845 = vunpack.c.l.b16 %v2700
        %v2846 = vunpack.c.h.b16 %v2700
        %v2847 = vunpack.c.l.b16 %v2701
        %v2848 = vunpack.c.h.b16 %v2701
        %v2849 = vunpack.c.l.b16 %v2702
        %v2850 = vunpack.c.h.b16 %v2702
        %v2851 = vunpack.c.l.b16 %v2703
        %v2852 = vunpack.c.h.b16 %v2703
        %v2853 = vunpack.c.l.b16 %v2704
        %v2854 = vunpack.c.h.b16 %v2704
        %v2855 = vunpack.c.l.b16 %v2705
        %v2856 = vunpack.c.h.b16 %v2705
        %v2857 = vunpack.c.l.b16 %v2706
        %v2858 = vunpack.c.h.b16 %v2706
        %v2859 = vunpack.c.l.b16 %v2707
        %v2860 = vunpack.c.h.b16 %v2707
        %v2861 = vunpack.c.l.b16 %v2708
        %v2862 = vunpack.c.h.b16 %v2708
        %v2863 = vunpack.c.l.b16 %v2709
        %v2864 = vunpack.c.h.b16 %v2709
        %v2865 = vunpack.c.l.b16 %v2710
        %v2866 = vunpack.c.h.b16 %v2710
        %v2867 = vunpack.c.l.b16 %v2711
        %v2868 = vunpack.c.h.b16 %v2711
        %v2869 = vunpack.c.l.b16 %v2712
        %v2870 = vunpack.c.h.b16 %v2712
        %v2871 = vunpack.c.l.b16 %v2713
        %v2872 = vunpack.c.h.b16 %v2713
        %v2873 = vunpack.c.l.b16 %v2714
        %v2874 = vunpack.c.h.b16 %v2714
        %v2875 = vunpack.c.l.b16 %v2715
        %v2876 = vunpack.c.h.b16 %v2715
        %v2877 = vunpack.c.l.b16 %v2716
        %v2878 = vunpack.c.h.b16 %v2716
        %v2879 = vunpack.c.l.b16 %v2717
        %v2880 = vunpack.c.h.b16 %v2717
        %v2881 = vunpack.c.l.b16 %v2718
        %v2882 = vunpack.c.h.b16 %v2718
        %v2883 = vunpack.c.l.b16 %v2719
        %v2884 = vunpack.c.h.b16 %v2719
        %v2885 = vunpack.c.l.b16 %v2720
        %v2886 = vunpack.c.h.b16 %v2720
        %v2887 = vunpack.c.l.b16 %v2721
        %v2888 = vunpack.c.h.b16 %v2721
        %v2889 = vunpack.c.l.b16 %v2722
        %v2890 = vunpack.c.h.b16 %v2722
        %v2891 = vunpack.c.l.b16 %v2723
        %v2892 = vunpack.c.h.b16 %v2723
        %v2893 = vunpack.c.l.b16 %v2724
        %v2894 = vunpack.c.h.b16 %v2724
        %v2895 = vunpack.c.l.b16 %v2725
        %v2896 = vunpack.c.h.b16 %v2725
        %v2897 = vunpack.c.l.b16 %v2726
        %v2898 = vunpack.c.h.b16 %v2726
        %v2899 = vunpack.c.l.b16 %v2727
        %v2900 = vunpack.c.h.b16 %v2727
        %v2901 = vunpack.c.l.b16 %v2728
        %v2902 = vunpack.c.h.b16 %v2728
        %v2903 = vunpack.c.l.b16 %v2729
        %v2904 = vunpack.c.h.b16 %v2729
        %v2905 = vunpack.c.l.b16 %v2730
        %v2906 = vunpack.c.h.b16 %v2730
        %v2907 = vunpack.c.l.b16 %v2731
        %v2908 = vunpack.c.h.b16 %v2731
        %v2909 = vunpack.c.l.b16 %v2732
        %v2910 = vunpack.c.h.b16 %v2732
        %v2911 = vunpack.c.l.b16 %v2733
        %v2912 = vunpack.c.h.b16 %v2733
        %v2913 = vunpack.c.l.b16 %v2734
        %v2914 = vunpack.c.h.b16 %v2734
        %v2915 = vunpack.c.l.b16 %v2735
        %v2916 = vunpack.c.h.b16 %v2735
        %v2917 = vunpack.c.l.b16 %v2736
        %v2918 = vunpack.c.h.b16 %v2736
        %v2919 = vunpack.c.l.b16 %v2737
        %v2920 = vunpack.c.h.b16 %v2737
        %v2921 = vunpack.c.l.b16 %v2738
        %v2922 = vunpack.c.h.b16 %v2738
        %v2923 = vunpack.c.l.b16 %v2739
        %v2924 = vunpack.c.h.b16 %v2739
        %v2925 = vunpack.c.l.b16 %v2740
        %v2926 = vunpack.c.h.b16 %v2740
        %v2927 = vunpack.c.l.b16 %v2741
        %v2928 = vunpack.c.h.b16 %v2741
        %v2929 = vunpack.c.l.b16 %v2742
        %v2930 = vunpack.c.h.b16 %v2742
        %v2931 = vunpack.c.l.b16 %v2743
        %v2932 = vunpack.c.h.b16 %v2743
        %v2933 = vunpack.c.l.b16 %v2744
        %v2934 = vunpack.c.h.b16 %v2744
        %v2935 = vunpack.c.l.b16 %v2745
        %v2936 = vunpack.c.h.b16 %v2745
        %v2937 = vunpack.c.l.b16 %v2746
        %v2938 = vunpack.c.h.b16 %v2746
        %v2939 = vunpack.c.l.b16 %v2747
        %v2940 = vunpack.c.h.b16 %v2747
        %v2941 = vunpack.c.l.b16 %v2748
        %v2942 = vunpack.c.h.b16 %v2748
        %v2943 = vunpack.c.l.b16 %v2749
        %v2944 = vunpack.c.h.b16 %v2749
        %v2945 = vunpack.c.l.b16 %v2750
        %v2946 = vunpack.c.h.b16 %v2750
        %v2947 = vunpack.c.l.b16 %v2751
        %v2948 = vunpack.c.h.b16 %v2751
        %v2949 = vunpack.c.l.b16 %v2752
        %v2950 = vunpack.c.h.b16 %v2752
        %v2951 = vunpack.c.l.b16 %v2753
        %v2952 = vunpack.c.h.b16 %v2753
        %v2953 = vunpack.c.l.b16 %v2754
        %v2954 = vunpack.c.h.b16 %v2754
        %v2955 = vunpack.c.l.b16 %v2755
        %v2956 = vunpack.c.h.b16 %v2755
        %v2957 = vunpack.c.l.b16 %v2756
        %v2958 = vunpack.c.h.b16 %v2756
        %v2959 = vunpack.c.l.b16 %v2757
        %v2960 = vunpack.c.h.b16 %v2757
        %v2961 = vunpack.c.l.b16 %v2758
        %v2962 = vunpack.c.h.b16 %v2758
        %v2963 = vpack.c.b16 %v2837, %v2835
        %v2964 = vpack.c.b16 %v2838, %v2836
        %v2965 = vpack.c.b16 %v2841, %v2839
        %v2966 = vpack.c.b16 %v2842, %v2840
        %v2967 = vpack.c.b16 %v2845, %v2843
        %v2968 = vpack.c.b16 %v2846, %v2844
        %v2969 = vpack.c.b16 %v2849, %v2847
        %v2970 = vpack.c.b16 %v2850, %v2848
        %v2971 = vpack.c.b16 %v2853, %v2851
        %v2972 = vpack.c.b16 %v2854, %v2852
        %v2973 = vpack.c.b16 %v2857, %v2855
        %v2974 = vpack.c.b16 %v2858, %v2856
        %v2975 = vpack.c.b16 %v2861, %v2859
        %v2976 = vpack.c.b16 %v2862, %v2860
        %v2977 = vpack.c.b16 %v2865, %v2863
        %v2978 = vpack.c.b16 %v2866, %v2864
        %v2979 = vpack.c.b16 %v2869, %v2867
        %v2980 = vpack.c.b16 %v2870, %v2868
        %v2981 = vpack.c.b16 %v2873, %v2871
        %v2982 = vpack.c.b16 %v2874, %v2872
        %v2983 = vpack.c.b16 %v2877, %v2875
        %v2984 = vpack.c.b16 %v2878, %v2876
        %v2985 = vpack.c.b16 %v2881, %v2879
        %v2986 = vpack.c.b16 %v2882, %v2880
        %v2987 = vpack.c.b16 %v2885, %v2883
        %v2988 = vpack.c.b16 %v2886, %v2884
        %v2989 = vpack.c.b16 %v2889, %v2887
        %v2990 = vpack.c.b16 %v2890, %v2888
        %v2991 = vpack.c.b16 %v2893, %v2891
        %v2992 = vpack.c.b16 %v2894, %v2892
        %v2993 = vpack.c.b16 %v2897, %v2895
        %v2994 = vpack.c.b16 %v2898, %v2896
        %v2995 = vpack.c.b16 %v2901, %v2899
        %v2996 = vpack.c.b16 %v2902, %v2900
        %v2997 = vpack.c.b16 %v2905, %v2903
        %v2998 = vpack.c.b16 %v2906, %v2904
        %v2999 = vpack.c.b16 %v2909, %v2907
        %v3000 = vpack.c.b16 %v2910, %v2908
        %v3001 = vpack.c.b16 %v2913, %v2911
        %v3002 = vpack.c.b16 %v2914, %v2912
        %v3003 = vpack.c.b16 %v2917, %v2915
        %v3004 = vpack.c.b16 %v2918, %v2916
        %v3005 = vpack.c.b16 %v2921, %v2919
        %v3006 = vpack.c.b16 %v2922, %v2920
        %v3007 = vpack.c.b16 %v2925, %v2923
        %v3008 = vpack.c.b16 %v2926, %v2924
        %v3009 = vpack.c.b16 %v2929, %v2927
        %v3010 = vpack.c.b16 %v2930, %v2928
        %v3011 = vpack.c.b16 %v2933, %v2931
        %v3012 = vpack.c.b16 %v2934, %v2932
        %v3013 = vpack.c.b16 %v2937, %v2935
        %v3014 = vpack.c.b16 %v2938, %v2936
        %v3015 = vpack.c.b16 %v2941, %v2939
        %v3016 = vpack.c.b16 %v2942, %v2940
        %v3017 = vpack.c.b16 %v2945, %v2943
        %v3018 = vpack.c.b16 %v2946, %v2944
        %v3019 = vpack.c.b16 %v2949, %v2947
        %v3020 = vpack.c.b16 %v2950, %v2948
        %v3021 = vpack.c.b16 %v2953, %v2951
        %v3022 = vpack.c.b16 %v2954, %v2952
        %v3023 = vpack.c.b16 %v2957, %v2955
        %v3024 = vpack.c.b16 %v2958, %v2956
        %v3025 = vpack.c.b16 %v2961, %v2959
        %v3026 = vpack.c.b16 %v2962, %v2960
        %3091 = vmatprep.subr.bf16.mxu0 %v2978
        %3092 = vmatpush1.bf16.msra.mxu0 %v2977
        %3093 = vmatprep.subr.bf16.mxu0 %v2976
        %3094 = vmatpush1.bf16.msra.mxu0 %v2975
        %3095 = vmatprep.subr.bf16.mxu0 %v2974
        %3096 = vmatpush1.bf16.msra.mxu0 %v2973
        %3097 = vmatprep.subr.bf16.mxu0 %v2972
        %3098 = vmatpush1.bf16.msra.mxu0 %v2971
        %3099 = vmatprep.subr.bf16.mxu0 %v2970
        %3100 = vmatpush1.bf16.msra.mxu0 %v2969
        %3101 = vmatprep.subr.bf16.mxu0 %v2968
        %3102 = vmatpush1.bf16.msra.mxu0 %v2967
        %3103 = vmatprep.subr.bf16.mxu0 %v2966
        %3104 = vmatpush1.bf16.msra.mxu0 %v2965
        %3105 = vmatprep.subr.bf16.mxu0 %v2964
        %3106 = vmatpush1.bf16.msra.mxu0 %v2963
        %3107 = vmatprep.subr.bf16.mxu0 %v2994
        %3108 = vmatpush2.bf16.msra.mxu0 %v2993
        %3109 = vmatprep.subr.bf16.mxu0 %v2992
        %3110 = vmatpush2.bf16.msra.mxu0 %v2991
        %3111 = vmatprep.subr.bf16.mxu0 %v2990
        %3112 = vmatpush2.bf16.msra.mxu0 %v2989
        %3113 = vmatprep.subr.bf16.mxu0 %v2988
        %3114 = vmatpush2.bf16.msra.mxu0 %v2987
        %3115 = vmatprep.subr.bf16.mxu0 %v2986
        %3116 = vmatpush2.bf16.msra.mxu0 %v2985
        %3117 = vmatprep.subr.bf16.mxu0 %v2984
        %3118 = vmatpush2.bf16.msra.mxu0 %v2983
        %3119 = vmatprep.subr.bf16.mxu0 %v2982
        %3120 = vmatpush2.bf16.msra.mxu0 %v2981
        %3121 = vmatprep.subr.bf16.mxu0 %v2980
        %3122 = vmatpush2.bf16.msra.mxu0 %v2979
        %3123 = vmatprep.mubr.bf16.mxu0 %v2692
        %3124 = vmatmul.mubr.bf16.gmra.mxu0 %v2691
        %v3125 = vpop.f32.mrf.mxu0
        %v3126 = vadd.f32 %v2764, %v3125
        %v3127 = vpop.f32.mrf.mxu0
        %v3128 = vadd.f32 %v2768, %v3127
        %v3129 = vpop.f32.mrf.mxu0
        %v3130 = vadd.f32 %v2764, %v3129
        %v3131 = vpop.f32.mrf.mxu0
        %v3132 = vadd.f32 %v2768, %v3131
        %3133 = vdwg.mxu0
        %3134 = vmatprep.subr.bf16.mxu0 %v3010
        %3135 = vmatpush1.bf16.msra.mxu0 %v3009
        %3136 = vmatprep.subr.bf16.mxu0 %v3008
        %3137 = vmatpush1.bf16.msra.mxu0 %v3007
        %3138 = vmatprep.subr.bf16.mxu0 %v3006
        %3139 = vmatpush1.bf16.msra.mxu0 %v3005
        %3140 = vmatprep.subr.bf16.mxu0 %v3004
        %3141 = vmatpush1.bf16.msra.mxu0 %v3003
        %3142 = vmatprep.subr.bf16.mxu0 %v3002
        %3143 = vmatpush1.bf16.msra.mxu0 %v3001
        %3144 = vmatprep.subr.bf16.mxu0 %v3000
        %3145 = vmatpush1.bf16.msra.mxu0 %v2999
        %3146 = vmatprep.subr.bf16.mxu0 %v2998
        %3147 = vmatpush1.bf16.msra.mxu0 %v2997
        %3148 = vmatprep.subr.bf16.mxu0 %v2996
        %3149 = vmatpush1.bf16.msra.mxu0 %v2995
        %3150 = vmatprep.subr.bf16.mxu0 %v3026
        %3151 = vmatpush2.bf16.msra.mxu0 %v3025
        %3152 = vmatprep.subr.bf16.mxu0 %v3024
        %3153 = vmatpush2.bf16.msra.mxu0 %v3023
        %3154 = vmatprep.subr.bf16.mxu0 %v3022
        %3155 = vmatpush2.bf16.msra.mxu0 %v3021
        %3156 = vmatprep.subr.bf16.mxu0 %v3020
        %3157 = vmatpush2.bf16.msra.mxu0 %v3019
        %3158 = vmatprep.subr.bf16.mxu0 %v3018
        %3159 = vmatpush2.bf16.msra.mxu0 %v3017
        %3160 = vmatprep.subr.bf16.mxu0 %v3016
        %3161 = vmatpush2.bf16.msra.mxu0 %v3015
        %3162 = vmatprep.subr.bf16.mxu0 %v3014
        %3163 = vmatpush2.bf16.msra.mxu0 %v3013
        %3164 = vmatprep.subr.bf16.mxu0 %v3012
        %3165 = vmatpush2.bf16.msra.mxu0 %v3011
        %3166 = vmatprep.mubr.bf16.mxu0 %v2694
        %3167 = vmatmul.mubr.bf16.gmra.mxu0 %v2693
        %v3168 = vpop.f32.mrf.mxu0
        %v3169 = vadd.f32 %v3126, %v3168
        %v3170 = vpop.f32.mrf.mxu0
        %v3171 = vadd.f32 %v3128, %v3170
        %v3172 = vpop.f32.mrf.mxu0
        %v3173 = vadd.f32 %v3130, %v3172
        %v3174 = vpop.f32.mrf.mxu0
        %v3175 = vadd.f32 %v3132, %v3174
        %3176 = vdwg.mxu0
        %v3177 = vadd.f32 %v3169, %v2121
        %v3178 = vadd.f32 %v3171, %v2122
        %v3179 = vadd.f32 %v3173, %v2123
        %v3180 = vadd.f32 %v3175, %v2124
        %v3181 = vld [vmem:[%s12] sm:$0x3]
        %v3182 = vld [vmem:[%s13] sm:$0x3]
        %v3183 = vadd.f32 %v3177, %v3178
        %3184 = vadd.xlane.f32.xlu0 %v3183
        %v3185 = vpop.xlane.xlu0 %3184
        %v3186 = vadd.f32 %v3179, %v3180
        %3187 = vadd.xlane.f32.xlu0 %v3186
        %v3188 = vpop.xlane.xlu0 %3187
        %v3189 = vmul.f32 %v3185, %v2068
        %v3190 = vmul.f32 %v3188, %v2068
        %v3191 = vsub.f32 %v3177, %v3189
        %v3192 = vsub.f32 %v3178, %v3189
        %v3193 = vsub.f32 %v3179, %v3190
        %v3194 = vsub.f32 %v3180, %v3190
        %v3195 = vmul.f32 %v3191, %v3191
        %v3196 = vmul.f32 %v3192, %v3192
        %v3197 = vmul.f32 %v3193, %v3193
        %v3198 = vmul.f32 %v3194, %v3194
        %v3199 = vadd.f32 %v3195, %v3196
        %3200 = vadd.xlane.f32.xlu0 %v3199
        %v3201 = vpop.xlane.xlu0 %3200
        %v3202 = vadd.f32 %v3197, %v3198
        %3203 = vadd.xlane.f32.xlu0 %v3202
        %v3204 = vpop.xlane.xlu0 %3203
        %v3205 = vmul.f32 %v3201, %v2068
        %v3206 = vmul.f32 %v3204, %v2068
        %v3207 = vadd.f32 %v3205, 1e-12
        %v3208 = vadd.f32 %v3206, 1e-12
        %v3209 = vrsqrt.pop %v3207
        %v3210 = vrsqrt.pop %v3208
        %v3211 = vmul.f32 %v3191, %v3209
        %v3212 = vmul.f32 %v3192, %v3209
        %v3213 = vmul.f32 %v3193, %v3210
        %v3214 = vmul.f32 %v3194, %v3210
        %v3216 = vlaneseq
        %v3217 = vshrl.u32 %v3216, 7
        %v3218 = vsub.s32 0, %v3217
        %v3219 = vrot.slane %v3181, %v3218
        %v3220 = vlaneseq
        %v3221 = vshrl.u32 %v3220, 7
        %v3222 = vsub.s32 1, %v3221
        %v3223 = vrot.slane %v3181, %v3222
        %v3226 = vmul.f32 %v3211, %v3219
        %v3227 = vmul.f32 %v3212, %v3223
        %v3228 = vmul.f32 %v3213, %v3219
        %v3229 = vmul.f32 %v3214, %v3223
        %v3231 = vlaneseq
        %v3232 = vshrl.u32 %v3231, 7
        %v3233 = vsub.s32 0, %v3232
        %v3234 = vrot.slane %v3182, %v3233
        %v3235 = vlaneseq
        %v3236 = vshrl.u32 %v3235, 7
        %v3237 = vsub.s32 1, %v3236
        %v3238 = vrot.slane %v3182, %v3237
        %v3241 = vadd.f32 %v3226, %v3234
        %v3242 = vadd.f32 %v3227, %v3238
        %v3243 = vadd.f32 %v3228, %v3234
        %v3244 = vadd.f32 %v3229, %v3238
        %v3245 = vpack.c.bf16 %v3243, %v3241
        %v3246 = vpack.c.bf16 %v3244, %v3242
        %v3249 = vunpack.c.l.b16 %v3245
        %v3250 = vunpack.c.l.b16 %v3246
        %v3251 = vunpack.c.h.b16 %v3245
        %v3252 = vunpack.c.h.b16 %v3246
        %v3253 = vpack.c.b16 %v3250, %v3249
        %v3254 = vpack.c.b16 %v3252, %v3251
        %3257 = vst [vmem:[%s525] sm:$0xff] %v3253
        %3258 = vst [vmem:[%s525 + $0x8] sm:$0xff] %v3254
        %p3259 = scmp.lt.s32.totalorder %s27, 1
        %s3260 = scalar_select %p3259, %s27, 1
        %s3261 = smul.addr %s3260, 4
        %s3262 = smul.addr %s3261, 4
        %s3263 = scalar_lea.vmem %s14, %s3262
        // Predicated region
        $region89: #{tag_value_forward.5} parent=75 // pred_check
          %p3264 = pneg %p349
        $region90: #{tag_value_forward.5} parent=75 // pred_check_branch
          %3266 = sbr.rel (%p3264) target = $region92
        $region91: #{tag_value_forward.5} parent=75 // pred_region
          _
        $region92: #{tag_value_forward.5} parent=75 // pred_fallthru
          _
      $region76: #{tag_value_forward.5} parent=5 // pred_fallthru
        _
      %p3267 = scmp.le.s32.totalorder 2, %s22
      // Predicated region
      $region93: #{tag_value_forward.5} parent=5 // pred_check
        %p3268 = pneg %p3267
      $region94: #{tag_value_forward.5} parent=5 // pred_check_branch
        %3270 = sbr.rel (%p3268) target = $region96
      $region95: #{tag_value_forward.5} parent=5 // pred_region
        %s3271 = ssub.s32 %s22, 2
        // Predicated region
        $region97: #{tag_value_forward.5} parent=95 // pred_check
          %p3272 = pneg %p355
        $region98: #{tag_value_forward.5} parent=95 // pred_check_branch
          %3274 = sbr.rel (%p3272) target = $region100
        $region99: #{tag_value_forward.5} parent=95 // pred_region
          %p3275 = scmp.lt.s32.totalorder %s28, 1
          %s3276 = scalar_select %p3275, %s28, 1
          %s3277 = smul.addr %s3276, 4
          %s3278 = smul.addr %s3277, 4
          %s3279 = scalar_lea.vmem %s14, %s3278
        $region100: #{tag_value_forward.5} parent=95 // pred_fallthru
          _
      $region96: #{tag_value_forward.5} parent=5 // pred_fallthru
        _
    $region6: #{tag_value_forward.5} parent=1 // loop_footer
      %s26 = sadd.s32 1, %s22
    $region7: #{tag_value_forward.5} parent=1 // loop_footer_branch
      %21 = sbr.rel target = $region3
    $region8: #{tag_value_forward.5} parent=1 // loop_exit
      _
    %3280 = vsyncpa [#allocation3], 1
    %s3281 = scalar_lea.sflag [#allocation3], 1
    %3282 = vsyncpa %s3281, 1
    %3283 = vsyncpa [#allocation5], 1

</llo_original>
